<compile_context>
chip_gen: v7x
topology: tpu7x:2x2x1
jax: 0.10.0
libtpu: 0.0.40
codegen_flags: <defaults>
</compile_context>

<pallas_src>
import jax
import jax.numpy as jnp
from jax import lax
from jax.experimental import pallas as pl
from jax.experimental.pallas import tpu as pltpu


# ---------------------------------------------------------------------------
# Fused kernel:
#   ConvTranspose2d(2,2)+BN+ReLU -> concat(.,z) -> conv3x3+BN+ReLU
#                                               -> conv3x3+BN+ReLU
# ---------------------------------------------------------------------------
def up_fused_kernel(x_ref, z_ref, wup_ref, su_ref, bu_ref,
                    w1_ref, s1_ref, b1_ref,
                    w2t_ref, s2_ref, b2_ref,
                    o_ref, ypad_ref, hpad_ref):
    _, H, W, Ci = x_ref.shape
    _, OH, OW, C = z_ref.shape

    x2d = x_ref[0].reshape(H * W, Ci)                              # (H*W, Ci) bf16

    # ---- ConvTranspose2d(k=2,s=2) + BN + ReLU -----------------------------
    # One small matmul per sub-pixel (dy, dx); the 2x2 spatial interleave is
    # built with lane-preserving reshapes + concatenates (no strided stores,
    # no lane-splitting reshapes).
    rows = []
    for dy in range(2):
        cols = []
        for dx in range(2):
            u = jnp.dot(x2d, wup_ref[2 * dy + dx],
                        preferred_element_type=jnp.float32)       # (H*W, C) f32
            u = jnp.maximum(u * su_ref[...] + bu_ref[...], 0.0)
            cols.append(u.astype(ypad_ref.dtype).reshape(H * W, 1, C))
        # (H*W, 2, C) -> (H, 1, 2W, C): width index = 2*w + dx
        rows.append(jnp.concatenate(cols, axis=1).reshape(H, 1, OW, C))
    # (H, 2, OW, C) -> (OH, OW, C): row index = 2*h + dy
    x_up = jnp.concatenate(rows, axis=1).reshape(OH, OW, C)

    # ---- padded concat([x_up, z]) lives only in VMEM -----------------------
    ypad_ref[...] = jnp.zeros(ypad_ref.shape, ypad_ref.dtype)
    ypad_ref[1:1 + OH, 1:1 + OW, 0:C] = x_up
    ypad_ref[1:1 + OH, 1:1 + OW, C:2 * C] = z_ref[0]

    # ---- conv1: im2col (rows = OH*OW, K = 9*2C) + BN + ReLU ----------------
    cols1 = []
    for ky in range(3):
        for kx in range(3):
            cols1.append(
                ypad_ref[ky:ky + OH, kx:kx + OW, :].reshape(OH * OW, 2 * C))
    p1 = jnp.concatenate(cols1, axis=1)                            # (OH*OW, 18C)
    h = jnp.dot(p1, w1_ref[...], preferred_element_type=jnp.float32)
    h = jnp.maximum(h * s1_ref[...] + b1_ref[...], 0.0)            # (OH*OW, C) f32

    # ---- conv2: pad h in VMEM, im2col (K = 9C), transposed matmul ----------
    hpad_ref[...] = jnp.zeros(hpad_ref.shape, hpad_ref.dtype)
    hpad_ref[1:1 + OH, 1:1 + OW, :] = h.astype(hpad_ref.dtype).reshape(OH, OW, C)
    cols2 = []
    for ky in range(3):
        for kx in range(3):
            cols2.append(
                hpad_ref[ky:ky + OH, kx:kx + OW, :].reshape(OH * OW, C))
    p2 = jnp.concatenate(cols2, axis=1)                            # (OH*OW, 9C)

    # (Cout, 9C) x (OH*OW, 9C)^T -> (Cout, OH*OW): output rides the lane axis.
    out_t = lax.dot_general(w2t_ref[...], p2,
                            dimension_numbers=(((1,), (1,)), ((), ())),
                            preferred_element_type=jnp.float32)
    out_t = jnp.maximum(out_t * s2_ref[...] + b2_ref[...], 0.0)
    o_ref[0] = out_t.astype(o_ref.dtype)


# ---------------------------------------------------------------------------
# Wrapper
# ---------------------------------------------------------------------------
def _fold_bn(gamma, beta, mean, var, conv_bias, eps=1e-6):
    scale = gamma / jnp.sqrt(var + eps)
    bias = beta + scale * (conv_bias - mean)
    return scale.astype(jnp.float32), bias.astype(jnp.float32)


def up_forward(x_nchw, z_nchw, p):
    N, Ci, H, W = x_nchw.shape
    Co = p["up_w"].shape[1]
    OH, OW = 2 * H, 2 * W

    # NCHW -> NHWC, bf16 activations (f32 accumulation inside the kernel).
    x = jnp.transpose(x_nchw, (0, 2, 3, 1)).astype(jnp.bfloat16)
    z = jnp.transpose(z_nchw, (0, 2, 3, 1)).astype(jnp.bfloat16)

    # Fold the three BatchNorms (inference mode) into per-channel scale/bias.
    s_up, b_up = _fold_bn(**p["up_bn"], conv_bias=p["up_b"])
    s1, b1 = _fold_bn(**p["bn1"], conv_bias=p["conv1_b"])
    s2, b2 = _fold_bn(**p["bn2"], conv_bias=p["conv2_b"])

    # ConvTranspose2d weight (Ci, Co, 2, 2) -> (2*dy+dx, Ci, Co)
    wup = (jnp.transpose(p["up_w"], (2, 3, 0, 1))
              .reshape(4, Ci, Co).astype(jnp.bfloat16))
    # Conv1 weight (Co, 2Co, 3, 3) -> im2col matrix (9*2Co, Co), rows (ky,kx,cin)
    w1 = (jnp.transpose(p["conv1_w"], (2, 3, 1, 0))
             .reshape(9 * 2 * Co, Co).astype(jnp.bfloat16))
    # Conv2 weight (Co, Co, 3, 3) -> transposed im2col matrix (Co, 9*Co)
    w2t = (jnp.transpose(p["conv2_w"], (2, 3, 1, 0))
              .reshape(9 * Co, Co).T.astype(jnp.bfloat16))

    out = pl.pallas_call(
        up_fused_kernel,
        out_shape=jax.ShapeDtypeStruct((N, Co, OH * OW), jnp.float32),
        grid=(N,),
        in_specs=[
            pl.BlockSpec((1, H, W, Ci), lambda n: (n, 0, 0, 0)),
            pl.BlockSpec((1, OH, OW, Co), lambda n: (n, 0, 0, 0)),
            pl.BlockSpec((4, Ci, Co), lambda n: (0, 0, 0)),
            pl.BlockSpec((1, Co), lambda n: (0, 0)),
            pl.BlockSpec((1, Co), lambda n: (0, 0)),
            pl.BlockSpec((9 * 2 * Co, Co), lambda n: (0, 0)),
            pl.BlockSpec((1, Co), lambda n: (0, 0)),
            pl.BlockSpec((1, Co), lambda n: (0, 0)),
            pl.BlockSpec((Co, 9 * Co), lambda n: (0, 0)),
            pl.BlockSpec((Co, 1), lambda n: (0, 0)),
            pl.BlockSpec((Co, 1), lambda n: (0, 0)),
        ],
        out_specs=pl.BlockSpec((1, Co, OH * OW), lambda n: (n, 0, 0)),
        scratch_shapes=[
            pltpu.VMEM((OH + 2, OW + 2, 2 * Co), jnp.bfloat16),    # padded concat
            pltpu.VMEM((OH + 2, OW + 2, Co), jnp.bfloat16),        # padded h
        ],
        compiler_params=pltpu.CompilerParams(
            dimension_semantics=("parallel",),
            vmem_limit_bytes=32 * 1024 * 1024),
    )(x, z, wup,
      s_up.reshape(1, Co), b_up.reshape(1, Co),
      w1, s1.reshape(1, Co), b1.reshape(1, Co),
      w2t, s2.reshape(Co, 1), b2.reshape(Co, 1))

    # (N, Co, OH*OW) -> NCHW: reshape only, no transpose needed.
    return out.reshape(N, Co, OH, OW)


# ---------------------------------------------------------------------------
# Parameter init (mirrors the PyTorch module's tensors)
# ---------------------------------------------------------------------------
def init_params(key, in_channels, out_channels):
    ks = jax.random.split(key, 16)
    Ci, Co = in_channels, out_channels

    def bn(k, c):
        k1, k2, k3, k4 = jax.random.split(k, 4)
        return dict(
            gamma=jax.random.uniform(k1, (c,), jnp.float32, 0.5, 1.5),
            beta=jax.random.normal(k2, (c,), jnp.float32) * 0.1,
            mean=jax.random.normal(k3, (c,), jnp.float32) * 0.1,
            var=jax.random.uniform(k4, (c,), jnp.float32, 0.5, 1.5),
        )

    return dict(
        up_w=jax.random.normal(ks[0], (Ci, Co, 2, 2), jnp.float32) * 0.1,
        up_b=jax.random.normal(ks[1], (Co,), jnp.float32) * 0.1,
        up_bn=bn(ks[2], Co),
        conv1_w=jax.random.normal(ks[3], (Co, 2 * Co, 3, 3), jnp.float32) * 0.1,
        conv1_b=jax.random.normal(ks[4], (Co,), jnp.float32) * 0.1,
        bn1=bn(ks[5], Co),
        conv2_w=jax.random.normal(ks[6], (Co, Co, 3, 3), jnp.float32) * 0.1,
        conv2_b=jax.random.normal(ks[7], (Co,), jnp.float32) * 0.1,
        bn2=bn(ks[8], Co),
    )


# ---------------------------------------------------------------------------
# Pure-JAX reference (mirrors the bf16 input rounding; f32 math)
# ---------------------------------------------------------------------------
def _ref_forward(x_nchw, z_nchw, p):
    q = lambda a: a.astype(jnp.bfloat16).astype(jnp.float32)
    x = q(jnp.transpose(x_nchw, (0, 2, 3, 1)))
    z = q(jnp.transpose(z_nchw, (0, 2, 3, 1)))
    N, H, W, _ = x.shape
    Co = p["up_w"].shape[1]
    hp = jax.lax.Precision.HIGHEST

    def bn_relu(t, bnp, conv_b):
        s, b = _fold_bn(**bnp, conv_bias=conv_b)
        return jnp.maximum(t * s + b, 0.0)

    # ConvTranspose2d(2,2): out[n, 2h+a, 2w+b, o] = sum_i x[n,h,w,i] W[i,o,a,b]
    u = jnp.einsum("nhwi,ioab->nhawbo", x, q(p["up_w"]), precision=hp)
    u = u.reshape(N, 2 * H, 2 * W, Co)
    u = q(bn_relu(u, p["up_bn"], p["up_b"]))

    y = jnp.concatenate([u, z], axis=-1)

    def conv3(t, w_oihw):
        w = q(jnp.transpose(w_oihw, (2, 3, 1, 0)))                 # (3,3,Cin,Cout)
        tp = jnp.pad(t, ((0, 0), (1, 1), (1, 1), (0, 0)))
        acc = 0.0
        for ky in range(3):
            for kx in range(3):
                acc = acc + jnp.einsum(
                    "nhwc,cf->nhwf",
                    tp[:, ky:ky + 2 * H, kx:kx + 2 * W, :], w[ky, kx],
                    precision=hp)
        return acc

    h = q(bn_relu(conv3(y, p["conv1_w"]), p["bn1"], p["conv1_b"]))
    o = bn_relu(conv3(h, p["conv2_w"]), p["bn2"], p["conv2_b"])
    return jnp.transpose(o, (0, 3, 1, 2))


if __name__ == "__main__":
    key = jax.random.PRNGKey(0)
    k_x, k_z, k_p = jax.random.split(key, 3)

    in_channels, out_channels = 8, 8
    N, H, W = 2, 8, 8

    x = jax.random.normal(k_x, (N, in_channels, H, W), jnp.float32)
    z = jax.random.normal(k_z, (N, out_channels, 2 * H, 2 * W), jnp.float32)
    params = init_params(k_p, in_channels, out_channels)

    out = jax.block_until_ready(jax.jit(up_forward)(x, z, params))
    ref = jax.block_until_ready(_ref_forward(x, z, params))

    assert out.shape == (N, out_channels, 2 * H, 2 * W), out.shape
    assert out.dtype == jnp.float32
    err = float(jnp.max(jnp.abs(out - ref)))
    assert err < 2e-2, f"max abs err {err}"
    print("KERNEL_OK")
</pallas_src>

<mosaic_0001>
module attributes {stable_mosaic.version = 11 : i64} {
  func.func @up_fused_kernel(%arg0: i32, %arg1: memref<1x8x8x8xbf16, #tpu.memory_space<vmem>>, %arg2: memref<1x16x16x8xbf16, #tpu.memory_space<vmem>>, %arg3: memref<4x8x8xbf16, #tpu.memory_space<vmem>>, %arg4: memref<1x8xf32, #tpu.memory_space<vmem>>, %arg5: memref<1x8xf32, #tpu.memory_space<vmem>>, %arg6: memref<144x8xbf16, #tpu.memory_space<vmem>>, %arg7: memref<1x8xf32, #tpu.memory_space<vmem>>, %arg8: memref<1x8xf32, #tpu.memory_space<vmem>>, %arg9: memref<8x72xbf16, #tpu.memory_space<vmem>>, %arg10: memref<8x1xf32, #tpu.memory_space<vmem>>, %arg11: memref<8x1xf32, #tpu.memory_space<vmem>>, %arg12: memref<1x8x256xf32, #tpu.memory_space<vmem>>, %arg13: memref<18x18x16xbf16, #tpu.memory_space<vmem>>, %arg14: memref<18x18x8xbf16, #tpu.memory_space<vmem>>) attributes {dimension_semantics = [#tpu.dimension_semantics<parallel>], iteration_bounds = array<i64: 2>, scalar_prefetch = 0 : i64, scratch_operands = 2 : i64, tpu.core_type = #tpu.core_type<tc>, window_params = [{transform_indices = @transform_0, window_bounds = array<i64: 1, 8, 8, 8>}, {transform_indices = @transform_1, window_bounds = array<i64: 1, 16, 16, 8>}, {pipeline_mode = #tpu.pipeline_mode<synchronous>, transform_indices = @transform_2, window_bounds = array<i64: 4, 8, 8>}, {pipeline_mode = #tpu.pipeline_mode<synchronous>, transform_indices = @transform_3, window_bounds = array<i64: 1, 8>}, {pipeline_mode = #tpu.pipeline_mode<synchronous>, transform_indices = @transform_4, window_bounds = array<i64: 1, 8>}, {pipeline_mode = #tpu.pipeline_mode<synchronous>, transform_indices = @transform_5, window_bounds = array<i64: 144, 8>}, {pipeline_mode = #tpu.pipeline_mode<synchronous>, transform_indices = @transform_6, window_bounds = array<i64: 1, 8>}, {pipeline_mode = #tpu.pipeline_mode<synchronous>, transform_indices = @transform_7, window_bounds = array<i64: 1, 8>}, {pipeline_mode = #tpu.pipeline_mode<synchronous>, transform_indices = @transform_8, window_bounds = array<i64: 8, 72>}, {pipeline_mode = #tpu.pipeline_mode<synchronous>, transform_indices = @transform_9, window_bounds = array<i64: 8, 1>}, {pipeline_mode = #tpu.pipeline_mode<synchronous>, transform_indices = @transform_10, window_bounds = array<i64: 8, 1>}, {transform_indices = @transform_11, window_bounds = array<i64: 1, 8, 256>}]} {
    %c0 = arith.constant 0 : index
    %c0_0 = arith.constant 0 : index
    %c0_1 = arith.constant 0 : index
    %c0_2 = arith.constant 0 : index
    %0 = vector.load %arg1[%c0, %c0_0, %c0_1, %c0_2] : memref<1x8x8x8xbf16, #tpu.memory_space<vmem>>, vector<1x8x8x8xbf16>
    %1 = vector.shape_cast %0 : vector<1x8x8x8xbf16> to vector<8x8x8xbf16>
    %2 = vector.shape_cast %1 : vector<8x8x8xbf16> to vector<64x8xbf16>
    %c0_3 = arith.constant 0 : index
    %c0_4 = arith.constant 0 : index
    %c0_5 = arith.constant 0 : index
    %3 = vector.load %arg3[%c0_3, %c0_4, %c0_5] : memref<4x8x8xbf16, #tpu.memory_space<vmem>>, vector<1x8x8xbf16>
    %4 = vector.shape_cast %3 : vector<1x8x8xbf16> to vector<8x8xbf16>
    %cst = arith.constant dense<0.000000e+00> : vector<64x8xf32>
    %5 = tpu.matmul %2, %4, %cst {dimension_numbers = #tpu.dot_dimension_numbers<[1], [0], [0], [1], [0, 0, 1, 1], [], []>} : vector<64x8xbf16>, vector<8x8xbf16>, vector<64x8xf32> -> vector<64x8xf32>
    %c0_6 = arith.constant 0 : index
    %c0_7 = arith.constant 0 : index
    %6 = vector.load %arg4[%c0_6, %c0_7] : memref<1x8xf32, #tpu.memory_space<vmem>>, vector<1x8xf32>
    %7 = vector.broadcast %6 : vector<1x8xf32> to vector<64x8xf32>
    %8 = arith.mulf %5, %7 : vector<64x8xf32>
    %c0_8 = arith.constant 0 : index
    %c0_9 = arith.constant 0 : index
    %9 = vector.load %arg5[%c0_8, %c0_9] : memref<1x8xf32, #tpu.memory_space<vmem>>, vector<1x8xf32>
    %10 = vector.broadcast %9 : vector<1x8xf32> to vector<64x8xf32>
    %11 = arith.addf %8, %10 : vector<64x8xf32>
    %cst_10 = arith.constant 0.000000e+00 : f32
    %12 = vector.broadcast %cst_10 : f32 to vector<64x8xf32>
    %13 = arith.maximumf %11, %12 : vector<64x8xf32>
    %14 = arith.truncf %13 : vector<64x8xf32> to vector<64x8xbf16>
    %15 = vector.shape_cast %14 : vector<64x8xbf16> to vector<64x1x8xbf16>
    %c1 = arith.constant 1 : index
    %c0_11 = arith.constant 0 : index
    %c0_12 = arith.constant 0 : index
    %16 = vector.load %arg3[%c1, %c0_11, %c0_12] : memref<4x8x8xbf16, #tpu.memory_space<vmem>>, vector<1x8x8xbf16>
    %17 = vector.shape_cast %16 : vector<1x8x8xbf16> to vector<8x8xbf16>
    %cst_13 = arith.constant dense<0.000000e+00> : vector<64x8xf32>
    %18 = tpu.matmul %2, %17, %cst_13 {dimension_numbers = #tpu.dot_dimension_numbers<[1], [0], [0], [1], [0, 0, 1, 1], [], []>} : vector<64x8xbf16>, vector<8x8xbf16>, vector<64x8xf32> -> vector<64x8xf32>
    %c0_14 = arith.constant 0 : index
    %c0_15 = arith.constant 0 : index
    %19 = vector.load %arg4[%c0_14, %c0_15] : memref<1x8xf32, #tpu.memory_space<vmem>>, vector<1x8xf32>
    %20 = vector.broadcast %19 : vector<1x8xf32> to vector<64x8xf32>
    %21 = arith.mulf %18, %20 : vector<64x8xf32>
    %c0_16 = arith.constant 0 : index
    %c0_17 = arith.constant 0 : index
    %22 = vector.load %arg5[%c0_16, %c0_17] : memref<1x8xf32, #tpu.memory_space<vmem>>, vector<1x8xf32>
    %23 = vector.broadcast %22 : vector<1x8xf32> to vector<64x8xf32>
    %24 = arith.addf %21, %23 : vector<64x8xf32>
    %cst_18 = arith.constant 0.000000e+00 : f32
    %25 = vector.broadcast %cst_18 : f32 to vector<64x8xf32>
    %26 = arith.maximumf %24, %25 : vector<64x8xf32>
    %27 = arith.truncf %26 : vector<64x8xf32> to vector<64x8xbf16>
    %28 = vector.shape_cast %27 : vector<64x8xbf16> to vector<64x1x8xbf16>
    %29 = tpu.concatenate %15, %28 in 1 : vector<64x1x8xbf16>, vector<64x1x8xbf16> -> vector<64x2x8xbf16>
    %30 = vector.shape_cast %29 : vector<64x2x8xbf16> to vector<8x1x16x8xbf16>
    %c2 = arith.constant 2 : index
    %c0_19 = arith.constant 0 : index
    %c0_20 = arith.constant 0 : index
    %31 = vector.load %arg3[%c2, %c0_19, %c0_20] : memref<4x8x8xbf16, #tpu.memory_space<vmem>>, vector<1x8x8xbf16>
    %32 = vector.shape_cast %31 : vector<1x8x8xbf16> to vector<8x8xbf16>
    %cst_21 = arith.constant dense<0.000000e+00> : vector<64x8xf32>
    %33 = tpu.matmul %2, %32, %cst_21 {dimension_numbers = #tpu.dot_dimension_numbers<[1], [0], [0], [1], [0, 0, 1, 1], [], []>} : vector<64x8xbf16>, vector<8x8xbf16>, vector<64x8xf32> -> vector<64x8xf32>
    %c0_22 = arith.constant 0 : index
    %c0_23 = arith.constant 0 : index
    %34 = vector.load %arg4[%c0_22, %c0_23] : memref<1x8xf32, #tpu.memory_space<vmem>>, vector<1x8xf32>
    %35 = vector.broadcast %34 : vector<1x8xf32> to vector<64x8xf32>
    %36 = arith.mulf %33, %35 : vector<64x8xf32>
    %c0_24 = arith.constant 0 : index
    %c0_25 = arith.constant 0 : index
    %37 = vector.load %arg5[%c0_24, %c0_25] : memref<1x8xf32, #tpu.memory_space<vmem>>, vector<1x8xf32>
    %38 = vector.broadcast %37 : vector<1x8xf32> to vector<64x8xf32>
    %39 = arith.addf %36, %38 : vector<64x8xf32>
    %cst_26 = arith.constant 0.000000e+00 : f32
    %40 = vector.broadcast %cst_26 : f32 to vector<64x8xf32>
    %41 = arith.maximumf %39, %40 : vector<64x8xf32>
    %42 = arith.truncf %41 : vector<64x8xf32> to vector<64x8xbf16>
    %43 = vector.shape_cast %42 : vector<64x8xbf16> to vector<64x1x8xbf16>
    %c3 = arith.constant 3 : index
    %c0_27 = arith.constant 0 : index
    %c0_28 = arith.constant 0 : index
    %44 = vector.load %arg3[%c3, %c0_27, %c0_28] : memref<4x8x8xbf16, #tpu.memory_space<vmem>>, vector<1x8x8xbf16>
    %45 = vector.shape_cast %44 : vector<1x8x8xbf16> to vector<8x8xbf16>
    %cst_29 = arith.constant dense<0.000000e+00> : vector<64x8xf32>
    %46 = tpu.matmul %2, %45, %cst_29 {dimension_numbers = #tpu.dot_dimension_numbers<[1], [0], [0], [1], [0, 0, 1, 1], [], []>} : vector<64x8xbf16>, vector<8x8xbf16>, vector<64x8xf32> -> vector<64x8xf32>
    %c0_30 = arith.constant 0 : index
    %c0_31 = arith.constant 0 : index
    %47 = vector.load %arg4[%c0_30, %c0_31] : memref<1x8xf32, #tpu.memory_space<vmem>>, vector<1x8xf32>
    %48 = vector.broadcast %47 : vector<1x8xf32> to vector<64x8xf32>
    %49 = arith.mulf %46, %48 : vector<64x8xf32>
    %c0_32 = arith.constant 0 : index
    %c0_33 = arith.constant 0 : index
    %50 = vector.load %arg5[%c0_32, %c0_33] : memref<1x8xf32, #tpu.memory_space<vmem>>, vector<1x8xf32>
    %51 = vector.broadcast %50 : vector<1x8xf32> to vector<64x8xf32>
    %52 = arith.addf %49, %51 : vector<64x8xf32>
    %cst_34 = arith.constant 0.000000e+00 : f32
    %53 = vector.broadcast %cst_34 : f32 to vector<64x8xf32>
    %54 = arith.maximumf %52, %53 : vector<64x8xf32>
    %55 = arith.truncf %54 : vector<64x8xf32> to vector<64x8xbf16>
    %56 = vector.shape_cast %55 : vector<64x8xbf16> to vector<64x1x8xbf16>
    %57 = tpu.concatenate %43, %56 in 1 : vector<64x1x8xbf16>, vector<64x1x8xbf16> -> vector<64x2x8xbf16>
    %58 = vector.shape_cast %57 : vector<64x2x8xbf16> to vector<8x1x16x8xbf16>
    %59 = tpu.concatenate %30, %58 in 1 : vector<8x1x16x8xbf16>, vector<8x1x16x8xbf16> -> vector<8x2x16x8xbf16>
    %60 = vector.shape_cast %59 : vector<8x2x16x8xbf16> to vector<16x16x8xbf16>
    %cst_35 = arith.constant 0.000000e+00 : bf16
    %61 = vector.broadcast %cst_35 : bf16 to vector<18x18x16xbf16>
    %c0_36 = arith.constant 0 : index
    %c0_37 = arith.constant 0 : index
    %c0_38 = arith.constant 0 : index
    %62 = vector.load %arg13[%c0_36, %c0_37, %c0_38] : memref<18x18x16xbf16, #tpu.memory_space<vmem>>, vector<18x18x16xbf16>
    tpu.vector_store %arg13[%c0_36, %c0_37, %c0_38], %61 {strides = array<i32>} : memref<18x18x16xbf16, #tpu.memory_space<vmem>>, vector<18x18x16xbf16>,
    %c1_39 = arith.constant 1 : index
    %c1_40 = arith.constant 1 : index
    %c0_41 = arith.constant 0 : index
    %63 = vector.load %arg13[%c1_39, %c1_40, %c0_41] : memref<18x18x16xbf16, #tpu.memory_space<vmem>>, vector<16x16x8xbf16>
    tpu.vector_store %arg13[%c1_39, %c1_40, %c0_41], %60 {strides = array<i32>} : memref<18x18x16xbf16, #tpu.memory_space<vmem>>, vector<16x16x8xbf16>,
    %c0_42 = arith.constant 0 : index
    %c0_43 = arith.constant 0 : index
    %c0_44 = arith.constant 0 : index
    %c0_45 = arith.constant 0 : index
    %64 = vector.load %arg2[%c0_42, %c0_43, %c0_44, %c0_45] : memref<1x16x16x8xbf16, #tpu.memory_space<vmem>>, vector<1x16x16x8xbf16>
    %65 = vector.shape_cast %64 : vector<1x16x16x8xbf16> to vector<16x16x8xbf16>
    %c1_46 = arith.constant 1 : index
    %c1_47 = arith.constant 1 : index
    %c8 = arith.constant 8 : index
    %66 = vector.load %arg13[%c1_46, %c1_47, %c8] : memref<18x18x16xbf16, #tpu.memory_space<vmem>>, vector<16x16x8xbf16>
    tpu.vector_store %arg13[%c1_46, %c1_47, %c8], %65 {strides = array<i32>} : memref<18x18x16xbf16, #tpu.memory_space<vmem>>, vector<16x16x8xbf16>,
    %c0_48 = arith.constant 0 : index
    %c0_49 = arith.constant 0 : index
    %c0_50 = arith.constant 0 : index
    %67 = vector.load %arg13[%c0_48, %c0_49, %c0_50] : memref<18x18x16xbf16, #tpu.memory_space<vmem>>, vector<16x16x16xbf16>
    %68 = vector.shape_cast %67 : vector<16x16x16xbf16> to vector<256x16xbf16>
    %c0_51 = arith.constant 0 : index
    %c1_52 = arith.constant 1 : index
    %c0_53 = arith.constant 0 : index
    %69 = vector.load %arg13[%c0_51, %c1_52, %c0_53] : memref<18x18x16xbf16, #tpu.memory_space<vmem>>, vector<16x16x16xbf16>
    %70 = vector.shape_cast %69 : vector<16x16x16xbf16> to vector<256x16xbf16>
    %c0_54 = arith.constant 0 : index
    %c2_55 = arith.constant 2 : index
    %c0_56 = arith.constant 0 : index
    %71 = vector.load %arg13[%c0_54, %c2_55, %c0_56] : memref<18x18x16xbf16, #tpu.memory_space<vmem>>, vector<16x16x16xbf16>
    %72 = vector.shape_cast %71 : vector<16x16x16xbf16> to vector<256x16xbf16>
    %c1_57 = arith.constant 1 : index
    %c0_58 = arith.constant 0 : index
    %c0_59 = arith.constant 0 : index
    %73 = vector.load %arg13[%c1_57, %c0_58, %c0_59] : memref<18x18x16xbf16, #tpu.memory_space<vmem>>, vector<16x16x16xbf16>
    %74 = vector.shape_cast %73 : vector<16x16x16xbf16> to vector<256x16xbf16>
    %c1_60 = arith.constant 1 : index
    %c1_61 = arith.constant 1 : index
    %c0_62 = arith.constant 0 : index
    %75 = vector.load %arg13[%c1_60, %c1_61, %c0_62] : memref<18x18x16xbf16, #tpu.memory_space<vmem>>, vector<16x16x16xbf16>
    %76 = vector.shape_cast %75 : vector<16x16x16xbf16> to vector<256x16xbf16>
    %c1_63 = arith.constant 1 : index
    %c2_64 = arith.constant 2 : index
    %c0_65 = arith.constant 0 : index
    %77 = vector.load %arg13[%c1_63, %c2_64, %c0_65] : memref<18x18x16xbf16, #tpu.memory_space<vmem>>, vector<16x16x16xbf16>
    %78 = vector.shape_cast %77 : vector<16x16x16xbf16> to vector<256x16xbf16>
    %c2_66 = arith.constant 2 : index
    %c0_67 = arith.constant 0 : index
    %c0_68 = arith.constant 0 : index
    %79 = vector.load %arg13[%c2_66, %c0_67, %c0_68] : memref<18x18x16xbf16, #tpu.memory_space<vmem>>, vector<16x16x16xbf16>
    %80 = vector.shape_cast %79 : vector<16x16x16xbf16> to vector<256x16xbf16>
    %c2_69 = arith.constant 2 : index
    %c1_70 = arith.constant 1 : index
    %c0_71 = arith.constant 0 : index
    %81 = vector.load %arg13[%c2_69, %c1_70, %c0_71] : memref<18x18x16xbf16, #tpu.memory_space<vmem>>, vector<16x16x16xbf16>
    %82 = vector.shape_cast %81 : vector<16x16x16xbf16> to vector<256x16xbf16>
    %c2_72 = arith.constant 2 : index
    %c2_73 = arith.constant 2 : index
    %c0_74 = arith.constant 0 : index
    %83 = vector.load %arg13[%c2_72, %c2_73, %c0_74] : memref<18x18x16xbf16, #tpu.memory_space<vmem>>, vector<16x16x16xbf16>
    %84 = vector.shape_cast %83 : vector<16x16x16xbf16> to vector<256x16xbf16>
    %85 = tpu.concatenate %68, %70, %72, %74, %76, %78, %80, %82, %84 in 1 : vector<256x16xbf16>, vector<256x16xbf16>, vector<256x16xbf16>, vector<256x16xbf16>, vector<256x16xbf16>, vector<256x16xbf16>, vector<256x16xbf16>, vector<256x16xbf16>, vector<256x16xbf16> -> vector<256x144xbf16>
    %c0_75 = arith.constant 0 : index
    %c0_76 = arith.constant 0 : index
    %86 = vector.load %arg6[%c0_75, %c0_76] : memref<144x8xbf16, #tpu.memory_space<vmem>>, vector<144x8xbf16>
    %cst_77 = arith.constant dense<0.000000e+00> : vector<256x8xf32>
    %87 = tpu.matmul %85, %86, %cst_77 {dimension_numbers = #tpu.dot_dimension_numbers<[1], [0], [0], [1], [0, 0, 1, 1], [], []>} : vector<256x144xbf16>, vector<144x8xbf16>, vector<256x8xf32> -> vector<256x8xf32>
    %c0_78 = arith.constant 0 : index
    %c0_79 = arith.constant 0 : index
    %88 = vector.load %arg7[%c0_78, %c0_79] : memref<1x8xf32, #tpu.memory_space<vmem>>, vector<1x8xf32>
    %89 = vector.broadcast %88 : vector<1x8xf32> to vector<256x8xf32>
    %90 = arith.mulf %87, %89 : vector<256x8xf32>
    %c0_80 = arith.constant 0 : index
    %c0_81 = arith.constant 0 : index
    %91 = vector.load %arg8[%c0_80, %c0_81] : memref<1x8xf32, #tpu.memory_space<vmem>>, vector<1x8xf32>
    %92 = vector.broadcast %91 : vector<1x8xf32> to vector<256x8xf32>
    %93 = arith.addf %90, %92 : vector<256x8xf32>
    %cst_82 = arith.constant 0.000000e+00 : f32
    %94 = vector.broadcast %cst_82 : f32 to vector<256x8xf32>
    %95 = arith.maximumf %93, %94 : vector<256x8xf32>
    %cst_83 = arith.constant 0.000000e+00 : bf16
    %96 = vector.broadcast %cst_83 : bf16 to vector<18x18x8xbf16>
    %c0_84 = arith.constant 0 : index
    %c0_85 = arith.constant 0 : index
    %c0_86 = arith.constant 0 : index
    %97 = vector.load %arg14[%c0_84, %c0_85, %c0_86] : memref<18x18x8xbf16, #tpu.memory_space<vmem>>, vector<18x18x8xbf16>
    tpu.vector_store %arg14[%c0_84, %c0_85, %c0_86], %96 {strides = array<i32>} : memref<18x18x8xbf16, #tpu.memory_space<vmem>>, vector<18x18x8xbf16>,
    %98 = arith.truncf %95 : vector<256x8xf32> to vector<256x8xbf16>
    %99 = vector.shape_cast %98 : vector<256x8xbf16> to vector<16x16x8xbf16>
    %c1_87 = arith.constant 1 : index
    %c1_88 = arith.constant 1 : index
    %c0_89 = arith.constant 0 : index
    %100 = vector.load %arg14[%c1_87, %c1_88, %c0_89] : memref<18x18x8xbf16, #tpu.memory_space<vmem>>, vector<16x16x8xbf16>
    tpu.vector_store %arg14[%c1_87, %c1_88, %c0_89], %99 {strides = array<i32>} : memref<18x18x8xbf16, #tpu.memory_space<vmem>>, vector<16x16x8xbf16>,
    %c0_90 = arith.constant 0 : index
    %c0_91 = arith.constant 0 : index
    %c0_92 = arith.constant 0 : index
    %101 = vector.load %arg14[%c0_90, %c0_91, %c0_92] : memref<18x18x8xbf16, #tpu.memory_space<vmem>>, vector<16x16x8xbf16>
    %102 = vector.shape_cast %101 : vector<16x16x8xbf16> to vector<256x8xbf16>
    %c0_93 = arith.constant 0 : index
    %c1_94 = arith.constant 1 : index
    %c0_95 = arith.constant 0 : index
    %103 = vector.load %arg14[%c0_93, %c1_94, %c0_95] : memref<18x18x8xbf16, #tpu.memory_space<vmem>>, vector<16x16x8xbf16>
    %104 = vector.shape_cast %103 : vector<16x16x8xbf16> to vector<256x8xbf16>
    %c0_96 = arith.constant 0 : index
    %c2_97 = arith.constant 2 : index
    %c0_98 = arith.constant 0 : index
    %105 = vector.load %arg14[%c0_96, %c2_97, %c0_98] : memref<18x18x8xbf16, #tpu.memory_space<vmem>>, vector<16x16x8xbf16>
    %106 = vector.shape_cast %105 : vector<16x16x8xbf16> to vector<256x8xbf16>
    %c1_99 = arith.constant 1 : index
    %c0_100 = arith.constant 0 : index
    %c0_101 = arith.constant 0 : index
    %107 = vector.load %arg14[%c1_99, %c0_100, %c0_101] : memref<18x18x8xbf16, #tpu.memory_space<vmem>>, vector<16x16x8xbf16>
    %108 = vector.shape_cast %107 : vector<16x16x8xbf16> to vector<256x8xbf16>
    %c1_102 = arith.constant 1 : index
    %c1_103 = arith.constant 1 : index
    %c0_104 = arith.constant 0 : index
    %109 = vector.load %arg14[%c1_102, %c1_103, %c0_104] : memref<18x18x8xbf16, #tpu.memory_space<vmem>>, vector<16x16x8xbf16>
    %110 = vector.shape_cast %109 : vector<16x16x8xbf16> to vector<256x8xbf16>
    %c1_105 = arith.constant 1 : index
    %c2_106 = arith.constant 2 : index
    %c0_107 = arith.constant 0 : index
    %111 = vector.load %arg14[%c1_105, %c2_106, %c0_107] : memref<18x18x8xbf16, #tpu.memory_space<vmem>>, vector<16x16x8xbf16>
    %112 = vector.shape_cast %111 : vector<16x16x8xbf16> to vector<256x8xbf16>
    %c2_108 = arith.constant 2 : index
    %c0_109 = arith.constant 0 : index
    %c0_110 = arith.constant 0 : index
    %113 = vector.load %arg14[%c2_108, %c0_109, %c0_110] : memref<18x18x8xbf16, #tpu.memory_space<vmem>>, vector<16x16x8xbf16>
    %114 = vector.shape_cast %113 : vector<16x16x8xbf16> to vector<256x8xbf16>
    %c2_111 = arith.constant 2 : index
    %c1_112 = arith.constant 1 : index
    %c0_113 = arith.constant 0 : index
    %115 = vector.load %arg14[%c2_111, %c1_112, %c0_113] : memref<18x18x8xbf16, #tpu.memory_space<vmem>>, vector<16x16x8xbf16>
    %116 = vector.shape_cast %115 : vector<16x16x8xbf16> to vector<256x8xbf16>
    %c2_114 = arith.constant 2 : index
    %c2_115 = arith.constant 2 : index
    %c0_116 = arith.constant 0 : index
    %117 = vector.load %arg14[%c2_114, %c2_115, %c0_116] : memref<18x18x8xbf16, #tpu.memory_space<vmem>>, vector<16x16x8xbf16>
    %118 = vector.shape_cast %117 : vector<16x16x8xbf16> to vector<256x8xbf16>
    %119 = tpu.concatenate %102, %104, %106, %108, %110, %112, %114, %116, %118 in 1 : vector<256x8xbf16>, vector<256x8xbf16>, vector<256x8xbf16>, vector<256x8xbf16>, vector<256x8xbf16>, vector<256x8xbf16>, vector<256x8xbf16>, vector<256x8xbf16>, vector<256x8xbf16> -> vector<256x72xbf16>
    %c0_117 = arith.constant 0 : index
    %c0_118 = arith.constant 0 : index
    %120 = vector.load %arg9[%c0_117, %c0_118] : memref<8x72xbf16, #tpu.memory_space<vmem>>, vector<8x72xbf16>
    %cst_119 = arith.constant dense<0.000000e+00> : vector<8x256xf32>
    %121 = tpu.matmul %120, %119, %cst_119 {dimension_numbers = #tpu.dot_dimension_numbers<[1], [1], [0], [0], [0, 0, 1, 0], [], []>} : vector<8x72xbf16>, vector<256x72xbf16>, vector<8x256xf32> -> vector<8x256xf32>
    %c0_120 = arith.constant 0 : index
    %c0_121 = arith.constant 0 : index
    %122 = vector.load %arg10[%c0_120, %c0_121] : memref<8x1xf32, #tpu.memory_space<vmem>>, vector<8x1xf32>
    %123 = vector.broadcast %122 : vector<8x1xf32> to vector<8x256xf32>
    %124 = arith.mulf %121, %123 : vector<8x256xf32>
    %c0_122 = arith.constant 0 : index
    %c0_123 = arith.constant 0 : index
    %125 = vector.load %arg11[%c0_122, %c0_123] : memref<8x1xf32, #tpu.memory_space<vmem>>, vector<8x1xf32>
    %126 = vector.broadcast %125 : vector<8x1xf32> to vector<8x256xf32>
    %127 = arith.addf %124, %126 : vector<8x256xf32>
    %cst_124 = arith.constant 0.000000e+00 : f32
    %128 = vector.broadcast %cst_124 : f32 to vector<8x256xf32>
    %129 = arith.maximumf %127, %128 : vector<8x256xf32>
    %c0_125 = arith.constant 0 : index
    %c0_126 = arith.constant 0 : index
    %c0_127 = arith.constant 0 : index
    %130 = vector.load %arg12[%c0_125, %c0_126, %c0_127] : memref<1x8x256xf32, #tpu.memory_space<vmem>>, vector<1x8x256xf32>
    %131 = vector.shape_cast %130 : vector<1x8x256xf32> to vector<8x256xf32>
    %132 = vector.shape_cast %129 : vector<8x256xf32> to vector<1x8x256xf32>
    tpu.vector_store %arg12[%c0_125, %c0_126, %c0_127], %132 {strides = array<i32>} : memref<1x8x256xf32, #tpu.memory_space<vmem>>, vector<1x8x256xf32>,
    return
  }
  func.func @transform_0(%arg0: i32) -> (i32, i32, i32, i32) {
    %c0_i32 = arith.constant 0 : i32
    %c0_i32_0 = arith.constant 0 : i32
    %c0_i32_1 = arith.constant 0 : i32
    %c0_i32_2 = arith.constant 0 : i32
    return %arg0, %c0_i32, %c0_i32_0, %c0_i32_1 : i32, i32, i32, i32
  }
  func.func @transform_1(%arg0: i32) -> (i32, i32, i32, i32) {
    %c0_i32 = arith.constant 0 : i32
    %c0_i32_0 = arith.constant 0 : i32
    %c0_i32_1 = arith.constant 0 : i32
    %c0_i32_2 = arith.constant 0 : i32
    return %arg0, %c0_i32, %c0_i32_0, %c0_i32_1 : i32, i32, i32, i32
  }
  func.func @transform_2(%arg0: i32) -> (i32, i32, i32) {
    %c0_i32 = arith.constant 0 : i32
    %c0_i32_0 = arith.constant 0 : i32
    %c0_i32_1 = arith.constant 0 : i32
    %c0_i32_2 = arith.constant 0 : i32
    return %c0_i32, %c0_i32_0, %c0_i32_1 : i32, i32, i32
  }
  func.func @transform_3(%arg0: i32) -> (i32, i32) {
    %c0_i32 = arith.constant 0 : i32
    %c0_i32_0 = arith.constant 0 : i32
    %c0_i32_1 = arith.constant 0 : i32
    return %c0_i32, %c0_i32_0 : i32, i32
  }
  func.func @transform_4(%arg0: i32) -> (i32, i32) {
    %c0_i32 = arith.constant 0 : i32
    %c0_i32_0 = arith.constant 0 : i32
    %c0_i32_1 = arith.constant 0 : i32
    return %c0_i32, %c0_i32_0 : i32, i32
  }
  func.func @transform_5(%arg0: i32) -> (i32, i32) {
    %c0_i32 = arith.constant 0 : i32
    %c0_i32_0 = arith.constant 0 : i32
    %c0_i32_1 = arith.constant 0 : i32
    return %c0_i32, %c0_i32_0 : i32, i32
  }
  func.func @transform_6(%arg0: i32) -> (i32, i32) {
    %c0_i32 = arith.constant 0 : i32
    %c0_i32_0 = arith.constant 0 : i32
    %c0_i32_1 = arith.constant 0 : i32
    return %c0_i32, %c0_i32_0 : i32, i32
  }
  func.func @transform_7(%arg0: i32) -> (i32, i32) {
    %c0_i32 = arith.constant 0 : i32
    %c0_i32_0 = arith.constant 0 : i32
    %c0_i32_1 = arith.constant 0 : i32
    return %c0_i32, %c0_i32_0 : i32, i32
  }
  func.func @transform_8(%arg0: i32) -> (i32, i32) {
    %c0_i32 = arith.constant 0 : i32
    %c0_i32_0 = arith.constant 0 : i32
    %c0_i32_1 = arith.constant 0 : i32
    return %c0_i32, %c0_i32_0 : i32, i32
  }
  func.func @transform_9(%arg0: i32) -> (i32, i32) {
    %c0_i32 = arith.constant 0 : i32
    %c0_i32_0 = arith.constant 0 : i32
    %c0_i32_1 = arith.constant 0 : i32
    return %c0_i32, %c0_i32_0 : i32, i32
  }
  func.func @transform_10(%arg0: i32) -> (i32, i32) {
    %c0_i32 = arith.constant 0 : i32
    %c0_i32_0 = arith.constant 0 : i32
    %c0_i32_1 = arith.constant 0 : i32
    return %c0_i32, %c0_i32_0 : i32, i32
  }
  func.func @transform_11(%arg0: i32) -> (i32, i32, i32) {
    %c0_i32 = arith.constant 0 : i32
    %c0_i32_0 = arith.constant 0 : i32
    %c0_i32_1 = arith.constant 0 : i32
    return %arg0, %c0_i32, %c0_i32_0 : i32, i32, i32
  }
}

</mosaic_0001>

<llo_original>
// kernel: up_forward.1
$region0: #{up_forward.1}
  #allocation0 [shape = 'u32[]', space=smem, size = 0x4, offset = 0x4, fixed_abs, tag = 'smem constant byte address 0x4 - core index']
  #allocation1 [shape = 'u32[144,128]{1,0:T(1,128)}', space=vmem, size = 0x12000, scoped, tag = 'internal scratch']
  #allocation2 [shape = 'bf16[18,18,16]{2,1,0:T(8,128)(2,1)}', space=vmem, size = 0x1b000, scoped, tag = 'scratch operand']
  #allocation3 [shape = 'bf16[18,18,8]{2,1,0:T(8,128)(2,1)}', space=vmem, size = 0x1b000, scoped, tag = 'scratch operand']
  %s0 = inlined_call_operand.vmem [shape: bf16[2,8,8,8], index: 0, kind: input, shape index: {}]
  %s1 = inlined_call_operand.vmem [shape: bf16[2,16,16,8], index: 1, kind: input, shape index: {}]
  %s2 = inlined_call_operand.vmem [shape: bf16[4,8,8], index: 2, kind: input, shape index: {}]
  %s3 = inlined_call_operand.vmem [shape: f32[1,8], index: 3, kind: input, shape index: {}]
  %s4 = inlined_call_operand.vmem [shape: f32[1,8], index: 4, kind: input, shape index: {}]
  %s5 = inlined_call_operand.vmem [shape: bf16[144,8], index: 5, kind: input, shape index: {}]
  %s6 = inlined_call_operand.vmem [shape: f32[1,8], index: 6, kind: input, shape index: {}]
  %s7 = inlined_call_operand.vmem [shape: f32[1,8], index: 7, kind: input, shape index: {}]
  %s8 = inlined_call_operand.vmem [shape: bf16[8,72], index: 8, kind: input, shape index: {}]
  %s9 = inlined_call_operand.vmem [shape: f32[8,1], index: 9, kind: input, shape index: {}]
  %s10 = inlined_call_operand.vmem [shape: f32[8,1], index: 10, kind: input, shape index: {}]
  %s11 = inlined_call_operand.vmem [shape: f32[2,8,256], index: 11, kind: output, shape index: {}]
  %s12 = sld [smem:[#allocation0]]
  $region77: #{up_forward.1} parent=0
    _
  %s14 = ssub.s32 1, %s12
  %s15 = scalar_select 0, %s14, %s12
  loop: start=0, step=1, limit=4
  $region2: #{up_forward.1} parent=0 // loop_pre_header
    _
  $region3: #{up_forward.1} parent=0 // loop_header
    %s17 = sphi 0, %s21
    %p18 = scmp.ge.s32.totalorder %s17, 4
    %s27 = sphi 0, %s29
    %s30 = sphi 0, %s27
    %s31 = sphi 0, %s30
    %s47 = sphi 0, %s31
    %s53 = sphi 0, %s55
    %s56 = sphi 0, %s53
    %s57 = sphi 0, %s56
    %s73 = sphi 0, %s57
    %s77 = sphi 0, %s77
    %s79 = sphi 0, %s77
    %s80 = sphi 0, %s79
    %s94 = sphi 0, %s80
    %s98 = sphi 0, %s98
    %s100 = sphi 0, %s98
    %s101 = sphi 0, %s100
    %s115 = sphi 0, %s101
    %s119 = sphi 0, %s119
    %s121 = sphi 0, %s119
    %s122 = sphi 0, %s121
    %s136 = sphi 0, %s122
    %s140 = sphi 0, %s140
    %s142 = sphi 0, %s140
    %s143 = sphi 0, %s142
    %s157 = sphi 0, %s143
    %s161 = sphi 0, %s161
    %s163 = sphi 0, %s161
    %s164 = sphi 0, %s163
    %s178 = sphi 0, %s164
    %s182 = sphi 0, %s182
    %s184 = sphi 0, %s182
    %s185 = sphi 0, %s184
    %s199 = sphi 0, %s185
    %s203 = sphi 0, %s203
    %s205 = sphi 0, %s203
    %s206 = sphi 0, %s205
    %s220 = sphi 0, %s206
    %s224 = sphi 0, %s224
    %s226 = sphi 0, %s224
    %s227 = sphi 0, %s226
    %s241 = sphi 0, %s227
    %s245 = sphi 0, %s245
    %s247 = sphi 0, %s245
    %s248 = sphi 0, %s247
    %s262 = sphi 0, %s248
    %s268 = sphi 0, %s270
    %s271 = sphi 0, %s268
    %s272 = sphi 0, %s271
    %s288 = sphi 0, %s272
  $region4: #{up_forward.1} parent=0 // loop_header_branch
    %20 = sbr.rel (%p18) target = $region8
  $region5: #{up_forward.1} parent=0 // loop_body
    %s22 = ssub.s32 %s17, 1
    %s23 = ssub.s32 %s17, 2
    %s24 = sadd.s32 %s17, 1
    %s25 = ssub.s32 %s17, %s24
    %p26 = scmp.eq.s32.totalorder %s25, 0
    %s28 = sadd.s32 %s27, 1
    %s29 = scalar_select %p26, %s27, %s28
    %p32 = pneg %p26
    %p33 = scmp.eq.s32.totalorder %s17, 1
    %p34 = por %p32, %p33
    %p35 = scmp.ne.s32.totalorder %s27, %s30
    %p36 = scmp.eq.s32.totalorder %s17, 0
    %p37 = por %p35, %p36
    %p38 = scmp.ne.s32.totalorder %s27, %s30
    %p39 = scmp.eq.s32.totalorder %s22, 1
    %p40 = por %p38, %p39
    %p41 = scmp.ne.s32.totalorder %s30, %s31
    %p42 = scmp.eq.s32.totalorder %s22, 0
    %p43 = por %p41, %p42
    %p44 = scmp.ne.s32.totalorder %s30, %s31
    %p45 = scmp.eq.s32.totalorder %s23, 1
    %p46 = por %p44, %p45
    %p48 = scmp.ne.s32.totalorder %s31, %s47
    %p49 = scmp.eq.s32.totalorder %s23, 0
    %p50 = por %p48, %p49
    %s51 = ssub.s32 %s17, %s24
    %p52 = scmp.eq.s32.totalorder %s51, 0
    %s54 = sadd.s32 %s53, 1
    %s55 = scalar_select %p52, %s53, %s54
    %p58 = pneg %p52
    %p59 = scmp.eq.s32.totalorder %s17, 1
    %p60 = por %p58, %p59
    %p61 = scmp.ne.s32.totalorder %s53, %s56
    %p62 = scmp.eq.s32.totalorder %s17, 0
    %p63 = por %p61, %p62
    %p64 = scmp.ne.s32.totalorder %s53, %s56
    %p65 = scmp.eq.s32.totalorder %s22, 1
    %p66 = por %p64, %p65
    %p67 = scmp.ne.s32.totalorder %s56, %s57
    %p68 = scmp.eq.s32.totalorder %s22, 0
    %p69 = por %p67, %p68
    %p70 = scmp.ne.s32.totalorder %s56, %s57
    %p71 = scmp.eq.s32.totalorder %s23, 1
    %p72 = por %p70, %p71
    %p74 = scmp.ne.s32.totalorder %s57, %s73
    %p75 = scmp.eq.s32.totalorder %s23, 0
    %p76 = por %p74, %p75
    %s78 = sadd.s32 %s77, 1
    %p81 = scmp.eq.s32.totalorder %s17, 1
    %p82 = scmp.ne.s32.totalorder %s77, %s79
    %p83 = scmp.eq.s32.totalorder %s17, 0
    %p84 = por %p82, %p83
    %p85 = scmp.ne.s32.totalorder %s77, %s79
    %p86 = scmp.eq.s32.totalorder %s22, 1
    %p87 = por %p85, %p86
    %p88 = scmp.ne.s32.totalorder %s79, %s80
    %p89 = scmp.eq.s32.totalorder %s22, 0
    %p90 = por %p88, %p89
    %p91 = scmp.ne.s32.totalorder %s79, %s80
    %p92 = scmp.eq.s32.totalorder %s23, 1
    %p93 = por %p91, %p92
    %p95 = scmp.ne.s32.totalorder %s80, %s94
    %p96 = scmp.eq.s32.totalorder %s23, 0
    %p97 = por %p95, %p96
    %s99 = sadd.s32 %s98, 1
    %p102 = scmp.eq.s32.totalorder %s17, 1
    %p103 = scmp.ne.s32.totalorder %s98, %s100
    %p104 = scmp.eq.s32.totalorder %s17, 0
    %p105 = por %p103, %p104
    %p106 = scmp.ne.s32.totalorder %s98, %s100
    %p107 = scmp.eq.s32.totalorder %s22, 1
    %p108 = por %p106, %p107
    %p109 = scmp.ne.s32.totalorder %s100, %s101
    %p110 = scmp.eq.s32.totalorder %s22, 0
    %p111 = por %p109, %p110
    %p112 = scmp.ne.s32.totalorder %s100, %s101
    %p113 = scmp.eq.s32.totalorder %s23, 1
    %p114 = por %p112, %p113
    %p116 = scmp.ne.s32.totalorder %s101, %s115
    %p117 = scmp.eq.s32.totalorder %s23, 0
    %p118 = por %p116, %p117
    %s120 = sadd.s32 %s119, 1
    %p123 = scmp.eq.s32.totalorder %s17, 1
    %p124 = scmp.ne.s32.totalorder %s119, %s121
    %p125 = scmp.eq.s32.totalorder %s17, 0
    %p126 = por %p124, %p125
    %p127 = scmp.ne.s32.totalorder %s119, %s121
    %p128 = scmp.eq.s32.totalorder %s22, 1
    %p129 = por %p127, %p128
    %p130 = scmp.ne.s32.totalorder %s121, %s122
    %p131 = scmp.eq.s32.totalorder %s22, 0
    %p132 = por %p130, %p131
    %p133 = scmp.ne.s32.totalorder %s121, %s122
    %p134 = scmp.eq.s32.totalorder %s23, 1
    %p135 = por %p133, %p134
    %p137 = scmp.ne.s32.totalorder %s122, %s136
    %p138 = scmp.eq.s32.totalorder %s23, 0
    %p139 = por %p137, %p138
    %s141 = sadd.s32 %s140, 1
    %p144 = scmp.eq.s32.totalorder %s17, 1
    %p145 = scmp.ne.s32.totalorder %s140, %s142
    %p146 = scmp.eq.s32.totalorder %s17, 0
    %p147 = por %p145, %p146
    %p148 = scmp.ne.s32.totalorder %s140, %s142
    %p149 = scmp.eq.s32.totalorder %s22, 1
    %p150 = por %p148, %p149
    %p151 = scmp.ne.s32.totalorder %s142, %s143
    %p152 = scmp.eq.s32.totalorder %s22, 0
    %p153 = por %p151, %p152
    %p154 = scmp.ne.s32.totalorder %s142, %s143
    %p155 = scmp.eq.s32.totalorder %s23, 1
    %p156 = por %p154, %p155
    %p158 = scmp.ne.s32.totalorder %s143, %s157
    %p159 = scmp.eq.s32.totalorder %s23, 0
    %p160 = por %p158, %p159
    %s162 = sadd.s32 %s161, 1
    %p165 = scmp.eq.s32.totalorder %s17, 1
    %p166 = scmp.ne.s32.totalorder %s161, %s163
    %p167 = scmp.eq.s32.totalorder %s17, 0
    %p168 = por %p166, %p167
    %p169 = scmp.ne.s32.totalorder %s161, %s163
    %p170 = scmp.eq.s32.totalorder %s22, 1
    %p171 = por %p169, %p170
    %p172 = scmp.ne.s32.totalorder %s163, %s164
    %p173 = scmp.eq.s32.totalorder %s22, 0
    %p174 = por %p172, %p173
    %p175 = scmp.ne.s32.totalorder %s163, %s164
    %p176 = scmp.eq.s32.totalorder %s23, 1
    %p177 = por %p175, %p176
    %p179 = scmp.ne.s32.totalorder %s164, %s178
    %p180 = scmp.eq.s32.totalorder %s23, 0
    %p181 = por %p179, %p180
    %s183 = sadd.s32 %s182, 1
    %p186 = scmp.eq.s32.totalorder %s17, 1
    %p187 = scmp.ne.s32.totalorder %s182, %s184
    %p188 = scmp.eq.s32.totalorder %s17, 0
    %p189 = por %p187, %p188
    %p190 = scmp.ne.s32.totalorder %s182, %s184
    %p191 = scmp.eq.s32.totalorder %s22, 1
    %p192 = por %p190, %p191
    %p193 = scmp.ne.s32.totalorder %s184, %s185
    %p194 = scmp.eq.s32.totalorder %s22, 0
    %p195 = por %p193, %p194
    %p196 = scmp.ne.s32.totalorder %s184, %s185
    %p197 = scmp.eq.s32.totalorder %s23, 1
    %p198 = por %p196, %p197
    %p200 = scmp.ne.s32.totalorder %s185, %s199
    %p201 = scmp.eq.s32.totalorder %s23, 0
    %p202 = por %p200, %p201
    %s204 = sadd.s32 %s203, 1
    %p207 = scmp.eq.s32.totalorder %s17, 1
    %p208 = scmp.ne.s32.totalorder %s203, %s205
    %p209 = scmp.eq.s32.totalorder %s17, 0
    %p210 = por %p208, %p209
    %p211 = scmp.ne.s32.totalorder %s203, %s205
    %p212 = scmp.eq.s32.totalorder %s22, 1
    %p213 = por %p211, %p212
    %p214 = scmp.ne.s32.totalorder %s205, %s206
    %p215 = scmp.eq.s32.totalorder %s22, 0
    %p216 = por %p214, %p215
    %p217 = scmp.ne.s32.totalorder %s205, %s206
    %p218 = scmp.eq.s32.totalorder %s23, 1
    %p219 = por %p217, %p218
    %p221 = scmp.ne.s32.totalorder %s206, %s220
    %p222 = scmp.eq.s32.totalorder %s23, 0
    %p223 = por %p221, %p222
    %s225 = sadd.s32 %s224, 1
    %p228 = scmp.eq.s32.totalorder %s17, 1
    %p229 = scmp.ne.s32.totalorder %s224, %s226
    %p230 = scmp.eq.s32.totalorder %s17, 0
    %p231 = por %p229, %p230
    %p232 = scmp.ne.s32.totalorder %s224, %s226
    %p233 = scmp.eq.s32.totalorder %s22, 1
    %p234 = por %p232, %p233
    %p235 = scmp.ne.s32.totalorder %s226, %s227
    %p236 = scmp.eq.s32.totalorder %s22, 0
    %p237 = por %p235, %p236
    %p238 = scmp.ne.s32.totalorder %s226, %s227
    %p239 = scmp.eq.s32.totalorder %s23, 1
    %p240 = por %p238, %p239
    %p242 = scmp.ne.s32.totalorder %s227, %s241
    %p243 = scmp.eq.s32.totalorder %s23, 0
    %p244 = por %p242, %p243
    %s246 = sadd.s32 %s245, 1
    %p249 = scmp.eq.s32.totalorder %s17, 1
    %p250 = scmp.ne.s32.totalorder %s245, %s247
    %p251 = scmp.eq.s32.totalorder %s17, 0
    %p252 = por %p250, %p251
    %p253 = scmp.ne.s32.totalorder %s245, %s247
    %p254 = scmp.eq.s32.totalorder %s22, 1
    %p255 = por %p253, %p254
    %p256 = scmp.ne.s32.totalorder %s247, %s248
    %p257 = scmp.eq.s32.totalorder %s22, 0
    %p258 = por %p256, %p257
    %p259 = scmp.ne.s32.totalorder %s247, %s248
    %p260 = scmp.eq.s32.totalorder %s23, 1
    %p261 = por %p259, %p260
    %p263 = scmp.ne.s32.totalorder %s248, %s262
    %p264 = scmp.eq.s32.totalorder %s23, 0
    %p265 = por %p263, %p264
    %s266 = ssub.s32 %s17, %s24
    %p267 = scmp.eq.s32.totalorder %s266, 0
    %s269 = sadd.s32 %s268, 1
    %s270 = scalar_select %p267, %s268, %s269
    %p273 = pneg %p267
    %p274 = scmp.eq.s32.totalorder %s17, 1
    %p275 = por %p273, %p274
    %p276 = scmp.ne.s32.totalorder %s268, %s271
    %p277 = scmp.eq.s32.totalorder %s17, 0
    %p278 = por %p276, %p277
    %p279 = scmp.ne.s32.totalorder %s268, %s271
    %p280 = scmp.eq.s32.totalorder %s22, 1
    %p281 = por %p279, %p280
    %p282 = scmp.ne.s32.totalorder %s271, %s272
    %p283 = scmp.eq.s32.totalorder %s22, 0
    %p284 = por %p282, %p283
    %p285 = scmp.ne.s32.totalorder %s271, %s272
    %p286 = scmp.eq.s32.totalorder %s23, 1
    %p287 = por %p285, %p286
    %p289 = scmp.ne.s32.totalorder %s272, %s288
    %p290 = scmp.eq.s32.totalorder %s23, 0
    %p291 = por %p289, %p290
    %p292 = scmp.le.s32.totalorder 1, %s17
    %p293 = scmp.lt.s32.totalorder %s17, 3
    %p294 = pnand %p292, %p293
    %p295 = pneg %p294
    // Predicated region
    $region9: #{up_forward.1} parent=5 // pred_check
      _
    $region10: #{up_forward.1} parent=5 // pred_check_branch
      %297 = sbr.rel (%p294) target = $region12
    $region11: #{up_forward.1} parent=5 // pred_region
      %s298 = ssub.s32 %s17, 1
      // Predicated region
      $region13: #{up_forward.1} parent=11 // pred_check
        %p299 = pneg %p90
      $region14: #{up_forward.1} parent=11 // pred_check_branch
        %301 = sbr.rel (%p299) target = $region16
      $region15: #{up_forward.1} parent=11 // pred_region
        _
      $region16: #{up_forward.1} parent=11 // pred_fallthru
        _
      // Predicated region
      $region17: #{up_forward.1} parent=11 // pred_check
        %p302 = pneg %p111
      $region18: #{up_forward.1} parent=11 // pred_check_branch
        %304 = sbr.rel (%p302) target = $region20
      $region19: #{up_forward.1} parent=11 // pred_region
        _
      $region20: #{up_forward.1} parent=11 // pred_fallthru
        _
      // Predicated region
      $region21: #{up_forward.1} parent=11 // pred_check
        %p305 = pneg %p132
      $region22: #{up_forward.1} parent=11 // pred_check_branch
        %307 = sbr.rel (%p305) target = $region24
      $region23: #{up_forward.1} parent=11 // pred_region
        _
      $region24: #{up_forward.1} parent=11 // pred_fallthru
        _
      // Predicated region
      $region25: #{up_forward.1} parent=11 // pred_check
        %p308 = pneg %p153
      $region26: #{up_forward.1} parent=11 // pred_check_branch
        %310 = sbr.rel (%p308) target = $region28
      $region27: #{up_forward.1} parent=11 // pred_region
        _
      $region28: #{up_forward.1} parent=11 // pred_fallthru
        _
      // Predicated region
      $region29: #{up_forward.1} parent=11 // pred_check
        %p311 = pneg %p174
      $region30: #{up_forward.1} parent=11 // pred_check_branch
        %313 = sbr.rel (%p311) target = $region32
      $region31: #{up_forward.1} parent=11 // pred_region
        _
      $region32: #{up_forward.1} parent=11 // pred_fallthru
        _
      // Predicated region
      $region33: #{up_forward.1} parent=11 // pred_check
        %p314 = pneg %p195
      $region34: #{up_forward.1} parent=11 // pred_check_branch
        %316 = sbr.rel (%p314) target = $region36
      $region35: #{up_forward.1} parent=11 // pred_region
        _
      $region36: #{up_forward.1} parent=11 // pred_fallthru
        _
      // Predicated region
      $region37: #{up_forward.1} parent=11 // pred_check
        %p317 = pneg %p216
      $region38: #{up_forward.1} parent=11 // pred_check_branch
        %319 = sbr.rel (%p317) target = $region40
      $region39: #{up_forward.1} parent=11 // pred_region
        _
      $region40: #{up_forward.1} parent=11 // pred_fallthru
        _
      // Predicated region
      $region41: #{up_forward.1} parent=11 // pred_check
        %p320 = pneg %p237
      $region42: #{up_forward.1} parent=11 // pred_check_branch
        %322 = sbr.rel (%p320) target = $region44
      $region43: #{up_forward.1} parent=11 // pred_region
        _
      $region44: #{up_forward.1} parent=11 // pred_fallthru
        _
      // Predicated region
      $region45: #{up_forward.1} parent=11 // pred_check
        %p323 = pneg %p258
      $region46: #{up_forward.1} parent=11 // pred_check_branch
        %325 = sbr.rel (%p323) target = $region48
      $region47: #{up_forward.1} parent=11 // pred_region
        _
      $region48: #{up_forward.1} parent=11 // pred_fallthru
        _
    $region12: #{up_forward.1} parent=5 // pred_fallthru
      _
    %p326 = scmp.lt.s32.totalorder %s17, 2
    // Predicated region
    $region49: #{up_forward.1} parent=5 // pred_check
      %p327 = pneg %p326
    $region50: #{up_forward.1} parent=5 // pred_check_branch
      %329 = sbr.rel (%p327) target = $region52
    $region51: #{up_forward.1} parent=5 // pred_region
      // Predicated region
      $region53: #{up_forward.1} parent=51 // pred_check
        %p330 = pneg %p37
      $region54: #{up_forward.1} parent=51 // pred_check_branch
        %332 = sbr.rel (%p330) target = $region56
      $region55: #{up_forward.1} parent=51 // pred_region
        %p333 = scmp.lt.s32.totalorder %s17, 1
        %s334 = scalar_select %p333, %s17, 1
        %s335 = smul.addr %s334, 8
        %s336 = smul.addr %s335, 4
        %s337 = scalar_lea.vmem %s0, %s336
      $region56: #{up_forward.1} parent=51 // pred_fallthru
        _
      // Predicated region
      $region57: #{up_forward.1} parent=51 // pred_check
        %p338 = pneg %p63
      $region58: #{up_forward.1} parent=51 // pred_check_branch
        %340 = sbr.rel (%p338) target = $region60
      $region59: #{up_forward.1} parent=51 // pred_region
        %p341 = scmp.lt.s32.totalorder %s17, 1
        %s342 = scalar_select %p341, %s17, 1
        %s343 = smul.addr %s342, 32
        %s344 = smul.addr %s343, 4
        %s345 = scalar_lea.vmem %s1, %s344
      $region60: #{up_forward.1} parent=51 // pred_fallthru
        _
    $region52: #{up_forward.1} parent=5 // pred_fallthru
      _
    %p346 = scmp.le.s32.totalorder 1, %s17
    %p347 = scmp.lt.s32.totalorder %s17, 3
    %p348 = pnand %p346, %p347
    %p349 = pneg %p348
    // Predicated region
    $region61: #{up_forward.1} parent=5 // pred_check
      _
    $region62: #{up_forward.1} parent=5 // pred_check_branch
      %351 = sbr.rel (%p348) target = $region64
    $region63: #{up_forward.1} parent=5 // pred_region
      %s352 = ssub.s32 %s17, 1
      %p353 = scmp.lt.s32.totalorder %s22, 1
      %s354 = scalar_select %p353, %s22, 1
      %s355 = smul.addr %s354, 8
      %s356 = smul.addr %s355, 4
      %s357 = scalar_lea.vmem %s0, %s356
      %p358 = pneg %p43
      %p359 = pneg %p40
      %p360 = scmp.lt.s32.totalorder %s22, 1
      %s361 = scalar_select %p360, %s22, 1
      %s362 = smul.addr %s361, 32
      %s363 = smul.addr %s362, 4
      %s364 = scalar_lea.vmem %s1, %s363
      %p365 = pneg %p69
      %p366 = pneg %p66
      %p367 = pneg %p90
      %p368 = pneg %p87
      %p369 = pneg %p111
      %p370 = pneg %p108
      %p371 = pneg %p132
      %p372 = pneg %p129
      %p373 = pneg %p153
      %p374 = pneg %p150
      %p375 = pneg %p174
      %p376 = pneg %p171
      %p377 = pneg %p195
      %p378 = pneg %p192
      %p379 = pneg %p216
      %p380 = pneg %p213
      %p381 = pneg %p237
      %p382 = pneg %p234
      %p383 = pneg %p258
      %p384 = pneg %p255
      %p385 = pneg %p284
      %p386 = pneg %p281
      %p387 = scmp.lt.s32.totalorder %s22, 1
      %s388 = scalar_select %p387, %s22, 1
      %s389 = smul.addr %s388, 2
      %s390 = smul.addr %s389, 8
      %s391 = scalar_lea.vmem %s11, %s390
      %p392 = scmp.lt.s32.totalorder %s22, 1
      %s393 = scalar_select %p392, %s22, 1
      %s394 = smul.addr %s393, 8
      %s395 = smul.addr %s394, 4
      %s396 = scalar_lea.vmem %s0, %s395
      %p397 = scmp.lt.s32.totalorder %s22, 1
      %s398 = scalar_select %p397, %s22, 1
      %s399 = smul.addr %s398, 32
      %s400 = smul.addr %s399, 4
      %s401 = scalar_lea.vmem %s1, %s400
      %p402 = scmp.lt.s32.totalorder %s22, 1
      %s403 = scalar_select %p402, %s22, 1
      %s404 = smul.addr %s403, 2
      %s405 = smul.addr %s404, 8
      %s406 = scalar_lea.vmem %s11, %s405
      %v408 = vld [vmem:[%s396] sm:$0xf]
      %v409 = vld [vmem:[%s396 + $0x4] sm:$0xf]
      %v410 = vld [vmem:[%s396 + $0x8] sm:$0xf]
      %v411 = vld [vmem:[%s396 + $0xc] sm:$0xf]
      %v412 = vld [vmem:[%s396 + $0x10] sm:$0xf]
      %v413 = vld [vmem:[%s396 + $0x14] sm:$0xf]
      %v414 = vld [vmem:[%s396 + $0x18] sm:$0xf]
      %v415 = vld [vmem:[%s396 + $0x1c] sm:$0xf]
      %v416 = vld [vmem:[%s2] sm:$0xf]
      %v425 = vunpack.c.l.b16 %v408
      %v426 = vunpack.c.l.b16 %v409
      %v427 = vunpack.c.l.b16 %v410
      %v428 = vunpack.c.l.b16 %v411
      %v429 = vunpack.c.l.b16 %v412
      %v430 = vunpack.c.l.b16 %v413
      %v431 = vunpack.c.l.b16 %v414
      %v432 = vunpack.c.l.b16 %v415
      %v433 = vpack.c.b16 %v426, %v425
      %v434 = vpack.c.b16 %v428, %v427
      %v435 = vpack.c.b16 %v430, %v429
      %v436 = vpack.c.b16 %v432, %v431
      %vm437 = vcmask 64512
      %v439 = vsel %vm437, %v433, 0
      %v442 = vsel %vm437, %v434, 0
      %v445 = vsel %vm437, %v435, 0
      %v448 = vsel %vm437, %v436, 0
      %vm450 = vcmask 1043456
      %v452 = vsel %vm450, %v416, 0
      %454 = vmatprep.subr.bf16.mxu0 0
      %455 = vmatpush1.bf16.msra.mxu0 %v452
      %456 = vmatprep.subr.bf16.mxu0 0
      %457 = vmatpush1.bf16.msra.mxu0 0
      %458 = vmatprep.subr.bf16.mxu0 0
      %459 = vmatpush1.bf16.msra.mxu0 0
      %460 = vmatprep.subr.bf16.mxu0 0
      %461 = vmatpush1.bf16.msra.mxu0 0
      %462 = vmatprep.subr.bf16.mxu0 0
      %463 = vmatpush1.bf16.msra.mxu0 0
      %464 = vmatprep.subr.bf16.mxu0 0
      %465 = vmatpush1.bf16.msra.mxu0 0
      %466 = vmatprep.subr.bf16.mxu0 0
      %467 = vmatpush1.bf16.msra.mxu0 0
      %468 = vmatprep.subr.bf16.mxu0 0
      %469 = vmatpush1.bf16.msra.mxu0 0
      %470 = vmatprep.subr.bf16.mxu0 0
      %471 = vmatpush1.bf16.msra.mxu0 0
      %472 = vmatprep.subr.bf16.mxu0 0
      %473 = vmatpush1.bf16.msra.mxu0 0
      %474 = vmatprep.subr.bf16.mxu0 0
      %475 = vmatpush1.bf16.msra.mxu0 0
      %476 = vmatprep.subr.bf16.mxu0 0
      %477 = vmatpush1.bf16.msra.mxu0 0
      %478 = vmatprep.subr.bf16.mxu0 0
      %479 = vmatpush1.bf16.msra.mxu0 0
      %480 = vmatprep.subr.bf16.mxu0 0
      %481 = vmatpush1.bf16.msra.mxu0 0
      %482 = vmatprep.subr.bf16.mxu0 0
      %483 = vmatpush1.bf16.msra.mxu0 0
      %484 = vmatprep.subr.bf16.mxu0 0
      %485 = vmatpush1.bf16.msra.mxu0 0
      %486 = vmatprep.mubr.bf16.mxu0 0
      %487 = vmatmul.mubr.bf16.gmra.mrb[0].mxu0 %v439
      %v488 = vpop.f32.mrb[0].mxu0
      %v489 = vadd.f32 0.0, %v488
      %v490 = vpop.f32.mrb[0].mxu0
      %v491 = vpop.f32.mrb[0].mxu0
      %v492 = vadd.f32 0.0, %v491
      %v493 = vpop.f32.mrb[0].mxu0
      %494 = vmatprep.mubr.bf16.mxu0 0
      %495 = vmatmul.mubr.bf16.gmra.mrb[0].mxu0 %v442
      %v496 = vpop.f32.mrb[0].mxu0
      %v497 = vadd.f32 0.0, %v496
      %v498 = vpop.f32.mrb[0].mxu0
      %v499 = vpop.f32.mrb[0].mxu0
      %v500 = vadd.f32 0.0, %v499
      %v501 = vpop.f32.mrb[0].mxu0
      %502 = vmatprep.mubr.bf16.mxu0 0
      %503 = vmatmul.mubr.bf16.gmra.mrb[0].mxu0 %v445
      %v504 = vpop.f32.mrb[0].mxu0
      %v505 = vadd.f32 0.0, %v504
      %v506 = vpop.f32.mrb[0].mxu0
      %v507 = vpop.f32.mrb[0].mxu0
      %v508 = vadd.f32 0.0, %v507
      %v509 = vpop.f32.mrb[0].mxu0
      %510 = vmatprep.mubr.bf16.mxu0 0
      %511 = vmatmul.mubr.bf16.gmra.mrb[0].mxu0 %v448
      %v512 = vpop.f32.mrb[0].mxu0
      %v513 = vadd.f32 0.0, %v512
      %v514 = vpop.f32.mrb[0].mxu0
      %v515 = vpop.f32.mrb[0].mxu0
      %v516 = vadd.f32 0.0, %v515
      %v517 = vpop.f32.mrb[0].mxu0
      %518 = vdwg.mxu0
      %v519 = vld [vmem:[%s3] sm:$0x1]
      %v521 = vlaneseq
      %v522 = vshrl.u32 %v521, 7
      %v523 = vsub.s32 0, %v522
      %v524 = vrot.slane %v519, %v523
      %v526 = vmul.f32 %v489, %v524
      %v527 = vmul.f32 %v492, %v524
      %v528 = vmul.f32 %v497, %v524
      %v529 = vmul.f32 %v500, %v524
      %v530 = vmul.f32 %v505, %v524
      %v531 = vmul.f32 %v508, %v524
      %v532 = vmul.f32 %v513, %v524
      %v533 = vmul.f32 %v516, %v524
      %v534 = vld [vmem:[%s4] sm:$0x1]
      %v536 = vlaneseq
      %v537 = vshrl.u32 %v536, 7
      %v538 = vsub.s32 0, %v537
      %v539 = vrot.slane %v534, %v538
      %v541 = vadd.f32 %v526, %v539
      %v542 = vadd.f32 %v527, %v539
      %v543 = vadd.f32 %v528, %v539
      %v544 = vadd.f32 %v529, %v539
      %v545 = vadd.f32 %v530, %v539
      %v546 = vadd.f32 %v531, %v539
      %v547 = vadd.f32 %v532, %v539
      %v548 = vadd.f32 %v533, %v539
      %v549 = vmax.f32 %v541, 0.0
      %v550 = vmax.f32 %v542, 0.0
      %v551 = vmax.f32 %v543, 0.0
      %v552 = vmax.f32 %v544, 0.0
      %v553 = vmax.f32 %v545, 0.0
      %v554 = vmax.f32 %v546, 0.0
      %v555 = vmax.f32 %v547, 0.0
      %v556 = vmax.f32 %v548, 0.0
      %v557 = vpack.c.bf16 %v550, %v549
      %v558 = vpack.c.bf16 %v552, %v551
      %v559 = vpack.c.bf16 %v554, %v553
      %v560 = vpack.c.bf16 %v556, %v555
      %v565 = vcombine.high %v557, %v557
      %v567 = vunpack.c.l.s4 1966171168
      %v568 = vunpack.c.0.s8 %v567
      %v569 = vlaneseq
      %v570 = vshrl.u32 %v569, 7
      %v571 = vsub.s32 %v568, %v570
      %v572 = vrot.slane %v557, %v571
      %v574 = vunpack.c.l.s4 1966171168
      %v575 = vunpack.c.0.s8 %v574
      %v576 = vlaneseq
      %v577 = vshrl.u32 %v576, 7
      %v578 = vsub.s32 %v575, %v577
      %v579 = vrot.slane %v565, %v578
      %v580 = vcombine.high %v572, %v572
      %v581 = vcombine.high %v579, %v579
      %v583 = vunpack.c.l.s4 1966171168
      %v584 = vunpack.c.0.s8 %v583
      %v585 = vlaneseq
      %v586 = vshrl.u32 %v585, 7
      %v587 = vsub.s32 %v584, %v586
      %v588 = vrot.slane %v572, %v587
      %v590 = vunpack.c.l.s4 1966171168
      %v591 = vunpack.c.0.s8 %v590
      %v592 = vlaneseq
      %v593 = vshrl.u32 %v592, 7
      %v594 = vsub.s32 %v591, %v593
      %v595 = vrot.slane %v579, %v594
      %v597 = vunpack.c.l.s4 1966171168
      %v598 = vunpack.c.0.s8 %v597
      %v599 = vlaneseq
      %v600 = vshrl.u32 %v599, 7
      %v601 = vsub.s32 %v598, %v600
      %v602 = vrot.slane %v580, %v601
      %v604 = vunpack.c.l.s4 1966171168
      %v605 = vunpack.c.0.s8 %v604
      %v606 = vlaneseq
      %v607 = vshrl.u32 %v606, 7
      %v608 = vsub.s32 %v605, %v607
      %v609 = vrot.slane %v581, %v608
      %v610 = vcombine.high %v588, %v588
      %v611 = vcombine.high %v595, %v595
      %v612 = vcombine.high %v602, %v602
      %v613 = vcombine.high %v609, %v609
      %v614 = vcombine.high %v558, %v558
      %v616 = vunpack.c.l.s4 1966171168
      %v617 = vunpack.c.0.s8 %v616
      %v618 = vlaneseq
      %v619 = vshrl.u32 %v618, 7
      %v620 = vsub.s32 %v617, %v619
      %v621 = vrot.slane %v558, %v620
      %v623 = vunpack.c.l.s4 1966171168
      %v624 = vunpack.c.0.s8 %v623
      %v625 = vlaneseq
      %v626 = vshrl.u32 %v625, 7
      %v627 = vsub.s32 %v624, %v626
      %v628 = vrot.slane %v614, %v627
      %v629 = vcombine.high %v621, %v621
      %v630 = vcombine.high %v628, %v628
      %v632 = vunpack.c.l.s4 1966171168
      %v633 = vunpack.c.0.s8 %v632
      %v634 = vlaneseq
      %v635 = vshrl.u32 %v634, 7
      %v636 = vsub.s32 %v633, %v635
      %v637 = vrot.slane %v621, %v636
      %v639 = vunpack.c.l.s4 1966171168
      %v640 = vunpack.c.0.s8 %v639
      %v641 = vlaneseq
      %v642 = vshrl.u32 %v641, 7
      %v643 = vsub.s32 %v640, %v642
      %v644 = vrot.slane %v628, %v643
      %v646 = vunpack.c.l.s4 1966171168
      %v647 = vunpack.c.0.s8 %v646
      %v648 = vlaneseq
      %v649 = vshrl.u32 %v648, 7
      %v650 = vsub.s32 %v647, %v649
      %v651 = vrot.slane %v629, %v650
      %v653 = vunpack.c.l.s4 1966171168
      %v654 = vunpack.c.0.s8 %v653
      %v655 = vlaneseq
      %v656 = vshrl.u32 %v655, 7
      %v657 = vsub.s32 %v654, %v656
      %v658 = vrot.slane %v630, %v657
      %v659 = vcombine.high %v637, %v637
      %v660 = vcombine.high %v644, %v644
      %v661 = vcombine.high %v651, %v651
      %v662 = vcombine.high %v658, %v658
      %v663 = vcombine.high %v559, %v559
      %v665 = vunpack.c.l.s4 1966171168
      %v666 = vunpack.c.0.s8 %v665
      %v667 = vlaneseq
      %v668 = vshrl.u32 %v667, 7
      %v669 = vsub.s32 %v666, %v668
      %v670 = vrot.slane %v559, %v669
      %v672 = vunpack.c.l.s4 1966171168
      %v673 = vunpack.c.0.s8 %v672
      %v674 = vlaneseq
      %v675 = vshrl.u32 %v674, 7
      %v676 = vsub.s32 %v673, %v675
      %v677 = vrot.slane %v663, %v676
      %v678 = vcombine.high %v670, %v670
      %v679 = vcombine.high %v677, %v677
      %v681 = vunpack.c.l.s4 1966171168
      %v682 = vunpack.c.0.s8 %v681
      %v683 = vlaneseq
      %v684 = vshrl.u32 %v683, 7
      %v685 = vsub.s32 %v682, %v684
      %v686 = vrot.slane %v670, %v685
      %v688 = vunpack.c.l.s4 1966171168
      %v689 = vunpack.c.0.s8 %v688
      %v690 = vlaneseq
      %v691 = vshrl.u32 %v690, 7
      %v692 = vsub.s32 %v689, %v691
      %v693 = vrot.slane %v677, %v692
      %v695 = vunpack.c.l.s4 1966171168
      %v696 = vunpack.c.0.s8 %v695
      %v697 = vlaneseq
      %v698 = vshrl.u32 %v697, 7
      %v699 = vsub.s32 %v696, %v698
      %v700 = vrot.slane %v678, %v699
      %v702 = vunpack.c.l.s4 1966171168
      %v703 = vunpack.c.0.s8 %v702
      %v704 = vlaneseq
      %v705 = vshrl.u32 %v704, 7
      %v706 = vsub.s32 %v703, %v705
      %v707 = vrot.slane %v679, %v706
      %v708 = vcombine.high %v686, %v686
      %v709 = vcombine.high %v693, %v693
      %v710 = vcombine.high %v700, %v700
      %v711 = vcombine.high %v707, %v707
      %v712 = vcombine.high %v560, %v560
      %v714 = vunpack.c.l.s4 1966171168
      %v715 = vunpack.c.0.s8 %v714
      %v716 = vlaneseq
      %v717 = vshrl.u32 %v716, 7
      %v718 = vsub.s32 %v715, %v717
      %v719 = vrot.slane %v560, %v718
      %v721 = vunpack.c.l.s4 1966171168
      %v722 = vunpack.c.0.s8 %v721
      %v723 = vlaneseq
      %v724 = vshrl.u32 %v723, 7
      %v725 = vsub.s32 %v722, %v724
      %v726 = vrot.slane %v712, %v725
      %v727 = vcombine.high %v719, %v719
      %v728 = vcombine.high %v726, %v726
      %v730 = vunpack.c.l.s4 1966171168
      %v731 = vunpack.c.0.s8 %v730
      %v732 = vlaneseq
      %v733 = vshrl.u32 %v732, 7
      %v734 = vsub.s32 %v731, %v733
      %v735 = vrot.slane %v719, %v734
      %v737 = vunpack.c.l.s4 1966171168
      %v738 = vunpack.c.0.s8 %v737
      %v739 = vlaneseq
      %v740 = vshrl.u32 %v739, 7
      %v741 = vsub.s32 %v738, %v740
      %v742 = vrot.slane %v726, %v741
      %v744 = vunpack.c.l.s4 1966171168
      %v745 = vunpack.c.0.s8 %v744
      %v746 = vlaneseq
      %v747 = vshrl.u32 %v746, 7
      %v748 = vsub.s32 %v745, %v747
      %v749 = vrot.slane %v727, %v748
      %v751 = vunpack.c.l.s4 1966171168
      %v752 = vunpack.c.0.s8 %v751
      %v753 = vlaneseq
      %v754 = vshrl.u32 %v753, 7
      %v755 = vsub.s32 %v752, %v754
      %v756 = vrot.slane %v728, %v755
      %v757 = vcombine.high %v735, %v735
      %v758 = vcombine.high %v742, %v742
      %v759 = vcombine.high %v749, %v749
      %v760 = vcombine.high %v756, %v756
      %v761 = vunpack.i.l.s16 %v588
      %v762 = vunpack.i.h.s16 %v588
      %v763 = vunpack.i.l.s16 %v602
      %v764 = vunpack.i.h.s16 %v602
      %v765 = vunpack.i.l.s16 %v610
      %v766 = vunpack.i.h.s16 %v610
      %v767 = vunpack.i.l.s16 %v612
      %v768 = vunpack.i.h.s16 %v612
      %v769 = vunpack.i.l.s16 %v595
      %v770 = vunpack.i.h.s16 %v595
      %v771 = vunpack.i.l.s16 %v609
      %v772 = vunpack.i.h.s16 %v609
      %v773 = vunpack.i.l.s16 %v611
      %v774 = vunpack.i.h.s16 %v611
      %v775 = vunpack.i.l.s16 %v613
      %v776 = vunpack.i.h.s16 %v613
      %v777 = vunpack.i.l.s16 %v637
      %v778 = vunpack.i.h.s16 %v637
      %v779 = vunpack.i.l.s16 %v651
      %v780 = vunpack.i.h.s16 %v651
      %v781 = vunpack.i.l.s16 %v659
      %v782 = vunpack.i.h.s16 %v659
      %v783 = vunpack.i.l.s16 %v661
      %v784 = vunpack.i.h.s16 %v661
      %v785 = vunpack.i.l.s16 %v644
      %v786 = vunpack.i.h.s16 %v644
      %v787 = vunpack.i.l.s16 %v658
      %v788 = vunpack.i.h.s16 %v658
      %v789 = vunpack.i.l.s16 %v660
      %v790 = vunpack.i.h.s16 %v660
      %v791 = vunpack.i.l.s16 %v662
      %v792 = vunpack.i.h.s16 %v662
      %v793 = vunpack.i.l.s16 %v686
      %v794 = vunpack.i.h.s16 %v686
      %v795 = vunpack.i.l.s16 %v700
      %v796 = vunpack.i.h.s16 %v700
      %v797 = vunpack.i.l.s16 %v708
      %v798 = vunpack.i.h.s16 %v708
      %v799 = vunpack.i.l.s16 %v710
      %v800 = vunpack.i.h.s16 %v710
      %v801 = vunpack.i.l.s16 %v693
      %v802 = vunpack.i.h.s16 %v693
      %v803 = vunpack.i.l.s16 %v707
      %v804 = vunpack.i.h.s16 %v707
      %v805 = vunpack.i.l.s16 %v709
      %v806 = vunpack.i.h.s16 %v709
      %v807 = vunpack.i.l.s16 %v711
      %v808 = vunpack.i.h.s16 %v711
      %v809 = vunpack.i.l.s16 %v735
      %v810 = vunpack.i.h.s16 %v735
      %v811 = vunpack.i.l.s16 %v749
      %v812 = vunpack.i.h.s16 %v749
      %v813 = vunpack.i.l.s16 %v757
      %v814 = vunpack.i.h.s16 %v757
      %v815 = vunpack.i.l.s16 %v759
      %v816 = vunpack.i.h.s16 %v759
      %v817 = vunpack.i.l.s16 %v742
      %v818 = vunpack.i.h.s16 %v742
      %v819 = vunpack.i.l.s16 %v756
      %v820 = vunpack.i.h.s16 %v756
      %v821 = vunpack.i.l.s16 %v758
      %v822 = vunpack.i.h.s16 %v758
      %v823 = vunpack.i.l.s16 %v760
      %v824 = vunpack.i.h.s16 %v760
      %s825 = scalar_lea.vmem %s2, 4
      %v826 = vld [vmem:[%s825] sm:$0xf]
      %v828 = vsel %vm450, %v826, 0
      %830 = vmatprep.subr.bf16.mxu0 0
      %831 = vmatpush1.bf16.msra.mxu0 %v828
      %832 = vmatprep.subr.bf16.mxu0 0
      %833 = vmatpush1.bf16.msra.mxu0 0
      %834 = vmatprep.subr.bf16.mxu0 0
      %835 = vmatpush1.bf16.msra.mxu0 0
      %836 = vmatprep.subr.bf16.mxu0 0
      %837 = vmatpush1.bf16.msra.mxu0 0
      %838 = vmatprep.subr.bf16.mxu0 0
      %839 = vmatpush1.bf16.msra.mxu0 0
      %840 = vmatprep.subr.bf16.mxu0 0
      %841 = vmatpush1.bf16.msra.mxu0 0
      %842 = vmatprep.subr.bf16.mxu0 0
      %843 = vmatpush1.bf16.msra.mxu0 0
      %844 = vmatprep.subr.bf16.mxu0 0
      %845 = vmatpush1.bf16.msra.mxu0 0
      %846 = vmatprep.subr.bf16.mxu0 0
      %847 = vmatpush1.bf16.msra.mxu0 0
      %848 = vmatprep.subr.bf16.mxu0 0
      %849 = vmatpush1.bf16.msra.mxu0 0
      %850 = vmatprep.subr.bf16.mxu0 0
      %851 = vmatpush1.bf16.msra.mxu0 0
      %852 = vmatprep.subr.bf16.mxu0 0
      %853 = vmatpush1.bf16.msra.mxu0 0
      %854 = vmatprep.subr.bf16.mxu0 0
      %855 = vmatpush1.bf16.msra.mxu0 0
      %856 = vmatprep.subr.bf16.mxu0 0
      %857 = vmatpush1.bf16.msra.mxu0 0
      %858 = vmatprep.subr.bf16.mxu0 0
      %859 = vmatpush1.bf16.msra.mxu0 0
      %860 = vmatprep.subr.bf16.mxu0 0
      %861 = vmatpush1.bf16.msra.mxu0 0
      %862 = vmatprep.mubr.bf16.mxu0 0
      %863 = vmatmul.mubr.bf16.gmra.mrb[0].mxu0 %v439
      %v864 = vpop.f32.mrb[0].mxu0
      %v865 = vadd.f32 0.0, %v864
      %v866 = vpop.f32.mrb[0].mxu0
      %v867 = vpop.f32.mrb[0].mxu0
      %v868 = vadd.f32 0.0, %v867
      %v869 = vpop.f32.mrb[0].mxu0
      %870 = vmatprep.mubr.bf16.mxu0 0
      %871 = vmatmul.mubr.bf16.gmra.mrb[0].mxu0 %v442
      %v872 = vpop.f32.mrb[0].mxu0
      %v873 = vadd.f32 0.0, %v872
      %v874 = vpop.f32.mrb[0].mxu0
      %v875 = vpop.f32.mrb[0].mxu0
      %v876 = vadd.f32 0.0, %v875
      %v877 = vpop.f32.mrb[0].mxu0
      %878 = vmatprep.mubr.bf16.mxu0 0
      %879 = vmatmul.mubr.bf16.gmra.mrb[0].mxu0 %v445
      %v880 = vpop.f32.mrb[0].mxu0
      %v881 = vadd.f32 0.0, %v880
      %v882 = vpop.f32.mrb[0].mxu0
      %v883 = vpop.f32.mrb[0].mxu0
      %v884 = vadd.f32 0.0, %v883
      %v885 = vpop.f32.mrb[0].mxu0
      %886 = vmatprep.mubr.bf16.mxu0 0
      %887 = vmatmul.mubr.bf16.gmra.mrb[0].mxu0 %v448
      %v888 = vpop.f32.mrb[0].mxu0
      %v889 = vadd.f32 0.0, %v888
      %v890 = vpop.f32.mrb[0].mxu0
      %v891 = vpop.f32.mrb[0].mxu0
      %v892 = vadd.f32 0.0, %v891
      %v893 = vpop.f32.mrb[0].mxu0
      %894 = vdwg.mxu0
      %v895 = vmul.f32 %v865, %v524
      %v896 = vmul.f32 %v868, %v524
      %v897 = vmul.f32 %v873, %v524
      %v898 = vmul.f32 %v876, %v524
      %v899 = vmul.f32 %v881, %v524
      %v900 = vmul.f32 %v884, %v524
      %v901 = vmul.f32 %v889, %v524
      %v902 = vmul.f32 %v892, %v524
      %v903 = vadd.f32 %v895, %v539
      %v904 = vadd.f32 %v896, %v539
      %v905 = vadd.f32 %v897, %v539
      %v906 = vadd.f32 %v898, %v539
      %v907 = vadd.f32 %v899, %v539
      %v908 = vadd.f32 %v900, %v539
      %v909 = vadd.f32 %v901, %v539
      %v910 = vadd.f32 %v902, %v539
      %v911 = vmax.f32 %v903, 0.0
      %v912 = vmax.f32 %v904, 0.0
      %v913 = vmax.f32 %v905, 0.0
      %v914 = vmax.f32 %v906, 0.0
      %v915 = vmax.f32 %v907, 0.0
      %v916 = vmax.f32 %v908, 0.0
      %v917 = vmax.f32 %v909, 0.0
      %v918 = vmax.f32 %v910, 0.0
      %v919 = vpack.c.bf16 %v912, %v911
      %v920 = vpack.c.bf16 %v914, %v913
      %v921 = vpack.c.bf16 %v916, %v915
      %v922 = vpack.c.bf16 %v918, %v917
      %v927 = vcombine.high %v919, %v919
      %v929 = vunpack.c.l.s4 1966171168
      %v930 = vunpack.c.0.s8 %v929
      %v931 = vlaneseq
      %v932 = vshrl.u32 %v931, 7
      %v933 = vsub.s32 %v930, %v932
      %v934 = vrot.slane %v919, %v933
      %v936 = vunpack.c.l.s4 1966171168
      %v937 = vunpack.c.0.s8 %v936
      %v938 = vlaneseq
      %v939 = vshrl.u32 %v938, 7
      %v940 = vsub.s32 %v937, %v939
      %v941 = vrot.slane %v927, %v940
      %v942 = vcombine.high %v934, %v934
      %v943 = vcombine.high %v941, %v941
      %v945 = vunpack.c.l.s4 1966171168
      %v946 = vunpack.c.0.s8 %v945
      %v947 = vlaneseq
      %v948 = vshrl.u32 %v947, 7
      %v949 = vsub.s32 %v946, %v948
      %v950 = vrot.slane %v934, %v949
      %v952 = vunpack.c.l.s4 1966171168
      %v953 = vunpack.c.0.s8 %v952
      %v954 = vlaneseq
      %v955 = vshrl.u32 %v954, 7
      %v956 = vsub.s32 %v953, %v955
      %v957 = vrot.slane %v941, %v956
      %v959 = vunpack.c.l.s4 1966171168
      %v960 = vunpack.c.0.s8 %v959
      %v961 = vlaneseq
      %v962 = vshrl.u32 %v961, 7
      %v963 = vsub.s32 %v960, %v962
      %v964 = vrot.slane %v942, %v963
      %v966 = vunpack.c.l.s4 1966171168
      %v967 = vunpack.c.0.s8 %v966
      %v968 = vlaneseq
      %v969 = vshrl.u32 %v968, 7
      %v970 = vsub.s32 %v967, %v969
      %v971 = vrot.slane %v943, %v970
      %v972 = vcombine.high %v950, %v950
      %v973 = vcombine.high %v957, %v957
      %v974 = vcombine.high %v964, %v964
      %v975 = vcombine.high %v971, %v971
      %v976 = vcombine.high %v920, %v920
      %v978 = vunpack.c.l.s4 1966171168
      %v979 = vunpack.c.0.s8 %v978
      %v980 = vlaneseq
      %v981 = vshrl.u32 %v980, 7
      %v982 = vsub.s32 %v979, %v981
      %v983 = vrot.slane %v920, %v982
      %v985 = vunpack.c.l.s4 1966171168
      %v986 = vunpack.c.0.s8 %v985
      %v987 = vlaneseq
      %v988 = vshrl.u32 %v987, 7
      %v989 = vsub.s32 %v986, %v988
      %v990 = vrot.slane %v976, %v989
      %v991 = vcombine.high %v983, %v983
      %v992 = vcombine.high %v990, %v990
      %v994 = vunpack.c.l.s4 1966171168
      %v995 = vunpack.c.0.s8 %v994
      %v996 = vlaneseq
      %v997 = vshrl.u32 %v996, 7
      %v998 = vsub.s32 %v995, %v997
      %v999 = vrot.slane %v983, %v998
      %v1001 = vunpack.c.l.s4 1966171168
      %v1002 = vunpack.c.0.s8 %v1001
      %v1003 = vlaneseq
      %v1004 = vshrl.u32 %v1003, 7
      %v1005 = vsub.s32 %v1002, %v1004
      %v1006 = vrot.slane %v990, %v1005
      %v1008 = vunpack.c.l.s4 1966171168
      %v1009 = vunpack.c.0.s8 %v1008
      %v1010 = vlaneseq
      %v1011 = vshrl.u32 %v1010, 7
      %v1012 = vsub.s32 %v1009, %v1011
      %v1013 = vrot.slane %v991, %v1012
      %v1015 = vunpack.c.l.s4 1966171168
      %v1016 = vunpack.c.0.s8 %v1015
      %v1017 = vlaneseq
      %v1018 = vshrl.u32 %v1017, 7
      %v1019 = vsub.s32 %v1016, %v1018
      %v1020 = vrot.slane %v992, %v1019
      %v1021 = vcombine.high %v999, %v999
      %v1022 = vcombine.high %v1006, %v1006
      %v1023 = vcombine.high %v1013, %v1013
      %v1024 = vcombine.high %v1020, %v1020
      %v1025 = vcombine.high %v921, %v921
      %v1027 = vunpack.c.l.s4 1966171168
      %v1028 = vunpack.c.0.s8 %v1027
      %v1029 = vlaneseq
      %v1030 = vshrl.u32 %v1029, 7
      %v1031 = vsub.s32 %v1028, %v1030
      %v1032 = vrot.slane %v921, %v1031
      %v1034 = vunpack.c.l.s4 1966171168
      %v1035 = vunpack.c.0.s8 %v1034
      %v1036 = vlaneseq
      %v1037 = vshrl.u32 %v1036, 7
      %v1038 = vsub.s32 %v1035, %v1037
      %v1039 = vrot.slane %v1025, %v1038
      %v1040 = vcombine.high %v1032, %v1032
      %v1041 = vcombine.high %v1039, %v1039
      %v1043 = vunpack.c.l.s4 1966171168
      %v1044 = vunpack.c.0.s8 %v1043
      %v1045 = vlaneseq
      %v1046 = vshrl.u32 %v1045, 7
      %v1047 = vsub.s32 %v1044, %v1046
      %v1048 = vrot.slane %v1032, %v1047
      %v1050 = vunpack.c.l.s4 1966171168
      %v1051 = vunpack.c.0.s8 %v1050
      %v1052 = vlaneseq
      %v1053 = vshrl.u32 %v1052, 7
      %v1054 = vsub.s32 %v1051, %v1053
      %v1055 = vrot.slane %v1039, %v1054
      %v1057 = vunpack.c.l.s4 1966171168
      %v1058 = vunpack.c.0.s8 %v1057
      %v1059 = vlaneseq
      %v1060 = vshrl.u32 %v1059, 7
      %v1061 = vsub.s32 %v1058, %v1060
      %v1062 = vrot.slane %v1040, %v1061
      %v1064 = vunpack.c.l.s4 1966171168
      %v1065 = vunpack.c.0.s8 %v1064
      %v1066 = vlaneseq
      %v1067 = vshrl.u32 %v1066, 7
      %v1068 = vsub.s32 %v1065, %v1067
      %v1069 = vrot.slane %v1041, %v1068
      %v1070 = vcombine.high %v1048, %v1048
      %v1071 = vcombine.high %v1055, %v1055
      %v1072 = vcombine.high %v1062, %v1062
      %v1073 = vcombine.high %v1069, %v1069
      %v1074 = vcombine.high %v922, %v922
      %v1076 = vunpack.c.l.s4 1966171168
      %v1077 = vunpack.c.0.s8 %v1076
      %v1078 = vlaneseq
      %v1079 = vshrl.u32 %v1078, 7
      %v1080 = vsub.s32 %v1077, %v1079
      %v1081 = vrot.slane %v922, %v1080
      %v1083 = vunpack.c.l.s4 1966171168
      %v1084 = vunpack.c.0.s8 %v1083
      %v1085 = vlaneseq
      %v1086 = vshrl.u32 %v1085, 7
      %v1087 = vsub.s32 %v1084, %v1086
      %v1088 = vrot.slane %v1074, %v1087
      %v1089 = vcombine.high %v1081, %v1081
      %v1090 = vcombine.high %v1088, %v1088
      %v1092 = vunpack.c.l.s4 1966171168
      %v1093 = vunpack.c.0.s8 %v1092
      %v1094 = vlaneseq
      %v1095 = vshrl.u32 %v1094, 7
      %v1096 = vsub.s32 %v1093, %v1095
      %v1097 = vrot.slane %v1081, %v1096
      %v1099 = vunpack.c.l.s4 1966171168
      %v1100 = vunpack.c.0.s8 %v1099
      %v1101 = vlaneseq
      %v1102 = vshrl.u32 %v1101, 7
      %v1103 = vsub.s32 %v1100, %v1102
      %v1104 = vrot.slane %v1088, %v1103
      %v1106 = vunpack.c.l.s4 1966171168
      %v1107 = vunpack.c.0.s8 %v1106
      %v1108 = vlaneseq
      %v1109 = vshrl.u32 %v1108, 7
      %v1110 = vsub.s32 %v1107, %v1109
      %v1111 = vrot.slane %v1089, %v1110
      %v1113 = vunpack.c.l.s4 1966171168
      %v1114 = vunpack.c.0.s8 %v1113
      %v1115 = vlaneseq
      %v1116 = vshrl.u32 %v1115, 7
      %v1117 = vsub.s32 %v1114, %v1116
      %v1118 = vrot.slane %v1090, %v1117
      %v1119 = vcombine.high %v1097, %v1097
      %v1120 = vcombine.high %v1104, %v1104
      %v1121 = vcombine.high %v1111, %v1111
      %v1122 = vcombine.high %v1118, %v1118
      %v1123 = vunpack.i.l.s16 %v950
      %v1124 = vunpack.i.h.s16 %v950
      %v1125 = vunpack.i.l.s16 %v964
      %v1126 = vunpack.i.h.s16 %v964
      %v1127 = vunpack.i.l.s16 %v972
      %v1128 = vunpack.i.h.s16 %v972
      %v1129 = vunpack.i.l.s16 %v974
      %v1130 = vunpack.i.h.s16 %v974
      %v1131 = vunpack.i.l.s16 %v957
      %v1132 = vunpack.i.h.s16 %v957
      %v1133 = vunpack.i.l.s16 %v971
      %v1134 = vunpack.i.h.s16 %v971
      %v1135 = vunpack.i.l.s16 %v973
      %v1136 = vunpack.i.h.s16 %v973
      %v1137 = vunpack.i.l.s16 %v975
      %v1138 = vunpack.i.h.s16 %v975
      %v1139 = vunpack.i.l.s16 %v999
      %v1140 = vunpack.i.h.s16 %v999
      %v1141 = vunpack.i.l.s16 %v1013
      %v1142 = vunpack.i.h.s16 %v1013
      %v1143 = vunpack.i.l.s16 %v1021
      %v1144 = vunpack.i.h.s16 %v1021
      %v1145 = vunpack.i.l.s16 %v1023
      %v1146 = vunpack.i.h.s16 %v1023
      %v1147 = vunpack.i.l.s16 %v1006
      %v1148 = vunpack.i.h.s16 %v1006
      %v1149 = vunpack.i.l.s16 %v1020
      %v1150 = vunpack.i.h.s16 %v1020
      %v1151 = vunpack.i.l.s16 %v1022
      %v1152 = vunpack.i.h.s16 %v1022
      %v1153 = vunpack.i.l.s16 %v1024
      %v1154 = vunpack.i.h.s16 %v1024
      %v1155 = vunpack.i.l.s16 %v1048
      %v1156 = vunpack.i.h.s16 %v1048
      %v1157 = vunpack.i.l.s16 %v1062
      %v1158 = vunpack.i.h.s16 %v1062
      %v1159 = vunpack.i.l.s16 %v1070
      %v1160 = vunpack.i.h.s16 %v1070
      %v1161 = vunpack.i.l.s16 %v1072
      %v1162 = vunpack.i.h.s16 %v1072
      %v1163 = vunpack.i.l.s16 %v1055
      %v1164 = vunpack.i.h.s16 %v1055
      %v1165 = vunpack.i.l.s16 %v1069
      %v1166 = vunpack.i.h.s16 %v1069
      %v1167 = vunpack.i.l.s16 %v1071
      %v1168 = vunpack.i.h.s16 %v1071
      %v1169 = vunpack.i.l.s16 %v1073
      %v1170 = vunpack.i.h.s16 %v1073
      %v1171 = vunpack.i.l.s16 %v1097
      %v1172 = vunpack.i.h.s16 %v1097
      %v1173 = vunpack.i.l.s16 %v1111
      %v1174 = vunpack.i.h.s16 %v1111
      %v1175 = vunpack.i.l.s16 %v1119
      %v1176 = vunpack.i.h.s16 %v1119
      %v1177 = vunpack.i.l.s16 %v1121
      %v1178 = vunpack.i.h.s16 %v1121
      %v1179 = vunpack.i.l.s16 %v1104
      %v1180 = vunpack.i.h.s16 %v1104
      %v1181 = vunpack.i.l.s16 %v1118
      %v1182 = vunpack.i.h.s16 %v1118
      %v1183 = vunpack.i.l.s16 %v1120
      %v1184 = vunpack.i.h.s16 %v1120
      %v1185 = vunpack.i.l.s16 %v1122
      %v1186 = vunpack.i.h.s16 %v1122
      %v1187 = vpack.i.b16 %v761, %v761
      %v1188 = vpack.i.b16 %v762, %v762
      %v1189 = vpack.i.b16 %v763, %v763
      %v1190 = vpack.i.b16 %v764, %v764
      %v1191 = vpack.i.b16 %v765, %v765
      %v1192 = vpack.i.b16 %v766, %v766
      %v1193 = vpack.i.b16 %v767, %v767
      %v1194 = vpack.i.b16 %v768, %v768
      %v1195 = vpack.i.b16 %v769, %v769
      %v1196 = vpack.i.b16 %v770, %v770
      %v1197 = vpack.i.b16 %v771, %v771
      %v1198 = vpack.i.b16 %v772, %v772
      %v1199 = vpack.i.b16 %v773, %v773
      %v1200 = vpack.i.b16 %v774, %v774
      %v1201 = vpack.i.b16 %v775, %v775
      %v1202 = vpack.i.b16 %v776, %v776
      %v1203 = vpack.i.b16 %v777, %v777
      %v1204 = vpack.i.b16 %v778, %v778
      %v1205 = vpack.i.b16 %v779, %v779
      %v1206 = vpack.i.b16 %v780, %v780
      %v1207 = vpack.i.b16 %v781, %v781
      %v1208 = vpack.i.b16 %v782, %v782
      %v1209 = vpack.i.b16 %v783, %v783
      %v1210 = vpack.i.b16 %v784, %v784
      %v1211 = vpack.i.b16 %v785, %v785
      %v1212 = vpack.i.b16 %v786, %v786
      %v1213 = vpack.i.b16 %v787, %v787
      %v1214 = vpack.i.b16 %v788, %v788
      %v1215 = vpack.i.b16 %v789, %v789
      %v1216 = vpack.i.b16 %v790, %v790
      %v1217 = vpack.i.b16 %v791, %v791
      %v1218 = vpack.i.b16 %v792, %v792
      %v1219 = vpack.i.b16 %v793, %v793
      %v1220 = vpack.i.b16 %v794, %v794
      %v1221 = vpack.i.b16 %v795, %v795
      %v1222 = vpack.i.b16 %v796, %v796
      %v1223 = vpack.i.b16 %v797, %v797
      %v1224 = vpack.i.b16 %v798, %v798
      %v1225 = vpack.i.b16 %v799, %v799
      %v1226 = vpack.i.b16 %v800, %v800
      %v1227 = vpack.i.b16 %v801, %v801
      %v1228 = vpack.i.b16 %v802, %v802
      %v1229 = vpack.i.b16 %v803, %v803
      %v1230 = vpack.i.b16 %v804, %v804
      %v1231 = vpack.i.b16 %v805, %v805
      %v1232 = vpack.i.b16 %v806, %v806
      %v1233 = vpack.i.b16 %v807, %v807
      %v1234 = vpack.i.b16 %v808, %v808
      %v1235 = vpack.i.b16 %v809, %v809
      %v1236 = vpack.i.b16 %v810, %v810
      %v1237 = vpack.i.b16 %v811, %v811
      %v1238 = vpack.i.b16 %v812, %v812
      %v1239 = vpack.i.b16 %v813, %v813
      %v1240 = vpack.i.b16 %v814, %v814
      %v1241 = vpack.i.b16 %v815, %v815
      %v1242 = vpack.i.b16 %v816, %v816
      %v1243 = vpack.i.b16 %v817, %v817
      %v1244 = vpack.i.b16 %v818, %v818
      %v1245 = vpack.i.b16 %v819, %v819
      %v1246 = vpack.i.b16 %v820, %v820
      %v1247 = vpack.i.b16 %v821, %v821
      %v1248 = vpack.i.b16 %v822, %v822
      %v1249 = vpack.i.b16 %v823, %v823
      %v1250 = vpack.i.b16 %v824, %v824
      %v1251 = vlaneseq
      %v1252 = vshrl.u32 %v1251, 7
      %v1253 = vsub.s32 0, %v1252
      %v1254 = vrot.slane %v1187, %v1253
      %v1255 = vlaneseq
      %v1256 = vshrl.u32 %v1255, 7
      %v1257 = vsub.s32 0, %v1256
      %v1258 = vrot.slane %v1188, %v1257
      %v1259 = vlaneseq
      %v1260 = vshrl.u32 %v1259, 7
      %v1261 = vsub.s32 0, %v1260
      %v1262 = vrot.slane %v1189, %v1261
      %v1263 = vlaneseq
      %v1264 = vshrl.u32 %v1263, 7
      %v1265 = vsub.s32 0, %v1264
      %v1266 = vrot.slane %v1190, %v1265
      %v1267 = vlaneseq
      %v1268 = vshrl.u32 %v1267, 7
      %v1269 = vsub.s32 0, %v1268
      %v1270 = vrot.slane %v1191, %v1269
      %v1271 = vlaneseq
      %v1272 = vshrl.u32 %v1271, 7
      %v1273 = vsub.s32 0, %v1272
      %v1274 = vrot.slane %v1192, %v1273
      %v1275 = vlaneseq
      %v1276 = vshrl.u32 %v1275, 7
      %v1277 = vsub.s32 0, %v1276
      %v1278 = vrot.slane %v1193, %v1277
      %v1279 = vlaneseq
      %v1280 = vshrl.u32 %v1279, 7
      %v1281 = vsub.s32 0, %v1280
      %v1282 = vrot.slane %v1194, %v1281
      %v1283 = vlaneseq
      %v1284 = vshrl.u32 %v1283, 7
      %v1285 = vsub.s32 0, %v1284
      %v1286 = vrot.slane %v1195, %v1285
      %v1287 = vlaneseq
      %v1288 = vshrl.u32 %v1287, 7
      %v1289 = vsub.s32 0, %v1288
      %v1290 = vrot.slane %v1196, %v1289
      %v1291 = vlaneseq
      %v1292 = vshrl.u32 %v1291, 7
      %v1293 = vsub.s32 0, %v1292
      %v1294 = vrot.slane %v1197, %v1293
      %v1295 = vlaneseq
      %v1296 = vshrl.u32 %v1295, 7
      %v1297 = vsub.s32 0, %v1296
      %v1298 = vrot.slane %v1198, %v1297
      %v1299 = vlaneseq
      %v1300 = vshrl.u32 %v1299, 7
      %v1301 = vsub.s32 0, %v1300
      %v1302 = vrot.slane %v1199, %v1301
      %v1303 = vlaneseq
      %v1304 = vshrl.u32 %v1303, 7
      %v1305 = vsub.s32 0, %v1304
      %v1306 = vrot.slane %v1200, %v1305
      %v1307 = vlaneseq
      %v1308 = vshrl.u32 %v1307, 7
      %v1309 = vsub.s32 0, %v1308
      %v1310 = vrot.slane %v1201, %v1309
      %v1311 = vlaneseq
      %v1312 = vshrl.u32 %v1311, 7
      %v1313 = vsub.s32 0, %v1312
      %v1314 = vrot.slane %v1202, %v1313
      %v1315 = vlaneseq
      %v1316 = vshrl.u32 %v1315, 7
      %v1317 = vsub.s32 0, %v1316
      %v1318 = vrot.slane %v1203, %v1317
      %v1319 = vlaneseq
      %v1320 = vshrl.u32 %v1319, 7
      %v1321 = vsub.s32 0, %v1320
      %v1322 = vrot.slane %v1204, %v1321
      %v1323 = vlaneseq
      %v1324 = vshrl.u32 %v1323, 7
      %v1325 = vsub.s32 0, %v1324
      %v1326 = vrot.slane %v1205, %v1325
      %v1327 = vlaneseq
      %v1328 = vshrl.u32 %v1327, 7
      %v1329 = vsub.s32 0, %v1328
      %v1330 = vrot.slane %v1206, %v1329
      %v1331 = vlaneseq
      %v1332 = vshrl.u32 %v1331, 7
      %v1333 = vsub.s32 0, %v1332
      %v1334 = vrot.slane %v1207, %v1333
      %v1335 = vlaneseq
      %v1336 = vshrl.u32 %v1335, 7
      %v1337 = vsub.s32 0, %v1336
      %v1338 = vrot.slane %v1208, %v1337
      %v1339 = vlaneseq
      %v1340 = vshrl.u32 %v1339, 7
      %v1341 = vsub.s32 0, %v1340
      %v1342 = vrot.slane %v1209, %v1341
      %v1343 = vlaneseq
      %v1344 = vshrl.u32 %v1343, 7
      %v1345 = vsub.s32 0, %v1344
      %v1346 = vrot.slane %v1210, %v1345
      %v1347 = vlaneseq
      %v1348 = vshrl.u32 %v1347, 7
      %v1349 = vsub.s32 0, %v1348
      %v1350 = vrot.slane %v1211, %v1349
      %v1351 = vlaneseq
      %v1352 = vshrl.u32 %v1351, 7
      %v1353 = vsub.s32 0, %v1352
      %v1354 = vrot.slane %v1212, %v1353
      %v1355 = vlaneseq
      %v1356 = vshrl.u32 %v1355, 7
      %v1357 = vsub.s32 0, %v1356
      %v1358 = vrot.slane %v1213, %v1357
      %v1359 = vlaneseq
      %v1360 = vshrl.u32 %v1359, 7
      %v1361 = vsub.s32 0, %v1360
      %v1362 = vrot.slane %v1214, %v1361
      %v1363 = vlaneseq
      %v1364 = vshrl.u32 %v1363, 7
      %v1365 = vsub.s32 0, %v1364
      %v1366 = vrot.slane %v1215, %v1365
      %v1367 = vlaneseq
      %v1368 = vshrl.u32 %v1367, 7
      %v1369 = vsub.s32 0, %v1368
      %v1370 = vrot.slane %v1216, %v1369
      %v1371 = vlaneseq
      %v1372 = vshrl.u32 %v1371, 7
      %v1373 = vsub.s32 0, %v1372
      %v1374 = vrot.slane %v1217, %v1373
      %v1375 = vlaneseq
      %v1376 = vshrl.u32 %v1375, 7
      %v1377 = vsub.s32 0, %v1376
      %v1378 = vrot.slane %v1218, %v1377
      %v1379 = vlaneseq
      %v1380 = vshrl.u32 %v1379, 7
      %v1381 = vsub.s32 0, %v1380
      %v1382 = vrot.slane %v1219, %v1381
      %v1383 = vlaneseq
      %v1384 = vshrl.u32 %v1383, 7
      %v1385 = vsub.s32 0, %v1384
      %v1386 = vrot.slane %v1220, %v1385
      %v1387 = vlaneseq
      %v1388 = vshrl.u32 %v1387, 7
      %v1389 = vsub.s32 0, %v1388
      %v1390 = vrot.slane %v1221, %v1389
      %v1391 = vlaneseq
      %v1392 = vshrl.u32 %v1391, 7
      %v1393 = vsub.s32 0, %v1392
      %v1394 = vrot.slane %v1222, %v1393
      %v1395 = vlaneseq
      %v1396 = vshrl.u32 %v1395, 7
      %v1397 = vsub.s32 0, %v1396
      %v1398 = vrot.slane %v1223, %v1397
      %v1399 = vlaneseq
      %v1400 = vshrl.u32 %v1399, 7
      %v1401 = vsub.s32 0, %v1400
      %v1402 = vrot.slane %v1224, %v1401
      %v1403 = vlaneseq
      %v1404 = vshrl.u32 %v1403, 7
      %v1405 = vsub.s32 0, %v1404
      %v1406 = vrot.slane %v1225, %v1405
      %v1407 = vlaneseq
      %v1408 = vshrl.u32 %v1407, 7
      %v1409 = vsub.s32 0, %v1408
      %v1410 = vrot.slane %v1226, %v1409
      %v1411 = vlaneseq
      %v1412 = vshrl.u32 %v1411, 7
      %v1413 = vsub.s32 0, %v1412
      %v1414 = vrot.slane %v1227, %v1413
      %v1415 = vlaneseq
      %v1416 = vshrl.u32 %v1415, 7
      %v1417 = vsub.s32 0, %v1416
      %v1418 = vrot.slane %v1228, %v1417
      %v1419 = vlaneseq
      %v1420 = vshrl.u32 %v1419, 7
      %v1421 = vsub.s32 0, %v1420
      %v1422 = vrot.slane %v1229, %v1421
      %v1423 = vlaneseq
      %v1424 = vshrl.u32 %v1423, 7
      %v1425 = vsub.s32 0, %v1424
      %v1426 = vrot.slane %v1230, %v1425
      %v1427 = vlaneseq
      %v1428 = vshrl.u32 %v1427, 7
      %v1429 = vsub.s32 0, %v1428
      %v1430 = vrot.slane %v1231, %v1429
      %v1431 = vlaneseq
      %v1432 = vshrl.u32 %v1431, 7
      %v1433 = vsub.s32 0, %v1432
      %v1434 = vrot.slane %v1232, %v1433
      %v1435 = vlaneseq
      %v1436 = vshrl.u32 %v1435, 7
      %v1437 = vsub.s32 0, %v1436
      %v1438 = vrot.slane %v1233, %v1437
      %v1439 = vlaneseq
      %v1440 = vshrl.u32 %v1439, 7
      %v1441 = vsub.s32 0, %v1440
      %v1442 = vrot.slane %v1234, %v1441
      %v1443 = vlaneseq
      %v1444 = vshrl.u32 %v1443, 7
      %v1445 = vsub.s32 0, %v1444
      %v1446 = vrot.slane %v1235, %v1445
      %v1447 = vlaneseq
      %v1448 = vshrl.u32 %v1447, 7
      %v1449 = vsub.s32 0, %v1448
      %v1450 = vrot.slane %v1236, %v1449
      %v1451 = vlaneseq
      %v1452 = vshrl.u32 %v1451, 7
      %v1453 = vsub.s32 0, %v1452
      %v1454 = vrot.slane %v1237, %v1453
      %v1455 = vlaneseq
      %v1456 = vshrl.u32 %v1455, 7
      %v1457 = vsub.s32 0, %v1456
      %v1458 = vrot.slane %v1238, %v1457
      %v1459 = vlaneseq
      %v1460 = vshrl.u32 %v1459, 7
      %v1461 = vsub.s32 0, %v1460
      %v1462 = vrot.slane %v1239, %v1461
      %v1463 = vlaneseq
      %v1464 = vshrl.u32 %v1463, 7
      %v1465 = vsub.s32 0, %v1464
      %v1466 = vrot.slane %v1240, %v1465
      %v1467 = vlaneseq
      %v1468 = vshrl.u32 %v1467, 7
      %v1469 = vsub.s32 0, %v1468
      %v1470 = vrot.slane %v1241, %v1469
      %v1471 = vlaneseq
      %v1472 = vshrl.u32 %v1471, 7
      %v1473 = vsub.s32 0, %v1472
      %v1474 = vrot.slane %v1242, %v1473
      %v1475 = vlaneseq
      %v1476 = vshrl.u32 %v1475, 7
      %v1477 = vsub.s32 0, %v1476
      %v1478 = vrot.slane %v1243, %v1477
      %v1479 = vlaneseq
      %v1480 = vshrl.u32 %v1479, 7
      %v1481 = vsub.s32 0, %v1480
      %v1482 = vrot.slane %v1244, %v1481
      %v1483 = vlaneseq
      %v1484 = vshrl.u32 %v1483, 7
      %v1485 = vsub.s32 0, %v1484
      %v1486 = vrot.slane %v1245, %v1485
      %v1487 = vlaneseq
      %v1488 = vshrl.u32 %v1487, 7
      %v1489 = vsub.s32 0, %v1488
      %v1490 = vrot.slane %v1246, %v1489
      %v1491 = vlaneseq
      %v1492 = vshrl.u32 %v1491, 7
      %v1493 = vsub.s32 0, %v1492
      %v1494 = vrot.slane %v1247, %v1493
      %v1495 = vlaneseq
      %v1496 = vshrl.u32 %v1495, 7
      %v1497 = vsub.s32 0, %v1496
      %v1498 = vrot.slane %v1248, %v1497
      %v1499 = vlaneseq
      %v1500 = vshrl.u32 %v1499, 7
      %v1501 = vsub.s32 0, %v1500
      %v1502 = vrot.slane %v1249, %v1501
      %v1503 = vlaneseq
      %v1504 = vshrl.u32 %v1503, 7
      %v1505 = vsub.s32 0, %v1504
      %v1506 = vrot.slane %v1250, %v1505
      %v1571 = vpack.i.b16 %v1123, %v1123
      %v1572 = vpack.i.b16 %v1124, %v1124
      %v1573 = vpack.i.b16 %v1125, %v1125
      %v1574 = vpack.i.b16 %v1126, %v1126
      %v1575 = vpack.i.b16 %v1127, %v1127
      %v1576 = vpack.i.b16 %v1128, %v1128
      %v1577 = vpack.i.b16 %v1129, %v1129
      %v1578 = vpack.i.b16 %v1130, %v1130
      %v1579 = vpack.i.b16 %v1131, %v1131
      %v1580 = vpack.i.b16 %v1132, %v1132
      %v1581 = vpack.i.b16 %v1133, %v1133
      %v1582 = vpack.i.b16 %v1134, %v1134
      %v1583 = vpack.i.b16 %v1135, %v1135
      %v1584 = vpack.i.b16 %v1136, %v1136
      %v1585 = vpack.i.b16 %v1137, %v1137
      %v1586 = vpack.i.b16 %v1138, %v1138
      %v1587 = vpack.i.b16 %v1139, %v1139
      %v1588 = vpack.i.b16 %v1140, %v1140
      %v1589 = vpack.i.b16 %v1141, %v1141
      %v1590 = vpack.i.b16 %v1142, %v1142
      %v1591 = vpack.i.b16 %v1143, %v1143
      %v1592 = vpack.i.b16 %v1144, %v1144
      %v1593 = vpack.i.b16 %v1145, %v1145
      %v1594 = vpack.i.b16 %v1146, %v1146
      %v1595 = vpack.i.b16 %v1147, %v1147
      %v1596 = vpack.i.b16 %v1148, %v1148
      %v1597 = vpack.i.b16 %v1149, %v1149
      %v1598 = vpack.i.b16 %v1150, %v1150
      %v1599 = vpack.i.b16 %v1151, %v1151
      %v1600 = vpack.i.b16 %v1152, %v1152
      %v1601 = vpack.i.b16 %v1153, %v1153
      %v1602 = vpack.i.b16 %v1154, %v1154
      %v1603 = vpack.i.b16 %v1155, %v1155
      %v1604 = vpack.i.b16 %v1156, %v1156
      %v1605 = vpack.i.b16 %v1157, %v1157
      %v1606 = vpack.i.b16 %v1158, %v1158
      %v1607 = vpack.i.b16 %v1159, %v1159
      %v1608 = vpack.i.b16 %v1160, %v1160
      %v1609 = vpack.i.b16 %v1161, %v1161
      %v1610 = vpack.i.b16 %v1162, %v1162
      %v1611 = vpack.i.b16 %v1163, %v1163
      %v1612 = vpack.i.b16 %v1164, %v1164
      %v1613 = vpack.i.b16 %v1165, %v1165
      %v1614 = vpack.i.b16 %v1166, %v1166
      %v1615 = vpack.i.b16 %v1167, %v1167
      %v1616 = vpack.i.b16 %v1168, %v1168
      %v1617 = vpack.i.b16 %v1169, %v1169
      %v1618 = vpack.i.b16 %v1170, %v1170
      %v1619 = vpack.i.b16 %v1171, %v1171
      %v1620 = vpack.i.b16 %v1172, %v1172
      %v1621 = vpack.i.b16 %v1173, %v1173
      %v1622 = vpack.i.b16 %v1174, %v1174
      %v1623 = vpack.i.b16 %v1175, %v1175
      %v1624 = vpack.i.b16 %v1176, %v1176
      %v1625 = vpack.i.b16 %v1177, %v1177
      %v1626 = vpack.i.b16 %v1178, %v1178
      %v1627 = vpack.i.b16 %v1179, %v1179
      %v1628 = vpack.i.b16 %v1180, %v1180
      %v1629 = vpack.i.b16 %v1181, %v1181
      %v1630 = vpack.i.b16 %v1182, %v1182
      %v1631 = vpack.i.b16 %v1183, %v1183
      %v1632 = vpack.i.b16 %v1184, %v1184
      %v1633 = vpack.i.b16 %v1185, %v1185
      %v1634 = vpack.i.b16 %v1186, %v1186
      %v1635 = vlaneseq
      %v1636 = vshrl.u32 %v1635, 7
      %v1637 = vsub.s32 0, %v1636
      %v1638 = vrot.slane %v1571, %v1637
      %v1639 = vlaneseq
      %v1640 = vshrl.u32 %v1639, 7
      %v1641 = vsub.s32 0, %v1640
      %v1642 = vrot.slane %v1572, %v1641
      %v1643 = vlaneseq
      %v1644 = vshrl.u32 %v1643, 7
      %v1645 = vsub.s32 0, %v1644
      %v1646 = vrot.slane %v1573, %v1645
      %v1647 = vlaneseq
      %v1648 = vshrl.u32 %v1647, 7
      %v1649 = vsub.s32 0, %v1648
      %v1650 = vrot.slane %v1574, %v1649
      %v1651 = vlaneseq
      %v1652 = vshrl.u32 %v1651, 7
      %v1653 = vsub.s32 0, %v1652
      %v1654 = vrot.slane %v1575, %v1653
      %v1655 = vlaneseq
      %v1656 = vshrl.u32 %v1655, 7
      %v1657 = vsub.s32 0, %v1656
      %v1658 = vrot.slane %v1576, %v1657
      %v1659 = vlaneseq
      %v1660 = vshrl.u32 %v1659, 7
      %v1661 = vsub.s32 0, %v1660
      %v1662 = vrot.slane %v1577, %v1661
      %v1663 = vlaneseq
      %v1664 = vshrl.u32 %v1663, 7
      %v1665 = vsub.s32 0, %v1664
      %v1666 = vrot.slane %v1578, %v1665
      %v1667 = vlaneseq
      %v1668 = vshrl.u32 %v1667, 7
      %v1669 = vsub.s32 0, %v1668
      %v1670 = vrot.slane %v1579, %v1669
      %v1671 = vlaneseq
      %v1672 = vshrl.u32 %v1671, 7
      %v1673 = vsub.s32 0, %v1672
      %v1674 = vrot.slane %v1580, %v1673
      %v1675 = vlaneseq
      %v1676 = vshrl.u32 %v1675, 7
      %v1677 = vsub.s32 0, %v1676
      %v1678 = vrot.slane %v1581, %v1677
      %v1679 = vlaneseq
      %v1680 = vshrl.u32 %v1679, 7
      %v1681 = vsub.s32 0, %v1680
      %v1682 = vrot.slane %v1582, %v1681
      %v1683 = vlaneseq
      %v1684 = vshrl.u32 %v1683, 7
      %v1685 = vsub.s32 0, %v1684
      %v1686 = vrot.slane %v1583, %v1685
      %v1687 = vlaneseq
      %v1688 = vshrl.u32 %v1687, 7
      %v1689 = vsub.s32 0, %v1688
      %v1690 = vrot.slane %v1584, %v1689
      %v1691 = vlaneseq
      %v1692 = vshrl.u32 %v1691, 7
      %v1693 = vsub.s32 0, %v1692
      %v1694 = vrot.slane %v1585, %v1693
      %v1695 = vlaneseq
      %v1696 = vshrl.u32 %v1695, 7
      %v1697 = vsub.s32 0, %v1696
      %v1698 = vrot.slane %v1586, %v1697
      %v1699 = vlaneseq
      %v1700 = vshrl.u32 %v1699, 7
      %v1701 = vsub.s32 0, %v1700
      %v1702 = vrot.slane %v1587, %v1701
      %v1703 = vlaneseq
      %v1704 = vshrl.u32 %v1703, 7
      %v1705 = vsub.s32 0, %v1704
      %v1706 = vrot.slane %v1588, %v1705
      %v1707 = vlaneseq
      %v1708 = vshrl.u32 %v1707, 7
      %v1709 = vsub.s32 0, %v1708
      %v1710 = vrot.slane %v1589, %v1709
      %v1711 = vlaneseq
      %v1712 = vshrl.u32 %v1711, 7
      %v1713 = vsub.s32 0, %v1712
      %v1714 = vrot.slane %v1590, %v1713
      %v1715 = vlaneseq
      %v1716 = vshrl.u32 %v1715, 7
      %v1717 = vsub.s32 0, %v1716
      %v1718 = vrot.slane %v1591, %v1717
      %v1719 = vlaneseq
      %v1720 = vshrl.u32 %v1719, 7
      %v1721 = vsub.s32 0, %v1720
      %v1722 = vrot.slane %v1592, %v1721
      %v1723 = vlaneseq
      %v1724 = vshrl.u32 %v1723, 7
      %v1725 = vsub.s32 0, %v1724
      %v1726 = vrot.slane %v1593, %v1725
      %v1727 = vlaneseq
      %v1728 = vshrl.u32 %v1727, 7
      %v1729 = vsub.s32 0, %v1728
      %v1730 = vrot.slane %v1594, %v1729
      %v1731 = vlaneseq
      %v1732 = vshrl.u32 %v1731, 7
      %v1733 = vsub.s32 0, %v1732
      %v1734 = vrot.slane %v1595, %v1733
      %v1735 = vlaneseq
      %v1736 = vshrl.u32 %v1735, 7
      %v1737 = vsub.s32 0, %v1736
      %v1738 = vrot.slane %v1596, %v1737
      %v1739 = vlaneseq
      %v1740 = vshrl.u32 %v1739, 7
      %v1741 = vsub.s32 0, %v1740
      %v1742 = vrot.slane %v1597, %v1741
      %v1743 = vlaneseq
      %v1744 = vshrl.u32 %v1743, 7
      %v1745 = vsub.s32 0, %v1744
      %v1746 = vrot.slane %v1598, %v1745
      %v1747 = vlaneseq
      %v1748 = vshrl.u32 %v1747, 7
      %v1749 = vsub.s32 0, %v1748
      %v1750 = vrot.slane %v1599, %v1749
      %v1751 = vlaneseq
      %v1752 = vshrl.u32 %v1751, 7
      %v1753 = vsub.s32 0, %v1752
      %v1754 = vrot.slane %v1600, %v1753
      %v1755 = vlaneseq
      %v1756 = vshrl.u32 %v1755, 7
      %v1757 = vsub.s32 0, %v1756
      %v1758 = vrot.slane %v1601, %v1757
      %v1759 = vlaneseq
      %v1760 = vshrl.u32 %v1759, 7
      %v1761 = vsub.s32 0, %v1760
      %v1762 = vrot.slane %v1602, %v1761
      %v1763 = vlaneseq
      %v1764 = vshrl.u32 %v1763, 7
      %v1765 = vsub.s32 0, %v1764
      %v1766 = vrot.slane %v1603, %v1765
      %v1767 = vlaneseq
      %v1768 = vshrl.u32 %v1767, 7
      %v1769 = vsub.s32 0, %v1768
      %v1770 = vrot.slane %v1604, %v1769
      %v1771 = vlaneseq
      %v1772 = vshrl.u32 %v1771, 7
      %v1773 = vsub.s32 0, %v1772
      %v1774 = vrot.slane %v1605, %v1773
      %v1775 = vlaneseq
      %v1776 = vshrl.u32 %v1775, 7
      %v1777 = vsub.s32 0, %v1776
      %v1778 = vrot.slane %v1606, %v1777
      %v1779 = vlaneseq
      %v1780 = vshrl.u32 %v1779, 7
      %v1781 = vsub.s32 0, %v1780
      %v1782 = vrot.slane %v1607, %v1781
      %v1783 = vlaneseq
      %v1784 = vshrl.u32 %v1783, 7
      %v1785 = vsub.s32 0, %v1784
      %v1786 = vrot.slane %v1608, %v1785
      %v1787 = vlaneseq
      %v1788 = vshrl.u32 %v1787, 7
      %v1789 = vsub.s32 0, %v1788
      %v1790 = vrot.slane %v1609, %v1789
      %v1791 = vlaneseq
      %v1792 = vshrl.u32 %v1791, 7
      %v1793 = vsub.s32 0, %v1792
      %v1794 = vrot.slane %v1610, %v1793
      %v1795 = vlaneseq
      %v1796 = vshrl.u32 %v1795, 7
      %v1797 = vsub.s32 0, %v1796
      %v1798 = vrot.slane %v1611, %v1797
      %v1799 = vlaneseq
      %v1800 = vshrl.u32 %v1799, 7
      %v1801 = vsub.s32 0, %v1800
      %v1802 = vrot.slane %v1612, %v1801
      %v1803 = vlaneseq
      %v1804 = vshrl.u32 %v1803, 7
      %v1805 = vsub.s32 0, %v1804
      %v1806 = vrot.slane %v1613, %v1805
      %v1807 = vlaneseq
      %v1808 = vshrl.u32 %v1807, 7
      %v1809 = vsub.s32 0, %v1808
      %v1810 = vrot.slane %v1614, %v1809
      %v1811 = vlaneseq
      %v1812 = vshrl.u32 %v1811, 7
      %v1813 = vsub.s32 0, %v1812
      %v1814 = vrot.slane %v1615, %v1813
      %v1815 = vlaneseq
      %v1816 = vshrl.u32 %v1815, 7
      %v1817 = vsub.s32 0, %v1816
      %v1818 = vrot.slane %v1616, %v1817
      %v1819 = vlaneseq
      %v1820 = vshrl.u32 %v1819, 7
      %v1821 = vsub.s32 0, %v1820
      %v1822 = vrot.slane %v1617, %v1821
      %v1823 = vlaneseq
      %v1824 = vshrl.u32 %v1823, 7
      %v1825 = vsub.s32 0, %v1824
      %v1826 = vrot.slane %v1618, %v1825
      %v1827 = vlaneseq
      %v1828 = vshrl.u32 %v1827, 7
      %v1829 = vsub.s32 0, %v1828
      %v1830 = vrot.slane %v1619, %v1829
      %v1831 = vlaneseq
      %v1832 = vshrl.u32 %v1831, 7
      %v1833 = vsub.s32 0, %v1832
      %v1834 = vrot.slane %v1620, %v1833
      %v1835 = vlaneseq
      %v1836 = vshrl.u32 %v1835, 7
      %v1837 = vsub.s32 0, %v1836
      %v1838 = vrot.slane %v1621, %v1837
      %v1839 = vlaneseq
      %v1840 = vshrl.u32 %v1839, 7
      %v1841 = vsub.s32 0, %v1840
      %v1842 = vrot.slane %v1622, %v1841
      %v1843 = vlaneseq
      %v1844 = vshrl.u32 %v1843, 7
      %v1845 = vsub.s32 0, %v1844
      %v1846 = vrot.slane %v1623, %v1845
      %v1847 = vlaneseq
      %v1848 = vshrl.u32 %v1847, 7
      %v1849 = vsub.s32 0, %v1848
      %v1850 = vrot.slane %v1624, %v1849
      %v1851 = vlaneseq
      %v1852 = vshrl.u32 %v1851, 7
      %v1853 = vsub.s32 0, %v1852
      %v1854 = vrot.slane %v1625, %v1853
      %v1855 = vlaneseq
      %v1856 = vshrl.u32 %v1855, 7
      %v1857 = vsub.s32 0, %v1856
      %v1858 = vrot.slane %v1626, %v1857
      %v1859 = vlaneseq
      %v1860 = vshrl.u32 %v1859, 7
      %v1861 = vsub.s32 0, %v1860
      %v1862 = vrot.slane %v1627, %v1861
      %v1863 = vlaneseq
      %v1864 = vshrl.u32 %v1863, 7
      %v1865 = vsub.s32 0, %v1864
      %v1866 = vrot.slane %v1628, %v1865
      %v1867 = vlaneseq
      %v1868 = vshrl.u32 %v1867, 7
      %v1869 = vsub.s32 0, %v1868
      %v1870 = vrot.slane %v1629, %v1869
      %v1871 = vlaneseq
      %v1872 = vshrl.u32 %v1871, 7
      %v1873 = vsub.s32 0, %v1872
      %v1874 = vrot.slane %v1630, %v1873
      %v1875 = vlaneseq
      %v1876 = vshrl.u32 %v1875, 7
      %v1877 = vsub.s32 0, %v1876
      %v1878 = vrot.slane %v1631, %v1877
      %v1879 = vlaneseq
      %v1880 = vshrl.u32 %v1879, 7
      %v1881 = vsub.s32 0, %v1880
      %v1882 = vrot.slane %v1632, %v1881
      %v1883 = vlaneseq
      %v1884 = vshrl.u32 %v1883, 7
      %v1885 = vsub.s32 0, %v1884
      %v1886 = vrot.slane %v1633, %v1885
      %v1887 = vlaneseq
      %v1888 = vshrl.u32 %v1887, 7
      %v1889 = vsub.s32 0, %v1888
      %v1890 = vrot.slane %v1634, %v1889
      %vm1955 = vcmask 1040384
      %vm1956 = vsmask.f32 256
      %vm1957 = vmand %vm1955, %vm1956
      %v1958 = vsel %vm1957, %v1254, %v1638
      %v1959 = vsel %vm1957, %v1258, %v1642
      %v1960 = vsel %vm1957, %v1262, %v1646
      %v1961 = vsel %vm1957, %v1266, %v1650
      %v1962 = vsel %vm1957, %v1270, %v1654
      %v1963 = vsel %vm1957, %v1274, %v1658
      %v1964 = vsel %vm1957, %v1278, %v1662
      %v1965 = vsel %vm1957, %v1282, %v1666
      %v1966 = vsel %vm1957, %v1286, %v1670
      %v1967 = vsel %vm1957, %v1290, %v1674
      %v1968 = vsel %vm1957, %v1294, %v1678
      %v1969 = vsel %vm1957, %v1298, %v1682
      %v1970 = vsel %vm1957, %v1302, %v1686
      %v1971 = vsel %vm1957, %v1306, %v1690
      %v1972 = vsel %vm1957, %v1310, %v1694
      %v1973 = vsel %vm1957, %v1314, %v1698
      %v1974 = vsel %vm1957, %v1318, %v1702
      %v1975 = vsel %vm1957, %v1322, %v1706
      %v1976 = vsel %vm1957, %v1326, %v1710
      %v1977 = vsel %vm1957, %v1330, %v1714
      %v1978 = vsel %vm1957, %v1334, %v1718
      %v1979 = vsel %vm1957, %v1338, %v1722
      %v1980 = vsel %vm1957, %v1342, %v1726
      %v1981 = vsel %vm1957, %v1346, %v1730
      %v1982 = vsel %vm1957, %v1350, %v1734
      %v1983 = vsel %vm1957, %v1354, %v1738
      %v1984 = vsel %vm1957, %v1358, %v1742
      %v1985 = vsel %vm1957, %v1362, %v1746
      %v1986 = vsel %vm1957, %v1366, %v1750
      %v1987 = vsel %vm1957, %v1370, %v1754
      %v1988 = vsel %vm1957, %v1374, %v1758
      %v1989 = vsel %vm1957, %v1378, %v1762
      %v1990 = vsel %vm1957, %v1382, %v1766
      %v1991 = vsel %vm1957, %v1386, %v1770
      %v1992 = vsel %vm1957, %v1390, %v1774
      %v1993 = vsel %vm1957, %v1394, %v1778
      %v1994 = vsel %vm1957, %v1398, %v1782
      %v1995 = vsel %vm1957, %v1402, %v1786
      %v1996 = vsel %vm1957, %v1406, %v1790
      %v1997 = vsel %vm1957, %v1410, %v1794
      %v1998 = vsel %vm1957, %v1414, %v1798
      %v1999 = vsel %vm1957, %v1418, %v1802
      %v2000 = vsel %vm1957, %v1422, %v1806
      %v2001 = vsel %vm1957, %v1426, %v1810
      %v2002 = vsel %vm1957, %v1430, %v1814
      %v2003 = vsel %vm1957, %v1434, %v1818
      %v2004 = vsel %vm1957, %v1438, %v1822
      %v2005 = vsel %vm1957, %v1442, %v1826
      %v2006 = vsel %vm1957, %v1446, %v1830
      %v2007 = vsel %vm1957, %v1450, %v1834
      %v2008 = vsel %vm1957, %v1454, %v1838
      %v2009 = vsel %vm1957, %v1458, %v1842
      %v2010 = vsel %vm1957, %v1462, %v1846
      %v2011 = vsel %vm1957, %v1466, %v1850
      %v2012 = vsel %vm1957, %v1470, %v1854
      %v2013 = vsel %vm1957, %v1474, %v1858
      %v2014 = vsel %vm1957, %v1478, %v1862
      %v2015 = vsel %vm1957, %v1482, %v1866
      %v2016 = vsel %vm1957, %v1486, %v1870
      %v2017 = vsel %vm1957, %v1490, %v1874
      %v2018 = vsel %vm1957, %v1494, %v1878
      %v2019 = vsel %vm1957, %v1498, %v1882
      %v2020 = vsel %vm1957, %v1502, %v1886
      %v2021 = vsel %vm1957, %v1506, %v1890
      %s2022 = scalar_lea.vmem %s2, 8
      %v2023 = vld [vmem:[%s2022] sm:$0xf]
      %v2025 = vsel %vm450, %v2023, 0
      %2027 = vmatprep.subr.bf16.mxu0 0
      %2028 = vmatpush1.bf16.msra.mxu0 %v2025
      %2029 = vmatprep.subr.bf16.mxu0 0
      %2030 = vmatpush1.bf16.msra.mxu0 0
      %2031 = vmatprep.subr.bf16.mxu0 0
      %2032 = vmatpush1.bf16.msra.mxu0 0
      %2033 = vmatprep.subr.bf16.mxu0 0
      %2034 = vmatpush1.bf16.msra.mxu0 0
      %2035 = vmatprep.subr.bf16.mxu0 0
      %2036 = vmatpush1.bf16.msra.mxu0 0
      %2037 = vmatprep.subr.bf16.mxu0 0
      %2038 = vmatpush1.bf16.msra.mxu0 0
      %2039 = vmatprep.subr.bf16.mxu0 0
      %2040 = vmatpush1.bf16.msra.mxu0 0
      %2041 = vmatprep.subr.bf16.mxu0 0
      %2042 = vmatpush1.bf16.msra.mxu0 0
      %2043 = vmatprep.subr.bf16.mxu0 0
      %2044 = vmatpush1.bf16.msra.mxu0 0
      %2045 = vmatprep.subr.bf16.mxu0 0
      %2046 = vmatpush1.bf16.msra.mxu0 0
      %2047 = vmatprep.subr.bf16.mxu0 0
      %2048 = vmatpush1.bf16.msra.mxu0 0
      %2049 = vmatprep.subr.bf16.mxu0 0
      %2050 = vmatpush1.bf16.msra.mxu0 0
      %2051 = vmatprep.subr.bf16.mxu0 0
      %2052 = vmatpush1.bf16.msra.mxu0 0
      %2053 = vmatprep.subr.bf16.mxu0 0
      %2054 = vmatpush1.bf16.msra.mxu0 0
      %2055 = vmatprep.subr.bf16.mxu0 0
      %2056 = vmatpush1.bf16.msra.mxu0 0
      %2057 = vmatprep.subr.bf16.mxu0 0
      %2058 = vmatpush1.bf16.msra.mxu0 0
      %2059 = vmatprep.mubr.bf16.mxu0 0
      %2060 = vmatmul.mubr.bf16.gmra.mrb[0].mxu0 %v439
      %v2061 = vpop.f32.mrb[0].mxu0
      %v2062 = vadd.f32 0.0, %v2061
      %v2063 = vpop.f32.mrb[0].mxu0
      %v2064 = vpop.f32.mrb[0].mxu0
      %v2065 = vadd.f32 0.0, %v2064
      %v2066 = vpop.f32.mrb[0].mxu0
      %2067 = vmatprep.mubr.bf16.mxu0 0
      %2068 = vmatmul.mubr.bf16.gmra.mrb[0].mxu0 %v442
      %v2069 = vpop.f32.mrb[0].mxu0
      %v2070 = vadd.f32 0.0, %v2069
      %v2071 = vpop.f32.mrb[0].mxu0
      %v2072 = vpop.f32.mrb[0].mxu0
      %v2073 = vadd.f32 0.0, %v2072
      %v2074 = vpop.f32.mrb[0].mxu0
      %2075 = vmatprep.mubr.bf16.mxu0 0
      %2076 = vmatmul.mubr.bf16.gmra.mrb[0].mxu0 %v445
      %v2077 = vpop.f32.mrb[0].mxu0
      %v2078 = vadd.f32 0.0, %v2077
      %v2079 = vpop.f32.mrb[0].mxu0
      %v2080 = vpop.f32.mrb[0].mxu0
      %v2081 = vadd.f32 0.0, %v2080
      %v2082 = vpop.f32.mrb[0].mxu0
      %2083 = vmatprep.mubr.bf16.mxu0 0
      %2084 = vmatmul.mubr.bf16.gmra.mrb[0].mxu0 %v448
      %v2085 = vpop.f32.mrb[0].mxu0
      %v2086 = vadd.f32 0.0, %v2085
      %v2087 = vpop.f32.mrb[0].mxu0
      %v2088 = vpop.f32.mrb[0].mxu0
      %v2089 = vadd.f32 0.0, %v2088
      %v2090 = vpop.f32.mrb[0].mxu0
      %2091 = vdwg.mxu0
      %v2092 = vmul.f32 %v2062, %v524
      %v2093 = vmul.f32 %v2065, %v524
      %v2094 = vmul.f32 %v2070, %v524
      %v2095 = vmul.f32 %v2073, %v524
      %v2096 = vmul.f32 %v2078, %v524
      %v2097 = vmul.f32 %v2081, %v524
      %v2098 = vmul.f32 %v2086, %v524
      %v2099 = vmul.f32 %v2089, %v524
      %v2100 = vadd.f32 %v2092, %v539
      %v2101 = vadd.f32 %v2093, %v539
      %v2102 = vadd.f32 %v2094, %v539
      %v2103 = vadd.f32 %v2095, %v539
      %v2104 = vadd.f32 %v2096, %v539
      %v2105 = vadd.f32 %v2097, %v539
      %v2106 = vadd.f32 %v2098, %v539
      %v2107 = vadd.f32 %v2099, %v539
      %v2108 = vmax.f32 %v2100, 0.0
      %v2109 = vmax.f32 %v2101, 0.0
      %v2110 = vmax.f32 %v2102, 0.0
      %v2111 = vmax.f32 %v2103, 0.0
      %v2112 = vmax.f32 %v2104, 0.0
      %v2113 = vmax.f32 %v2105, 0.0
      %v2114 = vmax.f32 %v2106, 0.0
      %v2115 = vmax.f32 %v2107, 0.0
      %v2116 = vpack.c.bf16 %v2109, %v2108
      %v2117 = vpack.c.bf16 %v2111, %v2110
      %v2118 = vpack.c.bf16 %v2113, %v2112
      %v2119 = vpack.c.bf16 %v2115, %v2114
      %v2124 = vcombine.high %v2116, %v2116
      %v2126 = vunpack.c.l.s4 1966171168
      %v2127 = vunpack.c.0.s8 %v2126
      %v2128 = vlaneseq
      %v2129 = vshrl.u32 %v2128, 7
      %v2130 = vsub.s32 %v2127, %v2129
      %v2131 = vrot.slane %v2116, %v2130
      %v2133 = vunpack.c.l.s4 1966171168
      %v2134 = vunpack.c.0.s8 %v2133
      %v2135 = vlaneseq
      %v2136 = vshrl.u32 %v2135, 7
      %v2137 = vsub.s32 %v2134, %v2136
      %v2138 = vrot.slane %v2124, %v2137
      %v2139 = vcombine.high %v2131, %v2131
      %v2140 = vcombine.high %v2138, %v2138
      %v2142 = vunpack.c.l.s4 1966171168
      %v2143 = vunpack.c.0.s8 %v2142
      %v2144 = vlaneseq
      %v2145 = vshrl.u32 %v2144, 7
      %v2146 = vsub.s32 %v2143, %v2145
      %v2147 = vrot.slane %v2131, %v2146
      %v2149 = vunpack.c.l.s4 1966171168
      %v2150 = vunpack.c.0.s8 %v2149
      %v2151 = vlaneseq
      %v2152 = vshrl.u32 %v2151, 7
      %v2153 = vsub.s32 %v2150, %v2152
      %v2154 = vrot.slane %v2138, %v2153
      %v2156 = vunpack.c.l.s4 1966171168
      %v2157 = vunpack.c.0.s8 %v2156
      %v2158 = vlaneseq
      %v2159 = vshrl.u32 %v2158, 7
      %v2160 = vsub.s32 %v2157, %v2159
      %v2161 = vrot.slane %v2139, %v2160
      %v2163 = vunpack.c.l.s4 1966171168
      %v2164 = vunpack.c.0.s8 %v2163
      %v2165 = vlaneseq
      %v2166 = vshrl.u32 %v2165, 7
      %v2167 = vsub.s32 %v2164, %v2166
      %v2168 = vrot.slane %v2140, %v2167
      %v2169 = vcombine.high %v2147, %v2147
      %v2170 = vcombine.high %v2154, %v2154
      %v2171 = vcombine.high %v2161, %v2161
      %v2172 = vcombine.high %v2168, %v2168
      %v2173 = vcombine.high %v2117, %v2117
      %v2175 = vunpack.c.l.s4 1966171168
      %v2176 = vunpack.c.0.s8 %v2175
      %v2177 = vlaneseq
      %v2178 = vshrl.u32 %v2177, 7
      %v2179 = vsub.s32 %v2176, %v2178
      %v2180 = vrot.slane %v2117, %v2179
      %v2182 = vunpack.c.l.s4 1966171168
      %v2183 = vunpack.c.0.s8 %v2182
      %v2184 = vlaneseq
      %v2185 = vshrl.u32 %v2184, 7
      %v2186 = vsub.s32 %v2183, %v2185
      %v2187 = vrot.slane %v2173, %v2186
      %v2188 = vcombine.high %v2180, %v2180
      %v2189 = vcombine.high %v2187, %v2187
      %v2191 = vunpack.c.l.s4 1966171168
      %v2192 = vunpack.c.0.s8 %v2191
      %v2193 = vlaneseq
      %v2194 = vshrl.u32 %v2193, 7
      %v2195 = vsub.s32 %v2192, %v2194
      %v2196 = vrot.slane %v2180, %v2195
      %v2198 = vunpack.c.l.s4 1966171168
      %v2199 = vunpack.c.0.s8 %v2198
      %v2200 = vlaneseq
      %v2201 = vshrl.u32 %v2200, 7
      %v2202 = vsub.s32 %v2199, %v2201
      %v2203 = vrot.slane %v2187, %v2202
      %v2205 = vunpack.c.l.s4 1966171168
      %v2206 = vunpack.c.0.s8 %v2205
      %v2207 = vlaneseq
      %v2208 = vshrl.u32 %v2207, 7
      %v2209 = vsub.s32 %v2206, %v2208
      %v2210 = vrot.slane %v2188, %v2209
      %v2212 = vunpack.c.l.s4 1966171168
      %v2213 = vunpack.c.0.s8 %v2212
      %v2214 = vlaneseq
      %v2215 = vshrl.u32 %v2214, 7
      %v2216 = vsub.s32 %v2213, %v2215
      %v2217 = vrot.slane %v2189, %v2216
      %v2218 = vcombine.high %v2196, %v2196
      %v2219 = vcombine.high %v2203, %v2203
      %v2220 = vcombine.high %v2210, %v2210
      %v2221 = vcombine.high %v2217, %v2217
      %v2222 = vcombine.high %v2118, %v2118
      %v2224 = vunpack.c.l.s4 1966171168
      %v2225 = vunpack.c.0.s8 %v2224
      %v2226 = vlaneseq
      %v2227 = vshrl.u32 %v2226, 7
      %v2228 = vsub.s32 %v2225, %v2227
      %v2229 = vrot.slane %v2118, %v2228
      %v2231 = vunpack.c.l.s4 1966171168
      %v2232 = vunpack.c.0.s8 %v2231
      %v2233 = vlaneseq
      %v2234 = vshrl.u32 %v2233, 7
      %v2235 = vsub.s32 %v2232, %v2234
      %v2236 = vrot.slane %v2222, %v2235
      %v2237 = vcombine.high %v2229, %v2229
      %v2238 = vcombine.high %v2236, %v2236
      %v2240 = vunpack.c.l.s4 1966171168
      %v2241 = vunpack.c.0.s8 %v2240
      %v2242 = vlaneseq
      %v2243 = vshrl.u32 %v2242, 7
      %v2244 = vsub.s32 %v2241, %v2243
      %v2245 = vrot.slane %v2229, %v2244
      %v2247 = vunpack.c.l.s4 1966171168
      %v2248 = vunpack.c.0.s8 %v2247
      %v2249 = vlaneseq
      %v2250 = vshrl.u32 %v2249, 7
      %v2251 = vsub.s32 %v2248, %v2250
      %v2252 = vrot.slane %v2236, %v2251
      %v2254 = vunpack.c.l.s4 1966171168
      %v2255 = vunpack.c.0.s8 %v2254
      %v2256 = vlaneseq
      %v2257 = vshrl.u32 %v2256, 7
      %v2258 = vsub.s32 %v2255, %v2257
      %v2259 = vrot.slane %v2237, %v2258
      %v2261 = vunpack.c.l.s4 1966171168
      %v2262 = vunpack.c.0.s8 %v2261
      %v2263 = vlaneseq
      %v2264 = vshrl.u32 %v2263, 7
      %v2265 = vsub.s32 %v2262, %v2264
      %v2266 = vrot.slane %v2238, %v2265
      %v2267 = vcombine.high %v2245, %v2245
      %v2268 = vcombine.high %v2252, %v2252
      %v2269 = vcombine.high %v2259, %v2259
      %v2270 = vcombine.high %v2266, %v2266
      %v2271 = vcombine.high %v2119, %v2119
      %v2273 = vunpack.c.l.s4 1966171168
      %v2274 = vunpack.c.0.s8 %v2273
      %v2275 = vlaneseq
      %v2276 = vshrl.u32 %v2275, 7
      %v2277 = vsub.s32 %v2274, %v2276
      %v2278 = vrot.slane %v2119, %v2277
      %v2280 = vunpack.c.l.s4 1966171168
      %v2281 = vunpack.c.0.s8 %v2280
      %v2282 = vlaneseq
      %v2283 = vshrl.u32 %v2282, 7
      %v2284 = vsub.s32 %v2281, %v2283
      %v2285 = vrot.slane %v2271, %v2284
      %v2286 = vcombine.high %v2278, %v2278
      %v2287 = vcombine.high %v2285, %v2285
      %v2289 = vunpack.c.l.s4 1966171168
      %v2290 = vunpack.c.0.s8 %v2289
      %v2291 = vlaneseq
      %v2292 = vshrl.u32 %v2291, 7
      %v2293 = vsub.s32 %v2290, %v2292
      %v2294 = vrot.slane %v2278, %v2293
      %v2296 = vunpack.c.l.s4 1966171168
      %v2297 = vunpack.c.0.s8 %v2296
      %v2298 = vlaneseq
      %v2299 = vshrl.u32 %v2298, 7
      %v2300 = vsub.s32 %v2297, %v2299
      %v2301 = vrot.slane %v2285, %v2300
      %v2303 = vunpack.c.l.s4 1966171168
      %v2304 = vunpack.c.0.s8 %v2303
      %v2305 = vlaneseq
      %v2306 = vshrl.u32 %v2305, 7
      %v2307 = vsub.s32 %v2304, %v2306
      %v2308 = vrot.slane %v2286, %v2307
      %v2310 = vunpack.c.l.s4 1966171168
      %v2311 = vunpack.c.0.s8 %v2310
      %v2312 = vlaneseq
      %v2313 = vshrl.u32 %v2312, 7
      %v2314 = vsub.s32 %v2311, %v2313
      %v2315 = vrot.slane %v2287, %v2314
      %v2316 = vcombine.high %v2294, %v2294
      %v2317 = vcombine.high %v2301, %v2301
      %v2318 = vcombine.high %v2308, %v2308
      %v2319 = vcombine.high %v2315, %v2315
      %v2320 = vunpack.i.l.s16 %v2147
      %v2321 = vunpack.i.h.s16 %v2147
      %v2322 = vunpack.i.l.s16 %v2161
      %v2323 = vunpack.i.h.s16 %v2161
      %v2324 = vunpack.i.l.s16 %v2169
      %v2325 = vunpack.i.h.s16 %v2169
      %v2326 = vunpack.i.l.s16 %v2171
      %v2327 = vunpack.i.h.s16 %v2171
      %v2328 = vunpack.i.l.s16 %v2154
      %v2329 = vunpack.i.h.s16 %v2154
      %v2330 = vunpack.i.l.s16 %v2168
      %v2331 = vunpack.i.h.s16 %v2168
      %v2332 = vunpack.i.l.s16 %v2170
      %v2333 = vunpack.i.h.s16 %v2170
      %v2334 = vunpack.i.l.s16 %v2172
      %v2335 = vunpack.i.h.s16 %v2172
      %v2336 = vunpack.i.l.s16 %v2196
      %v2337 = vunpack.i.h.s16 %v2196
      %v2338 = vunpack.i.l.s16 %v2210
      %v2339 = vunpack.i.h.s16 %v2210
      %v2340 = vunpack.i.l.s16 %v2218
      %v2341 = vunpack.i.h.s16 %v2218
      %v2342 = vunpack.i.l.s16 %v2220
      %v2343 = vunpack.i.h.s16 %v2220
      %v2344 = vunpack.i.l.s16 %v2203
      %v2345 = vunpack.i.h.s16 %v2203
      %v2346 = vunpack.i.l.s16 %v2217
      %v2347 = vunpack.i.h.s16 %v2217
      %v2348 = vunpack.i.l.s16 %v2219
      %v2349 = vunpack.i.h.s16 %v2219
      %v2350 = vunpack.i.l.s16 %v2221
      %v2351 = vunpack.i.h.s16 %v2221
      %v2352 = vunpack.i.l.s16 %v2245
      %v2353 = vunpack.i.h.s16 %v2245
      %v2354 = vunpack.i.l.s16 %v2259
      %v2355 = vunpack.i.h.s16 %v2259
      %v2356 = vunpack.i.l.s16 %v2267
      %v2357 = vunpack.i.h.s16 %v2267
      %v2358 = vunpack.i.l.s16 %v2269
      %v2359 = vunpack.i.h.s16 %v2269
      %v2360 = vunpack.i.l.s16 %v2252
      %v2361 = vunpack.i.h.s16 %v2252
      %v2362 = vunpack.i.l.s16 %v2266
      %v2363 = vunpack.i.h.s16 %v2266
      %v2364 = vunpack.i.l.s16 %v2268
      %v2365 = vunpack.i.h.s16 %v2268
      %v2366 = vunpack.i.l.s16 %v2270
      %v2367 = vunpack.i.h.s16 %v2270
      %v2368 = vunpack.i.l.s16 %v2294
      %v2369 = vunpack.i.h.s16 %v2294
      %v2370 = vunpack.i.l.s16 %v2308
      %v2371 = vunpack.i.h.s16 %v2308
      %v2372 = vunpack.i.l.s16 %v2316
      %v2373 = vunpack.i.h.s16 %v2316
      %v2374 = vunpack.i.l.s16 %v2318
      %v2375 = vunpack.i.h.s16 %v2318
      %v2376 = vunpack.i.l.s16 %v2301
      %v2377 = vunpack.i.h.s16 %v2301
      %v2378 = vunpack.i.l.s16 %v2315
      %v2379 = vunpack.i.h.s16 %v2315
      %v2380 = vunpack.i.l.s16 %v2317
      %v2381 = vunpack.i.h.s16 %v2317
      %v2382 = vunpack.i.l.s16 %v2319
      %v2383 = vunpack.i.h.s16 %v2319
      %s2384 = scalar_lea.vmem %s2, 12
      %v2385 = vld [vmem:[%s2384] sm:$0xf]
      %v2387 = vsel %vm450, %v2385, 0
      %2389 = vmatprep.subr.bf16.mxu0 0
      %2390 = vmatpush1.bf16.msra.mxu0 %v2387
      %2391 = vmatprep.subr.bf16.mxu0 0
      %2392 = vmatpush1.bf16.msra.mxu0 0
      %2393 = vmatprep.subr.bf16.mxu0 0
      %2394 = vmatpush1.bf16.msra.mxu0 0
      %2395 = vmatprep.subr.bf16.mxu0 0
      %2396 = vmatpush1.bf16.msra.mxu0 0
      %2397 = vmatprep.subr.bf16.mxu0 0
      %2398 = vmatpush1.bf16.msra.mxu0 0
      %2399 = vmatprep.subr.bf16.mxu0 0
      %2400 = vmatpush1.bf16.msra.mxu0 0
      %2401 = vmatprep.subr.bf16.mxu0 0
      %2402 = vmatpush1.bf16.msra.mxu0 0
      %2403 = vmatprep.subr.bf16.mxu0 0
      %2404 = vmatpush1.bf16.msra.mxu0 0
      %2405 = vmatprep.subr.bf16.mxu0 0
      %2406 = vmatpush1.bf16.msra.mxu0 0
      %2407 = vmatprep.subr.bf16.mxu0 0
      %2408 = vmatpush1.bf16.msra.mxu0 0
      %2409 = vmatprep.subr.bf16.mxu0 0
      %2410 = vmatpush1.bf16.msra.mxu0 0
      %2411 = vmatprep.subr.bf16.mxu0 0
      %2412 = vmatpush1.bf16.msra.mxu0 0
      %2413 = vmatprep.subr.bf16.mxu0 0
      %2414 = vmatpush1.bf16.msra.mxu0 0
      %2415 = vmatprep.subr.bf16.mxu0 0
      %2416 = vmatpush1.bf16.msra.mxu0 0
      %2417 = vmatprep.subr.bf16.mxu0 0
      %2418 = vmatpush1.bf16.msra.mxu0 0
      %2419 = vmatprep.subr.bf16.mxu0 0
      %2420 = vmatpush1.bf16.msra.mxu0 0
      %2421 = vmatprep.mubr.bf16.mxu0 0
      %2422 = vmatmul.mubr.bf16.gmra.mrb[0].mxu0 %v439
      %v2423 = vpop.f32.mrb[0].mxu0
      %v2424 = vadd.f32 0.0, %v2423
      %v2425 = vpop.f32.mrb[0].mxu0
      %v2426 = vpop.f32.mrb[0].mxu0
      %v2427 = vadd.f32 0.0, %v2426
      %v2428 = vpop.f32.mrb[0].mxu0
      %2429 = vmatprep.mubr.bf16.mxu0 0
      %2430 = vmatmul.mubr.bf16.gmra.mrb[0].mxu0 %v442
      %v2431 = vpop.f32.mrb[0].mxu0
      %v2432 = vadd.f32 0.0, %v2431
      %v2433 = vpop.f32.mrb[0].mxu0
      %v2434 = vpop.f32.mrb[0].mxu0
      %v2435 = vadd.f32 0.0, %v2434
      %v2436 = vpop.f32.mrb[0].mxu0
      %2437 = vmatprep.mubr.bf16.mxu0 0
      %2438 = vmatmul.mubr.bf16.gmra.mrb[0].mxu0 %v445
      %v2439 = vpop.f32.mrb[0].mxu0
      %v2440 = vadd.f32 0.0, %v2439
      %v2441 = vpop.f32.mrb[0].mxu0
      %v2442 = vpop.f32.mrb[0].mxu0
      %v2443 = vadd.f32 0.0, %v2442
      %v2444 = vpop.f32.mrb[0].mxu0
      %2445 = vmatprep.mubr.bf16.mxu0 0
      %2446 = vmatmul.mubr.bf16.gmra.mrb[0].mxu0 %v448
      %v2447 = vpop.f32.mrb[0].mxu0
      %v2448 = vadd.f32 0.0, %v2447
      %v2449 = vpop.f32.mrb[0].mxu0
      %v2450 = vpop.f32.mrb[0].mxu0
      %v2451 = vadd.f32 0.0, %v2450
      %v2452 = vpop.f32.mrb[0].mxu0
      %2453 = vdwg.mxu0
      %v2454 = vmul.f32 %v2424, %v524
      %v2455 = vmul.f32 %v2427, %v524
      %v2456 = vmul.f32 %v2432, %v524
      %v2457 = vmul.f32 %v2435, %v524
      %v2458 = vmul.f32 %v2440, %v524
      %v2459 = vmul.f32 %v2443, %v524
      %v2460 = vmul.f32 %v2448, %v524
      %v2461 = vmul.f32 %v2451, %v524
      %v2462 = vadd.f32 %v2454, %v539
      %v2463 = vadd.f32 %v2455, %v539
      %v2464 = vadd.f32 %v2456, %v539
      %v2465 = vadd.f32 %v2457, %v539
      %v2466 = vadd.f32 %v2458, %v539
      %v2467 = vadd.f32 %v2459, %v539
      %v2468 = vadd.f32 %v2460, %v539
      %v2469 = vadd.f32 %v2461, %v539
      %v2470 = vmax.f32 %v2462, 0.0
      %v2471 = vmax.f32 %v2463, 0.0
      %v2472 = vmax.f32 %v2464, 0.0
      %v2473 = vmax.f32 %v2465, 0.0
      %v2474 = vmax.f32 %v2466, 0.0
      %v2475 = vmax.f32 %v2467, 0.0
      %v2476 = vmax.f32 %v2468, 0.0
      %v2477 = vmax.f32 %v2469, 0.0
      %v2478 = vpack.c.bf16 %v2471, %v2470
      %v2479 = vpack.c.bf16 %v2473, %v2472
      %v2480 = vpack.c.bf16 %v2475, %v2474
      %v2481 = vpack.c.bf16 %v2477, %v2476
      %v2486 = vcombine.high %v2478, %v2478
      %v2488 = vunpack.c.l.s4 1966171168
      %v2489 = vunpack.c.0.s8 %v2488
      %v2490 = vlaneseq
      %v2491 = vshrl.u32 %v2490, 7
      %v2492 = vsub.s32 %v2489, %v2491
      %v2493 = vrot.slane %v2478, %v2492
      %v2495 = vunpack.c.l.s4 1966171168
      %v2496 = vunpack.c.0.s8 %v2495
      %v2497 = vlaneseq
      %v2498 = vshrl.u32 %v2497, 7
      %v2499 = vsub.s32 %v2496, %v2498
      %v2500 = vrot.slane %v2486, %v2499
      %v2501 = vcombine.high %v2493, %v2493
      %v2502 = vcombine.high %v2500, %v2500
      %v2504 = vunpack.c.l.s4 1966171168
      %v2505 = vunpack.c.0.s8 %v2504
      %v2506 = vlaneseq
      %v2507 = vshrl.u32 %v2506, 7
      %v2508 = vsub.s32 %v2505, %v2507
      %v2509 = vrot.slane %v2493, %v2508
      %v2511 = vunpack.c.l.s4 1966171168
      %v2512 = vunpack.c.0.s8 %v2511
      %v2513 = vlaneseq
      %v2514 = vshrl.u32 %v2513, 7
      %v2515 = vsub.s32 %v2512, %v2514
      %v2516 = vrot.slane %v2500, %v2515
      %v2518 = vunpack.c.l.s4 1966171168
      %v2519 = vunpack.c.0.s8 %v2518
      %v2520 = vlaneseq
      %v2521 = vshrl.u32 %v2520, 7
      %v2522 = vsub.s32 %v2519, %v2521
      %v2523 = vrot.slane %v2501, %v2522
      %v2525 = vunpack.c.l.s4 1966171168
      %v2526 = vunpack.c.0.s8 %v2525
      %v2527 = vlaneseq
      %v2528 = vshrl.u32 %v2527, 7
      %v2529 = vsub.s32 %v2526, %v2528
      %v2530 = vrot.slane %v2502, %v2529
      %v2531 = vcombine.high %v2509, %v2509
      %v2532 = vcombine.high %v2516, %v2516
      %v2533 = vcombine.high %v2523, %v2523
      %v2534 = vcombine.high %v2530, %v2530
      %v2535 = vcombine.high %v2479, %v2479
      %v2537 = vunpack.c.l.s4 1966171168
      %v2538 = vunpack.c.0.s8 %v2537
      %v2539 = vlaneseq
      %v2540 = vshrl.u32 %v2539, 7
      %v2541 = vsub.s32 %v2538, %v2540
      %v2542 = vrot.slane %v2479, %v2541
      %v2544 = vunpack.c.l.s4 1966171168
      %v2545 = vunpack.c.0.s8 %v2544
      %v2546 = vlaneseq
      %v2547 = vshrl.u32 %v2546, 7
      %v2548 = vsub.s32 %v2545, %v2547
      %v2549 = vrot.slane %v2535, %v2548
      %v2550 = vcombine.high %v2542, %v2542
      %v2551 = vcombine.high %v2549, %v2549
      %v2553 = vunpack.c.l.s4 1966171168
      %v2554 = vunpack.c.0.s8 %v2553
      %v2555 = vlaneseq
      %v2556 = vshrl.u32 %v2555, 7
      %v2557 = vsub.s32 %v2554, %v2556
      %v2558 = vrot.slane %v2542, %v2557
      %v2560 = vunpack.c.l.s4 1966171168
      %v2561 = vunpack.c.0.s8 %v2560
      %v2562 = vlaneseq
      %v2563 = vshrl.u32 %v2562, 7
      %v2564 = vsub.s32 %v2561, %v2563
      %v2565 = vrot.slane %v2549, %v2564
      %v2567 = vunpack.c.l.s4 1966171168
      %v2568 = vunpack.c.0.s8 %v2567
      %v2569 = vlaneseq
      %v2570 = vshrl.u32 %v2569, 7
      %v2571 = vsub.s32 %v2568, %v2570
      %v2572 = vrot.slane %v2550, %v2571
      %v2574 = vunpack.c.l.s4 1966171168
      %v2575 = vunpack.c.0.s8 %v2574
      %v2576 = vlaneseq
      %v2577 = vshrl.u32 %v2576, 7
      %v2578 = vsub.s32 %v2575, %v2577
      %v2579 = vrot.slane %v2551, %v2578
      %v2580 = vcombine.high %v2558, %v2558
      %v2581 = vcombine.high %v2565, %v2565
      %v2582 = vcombine.high %v2572, %v2572
      %v2583 = vcombine.high %v2579, %v2579
      %v2584 = vcombine.high %v2480, %v2480
      %v2586 = vunpack.c.l.s4 1966171168
      %v2587 = vunpack.c.0.s8 %v2586
      %v2588 = vlaneseq
      %v2589 = vshrl.u32 %v2588, 7
      %v2590 = vsub.s32 %v2587, %v2589
      %v2591 = vrot.slane %v2480, %v2590
      %v2593 = vunpack.c.l.s4 1966171168
      %v2594 = vunpack.c.0.s8 %v2593
      %v2595 = vlaneseq
      %v2596 = vshrl.u32 %v2595, 7
      %v2597 = vsub.s32 %v2594, %v2596
      %v2598 = vrot.slane %v2584, %v2597
      %v2599 = vcombine.high %v2591, %v2591
      %v2600 = vcombine.high %v2598, %v2598
      %v2602 = vunpack.c.l.s4 1966171168
      %v2603 = vunpack.c.0.s8 %v2602
      %v2604 = vlaneseq
      %v2605 = vshrl.u32 %v2604, 7
      %v2606 = vsub.s32 %v2603, %v2605
      %v2607 = vrot.slane %v2591, %v2606
      %v2609 = vunpack.c.l.s4 1966171168
      %v2610 = vunpack.c.0.s8 %v2609
      %v2611 = vlaneseq
      %v2612 = vshrl.u32 %v2611, 7
      %v2613 = vsub.s32 %v2610, %v2612
      %v2614 = vrot.slane %v2598, %v2613
      %v2616 = vunpack.c.l.s4 1966171168
      %v2617 = vunpack.c.0.s8 %v2616
      %v2618 = vlaneseq
      %v2619 = vshrl.u32 %v2618, 7
      %v2620 = vsub.s32 %v2617, %v2619
      %v2621 = vrot.slane %v2599, %v2620
      %v2623 = vunpack.c.l.s4 1966171168
      %v2624 = vunpack.c.0.s8 %v2623
      %v2625 = vlaneseq
      %v2626 = vshrl.u32 %v2625, 7
      %v2627 = vsub.s32 %v2624, %v2626
      %v2628 = vrot.slane %v2600, %v2627
      %v2629 = vcombine.high %v2607, %v2607
      %v2630 = vcombine.high %v2614, %v2614
      %v2631 = vcombine.high %v2621, %v2621
      %v2632 = vcombine.high %v2628, %v2628
      %v2633 = vcombine.high %v2481, %v2481
      %v2635 = vunpack.c.l.s4 1966171168
      %v2636 = vunpack.c.0.s8 %v2635
      %v2637 = vlaneseq
      %v2638 = vshrl.u32 %v2637, 7
      %v2639 = vsub.s32 %v2636, %v2638
      %v2640 = vrot.slane %v2481, %v2639
      %v2642 = vunpack.c.l.s4 1966171168
      %v2643 = vunpack.c.0.s8 %v2642
      %v2644 = vlaneseq
      %v2645 = vshrl.u32 %v2644, 7
      %v2646 = vsub.s32 %v2643, %v2645
      %v2647 = vrot.slane %v2633, %v2646
      %v2648 = vcombine.high %v2640, %v2640
      %v2649 = vcombine.high %v2647, %v2647
      %v2651 = vunpack.c.l.s4 1966171168
      %v2652 = vunpack.c.0.s8 %v2651
      %v2653 = vlaneseq
      %v2654 = vshrl.u32 %v2653, 7
      %v2655 = vsub.s32 %v2652, %v2654
      %v2656 = vrot.slane %v2640, %v2655
      %v2658 = vunpack.c.l.s4 1966171168
      %v2659 = vunpack.c.0.s8 %v2658
      %v2660 = vlaneseq
      %v2661 = vshrl.u32 %v2660, 7
      %v2662 = vsub.s32 %v2659, %v2661
      %v2663 = vrot.slane %v2647, %v2662
      %v2665 = vunpack.c.l.s4 1966171168
      %v2666 = vunpack.c.0.s8 %v2665
      %v2667 = vlaneseq
      %v2668 = vshrl.u32 %v2667, 7
      %v2669 = vsub.s32 %v2666, %v2668
      %v2670 = vrot.slane %v2648, %v2669
      %v2672 = vunpack.c.l.s4 1966171168
      %v2673 = vunpack.c.0.s8 %v2672
      %v2674 = vlaneseq
      %v2675 = vshrl.u32 %v2674, 7
      %v2676 = vsub.s32 %v2673, %v2675
      %v2677 = vrot.slane %v2649, %v2676
      %v2678 = vcombine.high %v2656, %v2656
      %v2679 = vcombine.high %v2663, %v2663
      %v2680 = vcombine.high %v2670, %v2670
      %v2681 = vcombine.high %v2677, %v2677
      %v2682 = vunpack.i.l.s16 %v2509
      %v2683 = vunpack.i.h.s16 %v2509
      %v2684 = vunpack.i.l.s16 %v2523
      %v2685 = vunpack.i.h.s16 %v2523
      %v2686 = vunpack.i.l.s16 %v2531
      %v2687 = vunpack.i.h.s16 %v2531
      %v2688 = vunpack.i.l.s16 %v2533
      %v2689 = vunpack.i.h.s16 %v2533
      %v2690 = vunpack.i.l.s16 %v2516
      %v2691 = vunpack.i.h.s16 %v2516
      %v2692 = vunpack.i.l.s16 %v2530
      %v2693 = vunpack.i.h.s16 %v2530
      %v2694 = vunpack.i.l.s16 %v2532
      %v2695 = vunpack.i.h.s16 %v2532
      %v2696 = vunpack.i.l.s16 %v2534
      %v2697 = vunpack.i.h.s16 %v2534
      %v2698 = vunpack.i.l.s16 %v2558
      %v2699 = vunpack.i.h.s16 %v2558
      %v2700 = vunpack.i.l.s16 %v2572
      %v2701 = vunpack.i.h.s16 %v2572
      %v2702 = vunpack.i.l.s16 %v2580
      %v2703 = vunpack.i.h.s16 %v2580
      %v2704 = vunpack.i.l.s16 %v2582
      %v2705 = vunpack.i.h.s16 %v2582
      %v2706 = vunpack.i.l.s16 %v2565
      %v2707 = vunpack.i.h.s16 %v2565
      %v2708 = vunpack.i.l.s16 %v2579
      %v2709 = vunpack.i.h.s16 %v2579
      %v2710 = vunpack.i.l.s16 %v2581
      %v2711 = vunpack.i.h.s16 %v2581
      %v2712 = vunpack.i.l.s16 %v2583
      %v2713 = vunpack.i.h.s16 %v2583
      %v2714 = vunpack.i.l.s16 %v2607
      %v2715 = vunpack.i.h.s16 %v2607
      %v2716 = vunpack.i.l.s16 %v2621
      %v2717 = vunpack.i.h.s16 %v2621
      %v2718 = vunpack.i.l.s16 %v2629
      %v2719 = vunpack.i.h.s16 %v2629
      %v2720 = vunpack.i.l.s16 %v2631
      %v2721 = vunpack.i.h.s16 %v2631
      %v2722 = vunpack.i.l.s16 %v2614
      %v2723 = vunpack.i.h.s16 %v2614
      %v2724 = vunpack.i.l.s16 %v2628
      %v2725 = vunpack.i.h.s16 %v2628
      %v2726 = vunpack.i.l.s16 %v2630
      %v2727 = vunpack.i.h.s16 %v2630
      %v2728 = vunpack.i.l.s16 %v2632
      %v2729 = vunpack.i.h.s16 %v2632
      %v2730 = vunpack.i.l.s16 %v2656
      %v2731 = vunpack.i.h.s16 %v2656
      %v2732 = vunpack.i.l.s16 %v2670
      %v2733 = vunpack.i.h.s16 %v2670
      %v2734 = vunpack.i.l.s16 %v2678
      %v2735 = vunpack.i.h.s16 %v2678
      %v2736 = vunpack.i.l.s16 %v2680
      %v2737 = vunpack.i.h.s16 %v2680
      %v2738 = vunpack.i.l.s16 %v2663
      %v2739 = vunpack.i.h.s16 %v2663
      %v2740 = vunpack.i.l.s16 %v2677
      %v2741 = vunpack.i.h.s16 %v2677
      %v2742 = vunpack.i.l.s16 %v2679
      %v2743 = vunpack.i.h.s16 %v2679
      %v2744 = vunpack.i.l.s16 %v2681
      %v2745 = vunpack.i.h.s16 %v2681
      %v2746 = vpack.i.b16 %v2320, %v2320
      %v2747 = vpack.i.b16 %v2321, %v2321
      %v2748 = vpack.i.b16 %v2322, %v2322
      %v2749 = vpack.i.b16 %v2323, %v2323
      %v2750 = vpack.i.b16 %v2324, %v2324
      %v2751 = vpack.i.b16 %v2325, %v2325
      %v2752 = vpack.i.b16 %v2326, %v2326
      %v2753 = vpack.i.b16 %v2327, %v2327
      %v2754 = vpack.i.b16 %v2328, %v2328
      %v2755 = vpack.i.b16 %v2329, %v2329
      %v2756 = vpack.i.b16 %v2330, %v2330
      %v2757 = vpack.i.b16 %v2331, %v2331
      %v2758 = vpack.i.b16 %v2332, %v2332
      %v2759 = vpack.i.b16 %v2333, %v2333
      %v2760 = vpack.i.b16 %v2334, %v2334
      %v2761 = vpack.i.b16 %v2335, %v2335
      %v2762 = vpack.i.b16 %v2336, %v2336
      %v2763 = vpack.i.b16 %v2337, %v2337
      %v2764 = vpack.i.b16 %v2338, %v2338
      %v2765 = vpack.i.b16 %v2339, %v2339
      %v2766 = vpack.i.b16 %v2340, %v2340
      %v2767 = vpack.i.b16 %v2341, %v2341
      %v2768 = vpack.i.b16 %v2342, %v2342
      %v2769 = vpack.i.b16 %v2343, %v2343
      %v2770 = vpack.i.b16 %v2344, %v2344
      %v2771 = vpack.i.b16 %v2345, %v2345
      %v2772 = vpack.i.b16 %v2346, %v2346
      %v2773 = vpack.i.b16 %v2347, %v2347
      %v2774 = vpack.i.b16 %v2348, %v2348
      %v2775 = vpack.i.b16 %v2349, %v2349
      %v2776 = vpack.i.b16 %v2350, %v2350
      %v2777 = vpack.i.b16 %v2351, %v2351
      %v2778 = vpack.i.b16 %v2352, %v2352
      %v2779 = vpack.i.b16 %v2353, %v2353
      %v2780 = vpack.i.b16 %v2354, %v2354
      %v2781 = vpack.i.b16 %v2355, %v2355
      %v2782 = vpack.i.b16 %v2356, %v2356
      %v2783 = vpack.i.b16 %v2357, %v2357
      %v2784 = vpack.i.b16 %v2358, %v2358
      %v2785 = vpack.i.b16 %v2359, %v2359
      %v2786 = vpack.i.b16 %v2360, %v2360
      %v2787 = vpack.i.b16 %v2361, %v2361
      %v2788 = vpack.i.b16 %v2362, %v2362
      %v2789 = vpack.i.b16 %v2363, %v2363
      %v2790 = vpack.i.b16 %v2364, %v2364
      %v2791 = vpack.i.b16 %v2365, %v2365
      %v2792 = vpack.i.b16 %v2366, %v2366
      %v2793 = vpack.i.b16 %v2367, %v2367
      %v2794 = vpack.i.b16 %v2368, %v2368
      %v2795 = vpack.i.b16 %v2369, %v2369
      %v2796 = vpack.i.b16 %v2370, %v2370
      %v2797 = vpack.i.b16 %v2371, %v2371
      %v2798 = vpack.i.b16 %v2372, %v2372
      %v2799 = vpack.i.b16 %v2373, %v2373
      %v2800 = vpack.i.b16 %v2374, %v2374
      %v2801 = vpack.i.b16 %v2375, %v2375
      %v2802 = vpack.i.b16 %v2376, %v2376
      %v2803 = vpack.i.b16 %v2377, %v2377
      %v2804 = vpack.i.b16 %v2378, %v2378
      %v2805 = vpack.i.b16 %v2379, %v2379
      %v2806 = vpack.i.b16 %v2380, %v2380
      %v2807 = vpack.i.b16 %v2381, %v2381
      %v2808 = vpack.i.b16 %v2382, %v2382
      %v2809 = vpack.i.b16 %v2383, %v2383
      %v2810 = vlaneseq
      %v2811 = vshrl.u32 %v2810, 7
      %v2812 = vsub.s32 0, %v2811
      %v2813 = vrot.slane %v2746, %v2812
      %v2814 = vlaneseq
      %v2815 = vshrl.u32 %v2814, 7
      %v2816 = vsub.s32 0, %v2815
      %v2817 = vrot.slane %v2747, %v2816
      %v2818 = vlaneseq
      %v2819 = vshrl.u32 %v2818, 7
      %v2820 = vsub.s32 0, %v2819
      %v2821 = vrot.slane %v2748, %v2820
      %v2822 = vlaneseq
      %v2823 = vshrl.u32 %v2822, 7
      %v2824 = vsub.s32 0, %v2823
      %v2825 = vrot.slane %v2749, %v2824
      %v2826 = vlaneseq
      %v2827 = vshrl.u32 %v2826, 7
      %v2828 = vsub.s32 0, %v2827
      %v2829 = vrot.slane %v2750, %v2828
      %v2830 = vlaneseq
      %v2831 = vshrl.u32 %v2830, 7
      %v2832 = vsub.s32 0, %v2831
      %v2833 = vrot.slane %v2751, %v2832
      %v2834 = vlaneseq
      %v2835 = vshrl.u32 %v2834, 7
      %v2836 = vsub.s32 0, %v2835
      %v2837 = vrot.slane %v2752, %v2836
      %v2838 = vlaneseq
      %v2839 = vshrl.u32 %v2838, 7
      %v2840 = vsub.s32 0, %v2839
      %v2841 = vrot.slane %v2753, %v2840
      %v2842 = vlaneseq
      %v2843 = vshrl.u32 %v2842, 7
      %v2844 = vsub.s32 0, %v2843
      %v2845 = vrot.slane %v2754, %v2844
      %v2846 = vlaneseq
      %v2847 = vshrl.u32 %v2846, 7
      %v2848 = vsub.s32 0, %v2847
      %v2849 = vrot.slane %v2755, %v2848
      %v2850 = vlaneseq
      %v2851 = vshrl.u32 %v2850, 7
      %v2852 = vsub.s32 0, %v2851
      %v2853 = vrot.slane %v2756, %v2852
      %v2854 = vlaneseq
      %v2855 = vshrl.u32 %v2854, 7
      %v2856 = vsub.s32 0, %v2855
      %v2857 = vrot.slane %v2757, %v2856
      %v2858 = vlaneseq
      %v2859 = vshrl.u32 %v2858, 7
      %v2860 = vsub.s32 0, %v2859
      %v2861 = vrot.slane %v2758, %v2860
      %v2862 = vlaneseq
      %v2863 = vshrl.u32 %v2862, 7
      %v2864 = vsub.s32 0, %v2863
      %v2865 = vrot.slane %v2759, %v2864
      %v2866 = vlaneseq
      %v2867 = vshrl.u32 %v2866, 7
      %v2868 = vsub.s32 0, %v2867
      %v2869 = vrot.slane %v2760, %v2868
      %v2870 = vlaneseq
      %v2871 = vshrl.u32 %v2870, 7
      %v2872 = vsub.s32 0, %v2871
      %v2873 = vrot.slane %v2761, %v2872
      %v2874 = vlaneseq
      %v2875 = vshrl.u32 %v2874, 7
      %v2876 = vsub.s32 0, %v2875
      %v2877 = vrot.slane %v2762, %v2876
      %v2878 = vlaneseq
      %v2879 = vshrl.u32 %v2878, 7
      %v2880 = vsub.s32 0, %v2879
      %v2881 = vrot.slane %v2763, %v2880
      %v2882 = vlaneseq
      %v2883 = vshrl.u32 %v2882, 7
      %v2884 = vsub.s32 0, %v2883
      %v2885 = vrot.slane %v2764, %v2884
      %v2886 = vlaneseq
      %v2887 = vshrl.u32 %v2886, 7
      %v2888 = vsub.s32 0, %v2887
      %v2889 = vrot.slane %v2765, %v2888
      %v2890 = vlaneseq
      %v2891 = vshrl.u32 %v2890, 7
      %v2892 = vsub.s32 0, %v2891
      %v2893 = vrot.slane %v2766, %v2892
      %v2894 = vlaneseq
      %v2895 = vshrl.u32 %v2894, 7
      %v2896 = vsub.s32 0, %v2895
      %v2897 = vrot.slane %v2767, %v2896
      %v2898 = vlaneseq
      %v2899 = vshrl.u32 %v2898, 7
      %v2900 = vsub.s32 0, %v2899
      %v2901 = vrot.slane %v2768, %v2900
      %v2902 = vlaneseq
      %v2903 = vshrl.u32 %v2902, 7
      %v2904 = vsub.s32 0, %v2903
      %v2905 = vrot.slane %v2769, %v2904
      %v2906 = vlaneseq
      %v2907 = vshrl.u32 %v2906, 7
      %v2908 = vsub.s32 0, %v2907
      %v2909 = vrot.slane %v2770, %v2908
      %v2910 = vlaneseq
      %v2911 = vshrl.u32 %v2910, 7
      %v2912 = vsub.s32 0, %v2911
      %v2913 = vrot.slane %v2771, %v2912
      %v2914 = vlaneseq
      %v2915 = vshrl.u32 %v2914, 7
      %v2916 = vsub.s32 0, %v2915
      %v2917 = vrot.slane %v2772, %v2916
      %v2918 = vlaneseq
      %v2919 = vshrl.u32 %v2918, 7
      %v2920 = vsub.s32 0, %v2919
      %v2921 = vrot.slane %v2773, %v2920
      %v2922 = vlaneseq
      %v2923 = vshrl.u32 %v2922, 7
      %v2924 = vsub.s32 0, %v2923
      %v2925 = vrot.slane %v2774, %v2924
      %v2926 = vlaneseq
      %v2927 = vshrl.u32 %v2926, 7
      %v2928 = vsub.s32 0, %v2927
      %v2929 = vrot.slane %v2775, %v2928
      %v2930 = vlaneseq
      %v2931 = vshrl.u32 %v2930, 7
      %v2932 = vsub.s32 0, %v2931
      %v2933 = vrot.slane %v2776, %v2932
      %v2934 = vlaneseq
      %v2935 = vshrl.u32 %v2934, 7
      %v2936 = vsub.s32 0, %v2935
      %v2937 = vrot.slane %v2777, %v2936
      %v2938 = vlaneseq
      %v2939 = vshrl.u32 %v2938, 7
      %v2940 = vsub.s32 0, %v2939
      %v2941 = vrot.slane %v2778, %v2940
      %v2942 = vlaneseq
      %v2943 = vshrl.u32 %v2942, 7
      %v2944 = vsub.s32 0, %v2943
      %v2945 = vrot.slane %v2779, %v2944
      %v2946 = vlaneseq
      %v2947 = vshrl.u32 %v2946, 7
      %v2948 = vsub.s32 0, %v2947
      %v2949 = vrot.slane %v2780, %v2948
      %v2950 = vlaneseq
      %v2951 = vshrl.u32 %v2950, 7
      %v2952 = vsub.s32 0, %v2951
      %v2953 = vrot.slane %v2781, %v2952
      %v2954 = vlaneseq
      %v2955 = vshrl.u32 %v2954, 7
      %v2956 = vsub.s32 0, %v2955
      %v2957 = vrot.slane %v2782, %v2956
      %v2958 = vlaneseq
      %v2959 = vshrl.u32 %v2958, 7
      %v2960 = vsub.s32 0, %v2959
      %v2961 = vrot.slane %v2783, %v2960
      %v2962 = vlaneseq
      %v2963 = vshrl.u32 %v2962, 7
      %v2964 = vsub.s32 0, %v2963
      %v2965 = vrot.slane %v2784, %v2964
      %v2966 = vlaneseq
      %v2967 = vshrl.u32 %v2966, 7
      %v2968 = vsub.s32 0, %v2967
      %v2969 = vrot.slane %v2785, %v2968
      %v2970 = vlaneseq
      %v2971 = vshrl.u32 %v2970, 7
      %v2972 = vsub.s32 0, %v2971
      %v2973 = vrot.slane %v2786, %v2972
      %v2974 = vlaneseq
      %v2975 = vshrl.u32 %v2974, 7
      %v2976 = vsub.s32 0, %v2975
      %v2977 = vrot.slane %v2787, %v2976
      %v2978 = vlaneseq
      %v2979 = vshrl.u32 %v2978, 7
      %v2980 = vsub.s32 0, %v2979
      %v2981 = vrot.slane %v2788, %v2980
      %v2982 = vlaneseq
      %v2983 = vshrl.u32 %v2982, 7
      %v2984 = vsub.s32 0, %v2983
      %v2985 = vrot.slane %v2789, %v2984
      %v2986 = vlaneseq
      %v2987 = vshrl.u32 %v2986, 7
      %v2988 = vsub.s32 0, %v2987
      %v2989 = vrot.slane %v2790, %v2988
      %v2990 = vlaneseq
      %v2991 = vshrl.u32 %v2990, 7
      %v2992 = vsub.s32 0, %v2991
      %v2993 = vrot.slane %v2791, %v2992
      %v2994 = vlaneseq
      %v2995 = vshrl.u32 %v2994, 7
      %v2996 = vsub.s32 0, %v2995
      %v2997 = vrot.slane %v2792, %v2996
      %v2998 = vlaneseq
      %v2999 = vshrl.u32 %v2998, 7
      %v3000 = vsub.s32 0, %v2999
      %v3001 = vrot.slane %v2793, %v3000
      %v3002 = vlaneseq
      %v3003 = vshrl.u32 %v3002, 7
      %v3004 = vsub.s32 0, %v3003
      %v3005 = vrot.slane %v2794, %v3004
      %v3006 = vlaneseq
      %v3007 = vshrl.u32 %v3006, 7
      %v3008 = vsub.s32 0, %v3007
      %v3009 = vrot.slane %v2795, %v3008
      %v3010 = vlaneseq
      %v3011 = vshrl.u32 %v3010, 7
      %v3012 = vsub.s32 0, %v3011
      %v3013 = vrot.slane %v2796, %v3012
      %v3014 = vlaneseq
      %v3015 = vshrl.u32 %v3014, 7
      %v3016 = vsub.s32 0, %v3015
      %v3017 = vrot.slane %v2797, %v3016
      %v3018 = vlaneseq
      %v3019 = vshrl.u32 %v3018, 7
      %v3020 = vsub.s32 0, %v3019
      %v3021 = vrot.slane %v2798, %v3020
      %v3022 = vlaneseq
      %v3023 = vshrl.u32 %v3022, 7
      %v3024 = vsub.s32 0, %v3023
      %v3025 = vrot.slane %v2799, %v3024
      %v3026 = vlaneseq
      %v3027 = vshrl.u32 %v3026, 7
      %v3028 = vsub.s32 0, %v3027
      %v3029 = vrot.slane %v2800, %v3028
      %v3030 = vlaneseq
      %v3031 = vshrl.u32 %v3030, 7
      %v3032 = vsub.s32 0, %v3031
      %v3033 = vrot.slane %v2801, %v3032
      %v3034 = vlaneseq
      %v3035 = vshrl.u32 %v3034, 7
      %v3036 = vsub.s32 0, %v3035
      %v3037 = vrot.slane %v2802, %v3036
      %v3038 = vlaneseq
      %v3039 = vshrl.u32 %v3038, 7
      %v3040 = vsub.s32 0, %v3039
      %v3041 = vrot.slane %v2803, %v3040
      %v3042 = vlaneseq
      %v3043 = vshrl.u32 %v3042, 7
      %v3044 = vsub.s32 0, %v3043
      %v3045 = vrot.slane %v2804, %v3044
      %v3046 = vlaneseq
      %v3047 = vshrl.u32 %v3046, 7
      %v3048 = vsub.s32 0, %v3047
      %v3049 = vrot.slane %v2805, %v3048
      %v3050 = vlaneseq
      %v3051 = vshrl.u32 %v3050, 7
      %v3052 = vsub.s32 0, %v3051
      %v3053 = vrot.slane %v2806, %v3052
      %v3054 = vlaneseq
      %v3055 = vshrl.u32 %v3054, 7
      %v3056 = vsub.s32 0, %v3055
      %v3057 = vrot.slane %v2807, %v3056
      %v3058 = vlaneseq
      %v3059 = vshrl.u32 %v3058, 7
      %v3060 = vsub.s32 0, %v3059
      %v3061 = vrot.slane %v2808, %v3060
      %v3062 = vlaneseq
      %v3063 = vshrl.u32 %v3062, 7
      %v3064 = vsub.s32 0, %v3063
      %v3065 = vrot.slane %v2809, %v3064
      %v3130 = vpack.i.b16 %v2682, %v2682
      %v3131 = vpack.i.b16 %v2683, %v2683
      %v3132 = vpack.i.b16 %v2684, %v2684
      %v3133 = vpack.i.b16 %v2685, %v2685
      %v3134 = vpack.i.b16 %v2686, %v2686
      %v3135 = vpack.i.b16 %v2687, %v2687
      %v3136 = vpack.i.b16 %v2688, %v2688
      %v3137 = vpack.i.b16 %v2689, %v2689
      %v3138 = vpack.i.b16 %v2690, %v2690
      %v3139 = vpack.i.b16 %v2691, %v2691
      %v3140 = vpack.i.b16 %v2692, %v2692
      %v3141 = vpack.i.b16 %v2693, %v2693
      %v3142 = vpack.i.b16 %v2694, %v2694
      %v3143 = vpack.i.b16 %v2695, %v2695
      %v3144 = vpack.i.b16 %v2696, %v2696
      %v3145 = vpack.i.b16 %v2697, %v2697
      %v3146 = vpack.i.b16 %v2698, %v2698
      %v3147 = vpack.i.b16 %v2699, %v2699
      %v3148 = vpack.i.b16 %v2700, %v2700
      %v3149 = vpack.i.b16 %v2701, %v2701
      %v3150 = vpack.i.b16 %v2702, %v2702
      %v3151 = vpack.i.b16 %v2703, %v2703
      %v3152 = vpack.i.b16 %v2704, %v2704
      %v3153 = vpack.i.b16 %v2705, %v2705
      %v3154 = vpack.i.b16 %v2706, %v2706
      %v3155 = vpack.i.b16 %v2707, %v2707
      %v3156 = vpack.i.b16 %v2708, %v2708
      %v3157 = vpack.i.b16 %v2709, %v2709
      %v3158 = vpack.i.b16 %v2710, %v2710
      %v3159 = vpack.i.b16 %v2711, %v2711
      %v3160 = vpack.i.b16 %v2712, %v2712
      %v3161 = vpack.i.b16 %v2713, %v2713
      %v3162 = vpack.i.b16 %v2714, %v2714
      %v3163 = vpack.i.b16 %v2715, %v2715
      %v3164 = vpack.i.b16 %v2716, %v2716
      %v3165 = vpack.i.b16 %v2717, %v2717
      %v3166 = vpack.i.b16 %v2718, %v2718
      %v3167 = vpack.i.b16 %v2719, %v2719
      %v3168 = vpack.i.b16 %v2720, %v2720
      %v3169 = vpack.i.b16 %v2721, %v2721
      %v3170 = vpack.i.b16 %v2722, %v2722
      %v3171 = vpack.i.b16 %v2723, %v2723
      %v3172 = vpack.i.b16 %v2724, %v2724
      %v3173 = vpack.i.b16 %v2725, %v2725
      %v3174 = vpack.i.b16 %v2726, %v2726
      %v3175 = vpack.i.b16 %v2727, %v2727
      %v3176 = vpack.i.b16 %v2728, %v2728
      %v3177 = vpack.i.b16 %v2729, %v2729
      %v3178 = vpack.i.b16 %v2730, %v2730
      %v3179 = vpack.i.b16 %v2731, %v2731
      %v3180 = vpack.i.b16 %v2732, %v2732
      %v3181 = vpack.i.b16 %v2733, %v2733
      %v3182 = vpack.i.b16 %v2734, %v2734
      %v3183 = vpack.i.b16 %v2735, %v2735
      %v3184 = vpack.i.b16 %v2736, %v2736
      %v3185 = vpack.i.b16 %v2737, %v2737
      %v3186 = vpack.i.b16 %v2738, %v2738
      %v3187 = vpack.i.b16 %v2739, %v2739
      %v3188 = vpack.i.b16 %v2740, %v2740
      %v3189 = vpack.i.b16 %v2741, %v2741
      %v3190 = vpack.i.b16 %v2742, %v2742
      %v3191 = vpack.i.b16 %v2743, %v2743
      %v3192 = vpack.i.b16 %v2744, %v2744
      %v3193 = vpack.i.b16 %v2745, %v2745
      %v3194 = vlaneseq
      %v3195 = vshrl.u32 %v3194, 7
      %v3196 = vsub.s32 0, %v3195
      %v3197 = vrot.slane %v3130, %v3196
      %v3198 = vlaneseq
      %v3199 = vshrl.u32 %v3198, 7
      %v3200 = vsub.s32 0, %v3199
      %v3201 = vrot.slane %v3131, %v3200
      %v3202 = vlaneseq
      %v3203 = vshrl.u32 %v3202, 7
      %v3204 = vsub.s32 0, %v3203
      %v3205 = vrot.slane %v3132, %v3204
      %v3206 = vlaneseq
      %v3207 = vshrl.u32 %v3206, 7
      %v3208 = vsub.s32 0, %v3207
      %v3209 = vrot.slane %v3133, %v3208
      %v3210 = vlaneseq
      %v3211 = vshrl.u32 %v3210, 7
      %v3212 = vsub.s32 0, %v3211
      %v3213 = vrot.slane %v3134, %v3212
      %v3214 = vlaneseq
      %v3215 = vshrl.u32 %v3214, 7
      %v3216 = vsub.s32 0, %v3215
      %v3217 = vrot.slane %v3135, %v3216
      %v3218 = vlaneseq
      %v3219 = vshrl.u32 %v3218, 7
      %v3220 = vsub.s32 0, %v3219
      %v3221 = vrot.slane %v3136, %v3220
      %v3222 = vlaneseq
      %v3223 = vshrl.u32 %v3222, 7
      %v3224 = vsub.s32 0, %v3223
      %v3225 = vrot.slane %v3137, %v3224
      %v3226 = vlaneseq
      %v3227 = vshrl.u32 %v3226, 7
      %v3228 = vsub.s32 0, %v3227
      %v3229 = vrot.slane %v3138, %v3228
      %v3230 = vlaneseq
      %v3231 = vshrl.u32 %v3230, 7
      %v3232 = vsub.s32 0, %v3231
      %v3233 = vrot.slane %v3139, %v3232
      %v3234 = vlaneseq
      %v3235 = vshrl.u32 %v3234, 7
      %v3236 = vsub.s32 0, %v3235
      %v3237 = vrot.slane %v3140, %v3236
      %v3238 = vlaneseq
      %v3239 = vshrl.u32 %v3238, 7
      %v3240 = vsub.s32 0, %v3239
      %v3241 = vrot.slane %v3141, %v3240
      %v3242 = vlaneseq
      %v3243 = vshrl.u32 %v3242, 7
      %v3244 = vsub.s32 0, %v3243
      %v3245 = vrot.slane %v3142, %v3244
      %v3246 = vlaneseq
      %v3247 = vshrl.u32 %v3246, 7
      %v3248 = vsub.s32 0, %v3247
      %v3249 = vrot.slane %v3143, %v3248
      %v3250 = vlaneseq
      %v3251 = vshrl.u32 %v3250, 7
      %v3252 = vsub.s32 0, %v3251
      %v3253 = vrot.slane %v3144, %v3252
      %v3254 = vlaneseq
      %v3255 = vshrl.u32 %v3254, 7
      %v3256 = vsub.s32 0, %v3255
      %v3257 = vrot.slane %v3145, %v3256
      %v3258 = vlaneseq
      %v3259 = vshrl.u32 %v3258, 7
      %v3260 = vsub.s32 0, %v3259
      %v3261 = vrot.slane %v3146, %v3260
      %v3262 = vlaneseq
      %v3263 = vshrl.u32 %v3262, 7
      %v3264 = vsub.s32 0, %v3263
      %v3265 = vrot.slane %v3147, %v3264
      %v3266 = vlaneseq
      %v3267 = vshrl.u32 %v3266, 7
      %v3268 = vsub.s32 0, %v3267
      %v3269 = vrot.slane %v3148, %v3268
      %v3270 = vlaneseq
      %v3271 = vshrl.u32 %v3270, 7
      %v3272 = vsub.s32 0, %v3271
      %v3273 = vrot.slane %v3149, %v3272
      %v3274 = vlaneseq
      %v3275 = vshrl.u32 %v3274, 7
      %v3276 = vsub.s32 0, %v3275
      %v3277 = vrot.slane %v3150, %v3276
      %v3278 = vlaneseq
      %v3279 = vshrl.u32 %v3278, 7
      %v3280 = vsub.s32 0, %v3279
      %v3281 = vrot.slane %v3151, %v3280
      %v3282 = vlaneseq
      %v3283 = vshrl.u32 %v3282, 7
      %v3284 = vsub.s32 0, %v3283
      %v3285 = vrot.slane %v3152, %v3284
      %v3286 = vlaneseq
      %v3287 = vshrl.u32 %v3286, 7
      %v3288 = vsub.s32 0, %v3287
      %v3289 = vrot.slane %v3153, %v3288
      %v3290 = vlaneseq
      %v3291 = vshrl.u32 %v3290, 7
      %v3292 = vsub.s32 0, %v3291
      %v3293 = vrot.slane %v3154, %v3292
      %v3294 = vlaneseq
      %v3295 = vshrl.u32 %v3294, 7
      %v3296 = vsub.s32 0, %v3295
      %v3297 = vrot.slane %v3155, %v3296
      %v3298 = vlaneseq
      %v3299 = vshrl.u32 %v3298, 7
      %v3300 = vsub.s32 0, %v3299
      %v3301 = vrot.slane %v3156, %v3300
      %v3302 = vlaneseq
      %v3303 = vshrl.u32 %v3302, 7
      %v3304 = vsub.s32 0, %v3303
      %v3305 = vrot.slane %v3157, %v3304
      %v3306 = vlaneseq
      %v3307 = vshrl.u32 %v3306, 7
      %v3308 = vsub.s32 0, %v3307
      %v3309 = vrot.slane %v3158, %v3308
      %v3310 = vlaneseq
      %v3311 = vshrl.u32 %v3310, 7
      %v3312 = vsub.s32 0, %v3311
      %v3313 = vrot.slane %v3159, %v3312
      %v3314 = vlaneseq
      %v3315 = vshrl.u32 %v3314, 7
      %v3316 = vsub.s32 0, %v3315
      %v3317 = vrot.slane %v3160, %v3316
      %v3318 = vlaneseq
      %v3319 = vshrl.u32 %v3318, 7
      %v3320 = vsub.s32 0, %v3319
      %v3321 = vrot.slane %v3161, %v3320
      %v3322 = vlaneseq
      %v3323 = vshrl.u32 %v3322, 7
      %v3324 = vsub.s32 0, %v3323
      %v3325 = vrot.slane %v3162, %v3324
      %v3326 = vlaneseq
      %v3327 = vshrl.u32 %v3326, 7
      %v3328 = vsub.s32 0, %v3327
      %v3329 = vrot.slane %v3163, %v3328
      %v3330 = vlaneseq
      %v3331 = vshrl.u32 %v3330, 7
      %v3332 = vsub.s32 0, %v3331
      %v3333 = vrot.slane %v3164, %v3332
      %v3334 = vlaneseq
      %v3335 = vshrl.u32 %v3334, 7
      %v3336 = vsub.s32 0, %v3335
      %v3337 = vrot.slane %v3165, %v3336
      %v3338 = vlaneseq
      %v3339 = vshrl.u32 %v3338, 7
      %v3340 = vsub.s32 0, %v3339
      %v3341 = vrot.slane %v3166, %v3340
      %v3342 = vlaneseq
      %v3343 = vshrl.u32 %v3342, 7
      %v3344 = vsub.s32 0, %v3343
      %v3345 = vrot.slane %v3167, %v3344
      %v3346 = vlaneseq
      %v3347 = vshrl.u32 %v3346, 7
      %v3348 = vsub.s32 0, %v3347
      %v3349 = vrot.slane %v3168, %v3348
      %v3350 = vlaneseq
      %v3351 = vshrl.u32 %v3350, 7
      %v3352 = vsub.s32 0, %v3351
      %v3353 = vrot.slane %v3169, %v3352
      %v3354 = vlaneseq
      %v3355 = vshrl.u32 %v3354, 7
      %v3356 = vsub.s32 0, %v3355
      %v3357 = vrot.slane %v3170, %v3356
      %v3358 = vlaneseq
      %v3359 = vshrl.u32 %v3358, 7
      %v3360 = vsub.s32 0, %v3359
      %v3361 = vrot.slane %v3171, %v3360
      %v3362 = vlaneseq
      %v3363 = vshrl.u32 %v3362, 7
      %v3364 = vsub.s32 0, %v3363
      %v3365 = vrot.slane %v3172, %v3364
      %v3366 = vlaneseq
      %v3367 = vshrl.u32 %v3366, 7
      %v3368 = vsub.s32 0, %v3367
      %v3369 = vrot.slane %v3173, %v3368
      %v3370 = vlaneseq
      %v3371 = vshrl.u32 %v3370, 7
      %v3372 = vsub.s32 0, %v3371
      %v3373 = vrot.slane %v3174, %v3372
      %v3374 = vlaneseq
      %v3375 = vshrl.u32 %v3374, 7
      %v3376 = vsub.s32 0, %v3375
      %v3377 = vrot.slane %v3175, %v3376
      %v3378 = vlaneseq
      %v3379 = vshrl.u32 %v3378, 7
      %v3380 = vsub.s32 0, %v3379
      %v3381 = vrot.slane %v3176, %v3380
      %v3382 = vlaneseq
      %v3383 = vshrl.u32 %v3382, 7
      %v3384 = vsub.s32 0, %v3383
      %v3385 = vrot.slane %v3177, %v3384
      %v3386 = vlaneseq
      %v3387 = vshrl.u32 %v3386, 7
      %v3388 = vsub.s32 0, %v3387
      %v3389 = vrot.slane %v3178, %v3388
      %v3390 = vlaneseq
      %v3391 = vshrl.u32 %v3390, 7
      %v3392 = vsub.s32 0, %v3391
      %v3393 = vrot.slane %v3179, %v3392
      %v3394 = vlaneseq
      %v3395 = vshrl.u32 %v3394, 7
      %v3396 = vsub.s32 0, %v3395
      %v3397 = vrot.slane %v3180, %v3396
      %v3398 = vlaneseq
      %v3399 = vshrl.u32 %v3398, 7
      %v3400 = vsub.s32 0, %v3399
      %v3401 = vrot.slane %v3181, %v3400
      %v3402 = vlaneseq
      %v3403 = vshrl.u32 %v3402, 7
      %v3404 = vsub.s32 0, %v3403
      %v3405 = vrot.slane %v3182, %v3404
      %v3406 = vlaneseq
      %v3407 = vshrl.u32 %v3406, 7
      %v3408 = vsub.s32 0, %v3407
      %v3409 = vrot.slane %v3183, %v3408
      %v3410 = vlaneseq
      %v3411 = vshrl.u32 %v3410, 7
      %v3412 = vsub.s32 0, %v3411
      %v3413 = vrot.slane %v3184, %v3412
      %v3414 = vlaneseq
      %v3415 = vshrl.u32 %v3414, 7
      %v3416 = vsub.s32 0, %v3415
      %v3417 = vrot.slane %v3185, %v3416
      %v3418 = vlaneseq
      %v3419 = vshrl.u32 %v3418, 7
      %v3420 = vsub.s32 0, %v3419
      %v3421 = vrot.slane %v3186, %v3420
      %v3422 = vlaneseq
      %v3423 = vshrl.u32 %v3422, 7
      %v3424 = vsub.s32 0, %v3423
      %v3425 = vrot.slane %v3187, %v3424
      %v3426 = vlaneseq
      %v3427 = vshrl.u32 %v3426, 7
      %v3428 = vsub.s32 0, %v3427
      %v3429 = vrot.slane %v3188, %v3428
      %v3430 = vlaneseq
      %v3431 = vshrl.u32 %v3430, 7
      %v3432 = vsub.s32 0, %v3431
      %v3433 = vrot.slane %v3189, %v3432
      %v3434 = vlaneseq
      %v3435 = vshrl.u32 %v3434, 7
      %v3436 = vsub.s32 0, %v3435
      %v3437 = vrot.slane %v3190, %v3436
      %v3438 = vlaneseq
      %v3439 = vshrl.u32 %v3438, 7
      %v3440 = vsub.s32 0, %v3439
      %v3441 = vrot.slane %v3191, %v3440
      %v3442 = vlaneseq
      %v3443 = vshrl.u32 %v3442, 7
      %v3444 = vsub.s32 0, %v3443
      %v3445 = vrot.slane %v3192, %v3444
      %v3446 = vlaneseq
      %v3447 = vshrl.u32 %v3446, 7
      %v3448 = vsub.s32 0, %v3447
      %v3449 = vrot.slane %v3193, %v3448
      %v3514 = vsel %vm1957, %v2813, %v3197
      %v3515 = vsel %vm1957, %v2817, %v3201
      %v3516 = vsel %vm1957, %v2821, %v3205
      %v3517 = vsel %vm1957, %v2825, %v3209
      %v3518 = vsel %vm1957, %v2829, %v3213
      %v3519 = vsel %vm1957, %v2833, %v3217
      %v3520 = vsel %vm1957, %v2837, %v3221
      %v3521 = vsel %vm1957, %v2841, %v3225
      %v3522 = vsel %vm1957, %v2845, %v3229
      %v3523 = vsel %vm1957, %v2849, %v3233
      %v3524 = vsel %vm1957, %v2853, %v3237
      %v3525 = vsel %vm1957, %v2857, %v3241
      %v3526 = vsel %vm1957, %v2861, %v3245
      %v3527 = vsel %vm1957, %v2865, %v3249
      %v3528 = vsel %vm1957, %v2869, %v3253
      %v3529 = vsel %vm1957, %v2873, %v3257
      %v3530 = vsel %vm1957, %v2877, %v3261
      %v3531 = vsel %vm1957, %v2881, %v3265
      %v3532 = vsel %vm1957, %v2885, %v3269
      %v3533 = vsel %vm1957, %v2889, %v3273
      %v3534 = vsel %vm1957, %v2893, %v3277
      %v3535 = vsel %vm1957, %v2897, %v3281
      %v3536 = vsel %vm1957, %v2901, %v3285
      %v3537 = vsel %vm1957, %v2905, %v3289
      %v3538 = vsel %vm1957, %v2909, %v3293
      %v3539 = vsel %vm1957, %v2913, %v3297
      %v3540 = vsel %vm1957, %v2917, %v3301
      %v3541 = vsel %vm1957, %v2921, %v3305
      %v3542 = vsel %vm1957, %v2925, %v3309
      %v3543 = vsel %vm1957, %v2929, %v3313
      %v3544 = vsel %vm1957, %v2933, %v3317
      %v3545 = vsel %vm1957, %v2937, %v3321
      %v3546 = vsel %vm1957, %v2941, %v3325
      %v3547 = vsel %vm1957, %v2945, %v3329
      %v3548 = vsel %vm1957, %v2949, %v3333
      %v3549 = vsel %vm1957, %v2953, %v3337
      %v3550 = vsel %vm1957, %v2957, %v3341
      %v3551 = vsel %vm1957, %v2961, %v3345
      %v3552 = vsel %vm1957, %v2965, %v3349
      %v3553 = vsel %vm1957, %v2969, %v3353
      %v3554 = vsel %vm1957, %v2973, %v3357
      %v3555 = vsel %vm1957, %v2977, %v3361
      %v3556 = vsel %vm1957, %v2981, %v3365
      %v3557 = vsel %vm1957, %v2985, %v3369
      %v3558 = vsel %vm1957, %v2989, %v3373
      %v3559 = vsel %vm1957, %v2993, %v3377
      %v3560 = vsel %vm1957, %v2997, %v3381
      %v3561 = vsel %vm1957, %v3001, %v3385
      %v3562 = vsel %vm1957, %v3005, %v3389
      %v3563 = vsel %vm1957, %v3009, %v3393
      %v3564 = vsel %vm1957, %v3013, %v3397
      %v3565 = vsel %vm1957, %v3017, %v3401
      %v3566 = vsel %vm1957, %v3021, %v3405
      %v3567 = vsel %vm1957, %v3025, %v3409
      %v3568 = vsel %vm1957, %v3029, %v3413
      %v3569 = vsel %vm1957, %v3033, %v3417
      %v3570 = vsel %vm1957, %v3037, %v3421
      %v3571 = vsel %vm1957, %v3041, %v3425
      %v3572 = vsel %vm1957, %v3045, %v3429
      %v3573 = vsel %vm1957, %v3049, %v3433
      %v3574 = vsel %vm1957, %v3053, %v3437
      %v3575 = vsel %vm1957, %v3057, %v3441
      %v3576 = vsel %vm1957, %v3061, %v3445
      %v3577 = vsel %vm1957, %v3065, %v3449
      %vm3578 = vcmask 125952
      %3579 = vst.msk [vmem:[#allocation2] sm:$0xf] %vm3578, 0
      %3580 = vst.msk [vmem:[#allocation2 + $0x4] sm:$0xf] %vm3578, 0
      %vm3581 = vcmask 122880
      %3582 = vst.msk [vmem:[#allocation2 + $0x8] sm:$0x1] %vm3581, 0
      %3583 = vst.msk [vmem:[#allocation2 + $0xc] sm:$0xf] %vm3578, 0
      %3584 = vst.msk [vmem:[#allocation2 + $0x10] sm:$0xf] %vm3578, 0
      %3585 = vst.msk [vmem:[#allocation2 + $0x14] sm:$0x1] %vm3581, 0
      %3586 = vst.msk [vmem:[#allocation2 + $0x18] sm:$0xf] %vm3578, 0
      %3587 = vst.msk [vmem:[#allocation2 + $0x1c] sm:$0xf] %vm3578, 0
      %3588 = vst.msk [vmem:[#allocation2 + $0x20] sm:$0x1] %vm3581, 0
      %3589 = vst.msk [vmem:[#allocation2 + $0x24] sm:$0xf] %vm3578, 0
      %3590 = vst.msk [vmem:[#allocation2 + $0x28] sm:$0xf] %vm3578, 0
      %3591 = vst.msk [vmem:[#allocation2 + $0x2c] sm:$0x1] %vm3581, 0
      %3592 = vst.msk [vmem:[#allocation2 + $0x30] sm:$0xf] %vm3578, 0
      %3593 = vst.msk [vmem:[#allocation2 + $0x34] sm:$0xf] %vm3578, 0
      %3594 = vst.msk [vmem:[#allocation2 + $0x38] sm:$0x1] %vm3581, 0
      %3595 = vst.msk [vmem:[#allocation2 + $0x3c] sm:$0xf] %vm3578, 0
      %3596 = vst.msk [vmem:[#allocation2 + $0x40] sm:$0xf] %vm3578, 0
      %3597 = vst.msk [vmem:[#allocation2 + $0x44] sm:$0x1] %vm3581, 0
      %3598 = vst.msk [vmem:[#allocation2 + $0x48] sm:$0xf] %vm3578, 0
      %3599 = vst.msk [vmem:[#allocation2 + $0x4c] sm:$0xf] %vm3578, 0
      %3600 = vst.msk [vmem:[#allocation2 + $0x50] sm:$0x1] %vm3581, 0
      %3601 = vst.msk [vmem:[#allocation2 + $0x54] sm:$0xf] %vm3578, 0
      %3602 = vst.msk [vmem:[#allocation2 + $0x58] sm:$0xf] %vm3578, 0
      %3603 = vst.msk [vmem:[#allocation2 + $0x5c] sm:$0x1] %vm3581, 0
      %3604 = vst.msk [vmem:[#allocation2 + $0x60] sm:$0xf] %vm3578, 0
      %3605 = vst.msk [vmem:[#allocation2 + $0x64] sm:$0xf] %vm3578, 0
      %3606 = vst.msk [vmem:[#allocation2 + $0x68] sm:$0x1] %vm3581, 0
      %3607 = vst.msk [vmem:[#allocation2 + $0x6c] sm:$0xf] %vm3578, 0
      %3608 = vst.msk [vmem:[#allocation2 + $0x70] sm:$0xf] %vm3578, 0
      %3609 = vst.msk [vmem:[#allocation2 + $0x74] sm:$0x1] %vm3581, 0
      %3610 = vst.msk [vmem:[#allocation2 + $0x78] sm:$0xf] %vm3578, 0
      %3611 = vst.msk [vmem:[#allocation2 + $0x7c] sm:$0xf] %vm3578, 0
      %3612 = vst.msk [vmem:[#allocation2 + $0x80] sm:$0x1] %vm3581, 0
      %3613 = vst.msk [vmem:[#allocation2 + $0x84] sm:$0xf] %vm3578, 0
      %3614 = vst.msk [vmem:[#allocation2 + $0x88] sm:$0xf] %vm3578, 0
      %3615 = vst.msk [vmem:[#allocation2 + $0x8c] sm:$0x1] %vm3581, 0
      %3616 = vst.msk [vmem:[#allocation2 + $0x90] sm:$0xf] %vm3578, 0
      %3617 = vst.msk [vmem:[#allocation2 + $0x94] sm:$0xf] %vm3578, 0
      %3618 = vst.msk [vmem:[#allocation2 + $0x98] sm:$0x1] %vm3581, 0
      %3619 = vst.msk [vmem:[#allocation2 + $0x9c] sm:$0xf] %vm3578, 0
      %3620 = vst.msk [vmem:[#allocation2 + $0xa0] sm:$0xf] %vm3578, 0
      %3621 = vst.msk [vmem:[#allocation2 + $0xa4] sm:$0x1] %vm3581, 0
      %3622 = vst.msk [vmem:[#allocation2 + $0xa8] sm:$0xf] %vm3578, 0
      %3623 = vst.msk [vmem:[#allocation2 + $0xac] sm:$0xf] %vm3578, 0
      %3624 = vst.msk [vmem:[#allocation2 + $0xb0] sm:$0x1] %vm3581, 0
      %3625 = vst.msk [vmem:[#allocation2 + $0xb4] sm:$0xf] %vm3578, 0
      %3626 = vst.msk [vmem:[#allocation2 + $0xb8] sm:$0xf] %vm3578, 0
      %3627 = vst.msk [vmem:[#allocation2 + $0xbc] sm:$0x1] %vm3581, 0
      %3628 = vst.msk [vmem:[#allocation2 + $0xc0] sm:$0xf] %vm3578, 0
      %3629 = vst.msk [vmem:[#allocation2 + $0xc4] sm:$0xf] %vm3578, 0
      %3630 = vst.msk [vmem:[#allocation2 + $0xc8] sm:$0x1] %vm3581, 0
      %3631 = vst.msk [vmem:[#allocation2 + $0xcc] sm:$0xf] %vm3578, 0
      %3632 = vst.msk [vmem:[#allocation2 + $0xd0] sm:$0xf] %vm3578, 0
      %3633 = vst.msk [vmem:[#allocation2 + $0xd4] sm:$0x1] %vm3581, 0
      %v3762 = vcombine.low %v1958, %v1960
      %v3763 = vcombine.low %v1959, %v1961
      %v3765 = vunpack.c.l.s4 1935823168
      %v3766 = vunpack.c.0.s8 %v3765
      %v3767 = vlaneseq
      %v3768 = vshrl.u32 %v3767, 7
      %v3769 = vsub.s32 %v3766, %v3768
      %v3770 = vrot.slane %v3762, %v3769
      %v3772 = vunpack.c.l.s4 1935823168
      %v3773 = vunpack.c.0.s8 %v3772
      %v3774 = vlaneseq
      %v3775 = vshrl.u32 %v3774, 7
      %v3776 = vsub.s32 %v3773, %v3775
      %v3777 = vrot.slane %v3763, %v3776
      %v3778 = vcombine.low %v3770, %v3777
      %v3780 = vunpack.c.l.s4 1935823168
      %v3781 = vunpack.c.0.s8 %v3780
      %v3782 = vlaneseq
      %v3783 = vshrl.u32 %v3782, 7
      %v3784 = vsub.s32 %v3781, %v3783
      %v3785 = vrot.slane %v3778, %v3784
      %v3786 = vcombine.low %v1962, %v1964
      %v3787 = vcombine.low %v1963, %v1965
      %v3789 = vunpack.c.l.s4 1935823168
      %v3790 = vunpack.c.0.s8 %v3789
      %v3791 = vlaneseq
      %v3792 = vshrl.u32 %v3791, 7
      %v3793 = vsub.s32 %v3790, %v3792
      %v3794 = vrot.slane %v3786, %v3793
      %v3796 = vunpack.c.l.s4 1935823168
      %v3797 = vunpack.c.0.s8 %v3796
      %v3798 = vlaneseq
      %v3799 = vshrl.u32 %v3798, 7
      %v3800 = vsub.s32 %v3797, %v3799
      %v3801 = vrot.slane %v3787, %v3800
      %v3802 = vcombine.low %v3794, %v3801
      %v3804 = vunpack.c.l.s4 1935823168
      %v3805 = vunpack.c.0.s8 %v3804
      %v3806 = vlaneseq
      %v3807 = vshrl.u32 %v3806, 7
      %v3808 = vsub.s32 %v3805, %v3807
      %v3809 = vrot.slane %v3802, %v3808
      %v3810 = vcombine.low %v3514, %v3516
      %v3811 = vcombine.low %v3515, %v3517
      %v3813 = vunpack.c.l.s4 1935823168
      %v3814 = vunpack.c.0.s8 %v3813
      %v3815 = vlaneseq
      %v3816 = vshrl.u32 %v3815, 7
      %v3817 = vsub.s32 %v3814, %v3816
      %v3818 = vrot.slane %v3810, %v3817
      %v3820 = vunpack.c.l.s4 1935823168
      %v3821 = vunpack.c.0.s8 %v3820
      %v3822 = vlaneseq
      %v3823 = vshrl.u32 %v3822, 7
      %v3824 = vsub.s32 %v3821, %v3823
      %v3825 = vrot.slane %v3811, %v3824
      %v3826 = vcombine.low %v3818, %v3825
      %v3828 = vunpack.c.l.s4 1935823168
      %v3829 = vunpack.c.0.s8 %v3828
      %v3830 = vlaneseq
      %v3831 = vshrl.u32 %v3830, 7
      %v3832 = vsub.s32 %v3829, %v3831
      %v3833 = vrot.slane %v3826, %v3832
      %v3834 = vcombine.low %v3518, %v3520
      %v3835 = vcombine.low %v3519, %v3521
      %v3837 = vunpack.c.l.s4 1935823168
      %v3838 = vunpack.c.0.s8 %v3837
      %v3839 = vlaneseq
      %v3840 = vshrl.u32 %v3839, 7
      %v3841 = vsub.s32 %v3838, %v3840
      %v3842 = vrot.slane %v3834, %v3841
      %v3844 = vunpack.c.l.s4 1935823168
      %v3845 = vunpack.c.0.s8 %v3844
      %v3846 = vlaneseq
      %v3847 = vshrl.u32 %v3846, 7
      %v3848 = vsub.s32 %v3845, %v3847
      %v3849 = vrot.slane %v3835, %v3848
      %v3850 = vcombine.low %v3842, %v3849
      %v3852 = vunpack.c.l.s4 1935823168
      %v3853 = vunpack.c.0.s8 %v3852
      %v3854 = vlaneseq
      %v3855 = vshrl.u32 %v3854, 7
      %v3856 = vsub.s32 %v3853, %v3855
      %v3857 = vrot.slane %v3850, %v3856
      %v3858 = vcombine.low %v1966, %v1968
      %v3859 = vcombine.low %v1967, %v1969
      %v3861 = vunpack.c.l.s4 1935823168
      %v3862 = vunpack.c.0.s8 %v3861
      %v3863 = vlaneseq
      %v3864 = vshrl.u32 %v3863, 7
      %v3865 = vsub.s32 %v3862, %v3864
      %v3866 = vrot.slane %v3858, %v3865
      %v3868 = vunpack.c.l.s4 1935823168
      %v3869 = vunpack.c.0.s8 %v3868
      %v3870 = vlaneseq
      %v3871 = vshrl.u32 %v3870, 7
      %v3872 = vsub.s32 %v3869, %v3871
      %v3873 = vrot.slane %v3859, %v3872
      %v3874 = vcombine.low %v3866, %v3873
      %v3876 = vunpack.c.l.s4 1935823168
      %v3877 = vunpack.c.0.s8 %v3876
      %v3878 = vlaneseq
      %v3879 = vshrl.u32 %v3878, 7
      %v3880 = vsub.s32 %v3877, %v3879
      %v3881 = vrot.slane %v3874, %v3880
      %v3882 = vcombine.low %v1970, %v1972
      %v3883 = vcombine.low %v1971, %v1973
      %v3885 = vunpack.c.l.s4 1935823168
      %v3886 = vunpack.c.0.s8 %v3885
      %v3887 = vlaneseq
      %v3888 = vshrl.u32 %v3887, 7
      %v3889 = vsub.s32 %v3886, %v3888
      %v3890 = vrot.slane %v3882, %v3889
      %v3892 = vunpack.c.l.s4 1935823168
      %v3893 = vunpack.c.0.s8 %v3892
      %v3894 = vlaneseq
      %v3895 = vshrl.u32 %v3894, 7
      %v3896 = vsub.s32 %v3893, %v3895
      %v3897 = vrot.slane %v3883, %v3896
      %v3898 = vcombine.low %v3890, %v3897
      %v3900 = vunpack.c.l.s4 1935823168
      %v3901 = vunpack.c.0.s8 %v3900
      %v3902 = vlaneseq
      %v3903 = vshrl.u32 %v3902, 7
      %v3904 = vsub.s32 %v3901, %v3903
      %v3905 = vrot.slane %v3898, %v3904
      %v3906 = vcombine.low %v3522, %v3524
      %v3907 = vcombine.low %v3523, %v3525
      %v3909 = vunpack.c.l.s4 1935823168
      %v3910 = vunpack.c.0.s8 %v3909
      %v3911 = vlaneseq
      %v3912 = vshrl.u32 %v3911, 7
      %v3913 = vsub.s32 %v3910, %v3912
      %v3914 = vrot.slane %v3906, %v3913
      %v3916 = vunpack.c.l.s4 1935823168
      %v3917 = vunpack.c.0.s8 %v3916
      %v3918 = vlaneseq
      %v3919 = vshrl.u32 %v3918, 7
      %v3920 = vsub.s32 %v3917, %v3919
      %v3921 = vrot.slane %v3907, %v3920
      %v3922 = vcombine.low %v3914, %v3921
      %v3924 = vunpack.c.l.s4 1935823168
      %v3925 = vunpack.c.0.s8 %v3924
      %v3926 = vlaneseq
      %v3927 = vshrl.u32 %v3926, 7
      %v3928 = vsub.s32 %v3925, %v3927
      %v3929 = vrot.slane %v3922, %v3928
      %v3930 = vcombine.low %v3526, %v3528
      %v3931 = vcombine.low %v3527, %v3529
      %v3933 = vunpack.c.l.s4 1935823168
      %v3934 = vunpack.c.0.s8 %v3933
      %v3935 = vlaneseq
      %v3936 = vshrl.u32 %v3935, 7
      %v3937 = vsub.s32 %v3934, %v3936
      %v3938 = vrot.slane %v3930, %v3937
      %v3940 = vunpack.c.l.s4 1935823168
      %v3941 = vunpack.c.0.s8 %v3940
      %v3942 = vlaneseq
      %v3943 = vshrl.u32 %v3942, 7
      %v3944 = vsub.s32 %v3941, %v3943
      %v3945 = vrot.slane %v3931, %v3944
      %v3946 = vcombine.low %v3938, %v3945
      %v3948 = vunpack.c.l.s4 1935823168
      %v3949 = vunpack.c.0.s8 %v3948
      %v3950 = vlaneseq
      %v3951 = vshrl.u32 %v3950, 7
      %v3952 = vsub.s32 %v3949, %v3951
      %v3953 = vrot.slane %v3946, %v3952
      %v3954 = vcombine.low %v1974, %v1976
      %v3955 = vcombine.low %v1975, %v1977
      %v3957 = vunpack.c.l.s4 1935823168
      %v3958 = vunpack.c.0.s8 %v3957
      %v3959 = vlaneseq
      %v3960 = vshrl.u32 %v3959, 7
      %v3961 = vsub.s32 %v3958, %v3960
      %v3962 = vrot.slane %v3954, %v3961
      %v3964 = vunpack.c.l.s4 1935823168
      %v3965 = vunpack.c.0.s8 %v3964
      %v3966 = vlaneseq
      %v3967 = vshrl.u32 %v3966, 7
      %v3968 = vsub.s32 %v3965, %v3967
      %v3969 = vrot.slane %v3955, %v3968
      %v3970 = vcombine.low %v3962, %v3969
      %v3972 = vunpack.c.l.s4 1935823168
      %v3973 = vunpack.c.0.s8 %v3972
      %v3974 = vlaneseq
      %v3975 = vshrl.u32 %v3974, 7
      %v3976 = vsub.s32 %v3973, %v3975
      %v3977 = vrot.slane %v3970, %v3976
      %v3978 = vcombine.low %v1978, %v1980
      %v3979 = vcombine.low %v1979, %v1981
      %v3981 = vunpack.c.l.s4 1935823168
      %v3982 = vunpack.c.0.s8 %v3981
      %v3983 = vlaneseq
      %v3984 = vshrl.u32 %v3983, 7
      %v3985 = vsub.s32 %v3982, %v3984
      %v3986 = vrot.slane %v3978, %v3985
      %v3988 = vunpack.c.l.s4 1935823168
      %v3989 = vunpack.c.0.s8 %v3988
      %v3990 = vlaneseq
      %v3991 = vshrl.u32 %v3990, 7
      %v3992 = vsub.s32 %v3989, %v3991
      %v3993 = vrot.slane %v3979, %v3992
      %v3994 = vcombine.low %v3986, %v3993
      %v3996 = vunpack.c.l.s4 1935823168
      %v3997 = vunpack.c.0.s8 %v3996
      %v3998 = vlaneseq
      %v3999 = vshrl.u32 %v3998, 7
      %v4000 = vsub.s32 %v3997, %v3999
      %v4001 = vrot.slane %v3994, %v4000
      %v4002 = vcombine.low %v3530, %v3532
      %v4003 = vcombine.low %v3531, %v3533
      %v4005 = vunpack.c.l.s4 1935823168
      %v4006 = vunpack.c.0.s8 %v4005
      %v4007 = vlaneseq
      %v4008 = vshrl.u32 %v4007, 7
      %v4009 = vsub.s32 %v4006, %v4008
      %v4010 = vrot.slane %v4002, %v4009
      %v4012 = vunpack.c.l.s4 1935823168
      %v4013 = vunpack.c.0.s8 %v4012
      %v4014 = vlaneseq
      %v4015 = vshrl.u32 %v4014, 7
      %v4016 = vsub.s32 %v4013, %v4015
      %v4017 = vrot.slane %v4003, %v4016
      %v4018 = vcombine.low %v4010, %v4017
      %v4020 = vunpack.c.l.s4 1935823168
      %v4021 = vunpack.c.0.s8 %v4020
      %v4022 = vlaneseq
      %v4023 = vshrl.u32 %v4022, 7
      %v4024 = vsub.s32 %v4021, %v4023
      %v4025 = vrot.slane %v4018, %v4024
      %v4026 = vcombine.low %v3534, %v3536
      %v4027 = vcombine.low %v3535, %v3537
      %v4029 = vunpack.c.l.s4 1935823168
      %v4030 = vunpack.c.0.s8 %v4029
      %v4031 = vlaneseq
      %v4032 = vshrl.u32 %v4031, 7
      %v4033 = vsub.s32 %v4030, %v4032
      %v4034 = vrot.slane %v4026, %v4033
      %v4036 = vunpack.c.l.s4 1935823168
      %v4037 = vunpack.c.0.s8 %v4036
      %v4038 = vlaneseq
      %v4039 = vshrl.u32 %v4038, 7
      %v4040 = vsub.s32 %v4037, %v4039
      %v4041 = vrot.slane %v4027, %v4040
      %v4042 = vcombine.low %v4034, %v4041
      %v4044 = vunpack.c.l.s4 1935823168
      %v4045 = vunpack.c.0.s8 %v4044
      %v4046 = vlaneseq
      %v4047 = vshrl.u32 %v4046, 7
      %v4048 = vsub.s32 %v4045, %v4047
      %v4049 = vrot.slane %v4042, %v4048
      %v4050 = vcombine.low %v1982, %v1984
      %v4051 = vcombine.low %v1983, %v1985
      %v4053 = vunpack.c.l.s4 1935823168
      %v4054 = vunpack.c.0.s8 %v4053
      %v4055 = vlaneseq
      %v4056 = vshrl.u32 %v4055, 7
      %v4057 = vsub.s32 %v4054, %v4056
      %v4058 = vrot.slane %v4050, %v4057
      %v4060 = vunpack.c.l.s4 1935823168
      %v4061 = vunpack.c.0.s8 %v4060
      %v4062 = vlaneseq
      %v4063 = vshrl.u32 %v4062, 7
      %v4064 = vsub.s32 %v4061, %v4063
      %v4065 = vrot.slane %v4051, %v4064
      %v4066 = vcombine.low %v4058, %v4065
      %v4068 = vunpack.c.l.s4 1935823168
      %v4069 = vunpack.c.0.s8 %v4068
      %v4070 = vlaneseq
      %v4071 = vshrl.u32 %v4070, 7
      %v4072 = vsub.s32 %v4069, %v4071
      %v4073 = vrot.slane %v4066, %v4072
      %v4074 = vcombine.low %v1986, %v1988
      %v4075 = vcombine.low %v1987, %v1989
      %v4077 = vunpack.c.l.s4 1935823168
      %v4078 = vunpack.c.0.s8 %v4077
      %v4079 = vlaneseq
      %v4080 = vshrl.u32 %v4079, 7
      %v4081 = vsub.s32 %v4078, %v4080
      %v4082 = vrot.slane %v4074, %v4081
      %v4084 = vunpack.c.l.s4 1935823168
      %v4085 = vunpack.c.0.s8 %v4084
      %v4086 = vlaneseq
      %v4087 = vshrl.u32 %v4086, 7
      %v4088 = vsub.s32 %v4085, %v4087
      %v4089 = vrot.slane %v4075, %v4088
      %v4090 = vcombine.low %v4082, %v4089
      %v4092 = vunpack.c.l.s4 1935823168
      %v4093 = vunpack.c.0.s8 %v4092
      %v4094 = vlaneseq
      %v4095 = vshrl.u32 %v4094, 7
      %v4096 = vsub.s32 %v4093, %v4095
      %v4097 = vrot.slane %v4090, %v4096
      %v4098 = vcombine.low %v3538, %v3540
      %v4099 = vcombine.low %v3539, %v3541
      %v4101 = vunpack.c.l.s4 1935823168
      %v4102 = vunpack.c.0.s8 %v4101
      %v4103 = vlaneseq
      %v4104 = vshrl.u32 %v4103, 7
      %v4105 = vsub.s32 %v4102, %v4104
      %v4106 = vrot.slane %v4098, %v4105
      %v4108 = vunpack.c.l.s4 1935823168
      %v4109 = vunpack.c.0.s8 %v4108
      %v4110 = vlaneseq
      %v4111 = vshrl.u32 %v4110, 7
      %v4112 = vsub.s32 %v4109, %v4111
      %v4113 = vrot.slane %v4099, %v4112
      %v4114 = vcombine.low %v4106, %v4113
      %v4116 = vunpack.c.l.s4 1935823168
      %v4117 = vunpack.c.0.s8 %v4116
      %v4118 = vlaneseq
      %v4119 = vshrl.u32 %v4118, 7
      %v4120 = vsub.s32 %v4117, %v4119
      %v4121 = vrot.slane %v4114, %v4120
      %v4122 = vcombine.low %v3542, %v3544
      %v4123 = vcombine.low %v3543, %v3545
      %v4125 = vunpack.c.l.s4 1935823168
      %v4126 = vunpack.c.0.s8 %v4125
      %v4127 = vlaneseq
      %v4128 = vshrl.u32 %v4127, 7
      %v4129 = vsub.s32 %v4126, %v4128
      %v4130 = vrot.slane %v4122, %v4129
      %v4132 = vunpack.c.l.s4 1935823168
      %v4133 = vunpack.c.0.s8 %v4132
      %v4134 = vlaneseq
      %v4135 = vshrl.u32 %v4134, 7
      %v4136 = vsub.s32 %v4133, %v4135
      %v4137 = vrot.slane %v4123, %v4136
      %v4138 = vcombine.low %v4130, %v4137
      %v4140 = vunpack.c.l.s4 1935823168
      %v4141 = vunpack.c.0.s8 %v4140
      %v4142 = vlaneseq
      %v4143 = vshrl.u32 %v4142, 7
      %v4144 = vsub.s32 %v4141, %v4143
      %v4145 = vrot.slane %v4138, %v4144
      %v4146 = vcombine.low %v1990, %v1992
      %v4147 = vcombine.low %v1991, %v1993
      %v4149 = vunpack.c.l.s4 1935823168
      %v4150 = vunpack.c.0.s8 %v4149
      %v4151 = vlaneseq
      %v4152 = vshrl.u32 %v4151, 7
      %v4153 = vsub.s32 %v4150, %v4152
      %v4154 = vrot.slane %v4146, %v4153
      %v4156 = vunpack.c.l.s4 1935823168
      %v4157 = vunpack.c.0.s8 %v4156
      %v4158 = vlaneseq
      %v4159 = vshrl.u32 %v4158, 7
      %v4160 = vsub.s32 %v4157, %v4159
      %v4161 = vrot.slane %v4147, %v4160
      %v4162 = vcombine.low %v4154, %v4161
      %v4164 = vunpack.c.l.s4 1935823168
      %v4165 = vunpack.c.0.s8 %v4164
      %v4166 = vlaneseq
      %v4167 = vshrl.u32 %v4166, 7
      %v4168 = vsub.s32 %v4165, %v4167
      %v4169 = vrot.slane %v4162, %v4168
      %v4170 = vcombine.low %v1994, %v1996
      %v4171 = vcombine.low %v1995, %v1997
      %v4173 = vunpack.c.l.s4 1935823168
      %v4174 = vunpack.c.0.s8 %v4173
      %v4175 = vlaneseq
      %v4176 = vshrl.u32 %v4175, 7
      %v4177 = vsub.s32 %v4174, %v4176
      %v4178 = vrot.slane %v4170, %v4177
      %v4180 = vunpack.c.l.s4 1935823168
      %v4181 = vunpack.c.0.s8 %v4180
      %v4182 = vlaneseq
      %v4183 = vshrl.u32 %v4182, 7
      %v4184 = vsub.s32 %v4181, %v4183
      %v4185 = vrot.slane %v4171, %v4184
      %v4186 = vcombine.low %v4178, %v4185
      %v4188 = vunpack.c.l.s4 1935823168
      %v4189 = vunpack.c.0.s8 %v4188
      %v4190 = vlaneseq
      %v4191 = vshrl.u32 %v4190, 7
      %v4192 = vsub.s32 %v4189, %v4191
      %v4193 = vrot.slane %v4186, %v4192
      %v4194 = vcombine.low %v3546, %v3548
      %v4195 = vcombine.low %v3547, %v3549
      %v4197 = vunpack.c.l.s4 1935823168
      %v4198 = vunpack.c.0.s8 %v4197
      %v4199 = vlaneseq
      %v4200 = vshrl.u32 %v4199, 7
      %v4201 = vsub.s32 %v4198, %v4200
      %v4202 = vrot.slane %v4194, %v4201
      %v4204 = vunpack.c.l.s4 1935823168
      %v4205 = vunpack.c.0.s8 %v4204
      %v4206 = vlaneseq
      %v4207 = vshrl.u32 %v4206, 7
      %v4208 = vsub.s32 %v4205, %v4207
      %v4209 = vrot.slane %v4195, %v4208
      %v4210 = vcombine.low %v4202, %v4209
      %v4212 = vunpack.c.l.s4 1935823168
      %v4213 = vunpack.c.0.s8 %v4212
      %v4214 = vlaneseq
      %v4215 = vshrl.u32 %v4214, 7
      %v4216 = vsub.s32 %v4213, %v4215
      %v4217 = vrot.slane %v4210, %v4216
      %v4218 = vcombine.low %v3550, %v3552
      %v4219 = vcombine.low %v3551, %v3553
      %v4221 = vunpack.c.l.s4 1935823168
      %v4222 = vunpack.c.0.s8 %v4221
      %v4223 = vlaneseq
      %v4224 = vshrl.u32 %v4223, 7
      %v4225 = vsub.s32 %v4222, %v4224
      %v4226 = vrot.slane %v4218, %v4225
      %v4228 = vunpack.c.l.s4 1935823168
      %v4229 = vunpack.c.0.s8 %v4228
      %v4230 = vlaneseq
      %v4231 = vshrl.u32 %v4230, 7
      %v4232 = vsub.s32 %v4229, %v4231
      %v4233 = vrot.slane %v4219, %v4232
      %v4234 = vcombine.low %v4226, %v4233
      %v4236 = vunpack.c.l.s4 1935823168
      %v4237 = vunpack.c.0.s8 %v4236
      %v4238 = vlaneseq
      %v4239 = vshrl.u32 %v4238, 7
      %v4240 = vsub.s32 %v4237, %v4239
      %v4241 = vrot.slane %v4234, %v4240
      %v4242 = vcombine.low %v1998, %v2000
      %v4243 = vcombine.low %v1999, %v2001
      %v4245 = vunpack.c.l.s4 1935823168
      %v4246 = vunpack.c.0.s8 %v4245
      %v4247 = vlaneseq
      %v4248 = vshrl.u32 %v4247, 7
      %v4249 = vsub.s32 %v4246, %v4248
      %v4250 = vrot.slane %v4242, %v4249
      %v4252 = vunpack.c.l.s4 1935823168
      %v4253 = vunpack.c.0.s8 %v4252
      %v4254 = vlaneseq
      %v4255 = vshrl.u32 %v4254, 7
      %v4256 = vsub.s32 %v4253, %v4255
      %v4257 = vrot.slane %v4243, %v4256
      %v4258 = vcombine.low %v4250, %v4257
      %v4260 = vunpack.c.l.s4 1935823168
      %v4261 = vunpack.c.0.s8 %v4260
      %v4262 = vlaneseq
      %v4263 = vshrl.u32 %v4262, 7
      %v4264 = vsub.s32 %v4261, %v4263
      %v4265 = vrot.slane %v4258, %v4264
      %v4266 = vcombine.low %v2002, %v2004
      %v4267 = vcombine.low %v2003, %v2005
      %v4269 = vunpack.c.l.s4 1935823168
      %v4270 = vunpack.c.0.s8 %v4269
      %v4271 = vlaneseq
      %v4272 = vshrl.u32 %v4271, 7
      %v4273 = vsub.s32 %v4270, %v4272
      %v4274 = vrot.slane %v4266, %v4273
      %v4276 = vunpack.c.l.s4 1935823168
      %v4277 = vunpack.c.0.s8 %v4276
      %v4278 = vlaneseq
      %v4279 = vshrl.u32 %v4278, 7
      %v4280 = vsub.s32 %v4277, %v4279
      %v4281 = vrot.slane %v4267, %v4280
      %v4282 = vcombine.low %v4274, %v4281
      %v4284 = vunpack.c.l.s4 1935823168
      %v4285 = vunpack.c.0.s8 %v4284
      %v4286 = vlaneseq
      %v4287 = vshrl.u32 %v4286, 7
      %v4288 = vsub.s32 %v4285, %v4287
      %v4289 = vrot.slane %v4282, %v4288
      %v4290 = vcombine.low %v3554, %v3556
      %v4291 = vcombine.low %v3555, %v3557
      %v4293 = vunpack.c.l.s4 1935823168
      %v4294 = vunpack.c.0.s8 %v4293
      %v4295 = vlaneseq
      %v4296 = vshrl.u32 %v4295, 7
      %v4297 = vsub.s32 %v4294, %v4296
      %v4298 = vrot.slane %v4290, %v4297
      %v4300 = vunpack.c.l.s4 1935823168
      %v4301 = vunpack.c.0.s8 %v4300
      %v4302 = vlaneseq
      %v4303 = vshrl.u32 %v4302, 7
      %v4304 = vsub.s32 %v4301, %v4303
      %v4305 = vrot.slane %v4291, %v4304
      %v4306 = vcombine.low %v4298, %v4305
      %v4308 = vunpack.c.l.s4 1935823168
      %v4309 = vunpack.c.0.s8 %v4308
      %v4310 = vlaneseq
      %v4311 = vshrl.u32 %v4310, 7
      %v4312 = vsub.s32 %v4309, %v4311
      %v4313 = vrot.slane %v4306, %v4312
      %v4314 = vcombine.low %v3558, %v3560
      %v4315 = vcombine.low %v3559, %v3561
      %v4317 = vunpack.c.l.s4 1935823168
      %v4318 = vunpack.c.0.s8 %v4317
      %v4319 = vlaneseq
      %v4320 = vshrl.u32 %v4319, 7
      %v4321 = vsub.s32 %v4318, %v4320
      %v4322 = vrot.slane %v4314, %v4321
      %v4324 = vunpack.c.l.s4 1935823168
      %v4325 = vunpack.c.0.s8 %v4324
      %v4326 = vlaneseq
      %v4327 = vshrl.u32 %v4326, 7
      %v4328 = vsub.s32 %v4325, %v4327
      %v4329 = vrot.slane %v4315, %v4328
      %v4330 = vcombine.low %v4322, %v4329
      %v4332 = vunpack.c.l.s4 1935823168
      %v4333 = vunpack.c.0.s8 %v4332
      %v4334 = vlaneseq
      %v4335 = vshrl.u32 %v4334, 7
      %v4336 = vsub.s32 %v4333, %v4335
      %v4337 = vrot.slane %v4330, %v4336
      %v4338 = vcombine.low %v2006, %v2008
      %v4339 = vcombine.low %v2007, %v2009
      %v4341 = vunpack.c.l.s4 1935823168
      %v4342 = vunpack.c.0.s8 %v4341
      %v4343 = vlaneseq
      %v4344 = vshrl.u32 %v4343, 7
      %v4345 = vsub.s32 %v4342, %v4344
      %v4346 = vrot.slane %v4338, %v4345
      %v4348 = vunpack.c.l.s4 1935823168
      %v4349 = vunpack.c.0.s8 %v4348
      %v4350 = vlaneseq
      %v4351 = vshrl.u32 %v4350, 7
      %v4352 = vsub.s32 %v4349, %v4351
      %v4353 = vrot.slane %v4339, %v4352
      %v4354 = vcombine.low %v4346, %v4353
      %v4356 = vunpack.c.l.s4 1935823168
      %v4357 = vunpack.c.0.s8 %v4356
      %v4358 = vlaneseq
      %v4359 = vshrl.u32 %v4358, 7
      %v4360 = vsub.s32 %v4357, %v4359
      %v4361 = vrot.slane %v4354, %v4360
      %v4362 = vcombine.low %v2010, %v2012
      %v4363 = vcombine.low %v2011, %v2013
      %v4365 = vunpack.c.l.s4 1935823168
      %v4366 = vunpack.c.0.s8 %v4365
      %v4367 = vlaneseq
      %v4368 = vshrl.u32 %v4367, 7
      %v4369 = vsub.s32 %v4366, %v4368
      %v4370 = vrot.slane %v4362, %v4369
      %v4372 = vunpack.c.l.s4 1935823168
      %v4373 = vunpack.c.0.s8 %v4372
      %v4374 = vlaneseq
      %v4375 = vshrl.u32 %v4374, 7
      %v4376 = vsub.s32 %v4373, %v4375
      %v4377 = vrot.slane %v4363, %v4376
      %v4378 = vcombine.low %v4370, %v4377
      %v4380 = vunpack.c.l.s4 1935823168
      %v4381 = vunpack.c.0.s8 %v4380
      %v4382 = vlaneseq
      %v4383 = vshrl.u32 %v4382, 7
      %v4384 = vsub.s32 %v4381, %v4383
      %v4385 = vrot.slane %v4378, %v4384
      %v4386 = vcombine.low %v3562, %v3564
      %v4387 = vcombine.low %v3563, %v3565
      %v4389 = vunpack.c.l.s4 1935823168
      %v4390 = vunpack.c.0.s8 %v4389
      %v4391 = vlaneseq
      %v4392 = vshrl.u32 %v4391, 7
      %v4393 = vsub.s32 %v4390, %v4392
      %v4394 = vrot.slane %v4386, %v4393
      %v4396 = vunpack.c.l.s4 1935823168
      %v4397 = vunpack.c.0.s8 %v4396
      %v4398 = vlaneseq
      %v4399 = vshrl.u32 %v4398, 7
      %v4400 = vsub.s32 %v4397, %v4399
      %v4401 = vrot.slane %v4387, %v4400
      %v4402 = vcombine.low %v4394, %v4401
      %v4404 = vunpack.c.l.s4 1935823168
      %v4405 = vunpack.c.0.s8 %v4404
      %v4406 = vlaneseq
      %v4407 = vshrl.u32 %v4406, 7
      %v4408 = vsub.s32 %v4405, %v4407
      %v4409 = vrot.slane %v4402, %v4408
      %v4410 = vcombine.low %v3566, %v3568
      %v4411 = vcombine.low %v3567, %v3569
      %v4413 = vunpack.c.l.s4 1935823168
      %v4414 = vunpack.c.0.s8 %v4413
      %v4415 = vlaneseq
      %v4416 = vshrl.u32 %v4415, 7
      %v4417 = vsub.s32 %v4414, %v4416
      %v4418 = vrot.slane %v4410, %v4417
      %v4420 = vunpack.c.l.s4 1935823168
      %v4421 = vunpack.c.0.s8 %v4420
      %v4422 = vlaneseq
      %v4423 = vshrl.u32 %v4422, 7
      %v4424 = vsub.s32 %v4421, %v4423
      %v4425 = vrot.slane %v4411, %v4424
      %v4426 = vcombine.low %v4418, %v4425
      %v4428 = vunpack.c.l.s4 1935823168
      %v4429 = vunpack.c.0.s8 %v4428
      %v4430 = vlaneseq
      %v4431 = vshrl.u32 %v4430, 7
      %v4432 = vsub.s32 %v4429, %v4431
      %v4433 = vrot.slane %v4426, %v4432
      %v4434 = vcombine.low %v2014, %v2016
      %v4435 = vcombine.low %v2015, %v2017
      %v4437 = vunpack.c.l.s4 1935823168
      %v4438 = vunpack.c.0.s8 %v4437
      %v4439 = vlaneseq
      %v4440 = vshrl.u32 %v4439, 7
      %v4441 = vsub.s32 %v4438, %v4440
      %v4442 = vrot.slane %v4434, %v4441
      %v4444 = vunpack.c.l.s4 1935823168
      %v4445 = vunpack.c.0.s8 %v4444
      %v4446 = vlaneseq
      %v4447 = vshrl.u32 %v4446, 7
      %v4448 = vsub.s32 %v4445, %v4447
      %v4449 = vrot.slane %v4435, %v4448
      %v4450 = vcombine.low %v4442, %v4449
      %v4452 = vunpack.c.l.s4 1935823168
      %v4453 = vunpack.c.0.s8 %v4452
      %v4454 = vlaneseq
      %v4455 = vshrl.u32 %v4454, 7
      %v4456 = vsub.s32 %v4453, %v4455
      %v4457 = vrot.slane %v4450, %v4456
      %v4458 = vcombine.low %v2018, %v2020
      %v4459 = vcombine.low %v2019, %v2021
      %v4461 = vunpack.c.l.s4 1935823168
      %v4462 = vunpack.c.0.s8 %v4461
      %v4463 = vlaneseq
      %v4464 = vshrl.u32 %v4463, 7
      %v4465 = vsub.s32 %v4462, %v4464
      %v4466 = vrot.slane %v4458, %v4465
      %v4468 = vunpack.c.l.s4 1935823168
      %v4469 = vunpack.c.0.s8 %v4468
      %v4470 = vlaneseq
      %v4471 = vshrl.u32 %v4470, 7
      %v4472 = vsub.s32 %v4469, %v4471
      %v4473 = vrot.slane %v4459, %v4472
      %v4474 = vcombine.low %v4466, %v4473
      %v4476 = vunpack.c.l.s4 1935823168
      %v4477 = vunpack.c.0.s8 %v4476
      %v4478 = vlaneseq
      %v4479 = vshrl.u32 %v4478, 7
      %v4480 = vsub.s32 %v4477, %v4479
      %v4481 = vrot.slane %v4474, %v4480
      %v4482 = vcombine.low %v3570, %v3572
      %v4483 = vcombine.low %v3571, %v3573
      %v4485 = vunpack.c.l.s4 1935823168
      %v4486 = vunpack.c.0.s8 %v4485
      %v4487 = vlaneseq
      %v4488 = vshrl.u32 %v4487, 7
      %v4489 = vsub.s32 %v4486, %v4488
      %v4490 = vrot.slane %v4482, %v4489
      %v4492 = vunpack.c.l.s4 1935823168
      %v4493 = vunpack.c.0.s8 %v4492
      %v4494 = vlaneseq
      %v4495 = vshrl.u32 %v4494, 7
      %v4496 = vsub.s32 %v4493, %v4495
      %v4497 = vrot.slane %v4483, %v4496
      %v4498 = vcombine.low %v4490, %v4497
      %v4500 = vunpack.c.l.s4 1935823168
      %v4501 = vunpack.c.0.s8 %v4500
      %v4502 = vlaneseq
      %v4503 = vshrl.u32 %v4502, 7
      %v4504 = vsub.s32 %v4501, %v4503
      %v4505 = vrot.slane %v4498, %v4504
      %v4506 = vcombine.low %v3574, %v3576
      %v4507 = vcombine.low %v3575, %v3577
      %v4509 = vunpack.c.l.s4 1935823168
      %v4510 = vunpack.c.0.s8 %v4509
      %v4511 = vlaneseq
      %v4512 = vshrl.u32 %v4511, 7
      %v4513 = vsub.s32 %v4510, %v4512
      %v4514 = vrot.slane %v4506, %v4513
      %v4516 = vunpack.c.l.s4 1935823168
      %v4517 = vunpack.c.0.s8 %v4516
      %v4518 = vlaneseq
      %v4519 = vshrl.u32 %v4518, 7
      %v4520 = vsub.s32 %v4517, %v4519
      %v4521 = vrot.slane %v4507, %v4520
      %v4522 = vcombine.low %v4514, %v4521
      %v4524 = vunpack.c.l.s4 1935823168
      %v4525 = vunpack.c.0.s8 %v4524
      %v4526 = vlaneseq
      %v4527 = vshrl.u32 %v4526, 7
      %v4528 = vsub.s32 %v4525, %v4527
      %v4529 = vrot.slane %v4522, %v4528
      %vm4530 = vsmask.f32 4368
      %vm4531 = vmor %vm1956, %vm4530
      %v4533 = vshrl.u32 %v3785, 16
      %v4535 = vrot.slane %v4533, 7
      %v4536 = vshll.u32 %v3785, 16
      %v4538 = vor.u32 %v4535, %v4536
      %v4539 = vrot.slane %v4535, 4
      %v4541 = vshrl.u32 %v3809, 16
      %v4543 = vrot.slane %v4541, 7
      %v4544 = vshll.u32 %v3809, 16
      %v4546 = vor.u32 %v4543, %v4544
      %v4547 = vsel %vm4531, %v4539, %v4546
      %v4548 = vrot.slane %v4543, 4
      %v4550 = vshrl.u32 %v3833, 16
      %v4552 = vrot.slane %v4550, 7
      %v4553 = vshll.u32 %v3833, 16
      %v4555 = vor.u32 %v4552, %v4553
      %v4556 = vrot.slane %v4552, 4
      %v4558 = vshrl.u32 %v3857, 16
      %v4560 = vrot.slane %v4558, 7
      %v4561 = vshll.u32 %v3857, 16
      %v4563 = vor.u32 %v4560, %v4561
      %v4564 = vsel %vm4531, %v4556, %v4563
      %v4565 = vrot.slane %v4560, 4
      %v4567 = vshrl.u32 %v3881, 16
      %v4569 = vrot.slane %v4567, 7
      %v4570 = vshll.u32 %v3881, 16
      %v4572 = vor.u32 %v4569, %v4570
      %v4573 = vrot.slane %v4569, 4
      %v4575 = vshrl.u32 %v3905, 16
      %v4577 = vrot.slane %v4575, 7
      %v4578 = vshll.u32 %v3905, 16
      %v4580 = vor.u32 %v4577, %v4578
      %v4581 = vsel %vm4531, %v4573, %v4580
      %v4582 = vrot.slane %v4577, 4
      %v4584 = vshrl.u32 %v3929, 16
      %v4586 = vrot.slane %v4584, 7
      %v4587 = vshll.u32 %v3929, 16
      %v4589 = vor.u32 %v4586, %v4587
      %v4590 = vrot.slane %v4586, 4
      %v4592 = vshrl.u32 %v3953, 16
      %v4594 = vrot.slane %v4592, 7
      %v4595 = vshll.u32 %v3953, 16
      %v4597 = vor.u32 %v4594, %v4595
      %v4598 = vsel %vm4531, %v4590, %v4597
      %v4599 = vrot.slane %v4594, 4
      %v4601 = vshrl.u32 %v3977, 16
      %v4603 = vrot.slane %v4601, 7
      %v4604 = vshll.u32 %v3977, 16
      %v4606 = vor.u32 %v4603, %v4604
      %v4607 = vrot.slane %v4603, 4
      %v4609 = vshrl.u32 %v4001, 16
      %v4611 = vrot.slane %v4609, 7
      %v4612 = vshll.u32 %v4001, 16
      %v4614 = vor.u32 %v4611, %v4612
      %v4615 = vsel %vm4531, %v4607, %v4614
      %v4616 = vrot.slane %v4611, 4
      %v4618 = vshrl.u32 %v4025, 16
      %v4620 = vrot.slane %v4618, 7
      %v4621 = vshll.u32 %v4025, 16
      %v4623 = vor.u32 %v4620, %v4621
      %v4624 = vrot.slane %v4620, 4
      %v4626 = vshrl.u32 %v4049, 16
      %v4628 = vrot.slane %v4626, 7
      %v4629 = vshll.u32 %v4049, 16
      %v4631 = vor.u32 %v4628, %v4629
      %v4632 = vsel %vm4531, %v4624, %v4631
      %v4633 = vrot.slane %v4628, 4
      %v4635 = vshrl.u32 %v4073, 16
      %v4637 = vrot.slane %v4635, 7
      %v4638 = vshll.u32 %v4073, 16
      %v4640 = vor.u32 %v4637, %v4638
      %v4641 = vrot.slane %v4637, 4
      %v4643 = vshrl.u32 %v4097, 16
      %v4645 = vrot.slane %v4643, 7
      %v4646 = vshll.u32 %v4097, 16
      %v4648 = vor.u32 %v4645, %v4646
      %v4649 = vsel %vm4531, %v4641, %v4648
      %v4650 = vrot.slane %v4645, 4
      %v4652 = vshrl.u32 %v4121, 16
      %v4654 = vrot.slane %v4652, 7
      %v4655 = vshll.u32 %v4121, 16
      %v4657 = vor.u32 %v4654, %v4655
      %v4658 = vrot.slane %v4654, 4
      %v4660 = vshrl.u32 %v4145, 16
      %v4662 = vrot.slane %v4660, 7
      %v4663 = vshll.u32 %v4145, 16
      %v4665 = vor.u32 %v4662, %v4663
      %v4666 = vsel %vm4531, %v4658, %v4665
      %v4667 = vrot.slane %v4662, 4
      %v4669 = vshrl.u32 %v4169, 16
      %v4671 = vrot.slane %v4669, 7
      %v4672 = vshll.u32 %v4169, 16
      %v4674 = vor.u32 %v4671, %v4672
      %v4675 = vrot.slane %v4671, 4
      %v4677 = vshrl.u32 %v4193, 16
      %v4679 = vrot.slane %v4677, 7
      %v4680 = vshll.u32 %v4193, 16
      %v4682 = vor.u32 %v4679, %v4680
      %v4683 = vsel %vm4531, %v4675, %v4682
      %v4684 = vrot.slane %v4679, 4
      %v4686 = vshrl.u32 %v4217, 16
      %v4688 = vrot.slane %v4686, 7
      %v4689 = vshll.u32 %v4217, 16
      %v4691 = vor.u32 %v4688, %v4689
      %v4692 = vrot.slane %v4688, 4
      %v4694 = vshrl.u32 %v4241, 16
      %v4696 = vrot.slane %v4694, 7
      %v4697 = vshll.u32 %v4241, 16
      %v4699 = vor.u32 %v4696, %v4697
      %v4700 = vsel %vm4531, %v4692, %v4699
      %v4701 = vrot.slane %v4696, 4
      %v4703 = vshrl.u32 %v4265, 16
      %v4705 = vrot.slane %v4703, 7
      %v4706 = vshll.u32 %v4265, 16
      %v4708 = vor.u32 %v4705, %v4706
      %v4709 = vrot.slane %v4705, 4
      %v4711 = vshrl.u32 %v4289, 16
      %v4713 = vrot.slane %v4711, 7
      %v4714 = vshll.u32 %v4289, 16
      %v4716 = vor.u32 %v4713, %v4714
      %v4717 = vsel %vm4531, %v4709, %v4716
      %v4718 = vrot.slane %v4713, 4
      %v4720 = vshrl.u32 %v4313, 16
      %v4722 = vrot.slane %v4720, 7
      %v4723 = vshll.u32 %v4313, 16
      %v4725 = vor.u32 %v4722, %v4723
      %v4726 = vrot.slane %v4722, 4
      %v4728 = vshrl.u32 %v4337, 16
      %v4730 = vrot.slane %v4728, 7
      %v4731 = vshll.u32 %v4337, 16
      %v4733 = vor.u32 %v4730, %v4731
      %v4734 = vsel %vm4531, %v4726, %v4733
      %v4735 = vrot.slane %v4730, 4
      %v4737 = vshrl.u32 %v4361, 16
      %v4739 = vrot.slane %v4737, 7
      %v4740 = vshll.u32 %v4361, 16
      %v4742 = vor.u32 %v4739, %v4740
      %v4743 = vrot.slane %v4739, 4
      %v4745 = vshrl.u32 %v4385, 16
      %v4747 = vrot.slane %v4745, 7
      %v4748 = vshll.u32 %v4385, 16
      %v4750 = vor.u32 %v4747, %v4748
      %v4751 = vsel %vm4531, %v4743, %v4750
      %v4752 = vrot.slane %v4747, 4
      %v4754 = vshrl.u32 %v4409, 16
      %v4756 = vrot.slane %v4754, 7
      %v4757 = vshll.u32 %v4409, 16
      %v4759 = vor.u32 %v4756, %v4757
      %v4760 = vrot.slane %v4756, 4
      %v4762 = vshrl.u32 %v4433, 16
      %v4764 = vrot.slane %v4762, 7
      %v4765 = vshll.u32 %v4433, 16
      %v4767 = vor.u32 %v4764, %v4765
      %v4768 = vsel %vm4531, %v4760, %v4767
      %v4769 = vrot.slane %v4764, 4
      %v4771 = vshrl.u32 %v4457, 16
      %v4773 = vrot.slane %v4771, 7
      %v4774 = vshll.u32 %v4457, 16
      %v4776 = vor.u32 %v4773, %v4774
      %v4777 = vrot.slane %v4773, 4
      %v4779 = vshrl.u32 %v4481, 16
      %v4781 = vrot.slane %v4779, 7
      %v4782 = vshll.u32 %v4481, 16
      %v4784 = vor.u32 %v4781, %v4782
      %v4785 = vsel %vm4531, %v4777, %v4784
      %v4786 = vrot.slane %v4781, 4
      %v4788 = vshrl.u32 %v4505, 16
      %v4790 = vrot.slane %v4788, 7
      %v4791 = vshll.u32 %v4505, 16
      %v4793 = vor.u32 %v4790, %v4791
      %v4794 = vrot.slane %v4790, 4
      %v4796 = vshrl.u32 %v4529, 16
      %v4798 = vrot.slane %v4796, 7
      %v4799 = vshll.u32 %v4529, 16
      %v4801 = vor.u32 %v4798, %v4799
      %v4802 = vsel %vm4531, %v4794, %v4801
      %v4803 = vrot.slane %v4798, 4
      %s4852 = scalar_lea.vmem [#allocation2], 12
      %vm4853 = vcmask 60416
      %vm4854 = vsmask.f32 7938
      %vm4855 = vmand %vm4853, %vm4854
      %v4856 = vld [vmem:[%s4852] sm:$0xf]
      %v4857 = vsel %vm4855, %v4538, %v4856
      %4858 = vst [vmem:[%s4852] sm:$0xf] %v4857
      %vm4859 = vcmask 60416
      %4860 = vst.msk [vmem:[%s4852 + $0x4] sm:$0xf] %vm4859, %v4547
      %vm4861 = vcmask 57344
      %vm4862 = vmand %vm4861, %vm1956
      %v4863 = vld [vmem:[%s4852 + $0x8] sm:$0x1]
      %v4864 = vsel %vm4862, %v4548, %v4863
      %4865 = vst [vmem:[%s4852 + $0x8] sm:$0x1] %v4864
      %v4866 = vld [vmem:[%s4852 + $0xc] sm:$0xf]
      %v4867 = vsel %vm4855, %v4555, %v4866
      %4868 = vst [vmem:[%s4852 + $0xc] sm:$0xf] %v4867
      %4869 = vst.msk [vmem:[%s4852 + $0x10] sm:$0xf] %vm4859, %v4564
      %v4870 = vld [vmem:[%s4852 + $0x14] sm:$0x1]
      %v4871 = vsel %vm4862, %v4565, %v4870
      %4872 = vst [vmem:[%s4852 + $0x14] sm:$0x1] %v4871
      %v4873 = vld [vmem:[%s4852 + $0x18] sm:$0xf]
      %v4874 = vsel %vm4855, %v4572, %v4873
      %4875 = vst [vmem:[%s4852 + $0x18] sm:$0xf] %v4874
      %4876 = vst.msk [vmem:[%s4852 + $0x1c] sm:$0xf] %vm4859, %v4581
      %v4877 = vld [vmem:[%s4852 + $0x20] sm:$0x1]
      %v4878 = vsel %vm4862, %v4582, %v4877
      %4879 = vst [vmem:[%s4852 + $0x20] sm:$0x1] %v4878
      %v4880 = vld [vmem:[%s4852 + $0x24] sm:$0xf]
      %v4881 = vsel %vm4855, %v4589, %v4880
      %4882 = vst [vmem:[%s4852 + $0x24] sm:$0xf] %v4881
      %4883 = vst.msk [vmem:[%s4852 + $0x28] sm:$0xf] %vm4859, %v4598
      %v4884 = vld [vmem:[%s4852 + $0x2c] sm:$0x1]
      %v4885 = vsel %vm4862, %v4599, %v4884
      %4886 = vst [vmem:[%s4852 + $0x2c] sm:$0x1] %v4885
      %v4887 = vld [vmem:[%s4852 + $0x30] sm:$0xf]
      %v4888 = vsel %vm4855, %v4606, %v4887
      %4889 = vst [vmem:[%s4852 + $0x30] sm:$0xf] %v4888
      %4890 = vst.msk [vmem:[%s4852 + $0x34] sm:$0xf] %vm4859, %v4615
      %v4891 = vld [vmem:[%s4852 + $0x38] sm:$0x1]
      %v4892 = vsel %vm4862, %v4616, %v4891
      %4893 = vst [vmem:[%s4852 + $0x38] sm:$0x1] %v4892
      %v4894 = vld [vmem:[%s4852 + $0x3c] sm:$0xf]
      %v4895 = vsel %vm4855, %v4623, %v4894
      %4896 = vst [vmem:[%s4852 + $0x3c] sm:$0xf] %v4895
      %4897 = vst.msk [vmem:[%s4852 + $0x40] sm:$0xf] %vm4859, %v4632
      %v4898 = vld [vmem:[%s4852 + $0x44] sm:$0x1]
      %v4899 = vsel %vm4862, %v4633, %v4898
      %4900 = vst [vmem:[%s4852 + $0x44] sm:$0x1] %v4899
      %v4901 = vld [vmem:[%s4852 + $0x48] sm:$0xf]
      %v4902 = vsel %vm4855, %v4640, %v4901
      %4903 = vst [vmem:[%s4852 + $0x48] sm:$0xf] %v4902
      %4904 = vst.msk [vmem:[%s4852 + $0x4c] sm:$0xf] %vm4859, %v4649
      %v4905 = vld [vmem:[%s4852 + $0x50] sm:$0x1]
      %v4906 = vsel %vm4862, %v4650, %v4905
      %4907 = vst [vmem:[%s4852 + $0x50] sm:$0x1] %v4906
      %v4908 = vld [vmem:[%s4852 + $0x54] sm:$0xf]
      %v4909 = vsel %vm4855, %v4657, %v4908
      %4910 = vst [vmem:[%s4852 + $0x54] sm:$0xf] %v4909
      %4911 = vst.msk [vmem:[%s4852 + $0x58] sm:$0xf] %vm4859, %v4666
      %v4912 = vld [vmem:[%s4852 + $0x5c] sm:$0x1]
      %v4913 = vsel %vm4862, %v4667, %v4912
      %4914 = vst [vmem:[%s4852 + $0x5c] sm:$0x1] %v4913
      %v4915 = vld [vmem:[%s4852 + $0x60] sm:$0xf]
      %v4916 = vsel %vm4855, %v4674, %v4915
      %4917 = vst [vmem:[%s4852 + $0x60] sm:$0xf] %v4916
      %4918 = vst.msk [vmem:[%s4852 + $0x64] sm:$0xf] %vm4859, %v4683
      %v4919 = vld [vmem:[%s4852 + $0x68] sm:$0x1]
      %v4920 = vsel %vm4862, %v4684, %v4919
      %4921 = vst [vmem:[%s4852 + $0x68] sm:$0x1] %v4920
      %v4922 = vld [vmem:[%s4852 + $0x6c] sm:$0xf]
      %v4923 = vsel %vm4855, %v4691, %v4922
      %4924 = vst [vmem:[%s4852 + $0x6c] sm:$0xf] %v4923
      %4925 = vst.msk [vmem:[%s4852 + $0x70] sm:$0xf] %vm4859, %v4700
      %v4926 = vld [vmem:[%s4852 + $0x74] sm:$0x1]
      %v4927 = vsel %vm4862, %v4701, %v4926
      %4928 = vst [vmem:[%s4852 + $0x74] sm:$0x1] %v4927
      %v4929 = vld [vmem:[%s4852 + $0x78] sm:$0xf]
      %v4930 = vsel %vm4855, %v4708, %v4929
      %4931 = vst [vmem:[%s4852 + $0x78] sm:$0xf] %v4930
      %4932 = vst.msk [vmem:[%s4852 + $0x7c] sm:$0xf] %vm4859, %v4717
      %v4933 = vld [vmem:[%s4852 + $0x80] sm:$0x1]
      %v4934 = vsel %vm4862, %v4718, %v4933
      %4935 = vst [vmem:[%s4852 + $0x80] sm:$0x1] %v4934
      %v4936 = vld [vmem:[%s4852 + $0x84] sm:$0xf]
      %v4937 = vsel %vm4855, %v4725, %v4936
      %4938 = vst [vmem:[%s4852 + $0x84] sm:$0xf] %v4937
      %4939 = vst.msk [vmem:[%s4852 + $0x88] sm:$0xf] %vm4859, %v4734
      %v4940 = vld [vmem:[%s4852 + $0x8c] sm:$0x1]
      %v4941 = vsel %vm4862, %v4735, %v4940
      %4942 = vst [vmem:[%s4852 + $0x8c] sm:$0x1] %v4941
      %v4943 = vld [vmem:[%s4852 + $0x90] sm:$0xf]
      %v4944 = vsel %vm4855, %v4742, %v4943
      %4945 = vst [vmem:[%s4852 + $0x90] sm:$0xf] %v4944
      %4946 = vst.msk [vmem:[%s4852 + $0x94] sm:$0xf] %vm4859, %v4751
      %v4947 = vld [vmem:[%s4852 + $0x98] sm:$0x1]
      %v4948 = vsel %vm4862, %v4752, %v4947
      %4949 = vst [vmem:[%s4852 + $0x98] sm:$0x1] %v4948
      %v4950 = vld [vmem:[%s4852 + $0x9c] sm:$0xf]
      %v4951 = vsel %vm4855, %v4759, %v4950
      %4952 = vst [vmem:[%s4852 + $0x9c] sm:$0xf] %v4951
      %4953 = vst.msk [vmem:[%s4852 + $0xa0] sm:$0xf] %vm4859, %v4768
      %v4954 = vld [vmem:[%s4852 + $0xa4] sm:$0x1]
      %v4955 = vsel %vm4862, %v4769, %v4954
      %4956 = vst [vmem:[%s4852 + $0xa4] sm:$0x1] %v4955
      %v4957 = vld [vmem:[%s4852 + $0xa8] sm:$0xf]
      %v4958 = vsel %vm4855, %v4776, %v4957
      %4959 = vst [vmem:[%s4852 + $0xa8] sm:$0xf] %v4958
      %4960 = vst.msk [vmem:[%s4852 + $0xac] sm:$0xf] %vm4859, %v4785
      %v4961 = vld [vmem:[%s4852 + $0xb0] sm:$0x1]
      %v4962 = vsel %vm4862, %v4786, %v4961
      %4963 = vst [vmem:[%s4852 + $0xb0] sm:$0x1] %v4962
      %v4964 = vld [vmem:[%s4852 + $0xb4] sm:$0xf]
      %v4965 = vsel %vm4855, %v4793, %v4964
      %4966 = vst [vmem:[%s4852 + $0xb4] sm:$0xf] %v4965
      %4967 = vst.msk [vmem:[%s4852 + $0xb8] sm:$0xf] %vm4859, %v4802
      %v4968 = vld [vmem:[%s4852 + $0xbc] sm:$0x1]
      %v4969 = vsel %vm4862, %v4803, %v4968
      %4970 = vst [vmem:[%s4852 + $0xbc] sm:$0x1] %v4969
      %v4971 = vld [vmem:[%s401] sm:$0xf]
      %v4972 = vld [vmem:[%s401 + $0x4] sm:$0xf]
      %v4973 = vld [vmem:[%s401 + $0x8] sm:$0xf]
      %v4974 = vld [vmem:[%s401 + $0xc] sm:$0xf]
      %v4975 = vld [vmem:[%s401 + $0x10] sm:$0xf]
      %v4976 = vld [vmem:[%s401 + $0x14] sm:$0xf]
      %v4977 = vld [vmem:[%s401 + $0x18] sm:$0xf]
      %v4978 = vld [vmem:[%s401 + $0x1c] sm:$0xf]
      %v4979 = vld [vmem:[%s401 + $0x20] sm:$0xf]
      %v4980 = vld [vmem:[%s401 + $0x24] sm:$0xf]
      %v4981 = vld [vmem:[%s401 + $0x28] sm:$0xf]
      %v4982 = vld [vmem:[%s401 + $0x2c] sm:$0xf]
      %v4983 = vld [vmem:[%s401 + $0x30] sm:$0xf]
      %v4984 = vld [vmem:[%s401 + $0x34] sm:$0xf]
      %v4985 = vld [vmem:[%s401 + $0x38] sm:$0xf]
      %v4986 = vld [vmem:[%s401 + $0x3c] sm:$0xf]
      %v4987 = vld [vmem:[%s401 + $0x40] sm:$0xf]
      %v4988 = vld [vmem:[%s401 + $0x44] sm:$0xf]
      %v4989 = vld [vmem:[%s401 + $0x48] sm:$0xf]
      %v4990 = vld [vmem:[%s401 + $0x4c] sm:$0xf]
      %v4991 = vld [vmem:[%s401 + $0x50] sm:$0xf]
      %v4992 = vld [vmem:[%s401 + $0x54] sm:$0xf]
      %v4993 = vld [vmem:[%s401 + $0x58] sm:$0xf]
      %v4994 = vld [vmem:[%s401 + $0x5c] sm:$0xf]
      %v4995 = vld [vmem:[%s401 + $0x60] sm:$0xf]
      %v4996 = vld [vmem:[%s401 + $0x64] sm:$0xf]
      %v4997 = vld [vmem:[%s401 + $0x68] sm:$0xf]
      %v4998 = vld [vmem:[%s401 + $0x6c] sm:$0xf]
      %v4999 = vld [vmem:[%s401 + $0x70] sm:$0xf]
      %v5000 = vld [vmem:[%s401 + $0x74] sm:$0xf]
      %v5001 = vld [vmem:[%s401 + $0x78] sm:$0xf]
      %v5002 = vld [vmem:[%s401 + $0x7c] sm:$0xf]
      %v5004 = vshrl.u32 %v4971, 16
      %v5006 = vrot.slane %v5004, 7
      %v5007 = vshll.u32 %v4971, 16
      %v5009 = vor.u32 %v5006, %v5007
      %v5010 = vrot.slane %v5006, 4
      %v5012 = vshrl.u32 %v4972, 16
      %v5014 = vrot.slane %v5012, 7
      %v5015 = vshll.u32 %v4972, 16
      %v5017 = vor.u32 %v5014, %v5015
      %v5018 = vsel %vm4531, %v5010, %v5017
      %v5019 = vrot.slane %v5014, 4
      %v5021 = vshrl.u32 %v4973, 16
      %v5023 = vrot.slane %v5021, 7
      %v5024 = vshll.u32 %v4973, 16
      %v5026 = vor.u32 %v5023, %v5024
      %v5027 = vrot.slane %v5023, 4
      %v5029 = vshrl.u32 %v4974, 16
      %v5031 = vrot.slane %v5029, 7
      %v5032 = vshll.u32 %v4974, 16
      %v5034 = vor.u32 %v5031, %v5032
      %v5035 = vsel %vm4531, %v5027, %v5034
      %v5036 = vrot.slane %v5031, 4
      %v5038 = vshrl.u32 %v4975, 16
      %v5040 = vrot.slane %v5038, 7
      %v5041 = vshll.u32 %v4975, 16
      %v5043 = vor.u32 %v5040, %v5041
      %v5044 = vrot.slane %v5040, 4
      %v5046 = vshrl.u32 %v4976, 16
      %v5048 = vrot.slane %v5046, 7
      %v5049 = vshll.u32 %v4976, 16
      %v5051 = vor.u32 %v5048, %v5049
      %v5052 = vsel %vm4531, %v5044, %v5051
      %v5053 = vrot.slane %v5048, 4
      %v5055 = vshrl.u32 %v4977, 16
      %v5057 = vrot.slane %v5055, 7
      %v5058 = vshll.u32 %v4977, 16
      %v5060 = vor.u32 %v5057, %v5058
      %v5061 = vrot.slane %v5057, 4
      %v5063 = vshrl.u32 %v4978, 16
      %v5065 = vrot.slane %v5063, 7
      %v5066 = vshll.u32 %v4978, 16
      %v5068 = vor.u32 %v5065, %v5066
      %v5069 = vsel %vm4531, %v5061, %v5068
      %v5070 = vrot.slane %v5065, 4
      %v5072 = vshrl.u32 %v4979, 16
      %v5074 = vrot.slane %v5072, 7
      %v5075 = vshll.u32 %v4979, 16
      %v5077 = vor.u32 %v5074, %v5075
      %v5078 = vrot.slane %v5074, 4
      %v5080 = vshrl.u32 %v4980, 16
      %v5082 = vrot.slane %v5080, 7
      %v5083 = vshll.u32 %v4980, 16
      %v5085 = vor.u32 %v5082, %v5083
      %v5086 = vsel %vm4531, %v5078, %v5085
      %v5087 = vrot.slane %v5082, 4
      %v5089 = vshrl.u32 %v4981, 16
      %v5091 = vrot.slane %v5089, 7
      %v5092 = vshll.u32 %v4981, 16
      %v5094 = vor.u32 %v5091, %v5092
      %v5095 = vrot.slane %v5091, 4
      %v5097 = vshrl.u32 %v4982, 16
      %v5099 = vrot.slane %v5097, 7
      %v5100 = vshll.u32 %v4982, 16
      %v5102 = vor.u32 %v5099, %v5100
      %v5103 = vsel %vm4531, %v5095, %v5102
      %v5104 = vrot.slane %v5099, 4
      %v5106 = vshrl.u32 %v4983, 16
      %v5108 = vrot.slane %v5106, 7
      %v5109 = vshll.u32 %v4983, 16
      %v5111 = vor.u32 %v5108, %v5109
      %v5112 = vrot.slane %v5108, 4
      %v5114 = vshrl.u32 %v4984, 16
      %v5116 = vrot.slane %v5114, 7
      %v5117 = vshll.u32 %v4984, 16
      %v5119 = vor.u32 %v5116, %v5117
      %v5120 = vsel %vm4531, %v5112, %v5119
      %v5121 = vrot.slane %v5116, 4
      %v5123 = vshrl.u32 %v4985, 16
      %v5125 = vrot.slane %v5123, 7
      %v5126 = vshll.u32 %v4985, 16
      %v5128 = vor.u32 %v5125, %v5126
      %v5129 = vrot.slane %v5125, 4
      %v5131 = vshrl.u32 %v4986, 16
      %v5133 = vrot.slane %v5131, 7
      %v5134 = vshll.u32 %v4986, 16
      %v5136 = vor.u32 %v5133, %v5134
      %v5137 = vsel %vm4531, %v5129, %v5136
      %v5138 = vrot.slane %v5133, 4
      %v5140 = vshrl.u32 %v4987, 16
      %v5142 = vrot.slane %v5140, 7
      %v5143 = vshll.u32 %v4987, 16
      %v5145 = vor.u32 %v5142, %v5143
      %v5146 = vrot.slane %v5142, 4
      %v5148 = vshrl.u32 %v4988, 16
      %v5150 = vrot.slane %v5148, 7
      %v5151 = vshll.u32 %v4988, 16
      %v5153 = vor.u32 %v5150, %v5151
      %v5154 = vsel %vm4531, %v5146, %v5153
      %v5155 = vrot.slane %v5150, 4
      %v5157 = vshrl.u32 %v4989, 16
      %v5159 = vrot.slane %v5157, 7
      %v5160 = vshll.u32 %v4989, 16
      %v5162 = vor.u32 %v5159, %v5160
      %v5163 = vrot.slane %v5159, 4
      %v5165 = vshrl.u32 %v4990, 16
      %v5167 = vrot.slane %v5165, 7
      %v5168 = vshll.u32 %v4990, 16
      %v5170 = vor.u32 %v5167, %v5168
      %v5171 = vsel %vm4531, %v5163, %v5170
      %v5172 = vrot.slane %v5167, 4
      %v5174 = vshrl.u32 %v4991, 16
      %v5176 = vrot.slane %v5174, 7
      %v5177 = vshll.u32 %v4991, 16
      %v5179 = vor.u32 %v5176, %v5177
      %v5180 = vrot.slane %v5176, 4
      %v5182 = vshrl.u32 %v4992, 16
      %v5184 = vrot.slane %v5182, 7
      %v5185 = vshll.u32 %v4992, 16
      %v5187 = vor.u32 %v5184, %v5185
      %v5188 = vsel %vm4531, %v5180, %v5187
      %v5189 = vrot.slane %v5184, 4
      %v5191 = vshrl.u32 %v4993, 16
      %v5193 = vrot.slane %v5191, 7
      %v5194 = vshll.u32 %v4993, 16
      %v5196 = vor.u32 %v5193, %v5194
      %v5197 = vrot.slane %v5193, 4
      %v5199 = vshrl.u32 %v4994, 16
      %v5201 = vrot.slane %v5199, 7
      %v5202 = vshll.u32 %v4994, 16
      %v5204 = vor.u32 %v5201, %v5202
      %v5205 = vsel %vm4531, %v5197, %v5204
      %v5206 = vrot.slane %v5201, 4
      %v5208 = vshrl.u32 %v4995, 16
      %v5210 = vrot.slane %v5208, 7
      %v5211 = vshll.u32 %v4995, 16
      %v5213 = vor.u32 %v5210, %v5211
      %v5214 = vrot.slane %v5210, 4
      %v5216 = vshrl.u32 %v4996, 16
      %v5218 = vrot.slane %v5216, 7
      %v5219 = vshll.u32 %v4996, 16
      %v5221 = vor.u32 %v5218, %v5219
      %v5222 = vsel %vm4531, %v5214, %v5221
      %v5223 = vrot.slane %v5218, 4
      %v5225 = vshrl.u32 %v4997, 16
      %v5227 = vrot.slane %v5225, 7
      %v5228 = vshll.u32 %v4997, 16
      %v5230 = vor.u32 %v5227, %v5228
      %v5231 = vrot.slane %v5227, 4
      %v5233 = vshrl.u32 %v4998, 16
      %v5235 = vrot.slane %v5233, 7
      %v5236 = vshll.u32 %v4998, 16
      %v5238 = vor.u32 %v5235, %v5236
      %v5239 = vsel %vm4531, %v5231, %v5238
      %v5240 = vrot.slane %v5235, 4
      %v5242 = vshrl.u32 %v4999, 16
      %v5244 = vrot.slane %v5242, 7
      %v5245 = vshll.u32 %v4999, 16
      %v5247 = vor.u32 %v5244, %v5245
      %v5248 = vrot.slane %v5244, 4
      %v5250 = vshrl.u32 %v5000, 16
      %v5252 = vrot.slane %v5250, 7
      %v5253 = vshll.u32 %v5000, 16
      %v5255 = vor.u32 %v5252, %v5253
      %v5256 = vsel %vm4531, %v5248, %v5255
      %v5257 = vrot.slane %v5252, 4
      %v5259 = vshrl.u32 %v5001, 16
      %v5261 = vrot.slane %v5259, 7
      %v5262 = vshll.u32 %v5001, 16
      %v5264 = vor.u32 %v5261, %v5262
      %v5265 = vrot.slane %v5261, 4
      %v5267 = vshrl.u32 %v5002, 16
      %v5269 = vrot.slane %v5267, 7
      %v5270 = vshll.u32 %v5002, 16
      %v5272 = vor.u32 %v5269, %v5270
      %v5273 = vsel %vm4531, %v5265, %v5272
      %v5274 = vrot.slane %v5269, 4
      %5275 = vrot.lane.b32.xlu0 %v5009, 8
      %v5276 = vpop.permute.xlu0 %5275
      %5277 = vrot.lane.b32.xlu0 %v5018, 8
      %v5278 = vpop.permute.xlu0 %5277
      %5279 = vrot.lane.b32.xlu0 %v5019, 8
      %v5280 = vpop.permute.xlu0 %5279
      %5281 = vrot.lane.b32.xlu0 %v5026, 8
      %v5282 = vpop.permute.xlu0 %5281
      %5283 = vrot.lane.b32.xlu0 %v5035, 8
      %v5284 = vpop.permute.xlu0 %5283
      %5285 = vrot.lane.b32.xlu0 %v5036, 8
      %v5286 = vpop.permute.xlu0 %5285
      %5287 = vrot.lane.b32.xlu0 %v5043, 8
      %v5288 = vpop.permute.xlu0 %5287
      %5289 = vrot.lane.b32.xlu0 %v5052, 8
      %v5290 = vpop.permute.xlu0 %5289
      %5291 = vrot.lane.b32.xlu0 %v5053, 8
      %v5292 = vpop.permute.xlu0 %5291
      %5293 = vrot.lane.b32.xlu0 %v5060, 8
      %v5294 = vpop.permute.xlu0 %5293
      %5295 = vrot.lane.b32.xlu0 %v5069, 8
      %v5296 = vpop.permute.xlu0 %5295
      %5297 = vrot.lane.b32.xlu0 %v5070, 8
      %v5298 = vpop.permute.xlu0 %5297
      %5299 = vrot.lane.b32.xlu0 %v5077, 8
      %v5300 = vpop.permute.xlu0 %5299
      %5301 = vrot.lane.b32.xlu0 %v5086, 8
      %v5302 = vpop.permute.xlu0 %5301
      %5303 = vrot.lane.b32.xlu0 %v5087, 8
      %v5304 = vpop.permute.xlu0 %5303
      %5305 = vrot.lane.b32.xlu0 %v5094, 8
      %v5306 = vpop.permute.xlu0 %5305
      %5307 = vrot.lane.b32.xlu0 %v5103, 8
      %v5308 = vpop.permute.xlu0 %5307
      %5309 = vrot.lane.b32.xlu0 %v5104, 8
      %v5310 = vpop.permute.xlu0 %5309
      %5311 = vrot.lane.b32.xlu0 %v5111, 8
      %v5312 = vpop.permute.xlu0 %5311
      %5313 = vrot.lane.b32.xlu0 %v5120, 8
      %v5314 = vpop.permute.xlu0 %5313
      %5315 = vrot.lane.b32.xlu0 %v5121, 8
      %v5316 = vpop.permute.xlu0 %5315
      %5317 = vrot.lane.b32.xlu0 %v5128, 8
      %v5318 = vpop.permute.xlu0 %5317
      %5319 = vrot.lane.b32.xlu0 %v5137, 8
      %v5320 = vpop.permute.xlu0 %5319
      %5321 = vrot.lane.b32.xlu0 %v5138, 8
      %v5322 = vpop.permute.xlu0 %5321
      %5323 = vrot.lane.b32.xlu0 %v5145, 8
      %v5324 = vpop.permute.xlu0 %5323
      %5325 = vrot.lane.b32.xlu0 %v5154, 8
      %v5326 = vpop.permute.xlu0 %5325
      %5327 = vrot.lane.b32.xlu0 %v5155, 8
      %v5328 = vpop.permute.xlu0 %5327
      %5329 = vrot.lane.b32.xlu0 %v5162, 8
      %v5330 = vpop.permute.xlu0 %5329
      %5331 = vrot.lane.b32.xlu0 %v5171, 8
      %v5332 = vpop.permute.xlu0 %5331
      %5333 = vrot.lane.b32.xlu0 %v5172, 8
      %v5334 = vpop.permute.xlu0 %5333
      %5335 = vrot.lane.b32.xlu0 %v5179, 8
      %v5336 = vpop.permute.xlu0 %5335
      %5337 = vrot.lane.b32.xlu0 %v5188, 8
      %v5338 = vpop.permute.xlu0 %5337
      %5339 = vrot.lane.b32.xlu0 %v5189, 8
      %v5340 = vpop.permute.xlu0 %5339
      %5341 = vrot.lane.b32.xlu0 %v5196, 8
      %v5342 = vpop.permute.xlu0 %5341
      %5343 = vrot.lane.b32.xlu0 %v5205, 8
      %v5344 = vpop.permute.xlu0 %5343
      %5345 = vrot.lane.b32.xlu0 %v5206, 8
      %v5346 = vpop.permute.xlu0 %5345
      %5347 = vrot.lane.b32.xlu0 %v5213, 8
      %v5348 = vpop.permute.xlu0 %5347
      %5349 = vrot.lane.b32.xlu0 %v5222, 8
      %v5350 = vpop.permute.xlu0 %5349
      %5351 = vrot.lane.b32.xlu0 %v5223, 8
      %v5352 = vpop.permute.xlu0 %5351
      %5353 = vrot.lane.b32.xlu0 %v5230, 8
      %v5354 = vpop.permute.xlu0 %5353
      %5355 = vrot.lane.b32.xlu0 %v5239, 8
      %v5356 = vpop.permute.xlu0 %5355
      %5357 = vrot.lane.b32.xlu0 %v5240, 8
      %v5358 = vpop.permute.xlu0 %5357
      %5359 = vrot.lane.b32.xlu0 %v5247, 8
      %v5360 = vpop.permute.xlu0 %5359
      %5361 = vrot.lane.b32.xlu0 %v5256, 8
      %v5362 = vpop.permute.xlu0 %5361
      %5363 = vrot.lane.b32.xlu0 %v5257, 8
      %v5364 = vpop.permute.xlu0 %5363
      %5365 = vrot.lane.b32.xlu0 %v5264, 8
      %v5366 = vpop.permute.xlu0 %5365
      %5367 = vrot.lane.b32.xlu0 %v5273, 8
      %v5368 = vpop.permute.xlu0 %5367
      %5369 = vrot.lane.b32.xlu0 %v5274, 8
      %v5370 = vpop.permute.xlu0 %5369
      %vm5419 = vcmask 126016
      %vm5420 = vmand %vm5419, %vm4854
      %v5421 = vld [vmem:[%s4852] sm:$0xf]
      %v5422 = vsel %vm5420, %v5276, %v5421
      %5423 = vst [vmem:[%s4852] sm:$0xf] %v5422
      %vm5424 = vcmask 126016
      %5425 = vst.msk [vmem:[%s4852 + $0x4] sm:$0xf] %vm5424, %v5278
      %vm5426 = vcmask 122944
      %vm5427 = vmand %vm5426, %vm1956
      %v5428 = vld [vmem:[%s4852 + $0x8] sm:$0x1]
      %v5429 = vsel %vm5427, %v5280, %v5428
      %5430 = vst [vmem:[%s4852 + $0x8] sm:$0x1] %v5429
      %v5431 = vld [vmem:[%s4852 + $0xc] sm:$0xf]
      %v5432 = vsel %vm5420, %v5282, %v5431
      %5433 = vst [vmem:[%s4852 + $0xc] sm:$0xf] %v5432
      %5434 = vst.msk [vmem:[%s4852 + $0x10] sm:$0xf] %vm5424, %v5284
      %v5435 = vld [vmem:[%s4852 + $0x14] sm:$0x1]
      %v5436 = vsel %vm5427, %v5286, %v5435
      %5437 = vst [vmem:[%s4852 + $0x14] sm:$0x1] %v5436
      %v5438 = vld [vmem:[%s4852 + $0x18] sm:$0xf]
      %v5439 = vsel %vm5420, %v5288, %v5438
      %5440 = vst [vmem:[%s4852 + $0x18] sm:$0xf] %v5439
      %5441 = vst.msk [vmem:[%s4852 + $0x1c] sm:$0xf] %vm5424, %v5290
      %v5442 = vld [vmem:[%s4852 + $0x20] sm:$0x1]
      %v5443 = vsel %vm5427, %v5292, %v5442
      %5444 = vst [vmem:[%s4852 + $0x20] sm:$0x1] %v5443
      %v5445 = vld [vmem:[%s4852 + $0x24] sm:$0xf]
      %v5446 = vsel %vm5420, %v5294, %v5445
      %5447 = vst [vmem:[%s4852 + $0x24] sm:$0xf] %v5446
      %5448 = vst.msk [vmem:[%s4852 + $0x28] sm:$0xf] %vm5424, %v5296
      %v5449 = vld [vmem:[%s4852 + $0x2c] sm:$0x1]
      %v5450 = vsel %vm5427, %v5298, %v5449
      %5451 = vst [vmem:[%s4852 + $0x2c] sm:$0x1] %v5450
      %v5452 = vld [vmem:[%s4852 + $0x30] sm:$0xf]
      %v5453 = vsel %vm5420, %v5300, %v5452
      %5454 = vst [vmem:[%s4852 + $0x30] sm:$0xf] %v5453
      %5455 = vst.msk [vmem:[%s4852 + $0x34] sm:$0xf] %vm5424, %v5302
      %v5456 = vld [vmem:[%s4852 + $0x38] sm:$0x1]
      %v5457 = vsel %vm5427, %v5304, %v5456
      %5458 = vst [vmem:[%s4852 + $0x38] sm:$0x1] %v5457
      %v5459 = vld [vmem:[%s4852 + $0x3c] sm:$0xf]
      %v5460 = vsel %vm5420, %v5306, %v5459
      %5461 = vst [vmem:[%s4852 + $0x3c] sm:$0xf] %v5460
      %5462 = vst.msk [vmem:[%s4852 + $0x40] sm:$0xf] %vm5424, %v5308
      %v5463 = vld [vmem:[%s4852 + $0x44] sm:$0x1]
      %v5464 = vsel %vm5427, %v5310, %v5463
      %5465 = vst [vmem:[%s4852 + $0x44] sm:$0x1] %v5464
      %v5466 = vld [vmem:[%s4852 + $0x48] sm:$0xf]
      %v5467 = vsel %vm5420, %v5312, %v5466
      %5468 = vst [vmem:[%s4852 + $0x48] sm:$0xf] %v5467
      %5469 = vst.msk [vmem:[%s4852 + $0x4c] sm:$0xf] %vm5424, %v5314
      %v5470 = vld [vmem:[%s4852 + $0x50] sm:$0x1]
      %v5471 = vsel %vm5427, %v5316, %v5470
      %5472 = vst [vmem:[%s4852 + $0x50] sm:$0x1] %v5471
      %v5473 = vld [vmem:[%s4852 + $0x54] sm:$0xf]
      %v5474 = vsel %vm5420, %v5318, %v5473
      %5475 = vst [vmem:[%s4852 + $0x54] sm:$0xf] %v5474
      %5476 = vst.msk [vmem:[%s4852 + $0x58] sm:$0xf] %vm5424, %v5320
      %v5477 = vld [vmem:[%s4852 + $0x5c] sm:$0x1]
      %v5478 = vsel %vm5427, %v5322, %v5477
      %5479 = vst [vmem:[%s4852 + $0x5c] sm:$0x1] %v5478
      %v5480 = vld [vmem:[%s4852 + $0x60] sm:$0xf]
      %v5481 = vsel %vm5420, %v5324, %v5480
      %5482 = vst [vmem:[%s4852 + $0x60] sm:$0xf] %v5481
      %5483 = vst.msk [vmem:[%s4852 + $0x64] sm:$0xf] %vm5424, %v5326
      %v5484 = vld [vmem:[%s4852 + $0x68] sm:$0x1]
      %v5485 = vsel %vm5427, %v5328, %v5484
      %5486 = vst [vmem:[%s4852 + $0x68] sm:$0x1] %v5485
      %v5487 = vld [vmem:[%s4852 + $0x6c] sm:$0xf]
      %v5488 = vsel %vm5420, %v5330, %v5487
      %5489 = vst [vmem:[%s4852 + $0x6c] sm:$0xf] %v5488
      %5490 = vst.msk [vmem:[%s4852 + $0x70] sm:$0xf] %vm5424, %v5332
      %v5491 = vld [vmem:[%s4852 + $0x74] sm:$0x1]
      %v5492 = vsel %vm5427, %v5334, %v5491
      %5493 = vst [vmem:[%s4852 + $0x74] sm:$0x1] %v5492
      %v5494 = vld [vmem:[%s4852 + $0x78] sm:$0xf]
      %v5495 = vsel %vm5420, %v5336, %v5494
      %5496 = vst [vmem:[%s4852 + $0x78] sm:$0xf] %v5495
      %5497 = vst.msk [vmem:[%s4852 + $0x7c] sm:$0xf] %vm5424, %v5338
      %v5498 = vld [vmem:[%s4852 + $0x80] sm:$0x1]
      %v5499 = vsel %vm5427, %v5340, %v5498
      %5500 = vst [vmem:[%s4852 + $0x80] sm:$0x1] %v5499
      %v5501 = vld [vmem:[%s4852 + $0x84] sm:$0xf]
      %v5502 = vsel %vm5420, %v5342, %v5501
      %5503 = vst [vmem:[%s4852 + $0x84] sm:$0xf] %v5502
      %5504 = vst.msk [vmem:[%s4852 + $0x88] sm:$0xf] %vm5424, %v5344
      %v5505 = vld [vmem:[%s4852 + $0x8c] sm:$0x1]
      %v5506 = vsel %vm5427, %v5346, %v5505
      %5507 = vst [vmem:[%s4852 + $0x8c] sm:$0x1] %v5506
      %v5508 = vld [vmem:[%s4852 + $0x90] sm:$0xf]
      %v5509 = vsel %vm5420, %v5348, %v5508
      %5510 = vst [vmem:[%s4852 + $0x90] sm:$0xf] %v5509
      %5511 = vst.msk [vmem:[%s4852 + $0x94] sm:$0xf] %vm5424, %v5350
      %v5512 = vld [vmem:[%s4852 + $0x98] sm:$0x1]
      %v5513 = vsel %vm5427, %v5352, %v5512
      %5514 = vst [vmem:[%s4852 + $0x98] sm:$0x1] %v5513
      %v5515 = vld [vmem:[%s4852 + $0x9c] sm:$0xf]
      %v5516 = vsel %vm5420, %v5354, %v5515
      %5517 = vst [vmem:[%s4852 + $0x9c] sm:$0xf] %v5516
      %5518 = vst.msk [vmem:[%s4852 + $0xa0] sm:$0xf] %vm5424, %v5356
      %v5519 = vld [vmem:[%s4852 + $0xa4] sm:$0x1]
      %v5520 = vsel %vm5427, %v5358, %v5519
      %5521 = vst [vmem:[%s4852 + $0xa4] sm:$0x1] %v5520
      %v5522 = vld [vmem:[%s4852 + $0xa8] sm:$0xf]
      %v5523 = vsel %vm5420, %v5360, %v5522
      %5524 = vst [vmem:[%s4852 + $0xa8] sm:$0xf] %v5523
      %5525 = vst.msk [vmem:[%s4852 + $0xac] sm:$0xf] %vm5424, %v5362
      %v5526 = vld [vmem:[%s4852 + $0xb0] sm:$0x1]
      %v5527 = vsel %vm5427, %v5364, %v5526
      %5528 = vst [vmem:[%s4852 + $0xb0] sm:$0x1] %v5527
      %v5529 = vld [vmem:[%s4852 + $0xb4] sm:$0xf]
      %v5530 = vsel %vm5420, %v5366, %v5529
      %5531 = vst [vmem:[%s4852 + $0xb4] sm:$0xf] %v5530
      %5532 = vst.msk [vmem:[%s4852 + $0xb8] sm:$0xf] %vm5424, %v5368
      %v5533 = vld [vmem:[%s4852 + $0xbc] sm:$0x1]
      %v5534 = vsel %vm5427, %v5370, %v5533
      %5535 = vst [vmem:[%s4852 + $0xbc] sm:$0x1] %v5534
      %v5536 = vld [vmem:[#allocation2] sm:$0xf]
      %v5537 = vld [vmem:[#allocation2 + $0x4] sm:$0xf]
      %v5538 = vld [vmem:[#allocation2 + $0xc] sm:$0xf]
      %v5539 = vld [vmem:[#allocation2 + $0x10] sm:$0xf]
      %v5540 = vld [vmem:[#allocation2 + $0x18] sm:$0xf]
      %v5541 = vld [vmem:[#allocation2 + $0x1c] sm:$0xf]
      %v5542 = vld [vmem:[#allocation2 + $0x24] sm:$0xf]
      %v5543 = vld [vmem:[#allocation2 + $0x28] sm:$0xf]
      %v5544 = vld [vmem:[#allocation2 + $0x30] sm:$0xf]
      %v5545 = vld [vmem:[#allocation2 + $0x34] sm:$0xf]
      %v5546 = vld [vmem:[#allocation2 + $0x3c] sm:$0xf]
      %v5547 = vld [vmem:[#allocation2 + $0x40] sm:$0xf]
      %v5548 = vld [vmem:[#allocation2 + $0x48] sm:$0xf]
      %v5549 = vld [vmem:[#allocation2 + $0x4c] sm:$0xf]
      %v5550 = vld [vmem:[#allocation2 + $0x54] sm:$0xf]
      %v5551 = vld [vmem:[#allocation2 + $0x58] sm:$0xf]
      %v5552 = vld [vmem:[#allocation2 + $0x60] sm:$0xf]
      %v5553 = vld [vmem:[#allocation2 + $0x64] sm:$0xf]
      %v5554 = vld [vmem:[#allocation2 + $0x6c] sm:$0xf]
      %v5555 = vld [vmem:[#allocation2 + $0x70] sm:$0xf]
      %v5556 = vld [vmem:[#allocation2 + $0x78] sm:$0xf]
      %v5557 = vld [vmem:[#allocation2 + $0x7c] sm:$0xf]
      %v5558 = vld [vmem:[#allocation2 + $0x84] sm:$0xf]
      %v5559 = vld [vmem:[#allocation2 + $0x88] sm:$0xf]
      %v5560 = vld [vmem:[#allocation2 + $0x90] sm:$0xf]
      %v5561 = vld [vmem:[#allocation2 + $0x94] sm:$0xf]
      %v5562 = vld [vmem:[#allocation2 + $0x9c] sm:$0xf]
      %v5563 = vld [vmem:[#allocation2 + $0xa0] sm:$0xf]
      %v5564 = vld [vmem:[#allocation2 + $0xa8] sm:$0xf]
      %v5565 = vld [vmem:[#allocation2 + $0xac] sm:$0xf]
      %v5566 = vld [vmem:[#allocation2 + $0xb4] sm:$0xf]
      %v5567 = vld [vmem:[#allocation2 + $0xb8] sm:$0xf]
      %v5568 = vld [vmem:[#allocation2 + $0x8] sm:$0x1]
      %v5569 = vld [vmem:[#allocation2 + $0x14] sm:$0x1]
      %v5570 = vld [vmem:[#allocation2 + $0x20] sm:$0x1]
      %v5571 = vld [vmem:[#allocation2 + $0x2c] sm:$0x1]
      %v5572 = vld [vmem:[#allocation2 + $0x38] sm:$0x1]
      %v5573 = vld [vmem:[#allocation2 + $0x44] sm:$0x1]
      %v5574 = vld [vmem:[#allocation2 + $0x50] sm:$0x1]
      %v5575 = vld [vmem:[#allocation2 + $0x5c] sm:$0x1]
      %v5576 = vld [vmem:[#allocation2 + $0x68] sm:$0x1]
      %v5577 = vld [vmem:[#allocation2 + $0x74] sm:$0x1]
      %v5578 = vld [vmem:[#allocation2 + $0x80] sm:$0x1]
      %v5579 = vld [vmem:[#allocation2 + $0x8c] sm:$0x1]
      %v5580 = vld [vmem:[#allocation2 + $0x98] sm:$0x1]
      %v5581 = vld [vmem:[#allocation2 + $0xa4] sm:$0x1]
      %v5582 = vld [vmem:[#allocation2 + $0xb0] sm:$0x1]
      %v5583 = vld [vmem:[#allocation2 + $0xbc] sm:$0x1]
      %vm5584 = vsmask.f32 3328
      %vm5585 = vsmask.f32 7440
      %vm5586 = vmor %vm5584, %vm5585
      %v5588 = vshrl.u32 %v5536, 16
      %v5590 = vrot.slane %v5588, 4
      %v5591 = vshll.u32 %v5536, 16
      %v5593 = vrot.slane %v5591, 5
      %v5594 = vor.u32 %v5590, %v5593
      %v5595 = vrot.slane %v5594, 4
      %v5597 = vshll.u32 %v5537, 16
      %v5599 = vrot.slane %v5597, 5
      %v5600 = vsel %vm5586, %v5595, %v5599
      %v5601 = vshrl.u32 %v5537, 16
      %v5603 = vrot.slane %v5601, 4
      %v5604 = vor.u32 %v5603, %v5599
      %v5605 = vrot.slane %v5604, 4
      %v5607 = vshll.u32 %v5568, 16
      %v5609 = vrot.slane %v5607, 5
      %v5610 = vsel %vm5586, %v5605, %v5609
      %v5612 = vshrl.u32 %v5538, 16
      %v5614 = vrot.slane %v5612, 4
      %v5615 = vshll.u32 %v5538, 16
      %v5617 = vrot.slane %v5615, 5
      %v5618 = vor.u32 %v5614, %v5617
      %v5619 = vrot.slane %v5618, 4
      %v5621 = vshll.u32 %v5539, 16
      %v5623 = vrot.slane %v5621, 5
      %v5624 = vsel %vm5586, %v5619, %v5623
      %v5625 = vshrl.u32 %v5539, 16
      %v5627 = vrot.slane %v5625, 4
      %v5628 = vor.u32 %v5627, %v5623
      %v5629 = vrot.slane %v5628, 4
      %v5631 = vshll.u32 %v5569, 16
      %v5633 = vrot.slane %v5631, 5
      %v5634 = vsel %vm5586, %v5629, %v5633
      %v5636 = vshrl.u32 %v5540, 16
      %v5638 = vrot.slane %v5636, 4
      %v5639 = vshll.u32 %v5540, 16
      %v5641 = vrot.slane %v5639, 5
      %v5642 = vor.u32 %v5638, %v5641
      %v5643 = vrot.slane %v5642, 4
      %v5645 = vshll.u32 %v5541, 16
      %v5647 = vrot.slane %v5645, 5
      %v5648 = vsel %vm5586, %v5643, %v5647
      %v5649 = vshrl.u32 %v5541, 16
      %v5651 = vrot.slane %v5649, 4
      %v5652 = vor.u32 %v5651, %v5647
      %v5653 = vrot.slane %v5652, 4
      %v5655 = vshll.u32 %v5570, 16
      %v5657 = vrot.slane %v5655, 5
      %v5658 = vsel %vm5586, %v5653, %v5657
      %v5660 = vshrl.u32 %v5542, 16
      %v5662 = vrot.slane %v5660, 4
      %v5663 = vshll.u32 %v5542, 16
      %v5665 = vrot.slane %v5663, 5
      %v5666 = vor.u32 %v5662, %v5665
      %v5667 = vrot.slane %v5666, 4
      %v5669 = vshll.u32 %v5543, 16
      %v5671 = vrot.slane %v5669, 5
      %v5672 = vsel %vm5586, %v5667, %v5671
      %v5673 = vshrl.u32 %v5543, 16
      %v5675 = vrot.slane %v5673, 4
      %v5676 = vor.u32 %v5675, %v5671
      %v5677 = vrot.slane %v5676, 4
      %v5679 = vshll.u32 %v5571, 16
      %v5681 = vrot.slane %v5679, 5
      %v5682 = vsel %vm5586, %v5677, %v5681
      %v5684 = vshrl.u32 %v5544, 16
      %v5686 = vrot.slane %v5684, 4
      %v5687 = vshll.u32 %v5544, 16
      %v5689 = vrot.slane %v5687, 5
      %v5690 = vor.u32 %v5686, %v5689
      %v5691 = vrot.slane %v5690, 4
      %v5693 = vshll.u32 %v5545, 16
      %v5695 = vrot.slane %v5693, 5
      %v5696 = vsel %vm5586, %v5691, %v5695
      %v5697 = vshrl.u32 %v5545, 16
      %v5699 = vrot.slane %v5697, 4
      %v5700 = vor.u32 %v5699, %v5695
      %v5701 = vrot.slane %v5700, 4
      %v5703 = vshll.u32 %v5572, 16
      %v5705 = vrot.slane %v5703, 5
      %v5706 = vsel %vm5586, %v5701, %v5705
      %v5708 = vshrl.u32 %v5546, 16
      %v5710 = vrot.slane %v5708, 4
      %v5711 = vshll.u32 %v5546, 16
      %v5713 = vrot.slane %v5711, 5
      %v5714 = vor.u32 %v5710, %v5713
      %v5715 = vrot.slane %v5714, 4
      %v5717 = vshll.u32 %v5547, 16
      %v5719 = vrot.slane %v5717, 5
      %v5720 = vsel %vm5586, %v5715, %v5719
      %v5721 = vshrl.u32 %v5547, 16
      %v5723 = vrot.slane %v5721, 4
      %v5724 = vor.u32 %v5723, %v5719
      %v5725 = vrot.slane %v5724, 4
      %v5727 = vshll.u32 %v5573, 16
      %v5729 = vrot.slane %v5727, 5
      %v5730 = vsel %vm5586, %v5725, %v5729
      %v5732 = vshrl.u32 %v5548, 16
      %v5734 = vrot.slane %v5732, 4
      %v5735 = vshll.u32 %v5548, 16
      %v5737 = vrot.slane %v5735, 5
      %v5738 = vor.u32 %v5734, %v5737
      %v5739 = vrot.slane %v5738, 4
      %v5741 = vshll.u32 %v5549, 16
      %v5743 = vrot.slane %v5741, 5
      %v5744 = vsel %vm5586, %v5739, %v5743
      %v5745 = vshrl.u32 %v5549, 16
      %v5747 = vrot.slane %v5745, 4
      %v5748 = vor.u32 %v5747, %v5743
      %v5749 = vrot.slane %v5748, 4
      %v5751 = vshll.u32 %v5574, 16
      %v5753 = vrot.slane %v5751, 5
      %v5754 = vsel %vm5586, %v5749, %v5753
      %v5756 = vshrl.u32 %v5550, 16
      %v5758 = vrot.slane %v5756, 4
      %v5759 = vshll.u32 %v5550, 16
      %v5761 = vrot.slane %v5759, 5
      %v5762 = vor.u32 %v5758, %v5761
      %v5763 = vrot.slane %v5762, 4
      %v5765 = vshll.u32 %v5551, 16
      %v5767 = vrot.slane %v5765, 5
      %v5768 = vsel %vm5586, %v5763, %v5767
      %v5769 = vshrl.u32 %v5551, 16
      %v5771 = vrot.slane %v5769, 4
      %v5772 = vor.u32 %v5771, %v5767
      %v5773 = vrot.slane %v5772, 4
      %v5775 = vshll.u32 %v5575, 16
      %v5777 = vrot.slane %v5775, 5
      %v5778 = vsel %vm5586, %v5773, %v5777
      %v5780 = vshrl.u32 %v5552, 16
      %v5782 = vrot.slane %v5780, 4
      %v5783 = vshll.u32 %v5552, 16
      %v5785 = vrot.slane %v5783, 5
      %v5786 = vor.u32 %v5782, %v5785
      %v5787 = vrot.slane %v5786, 4
      %v5789 = vshll.u32 %v5553, 16
      %v5791 = vrot.slane %v5789, 5
      %v5792 = vsel %vm5586, %v5787, %v5791
      %v5793 = vshrl.u32 %v5553, 16
      %v5795 = vrot.slane %v5793, 4
      %v5796 = vor.u32 %v5795, %v5791
      %v5797 = vrot.slane %v5796, 4
      %v5799 = vshll.u32 %v5576, 16
      %v5801 = vrot.slane %v5799, 5
      %v5802 = vsel %vm5586, %v5797, %v5801
      %v5804 = vshrl.u32 %v5554, 16
      %v5806 = vrot.slane %v5804, 4
      %v5807 = vshll.u32 %v5554, 16
      %v5809 = vrot.slane %v5807, 5
      %v5810 = vor.u32 %v5806, %v5809
      %v5811 = vrot.slane %v5810, 4
      %v5813 = vshll.u32 %v5555, 16
      %v5815 = vrot.slane %v5813, 5
      %v5816 = vsel %vm5586, %v5811, %v5815
      %v5817 = vshrl.u32 %v5555, 16
      %v5819 = vrot.slane %v5817, 4
      %v5820 = vor.u32 %v5819, %v5815
      %v5821 = vrot.slane %v5820, 4
      %v5823 = vshll.u32 %v5577, 16
      %v5825 = vrot.slane %v5823, 5
      %v5826 = vsel %vm5586, %v5821, %v5825
      %v5828 = vshrl.u32 %v5556, 16
      %v5830 = vrot.slane %v5828, 4
      %v5831 = vshll.u32 %v5556, 16
      %v5833 = vrot.slane %v5831, 5
      %v5834 = vor.u32 %v5830, %v5833
      %v5835 = vrot.slane %v5834, 4
      %v5837 = vshll.u32 %v5557, 16
      %v5839 = vrot.slane %v5837, 5
      %v5840 = vsel %vm5586, %v5835, %v5839
      %v5841 = vshrl.u32 %v5557, 16
      %v5843 = vrot.slane %v5841, 4
      %v5844 = vor.u32 %v5843, %v5839
      %v5845 = vrot.slane %v5844, 4
      %v5847 = vshll.u32 %v5578, 16
      %v5849 = vrot.slane %v5847, 5
      %v5850 = vsel %vm5586, %v5845, %v5849
      %v5852 = vshrl.u32 %v5558, 16
      %v5854 = vrot.slane %v5852, 4
      %v5855 = vshll.u32 %v5558, 16
      %v5857 = vrot.slane %v5855, 5
      %v5858 = vor.u32 %v5854, %v5857
      %v5859 = vrot.slane %v5858, 4
      %v5861 = vshll.u32 %v5559, 16
      %v5863 = vrot.slane %v5861, 5
      %v5864 = vsel %vm5586, %v5859, %v5863
      %v5865 = vshrl.u32 %v5559, 16
      %v5867 = vrot.slane %v5865, 4
      %v5868 = vor.u32 %v5867, %v5863
      %v5869 = vrot.slane %v5868, 4
      %v5871 = vshll.u32 %v5579, 16
      %v5873 = vrot.slane %v5871, 5
      %v5874 = vsel %vm5586, %v5869, %v5873
      %v5876 = vshrl.u32 %v5560, 16
      %v5878 = vrot.slane %v5876, 4
      %v5879 = vshll.u32 %v5560, 16
      %v5881 = vrot.slane %v5879, 5
      %v5882 = vor.u32 %v5878, %v5881
      %v5883 = vrot.slane %v5882, 4
      %v5885 = vshll.u32 %v5561, 16
      %v5887 = vrot.slane %v5885, 5
      %v5888 = vsel %vm5586, %v5883, %v5887
      %v5889 = vshrl.u32 %v5561, 16
      %v5891 = vrot.slane %v5889, 4
      %v5892 = vor.u32 %v5891, %v5887
      %v5893 = vrot.slane %v5892, 4
      %v5895 = vshll.u32 %v5580, 16
      %v5897 = vrot.slane %v5895, 5
      %v5898 = vsel %vm5586, %v5893, %v5897
      %v5900 = vshrl.u32 %v5562, 16
      %v5902 = vrot.slane %v5900, 4
      %v5903 = vshll.u32 %v5562, 16
      %v5905 = vrot.slane %v5903, 5
      %v5906 = vor.u32 %v5902, %v5905
      %v5907 = vrot.slane %v5906, 4
      %v5909 = vshll.u32 %v5563, 16
      %v5911 = vrot.slane %v5909, 5
      %v5912 = vsel %vm5586, %v5907, %v5911
      %v5913 = vshrl.u32 %v5563, 16
      %v5915 = vrot.slane %v5913, 4
      %v5916 = vor.u32 %v5915, %v5911
      %v5917 = vrot.slane %v5916, 4
      %v5919 = vshll.u32 %v5581, 16
      %v5921 = vrot.slane %v5919, 5
      %v5922 = vsel %vm5586, %v5917, %v5921
      %v5924 = vshrl.u32 %v5564, 16
      %v5926 = vrot.slane %v5924, 4
      %v5927 = vshll.u32 %v5564, 16
      %v5929 = vrot.slane %v5927, 5
      %v5930 = vor.u32 %v5926, %v5929
      %v5931 = vrot.slane %v5930, 4
      %v5933 = vshll.u32 %v5565, 16
      %v5935 = vrot.slane %v5933, 5
      %v5936 = vsel %vm5586, %v5931, %v5935
      %v5937 = vshrl.u32 %v5565, 16
      %v5939 = vrot.slane %v5937, 4
      %v5940 = vor.u32 %v5939, %v5935
      %v5941 = vrot.slane %v5940, 4
      %v5943 = vshll.u32 %v5582, 16
      %v5945 = vrot.slane %v5943, 5
      %v5946 = vsel %vm5586, %v5941, %v5945
      %v5948 = vshrl.u32 %v5566, 16
      %v5950 = vrot.slane %v5948, 4
      %v5951 = vshll.u32 %v5566, 16
      %v5953 = vrot.slane %v5951, 5
      %v5954 = vor.u32 %v5950, %v5953
      %v5955 = vrot.slane %v5954, 4
      %v5957 = vshll.u32 %v5567, 16
      %v5959 = vrot.slane %v5957, 5
      %v5960 = vsel %vm5586, %v5955, %v5959
      %v5961 = vshrl.u32 %v5567, 16
      %v5963 = vrot.slane %v5961, 4
      %v5964 = vor.u32 %v5963, %v5959
      %v5965 = vrot.slane %v5964, 4
      %v5967 = vshll.u32 %v5583, 16
      %v5969 = vrot.slane %v5967, 5
      %v5970 = vsel %vm5586, %v5965, %v5969
      %v5971 = vld [vmem:[#allocation2] sm:$0xe]
      %v5972 = vld [vmem:[#allocation2 + $0xc] sm:$0xe]
      %v5973 = vld [vmem:[#allocation2 + $0x18] sm:$0xe]
      %v5974 = vld [vmem:[#allocation2 + $0x24] sm:$0xe]
      %v5975 = vld [vmem:[#allocation2 + $0x30] sm:$0xe]
      %v5976 = vld [vmem:[#allocation2 + $0x3c] sm:$0xe]
      %v5977 = vld [vmem:[#allocation2 + $0x48] sm:$0xe]
      %v5978 = vld [vmem:[#allocation2 + $0x54] sm:$0xe]
      %v5979 = vld [vmem:[#allocation2 + $0x60] sm:$0xe]
      %v5980 = vld [vmem:[#allocation2 + $0x6c] sm:$0xe]
      %v5981 = vld [vmem:[#allocation2 + $0x78] sm:$0xe]
      %v5982 = vld [vmem:[#allocation2 + $0x84] sm:$0xe]
      %v5983 = vld [vmem:[#allocation2 + $0x90] sm:$0xe]
      %v5984 = vld [vmem:[#allocation2 + $0x9c] sm:$0xe]
      %v5985 = vld [vmem:[#allocation2 + $0xa8] sm:$0xe]
      %v5986 = vld [vmem:[#allocation2 + $0xb4] sm:$0xe]
      %vm6035 = vcmask 1042432
      %vm6036 = vcmask 1046532
      %vm6037 = vmor %vm6035, %vm6036
      %v6038 = vrot.slane %v5971, 5
      %v6039 = vrot.slane %v6038, 4
      %v6040 = vrot.slane %v5537, 5
      %v6041 = vsel %vm6037, %v6039, %v6040
      %v6042 = vrot.slane %v6040, 4
      %v6043 = vrot.slane %v5568, 5
      %v6044 = vsel %vm6037, %v6042, %v6043
      %v6045 = vrot.slane %v5972, 5
      %v6046 = vrot.slane %v6045, 4
      %v6047 = vrot.slane %v5539, 5
      %v6048 = vsel %vm6037, %v6046, %v6047
      %v6049 = vrot.slane %v6047, 4
      %v6050 = vrot.slane %v5569, 5
      %v6051 = vsel %vm6037, %v6049, %v6050
      %v6052 = vrot.slane %v5973, 5
      %v6053 = vrot.slane %v6052, 4
      %v6054 = vrot.slane %v5541, 5
      %v6055 = vsel %vm6037, %v6053, %v6054
      %v6056 = vrot.slane %v6054, 4
      %v6057 = vrot.slane %v5570, 5
      %v6058 = vsel %vm6037, %v6056, %v6057
      %v6059 = vrot.slane %v5974, 5
      %v6060 = vrot.slane %v6059, 4
      %v6061 = vrot.slane %v5543, 5
      %v6062 = vsel %vm6037, %v6060, %v6061
      %v6063 = vrot.slane %v6061, 4
      %v6064 = vrot.slane %v5571, 5
      %v6065 = vsel %vm6037, %v6063, %v6064
      %v6066 = vrot.slane %v5975, 5
      %v6067 = vrot.slane %v6066, 4
      %v6068 = vrot.slane %v5545, 5
      %v6069 = vsel %vm6037, %v6067, %v6068
      %v6070 = vrot.slane %v6068, 4
      %v6071 = vrot.slane %v5572, 5
      %v6072 = vsel %vm6037, %v6070, %v6071
      %v6073 = vrot.slane %v5976, 5
      %v6074 = vrot.slane %v6073, 4
      %v6075 = vrot.slane %v5547, 5
      %v6076 = vsel %vm6037, %v6074, %v6075
      %v6077 = vrot.slane %v6075, 4
      %v6078 = vrot.slane %v5573, 5
      %v6079 = vsel %vm6037, %v6077, %v6078
      %v6080 = vrot.slane %v5977, 5
      %v6081 = vrot.slane %v6080, 4
      %v6082 = vrot.slane %v5549, 5
      %v6083 = vsel %vm6037, %v6081, %v6082
      %v6084 = vrot.slane %v6082, 4
      %v6085 = vrot.slane %v5574, 5
      %v6086 = vsel %vm6037, %v6084, %v6085
      %v6087 = vrot.slane %v5978, 5
      %v6088 = vrot.slane %v6087, 4
      %v6089 = vrot.slane %v5551, 5
      %v6090 = vsel %vm6037, %v6088, %v6089
      %v6091 = vrot.slane %v6089, 4
      %v6092 = vrot.slane %v5575, 5
      %v6093 = vsel %vm6037, %v6091, %v6092
      %v6094 = vrot.slane %v5979, 5
      %v6095 = vrot.slane %v6094, 4
      %v6096 = vrot.slane %v5553, 5
      %v6097 = vsel %vm6037, %v6095, %v6096
      %v6098 = vrot.slane %v6096, 4
      %v6099 = vrot.slane %v5576, 5
      %v6100 = vsel %vm6037, %v6098, %v6099
      %v6101 = vrot.slane %v5980, 5
      %v6102 = vrot.slane %v6101, 4
      %v6103 = vrot.slane %v5555, 5
      %v6104 = vsel %vm6037, %v6102, %v6103
      %v6105 = vrot.slane %v6103, 4
      %v6106 = vrot.slane %v5577, 5
      %v6107 = vsel %vm6037, %v6105, %v6106
      %v6108 = vrot.slane %v5981, 5
      %v6109 = vrot.slane %v6108, 4
      %v6110 = vrot.slane %v5557, 5
      %v6111 = vsel %vm6037, %v6109, %v6110
      %v6112 = vrot.slane %v6110, 4
      %v6113 = vrot.slane %v5578, 5
      %v6114 = vsel %vm6037, %v6112, %v6113
      %v6115 = vrot.slane %v5982, 5
      %v6116 = vrot.slane %v6115, 4
      %v6117 = vrot.slane %v5559, 5
      %v6118 = vsel %vm6037, %v6116, %v6117
      %v6119 = vrot.slane %v6117, 4
      %v6120 = vrot.slane %v5579, 5
      %v6121 = vsel %vm6037, %v6119, %v6120
      %v6122 = vrot.slane %v5983, 5
      %v6123 = vrot.slane %v6122, 4
      %v6124 = vrot.slane %v5561, 5
      %v6125 = vsel %vm6037, %v6123, %v6124
      %v6126 = vrot.slane %v6124, 4
      %v6127 = vrot.slane %v5580, 5
      %v6128 = vsel %vm6037, %v6126, %v6127
      %v6129 = vrot.slane %v5984, 5
      %v6130 = vrot.slane %v6129, 4
      %v6131 = vrot.slane %v5563, 5
      %v6132 = vsel %vm6037, %v6130, %v6131
      %v6133 = vrot.slane %v6131, 4
      %v6134 = vrot.slane %v5581, 5
      %v6135 = vsel %vm6037, %v6133, %v6134
      %v6136 = vrot.slane %v5985, 5
      %v6137 = vrot.slane %v6136, 4
      %v6138 = vrot.slane %v5565, 5
      %v6139 = vsel %vm6037, %v6137, %v6138
      %v6140 = vrot.slane %v6138, 4
      %v6141 = vrot.slane %v5582, 5
      %v6142 = vsel %vm6037, %v6140, %v6141
      %v6143 = vrot.slane %v5986, 5
      %v6144 = vrot.slane %v6143, 4
      %v6145 = vrot.slane %v5567, 5
      %v6146 = vsel %vm6037, %v6144, %v6145
      %v6147 = vrot.slane %v6145, 4
      %v6148 = vrot.slane %v5583, 5
      %v6149 = vsel %vm6037, %v6147, %v6148
      %v6150 = vld [vmem:[%s4852] sm:$0xf]
      %v6151 = vld [vmem:[%s4852 + $0x4] sm:$0xf]
      %v6152 = vld [vmem:[%s4852 + $0xc] sm:$0xf]
      %v6153 = vld [vmem:[%s4852 + $0x10] sm:$0xf]
      %v6154 = vld [vmem:[%s4852 + $0x18] sm:$0xf]
      %v6155 = vld [vmem:[%s4852 + $0x1c] sm:$0xf]
      %v6156 = vld [vmem:[%s4852 + $0x24] sm:$0xf]
      %v6157 = vld [vmem:[%s4852 + $0x28] sm:$0xf]
      %v6158 = vld [vmem:[%s4852 + $0x30] sm:$0xf]
      %v6159 = vld [vmem:[%s4852 + $0x34] sm:$0xf]
      %v6160 = vld [vmem:[%s4852 + $0x3c] sm:$0xf]
      %v6161 = vld [vmem:[%s4852 + $0x40] sm:$0xf]
      %v6162 = vld [vmem:[%s4852 + $0x48] sm:$0xf]
      %v6163 = vld [vmem:[%s4852 + $0x4c] sm:$0xf]
      %v6164 = vld [vmem:[%s4852 + $0x54] sm:$0xf]
      %v6165 = vld [vmem:[%s4852 + $0x58] sm:$0xf]
      %v6166 = vld [vmem:[%s4852 + $0x60] sm:$0xf]
      %v6167 = vld [vmem:[%s4852 + $0x64] sm:$0xf]
      %v6168 = vld [vmem:[%s4852 + $0x6c] sm:$0xf]
      %v6169 = vld [vmem:[%s4852 + $0x70] sm:$0xf]
      %v6170 = vld [vmem:[%s4852 + $0x78] sm:$0xf]
      %v6171 = vld [vmem:[%s4852 + $0x7c] sm:$0xf]
      %v6172 = vld [vmem:[%s4852 + $0x84] sm:$0xf]
      %v6173 = vld [vmem:[%s4852 + $0x88] sm:$0xf]
      %v6174 = vld [vmem:[%s4852 + $0x90] sm:$0xf]
      %v6175 = vld [vmem:[%s4852 + $0x94] sm:$0xf]
      %v6176 = vld [vmem:[%s4852 + $0x9c] sm:$0xf]
      %v6177 = vld [vmem:[%s4852 + $0xa0] sm:$0xf]
      %v6178 = vld [vmem:[%s4852 + $0xa8] sm:$0xf]
      %v6179 = vld [vmem:[%s4852 + $0xac] sm:$0xf]
      %v6180 = vld [vmem:[%s4852 + $0xb4] sm:$0xf]
      %v6181 = vld [vmem:[%s4852 + $0xb8] sm:$0xf]
      %v6182 = vld [vmem:[%s4852 + $0x8] sm:$0x1]
      %v6183 = vld [vmem:[%s4852 + $0x14] sm:$0x1]
      %v6184 = vld [vmem:[%s4852 + $0x20] sm:$0x1]
      %v6185 = vld [vmem:[%s4852 + $0x2c] sm:$0x1]
      %v6186 = vld [vmem:[%s4852 + $0x38] sm:$0x1]
      %v6187 = vld [vmem:[%s4852 + $0x44] sm:$0x1]
      %v6188 = vld [vmem:[%s4852 + $0x50] sm:$0x1]
      %v6189 = vld [vmem:[%s4852 + $0x5c] sm:$0x1]
      %v6190 = vld [vmem:[%s4852 + $0x68] sm:$0x1]
      %v6191 = vld [vmem:[%s4852 + $0x74] sm:$0x1]
      %v6192 = vld [vmem:[%s4852 + $0x80] sm:$0x1]
      %v6193 = vld [vmem:[%s4852 + $0x8c] sm:$0x1]
      %v6194 = vld [vmem:[%s4852 + $0x98] sm:$0x1]
      %v6195 = vld [vmem:[%s4852 + $0xa4] sm:$0x1]
      %v6196 = vld [vmem:[%s4852 + $0xb0] sm:$0x1]
      %v6197 = vld [vmem:[%s4852 + $0xbc] sm:$0x1]
      %v6199 = vshrl.u32 %v6150, 16
      %v6201 = vrot.slane %v6199, 4
      %v6202 = vshll.u32 %v6150, 16
      %v6204 = vrot.slane %v6202, 5
      %v6205 = vor.u32 %v6201, %v6204
      %v6206 = vrot.slane %v6205, 4
      %v6208 = vshll.u32 %v6151, 16
      %v6210 = vrot.slane %v6208, 5
      %v6211 = vsel %vm5586, %v6206, %v6210
      %v6212 = vshrl.u32 %v6151, 16
      %v6214 = vrot.slane %v6212, 4
      %v6215 = vor.u32 %v6214, %v6210
      %v6216 = vrot.slane %v6215, 4
      %v6218 = vshll.u32 %v6182, 16
      %v6220 = vrot.slane %v6218, 5
      %v6221 = vsel %vm5586, %v6216, %v6220
      %v6223 = vshrl.u32 %v6152, 16
      %v6225 = vrot.slane %v6223, 4
      %v6226 = vshll.u32 %v6152, 16
      %v6228 = vrot.slane %v6226, 5
      %v6229 = vor.u32 %v6225, %v6228
      %v6230 = vrot.slane %v6229, 4
      %v6232 = vshll.u32 %v6153, 16
      %v6234 = vrot.slane %v6232, 5
      %v6235 = vsel %vm5586, %v6230, %v6234
      %v6236 = vshrl.u32 %v6153, 16
      %v6238 = vrot.slane %v6236, 4
      %v6239 = vor.u32 %v6238, %v6234
      %v6240 = vrot.slane %v6239, 4
      %v6242 = vshll.u32 %v6183, 16
      %v6244 = vrot.slane %v6242, 5
      %v6245 = vsel %vm5586, %v6240, %v6244
      %v6247 = vshrl.u32 %v6154, 16
      %v6249 = vrot.slane %v6247, 4
      %v6250 = vshll.u32 %v6154, 16
      %v6252 = vrot.slane %v6250, 5
      %v6253 = vor.u32 %v6249, %v6252
      %v6254 = vrot.slane %v6253, 4
      %v6256 = vshll.u32 %v6155, 16
      %v6258 = vrot.slane %v6256, 5
      %v6259 = vsel %vm5586, %v6254, %v6258
      %v6260 = vshrl.u32 %v6155, 16
      %v6262 = vrot.slane %v6260, 4
      %v6263 = vor.u32 %v6262, %v6258
      %v6264 = vrot.slane %v6263, 4
      %v6266 = vshll.u32 %v6184, 16
      %v6268 = vrot.slane %v6266, 5
      %v6269 = vsel %vm5586, %v6264, %v6268
      %v6271 = vshrl.u32 %v6156, 16
      %v6273 = vrot.slane %v6271, 4
      %v6274 = vshll.u32 %v6156, 16
      %v6276 = vrot.slane %v6274, 5
      %v6277 = vor.u32 %v6273, %v6276
      %v6278 = vrot.slane %v6277, 4
      %v6280 = vshll.u32 %v6157, 16
      %v6282 = vrot.slane %v6280, 5
      %v6283 = vsel %vm5586, %v6278, %v6282
      %v6284 = vshrl.u32 %v6157, 16
      %v6286 = vrot.slane %v6284, 4
      %v6287 = vor.u32 %v6286, %v6282
      %v6288 = vrot.slane %v6287, 4
      %v6290 = vshll.u32 %v6185, 16
      %v6292 = vrot.slane %v6290, 5
      %v6293 = vsel %vm5586, %v6288, %v6292
      %v6295 = vshrl.u32 %v6158, 16
      %v6297 = vrot.slane %v6295, 4
      %v6298 = vshll.u32 %v6158, 16
      %v6300 = vrot.slane %v6298, 5
      %v6301 = vor.u32 %v6297, %v6300
      %v6302 = vrot.slane %v6301, 4
      %v6304 = vshll.u32 %v6159, 16
      %v6306 = vrot.slane %v6304, 5
      %v6307 = vsel %vm5586, %v6302, %v6306
      %v6308 = vshrl.u32 %v6159, 16
      %v6310 = vrot.slane %v6308, 4
      %v6311 = vor.u32 %v6310, %v6306
      %v6312 = vrot.slane %v6311, 4
      %v6314 = vshll.u32 %v6186, 16
      %v6316 = vrot.slane %v6314, 5
      %v6317 = vsel %vm5586, %v6312, %v6316
      %v6319 = vshrl.u32 %v6160, 16
      %v6321 = vrot.slane %v6319, 4
      %v6322 = vshll.u32 %v6160, 16
      %v6324 = vrot.slane %v6322, 5
      %v6325 = vor.u32 %v6321, %v6324
      %v6326 = vrot.slane %v6325, 4
      %v6328 = vshll.u32 %v6161, 16
      %v6330 = vrot.slane %v6328, 5
      %v6331 = vsel %vm5586, %v6326, %v6330
      %v6332 = vshrl.u32 %v6161, 16
      %v6334 = vrot.slane %v6332, 4
      %v6335 = vor.u32 %v6334, %v6330
      %v6336 = vrot.slane %v6335, 4
      %v6338 = vshll.u32 %v6187, 16
      %v6340 = vrot.slane %v6338, 5
      %v6341 = vsel %vm5586, %v6336, %v6340
      %v6343 = vshrl.u32 %v6162, 16
      %v6345 = vrot.slane %v6343, 4
      %v6346 = vshll.u32 %v6162, 16
      %v6348 = vrot.slane %v6346, 5
      %v6349 = vor.u32 %v6345, %v6348
      %v6350 = vrot.slane %v6349, 4
      %v6352 = vshll.u32 %v6163, 16
      %v6354 = vrot.slane %v6352, 5
      %v6355 = vsel %vm5586, %v6350, %v6354
      %v6356 = vshrl.u32 %v6163, 16
      %v6358 = vrot.slane %v6356, 4
      %v6359 = vor.u32 %v6358, %v6354
      %v6360 = vrot.slane %v6359, 4
      %v6362 = vshll.u32 %v6188, 16
      %v6364 = vrot.slane %v6362, 5
      %v6365 = vsel %vm5586, %v6360, %v6364
      %v6367 = vshrl.u32 %v6164, 16
      %v6369 = vrot.slane %v6367, 4
      %v6370 = vshll.u32 %v6164, 16
      %v6372 = vrot.slane %v6370, 5
      %v6373 = vor.u32 %v6369, %v6372
      %v6374 = vrot.slane %v6373, 4
      %v6376 = vshll.u32 %v6165, 16
      %v6378 = vrot.slane %v6376, 5
      %v6379 = vsel %vm5586, %v6374, %v6378
      %v6380 = vshrl.u32 %v6165, 16
      %v6382 = vrot.slane %v6380, 4
      %v6383 = vor.u32 %v6382, %v6378
      %v6384 = vrot.slane %v6383, 4
      %v6386 = vshll.u32 %v6189, 16
      %v6388 = vrot.slane %v6386, 5
      %v6389 = vsel %vm5586, %v6384, %v6388
      %v6391 = vshrl.u32 %v6166, 16
      %v6393 = vrot.slane %v6391, 4
      %v6394 = vshll.u32 %v6166, 16
      %v6396 = vrot.slane %v6394, 5
      %v6397 = vor.u32 %v6393, %v6396
      %v6398 = vrot.slane %v6397, 4
      %v6400 = vshll.u32 %v6167, 16
      %v6402 = vrot.slane %v6400, 5
      %v6403 = vsel %vm5586, %v6398, %v6402
      %v6404 = vshrl.u32 %v6167, 16
      %v6406 = vrot.slane %v6404, 4
      %v6407 = vor.u32 %v6406, %v6402
      %v6408 = vrot.slane %v6407, 4
      %v6410 = vshll.u32 %v6190, 16
      %v6412 = vrot.slane %v6410, 5
      %v6413 = vsel %vm5586, %v6408, %v6412
      %v6415 = vshrl.u32 %v6168, 16
      %v6417 = vrot.slane %v6415, 4
      %v6418 = vshll.u32 %v6168, 16
      %v6420 = vrot.slane %v6418, 5
      %v6421 = vor.u32 %v6417, %v6420
      %v6422 = vrot.slane %v6421, 4
      %v6424 = vshll.u32 %v6169, 16
      %v6426 = vrot.slane %v6424, 5
      %v6427 = vsel %vm5586, %v6422, %v6426
      %v6428 = vshrl.u32 %v6169, 16
      %v6430 = vrot.slane %v6428, 4
      %v6431 = vor.u32 %v6430, %v6426
      %v6432 = vrot.slane %v6431, 4
      %v6434 = vshll.u32 %v6191, 16
      %v6436 = vrot.slane %v6434, 5
      %v6437 = vsel %vm5586, %v6432, %v6436
      %v6439 = vshrl.u32 %v6170, 16
      %v6441 = vrot.slane %v6439, 4
      %v6442 = vshll.u32 %v6170, 16
      %v6444 = vrot.slane %v6442, 5
      %v6445 = vor.u32 %v6441, %v6444
      %v6446 = vrot.slane %v6445, 4
      %v6448 = vshll.u32 %v6171, 16
      %v6450 = vrot.slane %v6448, 5
      %v6451 = vsel %vm5586, %v6446, %v6450
      %v6452 = vshrl.u32 %v6171, 16
      %v6454 = vrot.slane %v6452, 4
      %v6455 = vor.u32 %v6454, %v6450
      %v6456 = vrot.slane %v6455, 4
      %v6458 = vshll.u32 %v6192, 16
      %v6460 = vrot.slane %v6458, 5
      %v6461 = vsel %vm5586, %v6456, %v6460
      %v6463 = vshrl.u32 %v6172, 16
      %v6465 = vrot.slane %v6463, 4
      %v6466 = vshll.u32 %v6172, 16
      %v6468 = vrot.slane %v6466, 5
      %v6469 = vor.u32 %v6465, %v6468
      %v6470 = vrot.slane %v6469, 4
      %v6472 = vshll.u32 %v6173, 16
      %v6474 = vrot.slane %v6472, 5
      %v6475 = vsel %vm5586, %v6470, %v6474
      %v6476 = vshrl.u32 %v6173, 16
      %v6478 = vrot.slane %v6476, 4
      %v6479 = vor.u32 %v6478, %v6474
      %v6480 = vrot.slane %v6479, 4
      %v6482 = vshll.u32 %v6193, 16
      %v6484 = vrot.slane %v6482, 5
      %v6485 = vsel %vm5586, %v6480, %v6484
      %v6487 = vshrl.u32 %v6174, 16
      %v6489 = vrot.slane %v6487, 4
      %v6490 = vshll.u32 %v6174, 16
      %v6492 = vrot.slane %v6490, 5
      %v6493 = vor.u32 %v6489, %v6492
      %v6494 = vrot.slane %v6493, 4
      %v6496 = vshll.u32 %v6175, 16
      %v6498 = vrot.slane %v6496, 5
      %v6499 = vsel %vm5586, %v6494, %v6498
      %v6500 = vshrl.u32 %v6175, 16
      %v6502 = vrot.slane %v6500, 4
      %v6503 = vor.u32 %v6502, %v6498
      %v6504 = vrot.slane %v6503, 4
      %v6506 = vshll.u32 %v6194, 16
      %v6508 = vrot.slane %v6506, 5
      %v6509 = vsel %vm5586, %v6504, %v6508
      %v6511 = vshrl.u32 %v6176, 16
      %v6513 = vrot.slane %v6511, 4
      %v6514 = vshll.u32 %v6176, 16
      %v6516 = vrot.slane %v6514, 5
      %v6517 = vor.u32 %v6513, %v6516
      %v6518 = vrot.slane %v6517, 4
      %v6520 = vshll.u32 %v6177, 16
      %v6522 = vrot.slane %v6520, 5
      %v6523 = vsel %vm5586, %v6518, %v6522
      %v6524 = vshrl.u32 %v6177, 16
      %v6526 = vrot.slane %v6524, 4
      %v6527 = vor.u32 %v6526, %v6522
      %v6528 = vrot.slane %v6527, 4
      %v6530 = vshll.u32 %v6195, 16
      %v6532 = vrot.slane %v6530, 5
      %v6533 = vsel %vm5586, %v6528, %v6532
      %v6535 = vshrl.u32 %v6178, 16
      %v6537 = vrot.slane %v6535, 4
      %v6538 = vshll.u32 %v6178, 16
      %v6540 = vrot.slane %v6538, 5
      %v6541 = vor.u32 %v6537, %v6540
      %v6542 = vrot.slane %v6541, 4
      %v6544 = vshll.u32 %v6179, 16
      %v6546 = vrot.slane %v6544, 5
      %v6547 = vsel %vm5586, %v6542, %v6546
      %v6548 = vshrl.u32 %v6179, 16
      %v6550 = vrot.slane %v6548, 4
      %v6551 = vor.u32 %v6550, %v6546
      %v6552 = vrot.slane %v6551, 4
      %v6554 = vshll.u32 %v6196, 16
      %v6556 = vrot.slane %v6554, 5
      %v6557 = vsel %vm5586, %v6552, %v6556
      %v6559 = vshrl.u32 %v6180, 16
      %v6561 = vrot.slane %v6559, 4
      %v6562 = vshll.u32 %v6180, 16
      %v6564 = vrot.slane %v6562, 5
      %v6565 = vor.u32 %v6561, %v6564
      %v6566 = vrot.slane %v6565, 4
      %v6568 = vshll.u32 %v6181, 16
      %v6570 = vrot.slane %v6568, 5
      %v6571 = vsel %vm5586, %v6566, %v6570
      %v6572 = vshrl.u32 %v6181, 16
      %v6574 = vrot.slane %v6572, 4
      %v6575 = vor.u32 %v6574, %v6570
      %v6576 = vrot.slane %v6575, 4
      %v6578 = vshll.u32 %v6197, 16
      %v6580 = vrot.slane %v6578, 5
      %v6581 = vsel %vm5586, %v6576, %v6580
      %v6582 = vld [vmem:[%s4852] sm:$0xe]
      %v6583 = vld [vmem:[%s4852 + $0xc] sm:$0xe]
      %v6584 = vld [vmem:[%s4852 + $0x18] sm:$0xe]
      %v6585 = vld [vmem:[%s4852 + $0x24] sm:$0xe]
      %v6586 = vld [vmem:[%s4852 + $0x30] sm:$0xe]
      %v6587 = vld [vmem:[%s4852 + $0x3c] sm:$0xe]
      %v6588 = vld [vmem:[%s4852 + $0x48] sm:$0xe]
      %v6589 = vld [vmem:[%s4852 + $0x54] sm:$0xe]
      %v6590 = vld [vmem:[%s4852 + $0x60] sm:$0xe]
      %v6591 = vld [vmem:[%s4852 + $0x6c] sm:$0xe]
      %v6592 = vld [vmem:[%s4852 + $0x78] sm:$0xe]
      %v6593 = vld [vmem:[%s4852 + $0x84] sm:$0xe]
      %v6594 = vld [vmem:[%s4852 + $0x90] sm:$0xe]
      %v6595 = vld [vmem:[%s4852 + $0x9c] sm:$0xe]
      %v6596 = vld [vmem:[%s4852 + $0xa8] sm:$0xe]
      %v6597 = vld [vmem:[%s4852 + $0xb4] sm:$0xe]
      %v6646 = vrot.slane %v6582, 5
      %v6647 = vrot.slane %v6646, 4
      %v6648 = vrot.slane %v6151, 5
      %v6649 = vsel %vm6037, %v6647, %v6648
      %v6650 = vrot.slane %v6648, 4
      %v6651 = vrot.slane %v6182, 5
      %v6652 = vsel %vm6037, %v6650, %v6651
      %v6653 = vrot.slane %v6583, 5
      %v6654 = vrot.slane %v6653, 4
      %v6655 = vrot.slane %v6153, 5
      %v6656 = vsel %vm6037, %v6654, %v6655
      %v6657 = vrot.slane %v6655, 4
      %v6658 = vrot.slane %v6183, 5
      %v6659 = vsel %vm6037, %v6657, %v6658
      %v6660 = vrot.slane %v6584, 5
      %v6661 = vrot.slane %v6660, 4
      %v6662 = vrot.slane %v6155, 5
      %v6663 = vsel %vm6037, %v6661, %v6662
      %v6664 = vrot.slane %v6662, 4
      %v6665 = vrot.slane %v6184, 5
      %v6666 = vsel %vm6037, %v6664, %v6665
      %v6667 = vrot.slane %v6585, 5
      %v6668 = vrot.slane %v6667, 4
      %v6669 = vrot.slane %v6157, 5
      %v6670 = vsel %vm6037, %v6668, %v6669
      %v6671 = vrot.slane %v6669, 4
      %v6672 = vrot.slane %v6185, 5
      %v6673 = vsel %vm6037, %v6671, %v6672
      %v6674 = vrot.slane %v6586, 5
      %v6675 = vrot.slane %v6674, 4
      %v6676 = vrot.slane %v6159, 5
      %v6677 = vsel %vm6037, %v6675, %v6676
      %v6678 = vrot.slane %v6676, 4
      %v6679 = vrot.slane %v6186, 5
      %v6680 = vsel %vm6037, %v6678, %v6679
      %v6681 = vrot.slane %v6587, 5
      %v6682 = vrot.slane %v6681, 4
      %v6683 = vrot.slane %v6161, 5
      %v6684 = vsel %vm6037, %v6682, %v6683
      %v6685 = vrot.slane %v6683, 4
      %v6686 = vrot.slane %v6187, 5
      %v6687 = vsel %vm6037, %v6685, %v6686
      %v6688 = vrot.slane %v6588, 5
      %v6689 = vrot.slane %v6688, 4
      %v6690 = vrot.slane %v6163, 5
      %v6691 = vsel %vm6037, %v6689, %v6690
      %v6692 = vrot.slane %v6690, 4
      %v6693 = vrot.slane %v6188, 5
      %v6694 = vsel %vm6037, %v6692, %v6693
      %v6695 = vrot.slane %v6589, 5
      %v6696 = vrot.slane %v6695, 4
      %v6697 = vrot.slane %v6165, 5
      %v6698 = vsel %vm6037, %v6696, %v6697
      %v6699 = vrot.slane %v6697, 4
      %v6700 = vrot.slane %v6189, 5
      %v6701 = vsel %vm6037, %v6699, %v6700
      %v6702 = vrot.slane %v6590, 5
      %v6703 = vrot.slane %v6702, 4
      %v6704 = vrot.slane %v6167, 5
      %v6705 = vsel %vm6037, %v6703, %v6704
      %v6706 = vrot.slane %v6704, 4
      %v6707 = vrot.slane %v6190, 5
      %v6708 = vsel %vm6037, %v6706, %v6707
      %v6709 = vrot.slane %v6591, 5
      %v6710 = vrot.slane %v6709, 4
      %v6711 = vrot.slane %v6169, 5
      %v6712 = vsel %vm6037, %v6710, %v6711
      %v6713 = vrot.slane %v6711, 4
      %v6714 = vrot.slane %v6191, 5
      %v6715 = vsel %vm6037, %v6713, %v6714
      %v6716 = vrot.slane %v6592, 5
      %v6717 = vrot.slane %v6716, 4
      %v6718 = vrot.slane %v6171, 5
      %v6719 = vsel %vm6037, %v6717, %v6718
      %v6720 = vrot.slane %v6718, 4
      %v6721 = vrot.slane %v6192, 5
      %v6722 = vsel %vm6037, %v6720, %v6721
      %v6723 = vrot.slane %v6593, 5
      %v6724 = vrot.slane %v6723, 4
      %v6725 = vrot.slane %v6173, 5
      %v6726 = vsel %vm6037, %v6724, %v6725
      %v6727 = vrot.slane %v6725, 4
      %v6728 = vrot.slane %v6193, 5
      %v6729 = vsel %vm6037, %v6727, %v6728
      %v6730 = vrot.slane %v6594, 5
      %v6731 = vrot.slane %v6730, 4
      %v6732 = vrot.slane %v6175, 5
      %v6733 = vsel %vm6037, %v6731, %v6732
      %v6734 = vrot.slane %v6732, 4
      %v6735 = vrot.slane %v6194, 5
      %v6736 = vsel %vm6037, %v6734, %v6735
      %v6737 = vrot.slane %v6595, 5
      %v6738 = vrot.slane %v6737, 4
      %v6739 = vrot.slane %v6177, 5
      %v6740 = vsel %vm6037, %v6738, %v6739
      %v6741 = vrot.slane %v6739, 4
      %v6742 = vrot.slane %v6195, 5
      %v6743 = vsel %vm6037, %v6741, %v6742
      %v6744 = vrot.slane %v6596, 5
      %v6745 = vrot.slane %v6744, 4
      %v6746 = vrot.slane %v6179, 5
      %v6747 = vsel %vm6037, %v6745, %v6746
      %v6748 = vrot.slane %v6746, 4
      %v6749 = vrot.slane %v6196, 5
      %v6750 = vsel %vm6037, %v6748, %v6749
      %v6751 = vrot.slane %v6597, 5
      %v6752 = vrot.slane %v6751, 4
      %v6753 = vrot.slane %v6181, 5
      %v6754 = vsel %vm6037, %v6752, %v6753
      %v6755 = vrot.slane %v6753, 4
      %v6756 = vrot.slane %v6197, 5
      %v6757 = vsel %vm6037, %v6755, %v6756
      %s6758 = scalar_lea.vmem [#allocation2], 24
      %v6759 = vld [vmem:[%s6758] sm:$0xf]
      %v6760 = vld [vmem:[%s6758 + $0x4] sm:$0xf]
      %v6761 = vld [vmem:[%s6758 + $0xc] sm:$0xf]
      %v6762 = vld [vmem:[%s6758 + $0x10] sm:$0xf]
      %v6763 = vld [vmem:[%s6758 + $0x18] sm:$0xf]
      %v6764 = vld [vmem:[%s6758 + $0x1c] sm:$0xf]
      %v6765 = vld [vmem:[%s6758 + $0x24] sm:$0xf]
      %v6766 = vld [vmem:[%s6758 + $0x28] sm:$0xf]
      %v6767 = vld [vmem:[%s6758 + $0x30] sm:$0xf]
      %v6768 = vld [vmem:[%s6758 + $0x34] sm:$0xf]
      %v6769 = vld [vmem:[%s6758 + $0x3c] sm:$0xf]
      %v6770 = vld [vmem:[%s6758 + $0x40] sm:$0xf]
      %v6771 = vld [vmem:[%s6758 + $0x48] sm:$0xf]
      %v6772 = vld [vmem:[%s6758 + $0x4c] sm:$0xf]
      %v6773 = vld [vmem:[%s6758 + $0x54] sm:$0xf]
      %v6774 = vld [vmem:[%s6758 + $0x58] sm:$0xf]
      %v6775 = vld [vmem:[%s6758 + $0x60] sm:$0xf]
      %v6776 = vld [vmem:[%s6758 + $0x64] sm:$0xf]
      %v6777 = vld [vmem:[%s6758 + $0x6c] sm:$0xf]
      %v6778 = vld [vmem:[%s6758 + $0x70] sm:$0xf]
      %v6779 = vld [vmem:[%s6758 + $0x78] sm:$0xf]
      %v6780 = vld [vmem:[%s6758 + $0x7c] sm:$0xf]
      %v6781 = vld [vmem:[%s6758 + $0x84] sm:$0xf]
      %v6782 = vld [vmem:[%s6758 + $0x88] sm:$0xf]
      %v6783 = vld [vmem:[%s6758 + $0x90] sm:$0xf]
      %v6784 = vld [vmem:[%s6758 + $0x94] sm:$0xf]
      %v6785 = vld [vmem:[%s6758 + $0x9c] sm:$0xf]
      %v6786 = vld [vmem:[%s6758 + $0xa0] sm:$0xf]
      %v6787 = vld [vmem:[%s6758 + $0xa8] sm:$0xf]
      %v6788 = vld [vmem:[%s6758 + $0xac] sm:$0xf]
      %v6789 = vld [vmem:[%s6758 + $0xb4] sm:$0xf]
      %v6790 = vld [vmem:[%s6758 + $0xb8] sm:$0xf]
      %v6791 = vld [vmem:[%s6758 + $0x8] sm:$0x1]
      %v6792 = vld [vmem:[%s6758 + $0x14] sm:$0x1]
      %v6793 = vld [vmem:[%s6758 + $0x20] sm:$0x1]
      %v6794 = vld [vmem:[%s6758 + $0x2c] sm:$0x1]
      %v6795 = vld [vmem:[%s6758 + $0x38] sm:$0x1]
      %v6796 = vld [vmem:[%s6758 + $0x44] sm:$0x1]
      %v6797 = vld [vmem:[%s6758 + $0x50] sm:$0x1]
      %v6798 = vld [vmem:[%s6758 + $0x5c] sm:$0x1]
      %v6799 = vld [vmem:[%s6758 + $0x68] sm:$0x1]
      %v6800 = vld [vmem:[%s6758 + $0x74] sm:$0x1]
      %v6801 = vld [vmem:[%s6758 + $0x80] sm:$0x1]
      %v6802 = vld [vmem:[%s6758 + $0x8c] sm:$0x1]
      %v6803 = vld [vmem:[%s6758 + $0x98] sm:$0x1]
      %v6804 = vld [vmem:[%s6758 + $0xa4] sm:$0x1]
      %v6805 = vld [vmem:[%s6758 + $0xb0] sm:$0x1]
      %v6806 = vld [vmem:[%s6758 + $0xbc] sm:$0x1]
      %v6808 = vshrl.u32 %v6759, 16
      %v6810 = vrot.slane %v6808, 4
      %v6811 = vshll.u32 %v6759, 16
      %v6813 = vrot.slane %v6811, 5
      %v6814 = vor.u32 %v6810, %v6813
      %v6815 = vrot.slane %v6814, 4
      %v6817 = vshll.u32 %v6760, 16
      %v6819 = vrot.slane %v6817, 5
      %v6820 = vsel %vm5586, %v6815, %v6819
      %v6821 = vshrl.u32 %v6760, 16
      %v6823 = vrot.slane %v6821, 4
      %v6824 = vor.u32 %v6823, %v6819
      %v6825 = vrot.slane %v6824, 4
      %v6827 = vshll.u32 %v6791, 16
      %v6829 = vrot.slane %v6827, 5
      %v6830 = vsel %vm5586, %v6825, %v6829
      %v6832 = vshrl.u32 %v6761, 16
      %v6834 = vrot.slane %v6832, 4
      %v6835 = vshll.u32 %v6761, 16
      %v6837 = vrot.slane %v6835, 5
      %v6838 = vor.u32 %v6834, %v6837
      %v6839 = vrot.slane %v6838, 4
      %v6841 = vshll.u32 %v6762, 16
      %v6843 = vrot.slane %v6841, 5
      %v6844 = vsel %vm5586, %v6839, %v6843
      %v6845 = vshrl.u32 %v6762, 16
      %v6847 = vrot.slane %v6845, 4
      %v6848 = vor.u32 %v6847, %v6843
      %v6849 = vrot.slane %v6848, 4
      %v6851 = vshll.u32 %v6792, 16
      %v6853 = vrot.slane %v6851, 5
      %v6854 = vsel %vm5586, %v6849, %v6853
      %v6856 = vshrl.u32 %v6763, 16
      %v6858 = vrot.slane %v6856, 4
      %v6859 = vshll.u32 %v6763, 16
      %v6861 = vrot.slane %v6859, 5
      %v6862 = vor.u32 %v6858, %v6861
      %v6863 = vrot.slane %v6862, 4
      %v6865 = vshll.u32 %v6764, 16
      %v6867 = vrot.slane %v6865, 5
      %v6868 = vsel %vm5586, %v6863, %v6867
      %v6869 = vshrl.u32 %v6764, 16
      %v6871 = vrot.slane %v6869, 4
      %v6872 = vor.u32 %v6871, %v6867
      %v6873 = vrot.slane %v6872, 4
      %v6875 = vshll.u32 %v6793, 16
      %v6877 = vrot.slane %v6875, 5
      %v6878 = vsel %vm5586, %v6873, %v6877
      %v6880 = vshrl.u32 %v6765, 16
      %v6882 = vrot.slane %v6880, 4
      %v6883 = vshll.u32 %v6765, 16
      %v6885 = vrot.slane %v6883, 5
      %v6886 = vor.u32 %v6882, %v6885
      %v6887 = vrot.slane %v6886, 4
      %v6889 = vshll.u32 %v6766, 16
      %v6891 = vrot.slane %v6889, 5
      %v6892 = vsel %vm5586, %v6887, %v6891
      %v6893 = vshrl.u32 %v6766, 16
      %v6895 = vrot.slane %v6893, 4
      %v6896 = vor.u32 %v6895, %v6891
      %v6897 = vrot.slane %v6896, 4
      %v6899 = vshll.u32 %v6794, 16
      %v6901 = vrot.slane %v6899, 5
      %v6902 = vsel %vm5586, %v6897, %v6901
      %v6904 = vshrl.u32 %v6767, 16
      %v6906 = vrot.slane %v6904, 4
      %v6907 = vshll.u32 %v6767, 16
      %v6909 = vrot.slane %v6907, 5
      %v6910 = vor.u32 %v6906, %v6909
      %v6911 = vrot.slane %v6910, 4
      %v6913 = vshll.u32 %v6768, 16
      %v6915 = vrot.slane %v6913, 5
      %v6916 = vsel %vm5586, %v6911, %v6915
      %v6917 = vshrl.u32 %v6768, 16
      %v6919 = vrot.slane %v6917, 4
      %v6920 = vor.u32 %v6919, %v6915
      %v6921 = vrot.slane %v6920, 4
      %v6923 = vshll.u32 %v6795, 16
      %v6925 = vrot.slane %v6923, 5
      %v6926 = vsel %vm5586, %v6921, %v6925
      %v6928 = vshrl.u32 %v6769, 16
      %v6930 = vrot.slane %v6928, 4
      %v6931 = vshll.u32 %v6769, 16
      %v6933 = vrot.slane %v6931, 5
      %v6934 = vor.u32 %v6930, %v6933
      %v6935 = vrot.slane %v6934, 4
      %v6937 = vshll.u32 %v6770, 16
      %v6939 = vrot.slane %v6937, 5
      %v6940 = vsel %vm5586, %v6935, %v6939
      %v6941 = vshrl.u32 %v6770, 16
      %v6943 = vrot.slane %v6941, 4
      %v6944 = vor.u32 %v6943, %v6939
      %v6945 = vrot.slane %v6944, 4
      %v6947 = vshll.u32 %v6796, 16
      %v6949 = vrot.slane %v6947, 5
      %v6950 = vsel %vm5586, %v6945, %v6949
      %v6952 = vshrl.u32 %v6771, 16
      %v6954 = vrot.slane %v6952, 4
      %v6955 = vshll.u32 %v6771, 16
      %v6957 = vrot.slane %v6955, 5
      %v6958 = vor.u32 %v6954, %v6957
      %v6959 = vrot.slane %v6958, 4
      %v6961 = vshll.u32 %v6772, 16
      %v6963 = vrot.slane %v6961, 5
      %v6964 = vsel %vm5586, %v6959, %v6963
      %v6965 = vshrl.u32 %v6772, 16
      %v6967 = vrot.slane %v6965, 4
      %v6968 = vor.u32 %v6967, %v6963
      %v6969 = vrot.slane %v6968, 4
      %v6971 = vshll.u32 %v6797, 16
      %v6973 = vrot.slane %v6971, 5
      %v6974 = vsel %vm5586, %v6969, %v6973
      %v6976 = vshrl.u32 %v6773, 16
      %v6978 = vrot.slane %v6976, 4
      %v6979 = vshll.u32 %v6773, 16
      %v6981 = vrot.slane %v6979, 5
      %v6982 = vor.u32 %v6978, %v6981
      %v6983 = vrot.slane %v6982, 4
      %v6985 = vshll.u32 %v6774, 16
      %v6987 = vrot.slane %v6985, 5
      %v6988 = vsel %vm5586, %v6983, %v6987
      %v6989 = vshrl.u32 %v6774, 16
      %v6991 = vrot.slane %v6989, 4
      %v6992 = vor.u32 %v6991, %v6987
      %v6993 = vrot.slane %v6992, 4
      %v6995 = vshll.u32 %v6798, 16
      %v6997 = vrot.slane %v6995, 5
      %v6998 = vsel %vm5586, %v6993, %v6997
      %v7000 = vshrl.u32 %v6775, 16
      %v7002 = vrot.slane %v7000, 4
      %v7003 = vshll.u32 %v6775, 16
      %v7005 = vrot.slane %v7003, 5
      %v7006 = vor.u32 %v7002, %v7005
      %v7007 = vrot.slane %v7006, 4
      %v7009 = vshll.u32 %v6776, 16
      %v7011 = vrot.slane %v7009, 5
      %v7012 = vsel %vm5586, %v7007, %v7011
      %v7013 = vshrl.u32 %v6776, 16
      %v7015 = vrot.slane %v7013, 4
      %v7016 = vor.u32 %v7015, %v7011
      %v7017 = vrot.slane %v7016, 4
      %v7019 = vshll.u32 %v6799, 16
      %v7021 = vrot.slane %v7019, 5
      %v7022 = vsel %vm5586, %v7017, %v7021
      %v7024 = vshrl.u32 %v6777, 16
      %v7026 = vrot.slane %v7024, 4
      %v7027 = vshll.u32 %v6777, 16
      %v7029 = vrot.slane %v7027, 5
      %v7030 = vor.u32 %v7026, %v7029
      %v7031 = vrot.slane %v7030, 4
      %v7033 = vshll.u32 %v6778, 16
      %v7035 = vrot.slane %v7033, 5
      %v7036 = vsel %vm5586, %v7031, %v7035
      %v7037 = vshrl.u32 %v6778, 16
      %v7039 = vrot.slane %v7037, 4
      %v7040 = vor.u32 %v7039, %v7035
      %v7041 = vrot.slane %v7040, 4
      %v7043 = vshll.u32 %v6800, 16
      %v7045 = vrot.slane %v7043, 5
      %v7046 = vsel %vm5586, %v7041, %v7045
      %v7048 = vshrl.u32 %v6779, 16
      %v7050 = vrot.slane %v7048, 4
      %v7051 = vshll.u32 %v6779, 16
      %v7053 = vrot.slane %v7051, 5
      %v7054 = vor.u32 %v7050, %v7053
      %v7055 = vrot.slane %v7054, 4
      %v7057 = vshll.u32 %v6780, 16
      %v7059 = vrot.slane %v7057, 5
      %v7060 = vsel %vm5586, %v7055, %v7059
      %v7061 = vshrl.u32 %v6780, 16
      %v7063 = vrot.slane %v7061, 4
      %v7064 = vor.u32 %v7063, %v7059
      %v7065 = vrot.slane %v7064, 4
      %v7067 = vshll.u32 %v6801, 16
      %v7069 = vrot.slane %v7067, 5
      %v7070 = vsel %vm5586, %v7065, %v7069
      %v7072 = vshrl.u32 %v6781, 16
      %v7074 = vrot.slane %v7072, 4
      %v7075 = vshll.u32 %v6781, 16
      %v7077 = vrot.slane %v7075, 5
      %v7078 = vor.u32 %v7074, %v7077
      %v7079 = vrot.slane %v7078, 4
      %v7081 = vshll.u32 %v6782, 16
      %v7083 = vrot.slane %v7081, 5
      %v7084 = vsel %vm5586, %v7079, %v7083
      %v7085 = vshrl.u32 %v6782, 16
      %v7087 = vrot.slane %v7085, 4
      %v7088 = vor.u32 %v7087, %v7083
      %v7089 = vrot.slane %v7088, 4
      %v7091 = vshll.u32 %v6802, 16
      %v7093 = vrot.slane %v7091, 5
      %v7094 = vsel %vm5586, %v7089, %v7093
      %v7096 = vshrl.u32 %v6783, 16
      %v7098 = vrot.slane %v7096, 4
      %v7099 = vshll.u32 %v6783, 16
      %v7101 = vrot.slane %v7099, 5
      %v7102 = vor.u32 %v7098, %v7101
      %v7103 = vrot.slane %v7102, 4
      %v7105 = vshll.u32 %v6784, 16
      %v7107 = vrot.slane %v7105, 5
      %v7108 = vsel %vm5586, %v7103, %v7107
      %v7109 = vshrl.u32 %v6784, 16
      %v7111 = vrot.slane %v7109, 4
      %v7112 = vor.u32 %v7111, %v7107
      %v7113 = vrot.slane %v7112, 4
      %v7115 = vshll.u32 %v6803, 16
      %v7117 = vrot.slane %v7115, 5
      %v7118 = vsel %vm5586, %v7113, %v7117
      %v7120 = vshrl.u32 %v6785, 16
      %v7122 = vrot.slane %v7120, 4
      %v7123 = vshll.u32 %v6785, 16
      %v7125 = vrot.slane %v7123, 5
      %v7126 = vor.u32 %v7122, %v7125
      %v7127 = vrot.slane %v7126, 4
      %v7129 = vshll.u32 %v6786, 16
      %v7131 = vrot.slane %v7129, 5
      %v7132 = vsel %vm5586, %v7127, %v7131
      %v7133 = vshrl.u32 %v6786, 16
      %v7135 = vrot.slane %v7133, 4
      %v7136 = vor.u32 %v7135, %v7131
      %v7137 = vrot.slane %v7136, 4
      %v7139 = vshll.u32 %v6804, 16
      %v7141 = vrot.slane %v7139, 5
      %v7142 = vsel %vm5586, %v7137, %v7141
      %v7144 = vshrl.u32 %v6787, 16
      %v7146 = vrot.slane %v7144, 4
      %v7147 = vshll.u32 %v6787, 16
      %v7149 = vrot.slane %v7147, 5
      %v7150 = vor.u32 %v7146, %v7149
      %v7151 = vrot.slane %v7150, 4
      %v7153 = vshll.u32 %v6788, 16
      %v7155 = vrot.slane %v7153, 5
      %v7156 = vsel %vm5586, %v7151, %v7155
      %v7157 = vshrl.u32 %v6788, 16
      %v7159 = vrot.slane %v7157, 4
      %v7160 = vor.u32 %v7159, %v7155
      %v7161 = vrot.slane %v7160, 4
      %v7163 = vshll.u32 %v6805, 16
      %v7165 = vrot.slane %v7163, 5
      %v7166 = vsel %vm5586, %v7161, %v7165
      %v7168 = vshrl.u32 %v6789, 16
      %v7170 = vrot.slane %v7168, 4
      %v7171 = vshll.u32 %v6789, 16
      %v7173 = vrot.slane %v7171, 5
      %v7174 = vor.u32 %v7170, %v7173
      %v7175 = vrot.slane %v7174, 4
      %v7177 = vshll.u32 %v6790, 16
      %v7179 = vrot.slane %v7177, 5
      %v7180 = vsel %vm5586, %v7175, %v7179
      %v7181 = vshrl.u32 %v6790, 16
      %v7183 = vrot.slane %v7181, 4
      %v7184 = vor.u32 %v7183, %v7179
      %v7185 = vrot.slane %v7184, 4
      %v7187 = vshll.u32 %v6806, 16
      %v7189 = vrot.slane %v7187, 5
      %v7190 = vsel %vm5586, %v7185, %v7189
      %v7191 = vld [vmem:[%s6758] sm:$0xe]
      %v7192 = vld [vmem:[%s6758 + $0xc] sm:$0xe]
      %v7193 = vld [vmem:[%s6758 + $0x18] sm:$0xe]
      %v7194 = vld [vmem:[%s6758 + $0x24] sm:$0xe]
      %v7195 = vld [vmem:[%s6758 + $0x30] sm:$0xe]
      %v7196 = vld [vmem:[%s6758 + $0x3c] sm:$0xe]
      %v7197 = vld [vmem:[%s6758 + $0x48] sm:$0xe]
      %v7198 = vld [vmem:[%s6758 + $0x54] sm:$0xe]
      %v7199 = vld [vmem:[%s6758 + $0x60] sm:$0xe]
      %v7200 = vld [vmem:[%s6758 + $0x6c] sm:$0xe]
      %v7201 = vld [vmem:[%s6758 + $0x78] sm:$0xe]
      %v7202 = vld [vmem:[%s6758 + $0x84] sm:$0xe]
      %v7203 = vld [vmem:[%s6758 + $0x90] sm:$0xe]
      %v7204 = vld [vmem:[%s6758 + $0x9c] sm:$0xe]
      %v7205 = vld [vmem:[%s6758 + $0xa8] sm:$0xe]
      %v7206 = vld [vmem:[%s6758 + $0xb4] sm:$0xe]
      %v7255 = vrot.slane %v7191, 5
      %v7256 = vrot.slane %v7255, 4
      %v7257 = vrot.slane %v6760, 5
      %v7258 = vsel %vm6037, %v7256, %v7257
      %v7259 = vrot.slane %v7257, 4
      %v7260 = vrot.slane %v6791, 5
      %v7261 = vsel %vm6037, %v7259, %v7260
      %v7262 = vrot.slane %v7192, 5
      %v7263 = vrot.slane %v7262, 4
      %v7264 = vrot.slane %v6762, 5
      %v7265 = vsel %vm6037, %v7263, %v7264
      %v7266 = vrot.slane %v7264, 4
      %v7267 = vrot.slane %v6792, 5
      %v7268 = vsel %vm6037, %v7266, %v7267
      %v7269 = vrot.slane %v7193, 5
      %v7270 = vrot.slane %v7269, 4
      %v7271 = vrot.slane %v6764, 5
      %v7272 = vsel %vm6037, %v7270, %v7271
      %v7273 = vrot.slane %v7271, 4
      %v7274 = vrot.slane %v6793, 5
      %v7275 = vsel %vm6037, %v7273, %v7274
      %v7276 = vrot.slane %v7194, 5
      %v7277 = vrot.slane %v7276, 4
      %v7278 = vrot.slane %v6766, 5
      %v7279 = vsel %vm6037, %v7277, %v7278
      %v7280 = vrot.slane %v7278, 4
      %v7281 = vrot.slane %v6794, 5
      %v7282 = vsel %vm6037, %v7280, %v7281
      %v7283 = vrot.slane %v7195, 5
      %v7284 = vrot.slane %v7283, 4
      %v7285 = vrot.slane %v6768, 5
      %v7286 = vsel %vm6037, %v7284, %v7285
      %v7287 = vrot.slane %v7285, 4
      %v7288 = vrot.slane %v6795, 5
      %v7289 = vsel %vm6037, %v7287, %v7288
      %v7290 = vrot.slane %v7196, 5
      %v7291 = vrot.slane %v7290, 4
      %v7292 = vrot.slane %v6770, 5
      %v7293 = vsel %vm6037, %v7291, %v7292
      %v7294 = vrot.slane %v7292, 4
      %v7295 = vrot.slane %v6796, 5
      %v7296 = vsel %vm6037, %v7294, %v7295
      %v7297 = vrot.slane %v7197, 5
      %v7298 = vrot.slane %v7297, 4
      %v7299 = vrot.slane %v6772, 5
      %v7300 = vsel %vm6037, %v7298, %v7299
      %v7301 = vrot.slane %v7299, 4
      %v7302 = vrot.slane %v6797, 5
      %v7303 = vsel %vm6037, %v7301, %v7302
      %v7304 = vrot.slane %v7198, 5
      %v7305 = vrot.slane %v7304, 4
      %v7306 = vrot.slane %v6774, 5
      %v7307 = vsel %vm6037, %v7305, %v7306
      %v7308 = vrot.slane %v7306, 4
      %v7309 = vrot.slane %v6798, 5
      %v7310 = vsel %vm6037, %v7308, %v7309
      %v7311 = vrot.slane %v7199, 5
      %v7312 = vrot.slane %v7311, 4
      %v7313 = vrot.slane %v6776, 5
      %v7314 = vsel %vm6037, %v7312, %v7313
      %v7315 = vrot.slane %v7313, 4
      %v7316 = vrot.slane %v6799, 5
      %v7317 = vsel %vm6037, %v7315, %v7316
      %v7318 = vrot.slane %v7200, 5
      %v7319 = vrot.slane %v7318, 4
      %v7320 = vrot.slane %v6778, 5
      %v7321 = vsel %vm6037, %v7319, %v7320
      %v7322 = vrot.slane %v7320, 4
      %v7323 = vrot.slane %v6800, 5
      %v7324 = vsel %vm6037, %v7322, %v7323
      %v7325 = vrot.slane %v7201, 5
      %v7326 = vrot.slane %v7325, 4
      %v7327 = vrot.slane %v6780, 5
      %v7328 = vsel %vm6037, %v7326, %v7327
      %v7329 = vrot.slane %v7327, 4
      %v7330 = vrot.slane %v6801, 5
      %v7331 = vsel %vm6037, %v7329, %v7330
      %v7332 = vrot.slane %v7202, 5
      %v7333 = vrot.slane %v7332, 4
      %v7334 = vrot.slane %v6782, 5
      %v7335 = vsel %vm6037, %v7333, %v7334
      %v7336 = vrot.slane %v7334, 4
      %v7337 = vrot.slane %v6802, 5
      %v7338 = vsel %vm6037, %v7336, %v7337
      %v7339 = vrot.slane %v7203, 5
      %v7340 = vrot.slane %v7339, 4
      %v7341 = vrot.slane %v6784, 5
      %v7342 = vsel %vm6037, %v7340, %v7341
      %v7343 = vrot.slane %v7341, 4
      %v7344 = vrot.slane %v6803, 5
      %v7345 = vsel %vm6037, %v7343, %v7344
      %v7346 = vrot.slane %v7204, 5
      %v7347 = vrot.slane %v7346, 4
      %v7348 = vrot.slane %v6786, 5
      %v7349 = vsel %vm6037, %v7347, %v7348
      %v7350 = vrot.slane %v7348, 4
      %v7351 = vrot.slane %v6804, 5
      %v7352 = vsel %vm6037, %v7350, %v7351
      %v7353 = vrot.slane %v7205, 5
      %v7354 = vrot.slane %v7353, 4
      %v7355 = vrot.slane %v6788, 5
      %v7356 = vsel %vm6037, %v7354, %v7355
      %v7357 = vrot.slane %v7355, 4
      %v7358 = vrot.slane %v6805, 5
      %v7359 = vsel %vm6037, %v7357, %v7358
      %v7360 = vrot.slane %v7206, 5
      %v7361 = vrot.slane %v7360, 4
      %v7362 = vrot.slane %v6790, 5
      %v7363 = vsel %vm6037, %v7361, %v7362
      %v7364 = vrot.slane %v7362, 4
      %v7365 = vrot.slane %v6806, 5
      %v7366 = vsel %vm6037, %v7364, %v7365
      %v7383 = vunpack.c.l.b16 %v5536
      %v7384 = vunpack.c.l.b16 %v5537
      %v7385 = vunpack.c.l.b16 %v5538
      %v7386 = vunpack.c.l.b16 %v5539
      %v7387 = vunpack.c.l.b16 %v5540
      %v7388 = vunpack.c.l.b16 %v5541
      %v7389 = vunpack.c.l.b16 %v5542
      %v7390 = vunpack.c.l.b16 %v5543
      %v7391 = vunpack.c.l.b16 %v5544
      %v7392 = vunpack.c.l.b16 %v5545
      %v7393 = vunpack.c.l.b16 %v5546
      %v7394 = vunpack.c.l.b16 %v5547
      %v7395 = vunpack.c.l.b16 %v5548
      %v7396 = vunpack.c.l.b16 %v5549
      %v7397 = vunpack.c.l.b16 %v5550
      %v7398 = vunpack.c.l.b16 %v5551
      %v7399 = vunpack.c.l.b16 %v5552
      %v7400 = vunpack.c.l.b16 %v5553
      %v7401 = vunpack.c.l.b16 %v5554
      %v7402 = vunpack.c.l.b16 %v5555
      %v7403 = vunpack.c.l.b16 %v5556
      %v7404 = vunpack.c.l.b16 %v5557
      %v7405 = vunpack.c.l.b16 %v5558
      %v7406 = vunpack.c.l.b16 %v5559
      %v7407 = vunpack.c.l.b16 %v5560
      %v7408 = vunpack.c.l.b16 %v5561
      %v7409 = vunpack.c.l.b16 %v5562
      %v7410 = vunpack.c.l.b16 %v5563
      %v7411 = vunpack.c.l.b16 %v5564
      %v7412 = vunpack.c.l.b16 %v5565
      %v7413 = vunpack.c.l.b16 %v5566
      %v7414 = vunpack.c.l.b16 %v5567
      %v7415 = vpack.c.b16 %v7384, %v7383
      %v7416 = vpack.c.b16 %v7386, %v7385
      %v7417 = vpack.c.b16 %v7388, %v7387
      %v7418 = vpack.c.b16 %v7390, %v7389
      %v7419 = vpack.c.b16 %v7392, %v7391
      %v7420 = vpack.c.b16 %v7394, %v7393
      %v7421 = vpack.c.b16 %v7396, %v7395
      %v7422 = vpack.c.b16 %v7398, %v7397
      %v7423 = vpack.c.b16 %v7400, %v7399
      %v7424 = vpack.c.b16 %v7402, %v7401
      %v7425 = vpack.c.b16 %v7404, %v7403
      %v7426 = vpack.c.b16 %v7406, %v7405
      %v7427 = vpack.c.b16 %v7408, %v7407
      %v7428 = vpack.c.b16 %v7410, %v7409
      %v7429 = vpack.c.b16 %v7412, %v7411
      %v7430 = vpack.c.b16 %v7414, %v7413
      %v7431 = vunpack.c.l.b16 %v5600
      %v7432 = vunpack.c.l.b16 %v5610
      %v7433 = vunpack.c.l.b16 %v5624
      %v7434 = vunpack.c.l.b16 %v5634
      %v7435 = vunpack.c.l.b16 %v5648
      %v7436 = vunpack.c.l.b16 %v5658
      %v7437 = vunpack.c.l.b16 %v5672
      %v7438 = vunpack.c.l.b16 %v5682
      %v7439 = vunpack.c.l.b16 %v5696
      %v7440 = vunpack.c.l.b16 %v5706
      %v7441 = vunpack.c.l.b16 %v5720
      %v7442 = vunpack.c.l.b16 %v5730
      %v7443 = vunpack.c.l.b16 %v5744
      %v7444 = vunpack.c.l.b16 %v5754
      %v7445 = vunpack.c.l.b16 %v5768
      %v7446 = vunpack.c.l.b16 %v5778
      %v7447 = vunpack.c.l.b16 %v5792
      %v7448 = vunpack.c.l.b16 %v5802
      %v7449 = vunpack.c.l.b16 %v5816
      %v7450 = vunpack.c.l.b16 %v5826
      %v7451 = vunpack.c.l.b16 %v5840
      %v7452 = vunpack.c.l.b16 %v5850
      %v7453 = vunpack.c.l.b16 %v5864
      %v7454 = vunpack.c.l.b16 %v5874
      %v7455 = vunpack.c.l.b16 %v5888
      %v7456 = vunpack.c.l.b16 %v5898
      %v7457 = vunpack.c.l.b16 %v5912
      %v7458 = vunpack.c.l.b16 %v5922
      %v7459 = vunpack.c.l.b16 %v5936
      %v7460 = vunpack.c.l.b16 %v5946
      %v7461 = vunpack.c.l.b16 %v5960
      %v7462 = vunpack.c.l.b16 %v5970
      %v7463 = vpack.c.b16 %v7432, %v7431
      %v7464 = vpack.c.b16 %v7434, %v7433
      %v7465 = vpack.c.b16 %v7436, %v7435
      %v7466 = vpack.c.b16 %v7438, %v7437
      %v7467 = vpack.c.b16 %v7440, %v7439
      %v7468 = vpack.c.b16 %v7442, %v7441
      %v7469 = vpack.c.b16 %v7444, %v7443
      %v7470 = vpack.c.b16 %v7446, %v7445
      %v7471 = vpack.c.b16 %v7448, %v7447
      %v7472 = vpack.c.b16 %v7450, %v7449
      %v7473 = vpack.c.b16 %v7452, %v7451
      %v7474 = vpack.c.b16 %v7454, %v7453
      %v7475 = vpack.c.b16 %v7456, %v7455
      %v7476 = vpack.c.b16 %v7458, %v7457
      %v7477 = vpack.c.b16 %v7460, %v7459
      %v7478 = vpack.c.b16 %v7462, %v7461
      %7479 = vrot.lane.b32.xlu0 %v7463, 16
      %v7480 = vpop.permute.xlu0 %7479
      %7481 = vrot.lane.b32.xlu0 %v7464, 16
      %v7482 = vpop.permute.xlu0 %7481
      %7483 = vrot.lane.b32.xlu0 %v7465, 16
      %v7484 = vpop.permute.xlu0 %7483
      %7485 = vrot.lane.b32.xlu0 %v7466, 16
      %v7486 = vpop.permute.xlu0 %7485
      %7487 = vrot.lane.b32.xlu0 %v7467, 16
      %v7488 = vpop.permute.xlu0 %7487
      %7489 = vrot.lane.b32.xlu0 %v7468, 16
      %v7490 = vpop.permute.xlu0 %7489
      %7491 = vrot.lane.b32.xlu0 %v7469, 16
      %v7492 = vpop.permute.xlu0 %7491
      %7493 = vrot.lane.b32.xlu0 %v7470, 16
      %v7494 = vpop.permute.xlu0 %7493
      %7495 = vrot.lane.b32.xlu0 %v7471, 16
      %v7496 = vpop.permute.xlu0 %7495
      %7497 = vrot.lane.b32.xlu0 %v7472, 16
      %v7498 = vpop.permute.xlu0 %7497
      %7499 = vrot.lane.b32.xlu0 %v7473, 16
      %v7500 = vpop.permute.xlu0 %7499
      %7501 = vrot.lane.b32.xlu0 %v7474, 16
      %v7502 = vpop.permute.xlu0 %7501
      %7503 = vrot.lane.b32.xlu0 %v7475, 16
      %v7504 = vpop.permute.xlu0 %7503
      %7505 = vrot.lane.b32.xlu0 %v7476, 16
      %v7506 = vpop.permute.xlu0 %7505
      %7507 = vrot.lane.b32.xlu0 %v7477, 16
      %v7508 = vpop.permute.xlu0 %7507
      %7509 = vrot.lane.b32.xlu0 %v7478, 16
      %v7510 = vpop.permute.xlu0 %7509
      %v7511 = vunpack.c.l.b16 %v6041
      %v7512 = vunpack.c.l.b16 %v6044
      %v7513 = vunpack.c.l.b16 %v6048
      %v7514 = vunpack.c.l.b16 %v6051
      %v7515 = vunpack.c.l.b16 %v6055
      %v7516 = vunpack.c.l.b16 %v6058
      %v7517 = vunpack.c.l.b16 %v6062
      %v7518 = vunpack.c.l.b16 %v6065
      %v7519 = vunpack.c.l.b16 %v6069
      %v7520 = vunpack.c.l.b16 %v6072
      %v7521 = vunpack.c.l.b16 %v6076
      %v7522 = vunpack.c.l.b16 %v6079
      %v7523 = vunpack.c.l.b16 %v6083
      %v7524 = vunpack.c.l.b16 %v6086
      %v7525 = vunpack.c.l.b16 %v6090
      %v7526 = vunpack.c.l.b16 %v6093
      %v7527 = vunpack.c.l.b16 %v6097
      %v7528 = vunpack.c.l.b16 %v6100
      %v7529 = vunpack.c.l.b16 %v6104
      %v7530 = vunpack.c.l.b16 %v6107
      %v7531 = vunpack.c.l.b16 %v6111
      %v7532 = vunpack.c.l.b16 %v6114
      %v7533 = vunpack.c.l.b16 %v6118
      %v7534 = vunpack.c.l.b16 %v6121
      %v7535 = vunpack.c.l.b16 %v6125
      %v7536 = vunpack.c.l.b16 %v6128
      %v7537 = vunpack.c.l.b16 %v6132
      %v7538 = vunpack.c.l.b16 %v6135
      %v7539 = vunpack.c.l.b16 %v6139
      %v7540 = vunpack.c.l.b16 %v6142
      %v7541 = vunpack.c.l.b16 %v6146
      %v7542 = vunpack.c.l.b16 %v6149
      %v7543 = vpack.c.b16 %v7512, %v7511
      %v7544 = vpack.c.b16 %v7514, %v7513
      %v7545 = vpack.c.b16 %v7516, %v7515
      %v7546 = vpack.c.b16 %v7518, %v7517
      %v7547 = vpack.c.b16 %v7520, %v7519
      %v7548 = vpack.c.b16 %v7522, %v7521
      %v7549 = vpack.c.b16 %v7524, %v7523
      %v7550 = vpack.c.b16 %v7526, %v7525
      %v7551 = vpack.c.b16 %v7528, %v7527
      %v7552 = vpack.c.b16 %v7530, %v7529
      %v7553 = vpack.c.b16 %v7532, %v7531
      %v7554 = vpack.c.b16 %v7534, %v7533
      %v7555 = vpack.c.b16 %v7536, %v7535
      %v7556 = vpack.c.b16 %v7538, %v7537
      %v7557 = vpack.c.b16 %v7540, %v7539
      %v7558 = vpack.c.b16 %v7542, %v7541
      %7559 = vrot.lane.b32.xlu0 %v7543, 32
      %v7560 = vpop.permute.xlu0 %7559
      %7561 = vrot.lane.b32.xlu0 %v7544, 32
      %v7562 = vpop.permute.xlu0 %7561
      %7563 = vrot.lane.b32.xlu0 %v7545, 32
      %v7564 = vpop.permute.xlu0 %7563
      %7565 = vrot.lane.b32.xlu0 %v7546, 32
      %v7566 = vpop.permute.xlu0 %7565
      %7567 = vrot.lane.b32.xlu0 %v7547, 32
      %v7568 = vpop.permute.xlu0 %7567
      %7569 = vrot.lane.b32.xlu0 %v7548, 32
      %v7570 = vpop.permute.xlu0 %7569
      %7571 = vrot.lane.b32.xlu0 %v7549, 32
      %v7572 = vpop.permute.xlu0 %7571
      %7573 = vrot.lane.b32.xlu0 %v7550, 32
      %v7574 = vpop.permute.xlu0 %7573
      %7575 = vrot.lane.b32.xlu0 %v7551, 32
      %v7576 = vpop.permute.xlu0 %7575
      %7577 = vrot.lane.b32.xlu0 %v7552, 32
      %v7578 = vpop.permute.xlu0 %7577
      %7579 = vrot.lane.b32.xlu0 %v7553, 32
      %v7580 = vpop.permute.xlu0 %7579
      %7581 = vrot.lane.b32.xlu0 %v7554, 32
      %v7582 = vpop.permute.xlu0 %7581
      %7583 = vrot.lane.b32.xlu0 %v7555, 32
      %v7584 = vpop.permute.xlu0 %7583
      %7585 = vrot.lane.b32.xlu0 %v7556, 32
      %v7586 = vpop.permute.xlu0 %7585
      %7587 = vrot.lane.b32.xlu0 %v7557, 32
      %v7588 = vpop.permute.xlu0 %7587
      %7589 = vrot.lane.b32.xlu0 %v7558, 32
      %v7590 = vpop.permute.xlu0 %7589
      %v7607 = vunpack.c.l.b16 %v6150
      %v7608 = vunpack.c.l.b16 %v6151
      %v7609 = vunpack.c.l.b16 %v6152
      %v7610 = vunpack.c.l.b16 %v6153
      %v7611 = vunpack.c.l.b16 %v6154
      %v7612 = vunpack.c.l.b16 %v6155
      %v7613 = vunpack.c.l.b16 %v6156
      %v7614 = vunpack.c.l.b16 %v6157
      %v7615 = vunpack.c.l.b16 %v6158
      %v7616 = vunpack.c.l.b16 %v6159
      %v7617 = vunpack.c.l.b16 %v6160
      %v7618 = vunpack.c.l.b16 %v6161
      %v7619 = vunpack.c.l.b16 %v6162
      %v7620 = vunpack.c.l.b16 %v6163
      %v7621 = vunpack.c.l.b16 %v6164
      %v7622 = vunpack.c.l.b16 %v6165
      %v7623 = vunpack.c.l.b16 %v6166
      %v7624 = vunpack.c.l.b16 %v6167
      %v7625 = vunpack.c.l.b16 %v6168
      %v7626 = vunpack.c.l.b16 %v6169
      %v7627 = vunpack.c.l.b16 %v6170
      %v7628 = vunpack.c.l.b16 %v6171
      %v7629 = vunpack.c.l.b16 %v6172
      %v7630 = vunpack.c.l.b16 %v6173
      %v7631 = vunpack.c.l.b16 %v6174
      %v7632 = vunpack.c.l.b16 %v6175
      %v7633 = vunpack.c.l.b16 %v6176
      %v7634 = vunpack.c.l.b16 %v6177
      %v7635 = vunpack.c.l.b16 %v6178
      %v7636 = vunpack.c.l.b16 %v6179
      %v7637 = vunpack.c.l.b16 %v6180
      %v7638 = vunpack.c.l.b16 %v6181
      %v7639 = vpack.c.b16 %v7608, %v7607
      %v7640 = vpack.c.b16 %v7610, %v7609
      %v7641 = vpack.c.b16 %v7612, %v7611
      %v7642 = vpack.c.b16 %v7614, %v7613
      %v7643 = vpack.c.b16 %v7616, %v7615
      %v7644 = vpack.c.b16 %v7618, %v7617
      %v7645 = vpack.c.b16 %v7620, %v7619
      %v7646 = vpack.c.b16 %v7622, %v7621
      %v7647 = vpack.c.b16 %v7624, %v7623
      %v7648 = vpack.c.b16 %v7626, %v7625
      %v7649 = vpack.c.b16 %v7628, %v7627
      %v7650 = vpack.c.b16 %v7630, %v7629
      %v7651 = vpack.c.b16 %v7632, %v7631
      %v7652 = vpack.c.b16 %v7634, %v7633
      %v7653 = vpack.c.b16 %v7636, %v7635
      %v7654 = vpack.c.b16 %v7638, %v7637
      %7655 = vrot.lane.b32.xlu0 %v7639, 48
      %v7656 = vpop.permute.xlu0 %7655
      %7657 = vrot.lane.b32.xlu0 %v7640, 48
      %v7658 = vpop.permute.xlu0 %7657
      %7659 = vrot.lane.b32.xlu0 %v7641, 48
      %v7660 = vpop.permute.xlu0 %7659
      %7661 = vrot.lane.b32.xlu0 %v7642, 48
      %v7662 = vpop.permute.xlu0 %7661
      %7663 = vrot.lane.b32.xlu0 %v7643, 48
      %v7664 = vpop.permute.xlu0 %7663
      %7665 = vrot.lane.b32.xlu0 %v7644, 48
      %v7666 = vpop.permute.xlu0 %7665
      %7667 = vrot.lane.b32.xlu0 %v7645, 48
      %v7668 = vpop.permute.xlu0 %7667
      %7669 = vrot.lane.b32.xlu0 %v7646, 48
      %v7670 = vpop.permute.xlu0 %7669
      %7671 = vrot.lane.b32.xlu0 %v7647, 48
      %v7672 = vpop.permute.xlu0 %7671
      %7673 = vrot.lane.b32.xlu0 %v7648, 48
      %v7674 = vpop.permute.xlu0 %7673
      %7675 = vrot.lane.b32.xlu0 %v7649, 48
      %v7676 = vpop.permute.xlu0 %7675
      %7677 = vrot.lane.b32.xlu0 %v7650, 48
      %v7678 = vpop.permute.xlu0 %7677
      %7679 = vrot.lane.b32.xlu0 %v7651, 48
      %v7680 = vpop.permute.xlu0 %7679
      %7681 = vrot.lane.b32.xlu0 %v7652, 48
      %v7682 = vpop.permute.xlu0 %7681
      %7683 = vrot.lane.b32.xlu0 %v7653, 48
      %v7684 = vpop.permute.xlu0 %7683
      %7685 = vrot.lane.b32.xlu0 %v7654, 48
      %v7686 = vpop.permute.xlu0 %7685
      %v7687 = vunpack.c.l.b16 %v6211
      %v7688 = vunpack.c.l.b16 %v6221
      %v7689 = vunpack.c.l.b16 %v6235
      %v7690 = vunpack.c.l.b16 %v6245
      %v7691 = vunpack.c.l.b16 %v6259
      %v7692 = vunpack.c.l.b16 %v6269
      %v7693 = vunpack.c.l.b16 %v6283
      %v7694 = vunpack.c.l.b16 %v6293
      %v7695 = vunpack.c.l.b16 %v6307
      %v7696 = vunpack.c.l.b16 %v6317
      %v7697 = vunpack.c.l.b16 %v6331
      %v7698 = vunpack.c.l.b16 %v6341
      %v7699 = vunpack.c.l.b16 %v6355
      %v7700 = vunpack.c.l.b16 %v6365
      %v7701 = vunpack.c.l.b16 %v6379
      %v7702 = vunpack.c.l.b16 %v6389
      %v7703 = vunpack.c.l.b16 %v6403
      %v7704 = vunpack.c.l.b16 %v6413
      %v7705 = vunpack.c.l.b16 %v6427
      %v7706 = vunpack.c.l.b16 %v6437
      %v7707 = vunpack.c.l.b16 %v6451
      %v7708 = vunpack.c.l.b16 %v6461
      %v7709 = vunpack.c.l.b16 %v6475
      %v7710 = vunpack.c.l.b16 %v6485
      %v7711 = vunpack.c.l.b16 %v6499
      %v7712 = vunpack.c.l.b16 %v6509
      %v7713 = vunpack.c.l.b16 %v6523
      %v7714 = vunpack.c.l.b16 %v6533
      %v7715 = vunpack.c.l.b16 %v6547
      %v7716 = vunpack.c.l.b16 %v6557
      %v7717 = vunpack.c.l.b16 %v6571
      %v7718 = vunpack.c.l.b16 %v6581
      %v7719 = vpack.c.b16 %v7688, %v7687
      %v7720 = vpack.c.b16 %v7690, %v7689
      %v7721 = vpack.c.b16 %v7692, %v7691
      %v7722 = vpack.c.b16 %v7694, %v7693
      %v7723 = vpack.c.b16 %v7696, %v7695
      %v7724 = vpack.c.b16 %v7698, %v7697
      %v7725 = vpack.c.b16 %v7700, %v7699
      %v7726 = vpack.c.b16 %v7702, %v7701
      %v7727 = vpack.c.b16 %v7704, %v7703
      %v7728 = vpack.c.b16 %v7706, %v7705
      %v7729 = vpack.c.b16 %v7708, %v7707
      %v7730 = vpack.c.b16 %v7710, %v7709
      %v7731 = vpack.c.b16 %v7712, %v7711
      %v7732 = vpack.c.b16 %v7714, %v7713
      %v7733 = vpack.c.b16 %v7716, %v7715
      %v7734 = vpack.c.b16 %v7718, %v7717
      %7735 = vrot.lane.b32.xlu0 %v7719, 64
      %v7736 = vpop.permute.xlu0 %7735
      %7737 = vrot.lane.b32.xlu0 %v7720, 64
      %v7738 = vpop.permute.xlu0 %7737
      %7739 = vrot.lane.b32.xlu0 %v7721, 64
      %v7740 = vpop.permute.xlu0 %7739
      %7741 = vrot.lane.b32.xlu0 %v7722, 64
      %v7742 = vpop.permute.xlu0 %7741
      %7743 = vrot.lane.b32.xlu0 %v7723, 64
      %v7744 = vpop.permute.xlu0 %7743
      %7745 = vrot.lane.b32.xlu0 %v7724, 64
      %v7746 = vpop.permute.xlu0 %7745
      %7747 = vrot.lane.b32.xlu0 %v7725, 64
      %v7748 = vpop.permute.xlu0 %7747
      %7749 = vrot.lane.b32.xlu0 %v7726, 64
      %v7750 = vpop.permute.xlu0 %7749
      %7751 = vrot.lane.b32.xlu0 %v7727, 64
      %v7752 = vpop.permute.xlu0 %7751
      %7753 = vrot.lane.b32.xlu0 %v7728, 64
      %v7754 = vpop.permute.xlu0 %7753
      %7755 = vrot.lane.b32.xlu0 %v7729, 64
      %v7756 = vpop.permute.xlu0 %7755
      %7757 = vrot.lane.b32.xlu0 %v7730, 64
      %v7758 = vpop.permute.xlu0 %7757
      %7759 = vrot.lane.b32.xlu0 %v7731, 64
      %v7760 = vpop.permute.xlu0 %7759
      %7761 = vrot.lane.b32.xlu0 %v7732, 64
      %v7762 = vpop.permute.xlu0 %7761
      %7763 = vrot.lane.b32.xlu0 %v7733, 64
      %v7764 = vpop.permute.xlu0 %7763
      %7765 = vrot.lane.b32.xlu0 %v7734, 64
      %v7766 = vpop.permute.xlu0 %7765
      %v7767 = vunpack.c.l.b16 %v6649
      %v7768 = vunpack.c.l.b16 %v6652
      %v7769 = vunpack.c.l.b16 %v6656
      %v7770 = vunpack.c.l.b16 %v6659
      %v7771 = vunpack.c.l.b16 %v6663
      %v7772 = vunpack.c.l.b16 %v6666
      %v7773 = vunpack.c.l.b16 %v6670
      %v7774 = vunpack.c.l.b16 %v6673
      %v7775 = vunpack.c.l.b16 %v6677
      %v7776 = vunpack.c.l.b16 %v6680
      %v7777 = vunpack.c.l.b16 %v6684
      %v7778 = vunpack.c.l.b16 %v6687
      %v7779 = vunpack.c.l.b16 %v6691
      %v7780 = vunpack.c.l.b16 %v6694
      %v7781 = vunpack.c.l.b16 %v6698
      %v7782 = vunpack.c.l.b16 %v6701
      %v7783 = vunpack.c.l.b16 %v6705
      %v7784 = vunpack.c.l.b16 %v6708
      %v7785 = vunpack.c.l.b16 %v6712
      %v7786 = vunpack.c.l.b16 %v6715
      %v7787 = vunpack.c.l.b16 %v6719
      %v7788 = vunpack.c.l.b16 %v6722
      %v7789 = vunpack.c.l.b16 %v6726
      %v7790 = vunpack.c.l.b16 %v6729
      %v7791 = vunpack.c.l.b16 %v6733
      %v7792 = vunpack.c.l.b16 %v6736
      %v7793 = vunpack.c.l.b16 %v6740
      %v7794 = vunpack.c.l.b16 %v6743
      %v7795 = vunpack.c.l.b16 %v6747
      %v7796 = vunpack.c.l.b16 %v6750
      %v7797 = vunpack.c.l.b16 %v6754
      %v7798 = vunpack.c.l.b16 %v6757
      %v7799 = vpack.c.b16 %v7768, %v7767
      %v7800 = vpack.c.b16 %v7770, %v7769
      %v7801 = vpack.c.b16 %v7772, %v7771
      %v7802 = vpack.c.b16 %v7774, %v7773
      %v7803 = vpack.c.b16 %v7776, %v7775
      %v7804 = vpack.c.b16 %v7778, %v7777
      %v7805 = vpack.c.b16 %v7780, %v7779
      %v7806 = vpack.c.b16 %v7782, %v7781
      %v7807 = vpack.c.b16 %v7784, %v7783
      %v7808 = vpack.c.b16 %v7786, %v7785
      %v7809 = vpack.c.b16 %v7788, %v7787
      %v7810 = vpack.c.b16 %v7790, %v7789
      %v7811 = vpack.c.b16 %v7792, %v7791
      %v7812 = vpack.c.b16 %v7794, %v7793
      %v7813 = vpack.c.b16 %v7796, %v7795
      %v7814 = vpack.c.b16 %v7798, %v7797
      %7815 = vrot.lane.b32.xlu0 %v7799, 80
      %v7816 = vpop.permute.xlu0 %7815
      %7817 = vrot.lane.b32.xlu0 %v7800, 80
      %v7818 = vpop.permute.xlu0 %7817
      %7819 = vrot.lane.b32.xlu0 %v7801, 80
      %v7820 = vpop.permute.xlu0 %7819
      %7821 = vrot.lane.b32.xlu0 %v7802, 80
      %v7822 = vpop.permute.xlu0 %7821
      %7823 = vrot.lane.b32.xlu0 %v7803, 80
      %v7824 = vpop.permute.xlu0 %7823
      %7825 = vrot.lane.b32.xlu0 %v7804, 80
      %v7826 = vpop.permute.xlu0 %7825
      %7827 = vrot.lane.b32.xlu0 %v7805, 80
      %v7828 = vpop.permute.xlu0 %7827
      %7829 = vrot.lane.b32.xlu0 %v7806, 80
      %v7830 = vpop.permute.xlu0 %7829
      %7831 = vrot.lane.b32.xlu0 %v7807, 80
      %v7832 = vpop.permute.xlu0 %7831
      %7833 = vrot.lane.b32.xlu0 %v7808, 80
      %v7834 = vpop.permute.xlu0 %7833
      %7835 = vrot.lane.b32.xlu0 %v7809, 80
      %v7836 = vpop.permute.xlu0 %7835
      %7837 = vrot.lane.b32.xlu0 %v7810, 80
      %v7838 = vpop.permute.xlu0 %7837
      %7839 = vrot.lane.b32.xlu0 %v7811, 80
      %v7840 = vpop.permute.xlu0 %7839
      %7841 = vrot.lane.b32.xlu0 %v7812, 80
      %v7842 = vpop.permute.xlu0 %7841
      %7843 = vrot.lane.b32.xlu0 %v7813, 80
      %v7844 = vpop.permute.xlu0 %7843
      %7845 = vrot.lane.b32.xlu0 %v7814, 80
      %v7846 = vpop.permute.xlu0 %7845
      %v7863 = vunpack.c.l.b16 %v6759
      %v7864 = vunpack.c.l.b16 %v6760
      %v7865 = vunpack.c.l.b16 %v6761
      %v7866 = vunpack.c.l.b16 %v6762
      %v7867 = vunpack.c.l.b16 %v6763
      %v7868 = vunpack.c.l.b16 %v6764
      %v7869 = vunpack.c.l.b16 %v6765
      %v7870 = vunpack.c.l.b16 %v6766
      %v7871 = vunpack.c.l.b16 %v6767
      %v7872 = vunpack.c.l.b16 %v6768
      %v7873 = vunpack.c.l.b16 %v6769
      %v7874 = vunpack.c.l.b16 %v6770
      %v7875 = vunpack.c.l.b16 %v6771
      %v7876 = vunpack.c.l.b16 %v6772
      %v7877 = vunpack.c.l.b16 %v6773
      %v7878 = vunpack.c.l.b16 %v6774
      %v7879 = vunpack.c.l.b16 %v6775
      %v7880 = vunpack.c.l.b16 %v6776
      %v7881 = vunpack.c.l.b16 %v6777
      %v7882 = vunpack.c.l.b16 %v6778
      %v7883 = vunpack.c.l.b16 %v6779
      %v7884 = vunpack.c.l.b16 %v6780
      %v7885 = vunpack.c.l.b16 %v6781
      %v7886 = vunpack.c.l.b16 %v6782
      %v7887 = vunpack.c.l.b16 %v6783
      %v7888 = vunpack.c.l.b16 %v6784
      %v7889 = vunpack.c.l.b16 %v6785
      %v7890 = vunpack.c.l.b16 %v6786
      %v7891 = vunpack.c.l.b16 %v6787
      %v7892 = vunpack.c.l.b16 %v6788
      %v7893 = vunpack.c.l.b16 %v6789
      %v7894 = vunpack.c.l.b16 %v6790
      %v7895 = vpack.c.b16 %v7864, %v7863
      %v7896 = vpack.c.b16 %v7866, %v7865
      %v7897 = vpack.c.b16 %v7868, %v7867
      %v7898 = vpack.c.b16 %v7870, %v7869
      %v7899 = vpack.c.b16 %v7872, %v7871
      %v7900 = vpack.c.b16 %v7874, %v7873
      %v7901 = vpack.c.b16 %v7876, %v7875
      %v7902 = vpack.c.b16 %v7878, %v7877
      %v7903 = vpack.c.b16 %v7880, %v7879
      %v7904 = vpack.c.b16 %v7882, %v7881
      %v7905 = vpack.c.b16 %v7884, %v7883
      %v7906 = vpack.c.b16 %v7886, %v7885
      %v7907 = vpack.c.b16 %v7888, %v7887
      %v7908 = vpack.c.b16 %v7890, %v7889
      %v7909 = vpack.c.b16 %v7892, %v7891
      %v7910 = vpack.c.b16 %v7894, %v7893
      %7911 = vrot.lane.b32.xlu0 %v7895, 96
      %v7912 = vpop.permute.xlu0 %7911
      %7913 = vrot.lane.b32.xlu0 %v7896, 96
      %v7914 = vpop.permute.xlu0 %7913
      %7915 = vrot.lane.b32.xlu0 %v7897, 96
      %v7916 = vpop.permute.xlu0 %7915
      %7917 = vrot.lane.b32.xlu0 %v7898, 96
      %v7918 = vpop.permute.xlu0 %7917
      %7919 = vrot.lane.b32.xlu0 %v7899, 96
      %v7920 = vpop.permute.xlu0 %7919
      %7921 = vrot.lane.b32.xlu0 %v7900, 96
      %v7922 = vpop.permute.xlu0 %7921
      %7923 = vrot.lane.b32.xlu0 %v7901, 96
      %v7924 = vpop.permute.xlu0 %7923
      %7925 = vrot.lane.b32.xlu0 %v7902, 96
      %v7926 = vpop.permute.xlu0 %7925
      %7927 = vrot.lane.b32.xlu0 %v7903, 96
      %v7928 = vpop.permute.xlu0 %7927
      %7929 = vrot.lane.b32.xlu0 %v7904, 96
      %v7930 = vpop.permute.xlu0 %7929
      %7931 = vrot.lane.b32.xlu0 %v7905, 96
      %v7932 = vpop.permute.xlu0 %7931
      %7933 = vrot.lane.b32.xlu0 %v7906, 96
      %v7934 = vpop.permute.xlu0 %7933
      %7935 = vrot.lane.b32.xlu0 %v7907, 96
      %v7936 = vpop.permute.xlu0 %7935
      %7937 = vrot.lane.b32.xlu0 %v7908, 96
      %v7938 = vpop.permute.xlu0 %7937
      %7939 = vrot.lane.b32.xlu0 %v7909, 96
      %v7940 = vpop.permute.xlu0 %7939
      %7941 = vrot.lane.b32.xlu0 %v7910, 96
      %v7942 = vpop.permute.xlu0 %7941
      %v7943 = vunpack.c.l.b16 %v6820
      %v7944 = vunpack.c.l.b16 %v6830
      %v7945 = vunpack.c.l.b16 %v6844
      %v7946 = vunpack.c.l.b16 %v6854
      %v7947 = vunpack.c.l.b16 %v6868
      %v7948 = vunpack.c.l.b16 %v6878
      %v7949 = vunpack.c.l.b16 %v6892
      %v7950 = vunpack.c.l.b16 %v6902
      %v7951 = vunpack.c.l.b16 %v6916
      %v7952 = vunpack.c.l.b16 %v6926
      %v7953 = vunpack.c.l.b16 %v6940
      %v7954 = vunpack.c.l.b16 %v6950
      %v7955 = vunpack.c.l.b16 %v6964
      %v7956 = vunpack.c.l.b16 %v6974
      %v7957 = vunpack.c.l.b16 %v6988
      %v7958 = vunpack.c.l.b16 %v6998
      %v7959 = vunpack.c.l.b16 %v7012
      %v7960 = vunpack.c.l.b16 %v7022
      %v7961 = vunpack.c.l.b16 %v7036
      %v7962 = vunpack.c.l.b16 %v7046
      %v7963 = vunpack.c.l.b16 %v7060
      %v7964 = vunpack.c.l.b16 %v7070
      %v7965 = vunpack.c.l.b16 %v7084
      %v7966 = vunpack.c.l.b16 %v7094
      %v7967 = vunpack.c.l.b16 %v7108
      %v7968 = vunpack.c.l.b16 %v7118
      %v7969 = vunpack.c.l.b16 %v7132
      %v7970 = vunpack.c.l.b16 %v7142
      %v7971 = vunpack.c.l.b16 %v7156
      %v7972 = vunpack.c.l.b16 %v7166
      %v7973 = vunpack.c.l.b16 %v7180
      %v7974 = vunpack.c.l.b16 %v7190
      %v7975 = vpack.c.b16 %v7944, %v7943
      %v7976 = vpack.c.b16 %v7946, %v7945
      %v7977 = vpack.c.b16 %v7948, %v7947
      %v7978 = vpack.c.b16 %v7950, %v7949
      %v7979 = vpack.c.b16 %v7952, %v7951
      %v7980 = vpack.c.b16 %v7954, %v7953
      %v7981 = vpack.c.b16 %v7956, %v7955
      %v7982 = vpack.c.b16 %v7958, %v7957
      %v7983 = vpack.c.b16 %v7960, %v7959
      %v7984 = vpack.c.b16 %v7962, %v7961
      %v7985 = vpack.c.b16 %v7964, %v7963
      %v7986 = vpack.c.b16 %v7966, %v7965
      %v7987 = vpack.c.b16 %v7968, %v7967
      %v7988 = vpack.c.b16 %v7970, %v7969
      %v7989 = vpack.c.b16 %v7972, %v7971
      %v7990 = vpack.c.b16 %v7974, %v7973
      %7991 = vrot.lane.b32.xlu0 %v7975, 112
      %v7992 = vpop.permute.xlu0 %7991
      %7993 = vrot.lane.b32.xlu0 %v7976, 112
      %v7994 = vpop.permute.xlu0 %7993
      %7995 = vrot.lane.b32.xlu0 %v7977, 112
      %v7996 = vpop.permute.xlu0 %7995
      %7997 = vrot.lane.b32.xlu0 %v7978, 112
      %v7998 = vpop.permute.xlu0 %7997
      %7999 = vrot.lane.b32.xlu0 %v7979, 112
      %v8000 = vpop.permute.xlu0 %7999
      %8001 = vrot.lane.b32.xlu0 %v7980, 112
      %v8002 = vpop.permute.xlu0 %8001
      %8003 = vrot.lane.b32.xlu0 %v7981, 112
      %v8004 = vpop.permute.xlu0 %8003
      %8005 = vrot.lane.b32.xlu0 %v7982, 112
      %v8006 = vpop.permute.xlu0 %8005
      %8007 = vrot.lane.b32.xlu0 %v7983, 112
      %v8008 = vpop.permute.xlu0 %8007
      %8009 = vrot.lane.b32.xlu0 %v7984, 112
      %v8010 = vpop.permute.xlu0 %8009
      %8011 = vrot.lane.b32.xlu0 %v7985, 112
      %v8012 = vpop.permute.xlu0 %8011
      %8013 = vrot.lane.b32.xlu0 %v7986, 112
      %v8014 = vpop.permute.xlu0 %8013
      %8015 = vrot.lane.b32.xlu0 %v7987, 112
      %v8016 = vpop.permute.xlu0 %8015
      %8017 = vrot.lane.b32.xlu0 %v7988, 112
      %v8018 = vpop.permute.xlu0 %8017
      %8019 = vrot.lane.b32.xlu0 %v7989, 112
      %v8020 = vpop.permute.xlu0 %8019
      %8021 = vrot.lane.b32.xlu0 %v7990, 112
      %v8022 = vpop.permute.xlu0 %8021
      %v8023 = vunpack.c.l.b16 %v7258
      %v8024 = vunpack.c.l.b16 %v7261
      %v8025 = vunpack.c.l.b16 %v7265
      %v8026 = vunpack.c.l.b16 %v7268
      %v8027 = vunpack.c.l.b16 %v7272
      %v8028 = vunpack.c.l.b16 %v7275
      %v8029 = vunpack.c.l.b16 %v7279
      %v8030 = vunpack.c.l.b16 %v7282
      %v8031 = vunpack.c.l.b16 %v7286
      %v8032 = vunpack.c.l.b16 %v7289
      %v8033 = vunpack.c.l.b16 %v7293
      %v8034 = vunpack.c.l.b16 %v7296
      %v8035 = vunpack.c.l.b16 %v7300
      %v8036 = vunpack.c.l.b16 %v7303
      %v8037 = vunpack.c.l.b16 %v7307
      %v8038 = vunpack.c.l.b16 %v7310
      %v8039 = vunpack.c.l.b16 %v7314
      %v8040 = vunpack.c.l.b16 %v7317
      %v8041 = vunpack.c.l.b16 %v7321
      %v8042 = vunpack.c.l.b16 %v7324
      %v8043 = vunpack.c.l.b16 %v7328
      %v8044 = vunpack.c.l.b16 %v7331
      %v8045 = vunpack.c.l.b16 %v7335
      %v8046 = vunpack.c.l.b16 %v7338
      %v8047 = vunpack.c.l.b16 %v7342
      %v8048 = vunpack.c.l.b16 %v7345
      %v8049 = vunpack.c.l.b16 %v7349
      %v8050 = vunpack.c.l.b16 %v7352
      %v8051 = vunpack.c.l.b16 %v7356
      %v8052 = vunpack.c.l.b16 %v7359
      %v8053 = vunpack.c.l.b16 %v7363
      %v8054 = vunpack.c.l.b16 %v7366
      %v8055 = vpack.c.b16 %v8024, %v8023
      %v8056 = vpack.c.b16 %v8026, %v8025
      %v8057 = vpack.c.b16 %v8028, %v8027
      %v8058 = vpack.c.b16 %v8030, %v8029
      %v8059 = vpack.c.b16 %v8032, %v8031
      %v8060 = vpack.c.b16 %v8034, %v8033
      %v8061 = vpack.c.b16 %v8036, %v8035
      %v8062 = vpack.c.b16 %v8038, %v8037
      %v8063 = vpack.c.b16 %v8040, %v8039
      %v8064 = vpack.c.b16 %v8042, %v8041
      %v8065 = vpack.c.b16 %v8044, %v8043
      %v8066 = vpack.c.b16 %v8046, %v8045
      %v8067 = vpack.c.b16 %v8048, %v8047
      %v8068 = vpack.c.b16 %v8050, %v8049
      %v8069 = vpack.c.b16 %v8052, %v8051
      %v8070 = vpack.c.b16 %v8054, %v8053
      %vm8071 = vcmask 130048
      %v8074 = vsel %vm8071, %v7415, %v7480
      %v8077 = vsel %vm8071, %v7416, %v7482
      %v8080 = vsel %vm8071, %v7417, %v7484
      %v8083 = vsel %vm8071, %v7418, %v7486
      %v8086 = vsel %vm8071, %v7419, %v7488
      %v8089 = vsel %vm8071, %v7420, %v7490
      %v8092 = vsel %vm8071, %v7421, %v7492
      %v8095 = vsel %vm8071, %v7422, %v7494
      %v8098 = vsel %vm8071, %v7423, %v7496
      %v8101 = vsel %vm8071, %v7424, %v7498
      %v8104 = vsel %vm8071, %v7425, %v7500
      %v8107 = vsel %vm8071, %v7426, %v7502
      %v8110 = vsel %vm8071, %v7427, %v7504
      %v8113 = vsel %vm8071, %v7428, %v7506
      %v8116 = vsel %vm8071, %v7429, %v7508
      %v8119 = vsel %vm8071, %v7430, %v7510
      %vm8120 = vcmask 261120
      %v8122 = vsel %vm8120, %v8074, %v7560
      %v8124 = vsel %vm8120, %v8077, %v7562
      %v8126 = vsel %vm8120, %v8080, %v7564
      %v8128 = vsel %vm8120, %v8083, %v7566
      %v8130 = vsel %vm8120, %v8086, %v7568
      %v8132 = vsel %vm8120, %v8089, %v7570
      %v8134 = vsel %vm8120, %v8092, %v7572
      %v8136 = vsel %vm8120, %v8095, %v7574
      %v8138 = vsel %vm8120, %v8098, %v7576
      %v8140 = vsel %vm8120, %v8101, %v7578
      %v8142 = vsel %vm8120, %v8104, %v7580
      %v8144 = vsel %vm8120, %v8107, %v7582
      %v8146 = vsel %vm8120, %v8110, %v7584
      %v8148 = vsel %vm8120, %v8113, %v7586
      %v8150 = vsel %vm8120, %v8116, %v7588
      %v8152 = vsel %vm8120, %v8119, %v7590
      %vm8153 = vcmask 392192
      %v8155 = vsel %vm8153, %v8122, %v7656
      %v8157 = vsel %vm8153, %v8124, %v7658
      %v8159 = vsel %vm8153, %v8126, %v7660
      %v8161 = vsel %vm8153, %v8128, %v7662
      %v8163 = vsel %vm8153, %v8130, %v7664
      %v8165 = vsel %vm8153, %v8132, %v7666
      %v8167 = vsel %vm8153, %v8134, %v7668
      %v8169 = vsel %vm8153, %v8136, %v7670
      %v8171 = vsel %vm8153, %v8138, %v7672
      %v8173 = vsel %vm8153, %v8140, %v7674
      %v8175 = vsel %vm8153, %v8142, %v7676
      %v8177 = vsel %vm8153, %v8144, %v7678
      %v8179 = vsel %vm8153, %v8146, %v7680
      %v8181 = vsel %vm8153, %v8148, %v7682
      %v8183 = vsel %vm8153, %v8150, %v7684
      %v8185 = vsel %vm8153, %v8152, %v7686
      %vm8186 = vcmask 523264
      %v8188 = vsel %vm8186, %v8155, %v7736
      %v8190 = vsel %vm8186, %v8157, %v7738
      %v8192 = vsel %vm8186, %v8159, %v7740
      %v8194 = vsel %vm8186, %v8161, %v7742
      %v8196 = vsel %vm8186, %v8163, %v7744
      %v8198 = vsel %vm8186, %v8165, %v7746
      %v8200 = vsel %vm8186, %v8167, %v7748
      %v8202 = vsel %vm8186, %v8169, %v7750
      %v8204 = vsel %vm8186, %v8171, %v7752
      %v8206 = vsel %vm8186, %v8173, %v7754
      %v8208 = vsel %vm8186, %v8175, %v7756
      %v8210 = vsel %vm8186, %v8177, %v7758
      %v8212 = vsel %vm8186, %v8179, %v7760
      %v8214 = vsel %vm8186, %v8181, %v7762
      %v8216 = vsel %vm8186, %v8183, %v7764
      %v8218 = vsel %vm8186, %v8185, %v7766
      %vm8219 = vcmask 654336
      %v8221 = vsel %vm8219, %v8188, %v7816
      %v8223 = vsel %vm8219, %v8190, %v7818
      %v8225 = vsel %vm8219, %v8192, %v7820
      %v8227 = vsel %vm8219, %v8194, %v7822
      %v8229 = vsel %vm8219, %v8196, %v7824
      %v8231 = vsel %vm8219, %v8198, %v7826
      %v8233 = vsel %vm8219, %v8200, %v7828
      %v8235 = vsel %vm8219, %v8202, %v7830
      %v8237 = vsel %vm8219, %v8204, %v7832
      %v8239 = vsel %vm8219, %v8206, %v7834
      %v8241 = vsel %vm8219, %v8208, %v7836
      %v8243 = vsel %vm8219, %v8210, %v7838
      %v8245 = vsel %vm8219, %v8212, %v7840
      %v8247 = vsel %vm8219, %v8214, %v7842
      %v8249 = vsel %vm8219, %v8216, %v7844
      %v8251 = vsel %vm8219, %v8218, %v7846
      %vm8252 = vcmask 785408
      %v8254 = vsel %vm8252, %v8221, %v7912
      %v8256 = vsel %vm8252, %v8223, %v7914
      %v8258 = vsel %vm8252, %v8225, %v7916
      %v8260 = vsel %vm8252, %v8227, %v7918
      %v8262 = vsel %vm8252, %v8229, %v7920
      %v8264 = vsel %vm8252, %v8231, %v7922
      %v8266 = vsel %vm8252, %v8233, %v7924
      %v8268 = vsel %vm8252, %v8235, %v7926
      %v8270 = vsel %vm8252, %v8237, %v7928
      %v8272 = vsel %vm8252, %v8239, %v7930
      %v8274 = vsel %vm8252, %v8241, %v7932
      %v8276 = vsel %vm8252, %v8243, %v7934
      %v8278 = vsel %vm8252, %v8245, %v7936
      %v8280 = vsel %vm8252, %v8247, %v7938
      %v8282 = vsel %vm8252, %v8249, %v7940
      %v8284 = vsel %vm8252, %v8251, %v7942
      %vm8285 = vcmask 916480
      %v8287 = vsel %vm8285, %v8254, %v7992
      %v8290 = vsel %vm8285, %v8256, %v7994
      %v8293 = vsel %vm8285, %v8258, %v7996
      %v8296 = vsel %vm8285, %v8260, %v7998
      %v8299 = vsel %vm8285, %v8262, %v8000
      %v8302 = vsel %vm8285, %v8264, %v8002
      %v8305 = vsel %vm8285, %v8266, %v8004
      %v8308 = vsel %vm8285, %v8268, %v8006
      %v8311 = vsel %vm8285, %v8270, %v8008
      %v8314 = vsel %vm8285, %v8272, %v8010
      %v8317 = vsel %vm8285, %v8274, %v8012
      %v8320 = vsel %vm8285, %v8276, %v8014
      %v8323 = vsel %vm8285, %v8278, %v8016
      %v8326 = vsel %vm8285, %v8280, %v8018
      %v8329 = vsel %vm8285, %v8282, %v8020
      %v8332 = vsel %vm8285, %v8284, %v8022
      %v8334 = vld [vmem:[%s5] sm:$0xf]
      %v8335 = vld [vmem:[%s5 + $0x4] sm:$0xf]
      %v8336 = vld [vmem:[%s5 + $0x8] sm:$0xf]
      %v8337 = vld [vmem:[%s5 + $0xc] sm:$0xf]
      %v8338 = vld [vmem:[%s5 + $0x10] sm:$0xf]
      %v8339 = vld [vmem:[%s5 + $0x14] sm:$0xf]
      %v8340 = vld [vmem:[%s5 + $0x18] sm:$0xf]
      %v8341 = vld [vmem:[%s5 + $0x1c] sm:$0xf]
      %v8342 = vld [vmem:[%s5 + $0x20] sm:$0xf]
      %v8343 = vld [vmem:[%s5 + $0x24] sm:$0xf]
      %v8344 = vld [vmem:[%s5 + $0x28] sm:$0xf]
      %v8345 = vld [vmem:[%s5 + $0x2c] sm:$0xf]
      %v8346 = vld [vmem:[%s5 + $0x30] sm:$0xf]
      %v8347 = vld [vmem:[%s5 + $0x34] sm:$0xf]
      %v8348 = vld [vmem:[%s5 + $0x38] sm:$0xf]
      %v8349 = vld [vmem:[%s5 + $0x3c] sm:$0xf]
      %v8350 = vld [vmem:[%s5 + $0x40] sm:$0xf]
      %v8351 = vld [vmem:[%s5 + $0x44] sm:$0xf]
      %v8370 = vunpack.c.l.b16 %v8334
      %v8371 = vunpack.c.l.b16 %v8335
      %v8372 = vunpack.c.l.b16 %v8336
      %v8373 = vunpack.c.l.b16 %v8337
      %v8374 = vunpack.c.l.b16 %v8338
      %v8375 = vunpack.c.l.b16 %v8339
      %v8376 = vunpack.c.l.b16 %v8340
      %v8377 = vunpack.c.l.b16 %v8341
      %v8378 = vunpack.c.l.b16 %v8342
      %v8379 = vunpack.c.l.b16 %v8343
      %v8380 = vunpack.c.l.b16 %v8344
      %v8381 = vunpack.c.l.b16 %v8345
      %v8382 = vunpack.c.l.b16 %v8346
      %v8383 = vunpack.c.l.b16 %v8347
      %v8384 = vunpack.c.l.b16 %v8348
      %v8385 = vunpack.c.l.b16 %v8349
      %v8386 = vunpack.c.l.b16 %v8350
      %v8387 = vunpack.c.l.b16 %v8351
      %v8388 = vpack.c.b16 %v8371, %v8370
      %v8389 = vpack.c.b16 %v8373, %v8372
      %v8390 = vpack.c.b16 %v8375, %v8374
      %v8391 = vpack.c.b16 %v8377, %v8376
      %v8392 = vpack.c.b16 %v8379, %v8378
      %v8393 = vpack.c.b16 %v8381, %v8380
      %v8394 = vpack.c.b16 %v8383, %v8382
      %v8395 = vpack.c.b16 %v8385, %v8384
      %v8396 = vpack.c.b16 %v8387, %v8386
      %v8407 = vsel %vm8071, %v8055, 0
      %v8410 = vsel %vm8071, %v8056, 0
      %v8413 = vsel %vm8071, %v8057, 0
      %v8416 = vsel %vm8071, %v8058, 0
      %v8419 = vsel %vm8071, %v8059, 0
      %v8422 = vsel %vm8071, %v8060, 0
      %v8425 = vsel %vm8071, %v8061, 0
      %v8428 = vsel %vm8071, %v8062, 0
      %v8431 = vsel %vm8071, %v8063, 0
      %v8434 = vsel %vm8071, %v8064, 0
      %v8437 = vsel %vm8071, %v8065, 0
      %v8440 = vsel %vm8071, %v8066, 0
      %v8443 = vsel %vm8071, %v8067, 0
      %v8446 = vsel %vm8071, %v8068, 0
      %v8449 = vsel %vm8071, %v8069, 0
      %v8452 = vsel %vm8071, %v8070, 0
      %8454 = vmatprep.subr.bf16.mxu0 0
      %8455 = vmatpush1.bf16.msra.mxu0 %v8388
      %8456 = vmatprep.subr.bf16.mxu0 0
      %8457 = vmatpush1.bf16.msra.mxu0 %v8389
      %8458 = vmatprep.subr.bf16.mxu0 0
      %8459 = vmatpush1.bf16.msra.mxu0 %v8390
      %8460 = vmatprep.subr.bf16.mxu0 0
      %8461 = vmatpush1.bf16.msra.mxu0 %v8391
      %8462 = vmatprep.subr.bf16.mxu0 0
      %8463 = vmatpush1.bf16.msra.mxu0 %v8392
      %8464 = vmatprep.subr.bf16.mxu0 0
      %8465 = vmatpush1.bf16.msra.mxu0 %v8393
      %8466 = vmatprep.subr.bf16.mxu0 0
      %8467 = vmatpush1.bf16.msra.mxu0 %v8394
      %8468 = vmatprep.subr.bf16.mxu0 0
      %8469 = vmatpush1.bf16.msra.mxu0 %v8395
      %8470 = vmatprep.subr.bf16.mxu0 0
      %8471 = vmatpush1.bf16.msra.mxu0 %v8396
      %8472 = vmatprep.subr.bf16.mxu0 0
      %8473 = vmatpush1.bf16.msra.mxu0 0
      %8474 = vmatprep.subr.bf16.mxu0 0
      %8475 = vmatpush1.bf16.msra.mxu0 0
      %8476 = vmatprep.subr.bf16.mxu0 0
      %8477 = vmatpush1.bf16.msra.mxu0 0
      %8478 = vmatprep.subr.bf16.mxu0 0
      %8479 = vmatpush1.bf16.msra.mxu0 0
      %8480 = vmatprep.subr.bf16.mxu0 0
      %8481 = vmatpush1.bf16.msra.mxu0 0
      %8482 = vmatprep.subr.bf16.mxu0 0
      %8483 = vmatpush1.bf16.msra.mxu0 0
      %8484 = vmatprep.subr.bf16.mxu0 0
      %8485 = vmatpush1.bf16.msra.mxu0 0
      %8486 = vmatprep.mubr.bf16.mxu0 %v8407
      %8487 = vmatmul.mubr.bf16.gmra.mrb[0].mxu0 %v8287
      %v8488 = vpop.f32.mrb[0].mxu0
      %v8489 = vadd.f32 0.0, %v8488
      %v8490 = vpop.f32.mrb[0].mxu0
      %v8491 = vpop.f32.mrb[0].mxu0
      %v8492 = vadd.f32 0.0, %v8491
      %v8493 = vpop.f32.mrb[0].mxu0
      %8494 = vmatprep.mubr.bf16.mxu0 %v8410
      %8495 = vmatmul.mubr.bf16.gmra.mrb[0].mxu0 %v8290
      %v8496 = vpop.f32.mrb[0].mxu0
      %v8497 = vadd.f32 0.0, %v8496
      %v8498 = vpop.f32.mrb[0].mxu0
      %v8499 = vpop.f32.mrb[0].mxu0
      %v8500 = vadd.f32 0.0, %v8499
      %v8501 = vpop.f32.mrb[0].mxu0
      %8502 = vmatprep.mubr.bf16.mxu0 %v8413
      %8503 = vmatmul.mubr.bf16.gmra.mrb[0].mxu0 %v8293
      %v8504 = vpop.f32.mrb[0].mxu0
      %v8505 = vadd.f32 0.0, %v8504
      %v8506 = vpop.f32.mrb[0].mxu0
      %v8507 = vpop.f32.mrb[0].mxu0
      %v8508 = vadd.f32 0.0, %v8507
      %v8509 = vpop.f32.mrb[0].mxu0
      %8510 = vmatprep.mubr.bf16.mxu0 %v8416
      %8511 = vmatmul.mubr.bf16.gmra.mrb[0].mxu0 %v8296
      %v8512 = vpop.f32.mrb[0].mxu0
      %v8513 = vadd.f32 0.0, %v8512
      %v8514 = vpop.f32.mrb[0].mxu0
      %v8515 = vpop.f32.mrb[0].mxu0
      %v8516 = vadd.f32 0.0, %v8515
      %v8517 = vpop.f32.mrb[0].mxu0
      %8518 = vmatprep.mubr.bf16.mxu0 %v8419
      %8519 = vmatmul.mubr.bf16.gmra.mrb[0].mxu0 %v8299
      %v8520 = vpop.f32.mrb[0].mxu0
      %v8521 = vadd.f32 0.0, %v8520
      %v8522 = vpop.f32.mrb[0].mxu0
      %v8523 = vpop.f32.mrb[0].mxu0
      %v8524 = vadd.f32 0.0, %v8523
      %v8525 = vpop.f32.mrb[0].mxu0
      %8526 = vmatprep.mubr.bf16.mxu0 %v8422
      %8527 = vmatmul.mubr.bf16.gmra.mrb[0].mxu0 %v8302
      %v8528 = vpop.f32.mrb[0].mxu0
      %v8529 = vadd.f32 0.0, %v8528
      %v8530 = vpop.f32.mrb[0].mxu0
      %v8531 = vpop.f32.mrb[0].mxu0
      %v8532 = vadd.f32 0.0, %v8531
      %v8533 = vpop.f32.mrb[0].mxu0
      %8534 = vmatprep.mubr.bf16.mxu0 %v8425
      %8535 = vmatmul.mubr.bf16.gmra.mrb[0].mxu0 %v8305
      %v8536 = vpop.f32.mrb[0].mxu0
      %v8537 = vadd.f32 0.0, %v8536
      %v8538 = vpop.f32.mrb[0].mxu0
      %v8539 = vpop.f32.mrb[0].mxu0
      %v8540 = vadd.f32 0.0, %v8539
      %v8541 = vpop.f32.mrb[0].mxu0
      %8542 = vmatprep.mubr.bf16.mxu0 %v8428
      %8543 = vmatmul.mubr.bf16.gmra.mrb[0].mxu0 %v8308
      %v8544 = vpop.f32.mrb[0].mxu0
      %v8545 = vadd.f32 0.0, %v8544
      %v8546 = vpop.f32.mrb[0].mxu0
      %v8547 = vpop.f32.mrb[0].mxu0
      %v8548 = vadd.f32 0.0, %v8547
      %v8549 = vpop.f32.mrb[0].mxu0
      %8550 = vmatprep.mubr.bf16.mxu0 %v8431
      %8551 = vmatmul.mubr.bf16.gmra.mrb[0].mxu0 %v8311
      %v8552 = vpop.f32.mrb[0].mxu0
      %v8553 = vadd.f32 0.0, %v8552
      %v8554 = vpop.f32.mrb[0].mxu0
      %v8555 = vpop.f32.mrb[0].mxu0
      %v8556 = vadd.f32 0.0, %v8555
      %v8557 = vpop.f32.mrb[0].mxu0
      %8558 = vmatprep.mubr.bf16.mxu0 %v8434
      %8559 = vmatmul.mubr.bf16.gmra.mrb[0].mxu0 %v8314
      %v8560 = vpop.f32.mrb[0].mxu0
      %v8561 = vadd.f32 0.0, %v8560
      %v8562 = vpop.f32.mrb[0].mxu0
      %v8563 = vpop.f32.mrb[0].mxu0
      %v8564 = vadd.f32 0.0, %v8563
      %v8565 = vpop.f32.mrb[0].mxu0
      %8566 = vmatprep.mubr.bf16.mxu0 %v8437
      %8567 = vmatmul.mubr.bf16.gmra.mrb[0].mxu0 %v8317
      %v8568 = vpop.f32.mrb[0].mxu0
      %v8569 = vadd.f32 0.0, %v8568
      %v8570 = vpop.f32.mrb[0].mxu0
      %v8571 = vpop.f32.mrb[0].mxu0
      %v8572 = vadd.f32 0.0, %v8571
      %v8573 = vpop.f32.mrb[0].mxu0
      %8574 = vmatprep.mubr.bf16.mxu0 %v8440
      %8575 = vmatmul.mubr.bf16.gmra.mrb[0].mxu0 %v8320
      %v8576 = vpop.f32.mrb[0].mxu0
      %v8577 = vadd.f32 0.0, %v8576
      %v8578 = vpop.f32.mrb[0].mxu0
      %v8579 = vpop.f32.mrb[0].mxu0
      %v8580 = vadd.f32 0.0, %v8579
      %v8581 = vpop.f32.mrb[0].mxu0
      %8582 = vmatprep.mubr.bf16.mxu0 %v8443
      %8583 = vmatmul.mubr.bf16.gmra.mrb[0].mxu0 %v8323
      %v8584 = vpop.f32.mrb[0].mxu0
      %v8585 = vadd.f32 0.0, %v8584
      %v8586 = vpop.f32.mrb[0].mxu0
      %v8587 = vpop.f32.mrb[0].mxu0
      %v8588 = vadd.f32 0.0, %v8587
      %v8589 = vpop.f32.mrb[0].mxu0
      %8590 = vmatprep.mubr.bf16.mxu0 %v8446
      %8591 = vmatmul.mubr.bf16.gmra.mrb[0].mxu0 %v8326
      %v8592 = vpop.f32.mrb[0].mxu0
      %v8593 = vadd.f32 0.0, %v8592
      %v8594 = vpop.f32.mrb[0].mxu0
      %v8595 = vpop.f32.mrb[0].mxu0
      %v8596 = vadd.f32 0.0, %v8595
      %v8597 = vpop.f32.mrb[0].mxu0
      %8598 = vmatprep.mubr.bf16.mxu0 %v8449
      %8599 = vmatmul.mubr.bf16.gmra.mrb[0].mxu0 %v8329
      %v8600 = vpop.f32.mrb[0].mxu0
      %v8601 = vadd.f32 0.0, %v8600
      %v8602 = vpop.f32.mrb[0].mxu0
      %v8603 = vpop.f32.mrb[0].mxu0
      %v8604 = vadd.f32 0.0, %v8603
      %v8605 = vpop.f32.mrb[0].mxu0
      %8606 = vmatprep.mubr.bf16.mxu0 %v8452
      %8607 = vmatmul.mubr.bf16.gmra.mrb[0].mxu0 %v8332
      %v8608 = vpop.f32.mrb[0].mxu0
      %v8609 = vadd.f32 0.0, %v8608
      %v8610 = vpop.f32.mrb[0].mxu0
      %v8611 = vpop.f32.mrb[0].mxu0
      %v8612 = vadd.f32 0.0, %v8611
      %v8613 = vpop.f32.mrb[0].mxu0
      %8614 = vdwg.mxu0
      %v8615 = vld [vmem:[%s6] sm:$0x1]
      %v8617 = vlaneseq
      %v8618 = vshrl.u32 %v8617, 7
      %v8619 = vsub.s32 0, %v8618
      %v8620 = vrot.slane %v8615, %v8619
      %v8622 = vmul.f32 %v8489, %v8620
      %v8623 = vmul.f32 %v8492, %v8620
      %v8624 = vmul.f32 %v8497, %v8620
      %v8625 = vmul.f32 %v8500, %v8620
      %v8626 = vmul.f32 %v8505, %v8620
      %v8627 = vmul.f32 %v8508, %v8620
      %v8628 = vmul.f32 %v8513, %v8620
      %v8629 = vmul.f32 %v8516, %v8620
      %v8630 = vmul.f32 %v8521, %v8620
      %v8631 = vmul.f32 %v8524, %v8620
      %v8632 = vmul.f32 %v8529, %v8620
      %v8633 = vmul.f32 %v8532, %v8620
      %v8634 = vmul.f32 %v8537, %v8620
      %v8635 = vmul.f32 %v8540, %v8620
      %v8636 = vmul.f32 %v8545, %v8620
      %v8637 = vmul.f32 %v8548, %v8620
      %v8638 = vmul.f32 %v8553, %v8620
      %v8639 = vmul.f32 %v8556, %v8620
      %v8640 = vmul.f32 %v8561, %v8620
      %v8641 = vmul.f32 %v8564, %v8620
      %v8642 = vmul.f32 %v8569, %v8620
      %v8643 = vmul.f32 %v8572, %v8620
      %v8644 = vmul.f32 %v8577, %v8620
      %v8645 = vmul.f32 %v8580, %v8620
      %v8646 = vmul.f32 %v8585, %v8620
      %v8647 = vmul.f32 %v8588, %v8620
      %v8648 = vmul.f32 %v8593, %v8620
      %v8649 = vmul.f32 %v8596, %v8620
      %v8650 = vmul.f32 %v8601, %v8620
      %v8651 = vmul.f32 %v8604, %v8620
      %v8652 = vmul.f32 %v8609, %v8620
      %v8653 = vmul.f32 %v8612, %v8620
      %v8654 = vld [vmem:[%s7] sm:$0x1]
      %v8656 = vlaneseq
      %v8657 = vshrl.u32 %v8656, 7
      %v8658 = vsub.s32 0, %v8657
      %v8659 = vrot.slane %v8654, %v8658
      %v8661 = vadd.f32 %v8622, %v8659
      %v8662 = vadd.f32 %v8623, %v8659
      %v8663 = vadd.f32 %v8624, %v8659
      %v8664 = vadd.f32 %v8625, %v8659
      %v8665 = vadd.f32 %v8626, %v8659
      %v8666 = vadd.f32 %v8627, %v8659
      %v8667 = vadd.f32 %v8628, %v8659
      %v8668 = vadd.f32 %v8629, %v8659
      %v8669 = vadd.f32 %v8630, %v8659
      %v8670 = vadd.f32 %v8631, %v8659
      %v8671 = vadd.f32 %v8632, %v8659
      %v8672 = vadd.f32 %v8633, %v8659
      %v8673 = vadd.f32 %v8634, %v8659
      %v8674 = vadd.f32 %v8635, %v8659
      %v8675 = vadd.f32 %v8636, %v8659
      %v8676 = vadd.f32 %v8637, %v8659
      %v8677 = vadd.f32 %v8638, %v8659
      %v8678 = vadd.f32 %v8639, %v8659
      %v8679 = vadd.f32 %v8640, %v8659
      %v8680 = vadd.f32 %v8641, %v8659
      %v8681 = vadd.f32 %v8642, %v8659
      %v8682 = vadd.f32 %v8643, %v8659
      %v8683 = vadd.f32 %v8644, %v8659
      %v8684 = vadd.f32 %v8645, %v8659
      %v8685 = vadd.f32 %v8646, %v8659
      %v8686 = vadd.f32 %v8647, %v8659
      %v8687 = vadd.f32 %v8648, %v8659
      %v8688 = vadd.f32 %v8649, %v8659
      %v8689 = vadd.f32 %v8650, %v8659
      %v8690 = vadd.f32 %v8651, %v8659
      %v8691 = vadd.f32 %v8652, %v8659
      %v8692 = vadd.f32 %v8653, %v8659
      %v8693 = vmax.f32 %v8661, 0.0
      %v8694 = vmax.f32 %v8662, 0.0
      %v8695 = vmax.f32 %v8663, 0.0
      %v8696 = vmax.f32 %v8664, 0.0
      %v8697 = vmax.f32 %v8665, 0.0
      %v8698 = vmax.f32 %v8666, 0.0
      %v8699 = vmax.f32 %v8667, 0.0
      %v8700 = vmax.f32 %v8668, 0.0
      %v8701 = vmax.f32 %v8669, 0.0
      %v8702 = vmax.f32 %v8670, 0.0
      %v8703 = vmax.f32 %v8671, 0.0
      %v8704 = vmax.f32 %v8672, 0.0
      %v8705 = vmax.f32 %v8673, 0.0
      %v8706 = vmax.f32 %v8674, 0.0
      %v8707 = vmax.f32 %v8675, 0.0
      %v8708 = vmax.f32 %v8676, 0.0
      %v8709 = vmax.f32 %v8677, 0.0
      %v8710 = vmax.f32 %v8678, 0.0
      %v8711 = vmax.f32 %v8679, 0.0
      %v8712 = vmax.f32 %v8680, 0.0
      %v8713 = vmax.f32 %v8681, 0.0
      %v8714 = vmax.f32 %v8682, 0.0
      %v8715 = vmax.f32 %v8683, 0.0
      %v8716 = vmax.f32 %v8684, 0.0
      %v8717 = vmax.f32 %v8685, 0.0
      %v8718 = vmax.f32 %v8686, 0.0
      %v8719 = vmax.f32 %v8687, 0.0
      %v8720 = vmax.f32 %v8688, 0.0
      %v8721 = vmax.f32 %v8689, 0.0
      %v8722 = vmax.f32 %v8690, 0.0
      %v8723 = vmax.f32 %v8691, 0.0
      %v8724 = vmax.f32 %v8692, 0.0
      %8725 = vst.msk [vmem:[#allocation3] sm:$0xf] %vm4859, 0
      %8726 = vst.msk [vmem:[#allocation3 + $0x4] sm:$0xf] %vm4859, 0
      %vm8727 = vcmask 57344
      %8728 = vst.msk [vmem:[#allocation3 + $0x8] sm:$0x1] %vm8727, 0
      %8729 = vst.msk [vmem:[#allocation3 + $0xc] sm:$0xf] %vm4859, 0
      %8730 = vst.msk [vmem:[#allocation3 + $0x10] sm:$0xf] %vm4859, 0
      %8731 = vst.msk [vmem:[#allocation3 + $0x14] sm:$0x1] %vm8727, 0
      %8732 = vst.msk [vmem:[#allocation3 + $0x18] sm:$0xf] %vm4859, 0
      %8733 = vst.msk [vmem:[#allocation3 + $0x1c] sm:$0xf] %vm4859, 0
      %8734 = vst.msk [vmem:[#allocation3 + $0x20] sm:$0x1] %vm8727, 0
      %8735 = vst.msk [vmem:[#allocation3 + $0x24] sm:$0xf] %vm4859, 0
      %8736 = vst.msk [vmem:[#allocation3 + $0x28] sm:$0xf] %vm4859, 0
      %8737 = vst.msk [vmem:[#allocation3 + $0x2c] sm:$0x1] %vm8727, 0
      %8738 = vst.msk [vmem:[#allocation3 + $0x30] sm:$0xf] %vm4859, 0
      %8739 = vst.msk [vmem:[#allocation3 + $0x34] sm:$0xf] %vm4859, 0
      %8740 = vst.msk [vmem:[#allocation3 + $0x38] sm:$0x1] %vm8727, 0
      %8741 = vst.msk [vmem:[#allocation3 + $0x3c] sm:$0xf] %vm4859, 0
      %8742 = vst.msk [vmem:[#allocation3 + $0x40] sm:$0xf] %vm4859, 0
      %8743 = vst.msk [vmem:[#allocation3 + $0x44] sm:$0x1] %vm8727, 0
      %8744 = vst.msk [vmem:[#allocation3 + $0x48] sm:$0xf] %vm4859, 0
      %8745 = vst.msk [vmem:[#allocation3 + $0x4c] sm:$0xf] %vm4859, 0
      %8746 = vst.msk [vmem:[#allocation3 + $0x50] sm:$0x1] %vm8727, 0
      %8747 = vst.msk [vmem:[#allocation3 + $0x54] sm:$0xf] %vm4859, 0
      %8748 = vst.msk [vmem:[#allocation3 + $0x58] sm:$0xf] %vm4859, 0
      %8749 = vst.msk [vmem:[#allocation3 + $0x5c] sm:$0x1] %vm8727, 0
      %8750 = vst.msk [vmem:[#allocation3 + $0x60] sm:$0xf] %vm4859, 0
      %8751 = vst.msk [vmem:[#allocation3 + $0x64] sm:$0xf] %vm4859, 0
      %8752 = vst.msk [vmem:[#allocation3 + $0x68] sm:$0x1] %vm8727, 0
      %8753 = vst.msk [vmem:[#allocation3 + $0x6c] sm:$0xf] %vm4859, 0
      %8754 = vst.msk [vmem:[#allocation3 + $0x70] sm:$0xf] %vm4859, 0
      %8755 = vst.msk [vmem:[#allocation3 + $0x74] sm:$0x1] %vm8727, 0
      %8756 = vst.msk [vmem:[#allocation3 + $0x78] sm:$0xf] %vm4859, 0
      %8757 = vst.msk [vmem:[#allocation3 + $0x7c] sm:$0xf] %vm4859, 0
      %8758 = vst.msk [vmem:[#allocation3 + $0x80] sm:$0x1] %vm8727, 0
      %8759 = vst.msk [vmem:[#allocation3 + $0x84] sm:$0xf] %vm4859, 0
      %8760 = vst.msk [vmem:[#allocation3 + $0x88] sm:$0xf] %vm4859, 0
      %8761 = vst.msk [vmem:[#allocation3 + $0x8c] sm:$0x1] %vm8727, 0
      %8762 = vst.msk [vmem:[#allocation3 + $0x90] sm:$0xf] %vm4859, 0
      %8763 = vst.msk [vmem:[#allocation3 + $0x94] sm:$0xf] %vm4859, 0
      %8764 = vst.msk [vmem:[#allocation3 + $0x98] sm:$0x1] %vm8727, 0
      %8765 = vst.msk [vmem:[#allocation3 + $0x9c] sm:$0xf] %vm4859, 0
      %8766 = vst.msk [vmem:[#allocation3 + $0xa0] sm:$0xf] %vm4859, 0
      %8767 = vst.msk [vmem:[#allocation3 + $0xa4] sm:$0x1] %vm8727, 0
      %8768 = vst.msk [vmem:[#allocation3 + $0xa8] sm:$0xf] %vm4859, 0
      %8769 = vst.msk [vmem:[#allocation3 + $0xac] sm:$0xf] %vm4859, 0
      %8770 = vst.msk [vmem:[#allocation3 + $0xb0] sm:$0x1] %vm8727, 0
      %8771 = vst.msk [vmem:[#allocation3 + $0xb4] sm:$0xf] %vm4859, 0
      %8772 = vst.msk [vmem:[#allocation3 + $0xb8] sm:$0xf] %vm4859, 0
      %8773 = vst.msk [vmem:[#allocation3 + $0xbc] sm:$0x1] %vm8727, 0
      %8774 = vst.msk [vmem:[#allocation3 + $0xc0] sm:$0xf] %vm4859, 0
      %8775 = vst.msk [vmem:[#allocation3 + $0xc4] sm:$0xf] %vm4859, 0
      %8776 = vst.msk [vmem:[#allocation3 + $0xc8] sm:$0x1] %vm8727, 0
      %8777 = vst.msk [vmem:[#allocation3 + $0xcc] sm:$0xf] %vm4859, 0
      %8778 = vst.msk [vmem:[#allocation3 + $0xd0] sm:$0xf] %vm4859, 0
      %8779 = vst.msk [vmem:[#allocation3 + $0xd4] sm:$0x1] %vm8727, 0
      %v8780 = vpack.c.bf16 %v8694, %v8693
      %v8781 = vpack.c.bf16 %v8696, %v8695
      %v8782 = vpack.c.bf16 %v8698, %v8697
      %v8783 = vpack.c.bf16 %v8700, %v8699
      %v8784 = vpack.c.bf16 %v8702, %v8701
      %v8785 = vpack.c.bf16 %v8704, %v8703
      %v8786 = vpack.c.bf16 %v8706, %v8705
      %v8787 = vpack.c.bf16 %v8708, %v8707
      %v8788 = vpack.c.bf16 %v8710, %v8709
      %v8789 = vpack.c.bf16 %v8712, %v8711
      %v8790 = vpack.c.bf16 %v8714, %v8713
      %v8791 = vpack.c.bf16 %v8716, %v8715
      %v8792 = vpack.c.bf16 %v8718, %v8717
      %v8793 = vpack.c.bf16 %v8720, %v8719
      %v8794 = vpack.c.bf16 %v8722, %v8721
      %v8795 = vpack.c.bf16 %v8724, %v8723
      %v8812 = vunpack.c.l.b16 %v8780
      %v8813 = vunpack.c.h.b16 %v8780
      %v8814 = vunpack.c.l.b16 %v8781
      %v8815 = vunpack.c.h.b16 %v8781
      %v8816 = vunpack.c.l.b16 %v8782
      %v8817 = vunpack.c.h.b16 %v8782
      %v8818 = vunpack.c.l.b16 %v8783
      %v8819 = vunpack.c.h.b16 %v8783
      %v8820 = vunpack.c.l.b16 %v8784
      %v8821 = vunpack.c.h.b16 %v8784
      %v8822 = vunpack.c.l.b16 %v8785
      %v8823 = vunpack.c.h.b16 %v8785
      %v8824 = vunpack.c.l.b16 %v8786
      %v8825 = vunpack.c.h.b16 %v8786
      %v8826 = vunpack.c.l.b16 %v8787
      %v8827 = vunpack.c.h.b16 %v8787
      %v8828 = vunpack.c.l.b16 %v8788
      %v8829 = vunpack.c.h.b16 %v8788
      %v8830 = vunpack.c.l.b16 %v8789
      %v8831 = vunpack.c.h.b16 %v8789
      %v8832 = vunpack.c.l.b16 %v8790
      %v8833 = vunpack.c.h.b16 %v8790
      %v8834 = vunpack.c.l.b16 %v8791
      %v8835 = vunpack.c.h.b16 %v8791
      %v8836 = vunpack.c.l.b16 %v8792
      %v8837 = vunpack.c.h.b16 %v8792
      %v8838 = vunpack.c.l.b16 %v8793
      %v8839 = vunpack.c.h.b16 %v8793
      %v8840 = vunpack.c.l.b16 %v8794
      %v8841 = vunpack.c.h.b16 %v8794
      %v8842 = vunpack.c.l.b16 %v8795
      %v8843 = vunpack.c.h.b16 %v8795
      %v8844 = vpack.c.b16 %v8812, %v8812
      %v8845 = vpack.c.b16 %v8813, %v8813
      %v8846 = vpack.c.b16 %v8814, %v8814
      %v8847 = vpack.c.b16 %v8815, %v8815
      %v8848 = vpack.c.b16 %v8816, %v8816
      %v8849 = vpack.c.b16 %v8817, %v8817
      %v8850 = vpack.c.b16 %v8818, %v8818
      %v8851 = vpack.c.b16 %v8819, %v8819
      %v8852 = vpack.c.b16 %v8820, %v8820
      %v8853 = vpack.c.b16 %v8821, %v8821
      %v8854 = vpack.c.b16 %v8822, %v8822
      %v8855 = vpack.c.b16 %v8823, %v8823
      %v8856 = vpack.c.b16 %v8824, %v8824
      %v8857 = vpack.c.b16 %v8825, %v8825
      %v8858 = vpack.c.b16 %v8826, %v8826
      %v8859 = vpack.c.b16 %v8827, %v8827
      %v8860 = vpack.c.b16 %v8828, %v8828
      %v8861 = vpack.c.b16 %v8829, %v8829
      %v8862 = vpack.c.b16 %v8830, %v8830
      %v8863 = vpack.c.b16 %v8831, %v8831
      %v8864 = vpack.c.b16 %v8832, %v8832
      %v8865 = vpack.c.b16 %v8833, %v8833
      %v8866 = vpack.c.b16 %v8834, %v8834
      %v8867 = vpack.c.b16 %v8835, %v8835
      %v8868 = vpack.c.b16 %v8836, %v8836
      %v8869 = vpack.c.b16 %v8837, %v8837
      %v8870 = vpack.c.b16 %v8838, %v8838
      %v8871 = vpack.c.b16 %v8839, %v8839
      %v8872 = vpack.c.b16 %v8840, %v8840
      %v8873 = vpack.c.b16 %v8841, %v8841
      %v8874 = vpack.c.b16 %v8842, %v8842
      %v8875 = vpack.c.b16 %v8843, %v8843
      %v8877 = vshrl.u32 %v8844, 16
      %v8879 = vrot.slane %v8877, 7
      %v8880 = vshll.u32 %v8844, 16
      %v8882 = vor.u32 %v8879, %v8880
      %v8883 = vrot.slane %v8879, 4
      %v8885 = vshrl.u32 %v8845, 16
      %v8887 = vrot.slane %v8885, 7
      %v8888 = vshll.u32 %v8845, 16
      %v8890 = vor.u32 %v8887, %v8888
      %v8891 = vsel %vm4531, %v8883, %v8890
      %v8892 = vrot.slane %v8887, 4
      %v8894 = vshrl.u32 %v8846, 16
      %v8896 = vrot.slane %v8894, 7
      %v8897 = vshll.u32 %v8846, 16
      %v8899 = vor.u32 %v8896, %v8897
      %v8900 = vrot.slane %v8896, 4
      %v8902 = vshrl.u32 %v8847, 16
      %v8904 = vrot.slane %v8902, 7
      %v8905 = vshll.u32 %v8847, 16
      %v8907 = vor.u32 %v8904, %v8905
      %v8908 = vsel %vm4531, %v8900, %v8907
      %v8909 = vrot.slane %v8904, 4
      %v8911 = vshrl.u32 %v8848, 16
      %v8913 = vrot.slane %v8911, 7
      %v8914 = vshll.u32 %v8848, 16
      %v8916 = vor.u32 %v8913, %v8914
      %v8917 = vrot.slane %v8913, 4
      %v8919 = vshrl.u32 %v8849, 16
      %v8921 = vrot.slane %v8919, 7
      %v8922 = vshll.u32 %v8849, 16
      %v8924 = vor.u32 %v8921, %v8922
      %v8925 = vsel %vm4531, %v8917, %v8924
      %v8926 = vrot.slane %v8921, 4
      %v8928 = vshrl.u32 %v8850, 16
      %v8930 = vrot.slane %v8928, 7
      %v8931 = vshll.u32 %v8850, 16
      %v8933 = vor.u32 %v8930, %v8931
      %v8934 = vrot.slane %v8930, 4
      %v8936 = vshrl.u32 %v8851, 16
      %v8938 = vrot.slane %v8936, 7
      %v8939 = vshll.u32 %v8851, 16
      %v8941 = vor.u32 %v8938, %v8939
      %v8942 = vsel %vm4531, %v8934, %v8941
      %v8943 = vrot.slane %v8938, 4
      %v8945 = vshrl.u32 %v8852, 16
      %v8947 = vrot.slane %v8945, 7
      %v8948 = vshll.u32 %v8852, 16
      %v8950 = vor.u32 %v8947, %v8948
      %v8951 = vrot.slane %v8947, 4
      %v8953 = vshrl.u32 %v8853, 16
      %v8955 = vrot.slane %v8953, 7
      %v8956 = vshll.u32 %v8853, 16
      %v8958 = vor.u32 %v8955, %v8956
      %v8959 = vsel %vm4531, %v8951, %v8958
      %v8960 = vrot.slane %v8955, 4
      %v8962 = vshrl.u32 %v8854, 16
      %v8964 = vrot.slane %v8962, 7
      %v8965 = vshll.u32 %v8854, 16
      %v8967 = vor.u32 %v8964, %v8965
      %v8968 = vrot.slane %v8964, 4
      %v8970 = vshrl.u32 %v8855, 16
      %v8972 = vrot.slane %v8970, 7
      %v8973 = vshll.u32 %v8855, 16
      %v8975 = vor.u32 %v8972, %v8973
      %v8976 = vsel %vm4531, %v8968, %v8975
      %v8977 = vrot.slane %v8972, 4
      %v8979 = vshrl.u32 %v8856, 16
      %v8981 = vrot.slane %v8979, 7
      %v8982 = vshll.u32 %v8856, 16
      %v8984 = vor.u32 %v8981, %v8982
      %v8985 = vrot.slane %v8981, 4
      %v8987 = vshrl.u32 %v8857, 16
      %v8989 = vrot.slane %v8987, 7
      %v8990 = vshll.u32 %v8857, 16
      %v8992 = vor.u32 %v8989, %v8990
      %v8993 = vsel %vm4531, %v8985, %v8992
      %v8994 = vrot.slane %v8989, 4
      %v8996 = vshrl.u32 %v8858, 16
      %v8998 = vrot.slane %v8996, 7
      %v8999 = vshll.u32 %v8858, 16
      %v9001 = vor.u32 %v8998, %v8999
      %v9002 = vrot.slane %v8998, 4
      %v9004 = vshrl.u32 %v8859, 16
      %v9006 = vrot.slane %v9004, 7
      %v9007 = vshll.u32 %v8859, 16
      %v9009 = vor.u32 %v9006, %v9007
      %v9010 = vsel %vm4531, %v9002, %v9009
      %v9011 = vrot.slane %v9006, 4
      %v9013 = vshrl.u32 %v8860, 16
      %v9015 = vrot.slane %v9013, 7
      %v9016 = vshll.u32 %v8860, 16
      %v9018 = vor.u32 %v9015, %v9016
      %v9019 = vrot.slane %v9015, 4
      %v9021 = vshrl.u32 %v8861, 16
      %v9023 = vrot.slane %v9021, 7
      %v9024 = vshll.u32 %v8861, 16
      %v9026 = vor.u32 %v9023, %v9024
      %v9027 = vsel %vm4531, %v9019, %v9026
      %v9028 = vrot.slane %v9023, 4
      %v9030 = vshrl.u32 %v8862, 16
      %v9032 = vrot.slane %v9030, 7
      %v9033 = vshll.u32 %v8862, 16
      %v9035 = vor.u32 %v9032, %v9033
      %v9036 = vrot.slane %v9032, 4
      %v9038 = vshrl.u32 %v8863, 16
      %v9040 = vrot.slane %v9038, 7
      %v9041 = vshll.u32 %v8863, 16
      %v9043 = vor.u32 %v9040, %v9041
      %v9044 = vsel %vm4531, %v9036, %v9043
      %v9045 = vrot.slane %v9040, 4
      %v9047 = vshrl.u32 %v8864, 16
      %v9049 = vrot.slane %v9047, 7
      %v9050 = vshll.u32 %v8864, 16
      %v9052 = vor.u32 %v9049, %v9050
      %v9053 = vrot.slane %v9049, 4
      %v9055 = vshrl.u32 %v8865, 16
      %v9057 = vrot.slane %v9055, 7
      %v9058 = vshll.u32 %v8865, 16
      %v9060 = vor.u32 %v9057, %v9058
      %v9061 = vsel %vm4531, %v9053, %v9060
      %v9062 = vrot.slane %v9057, 4
      %v9064 = vshrl.u32 %v8866, 16
      %v9066 = vrot.slane %v9064, 7
      %v9067 = vshll.u32 %v8866, 16
      %v9069 = vor.u32 %v9066, %v9067
      %v9070 = vrot.slane %v9066, 4
      %v9072 = vshrl.u32 %v8867, 16
      %v9074 = vrot.slane %v9072, 7
      %v9075 = vshll.u32 %v8867, 16
      %v9077 = vor.u32 %v9074, %v9075
      %v9078 = vsel %vm4531, %v9070, %v9077
      %v9079 = vrot.slane %v9074, 4
      %v9081 = vshrl.u32 %v8868, 16
      %v9083 = vrot.slane %v9081, 7
      %v9084 = vshll.u32 %v8868, 16
      %v9086 = vor.u32 %v9083, %v9084
      %v9087 = vrot.slane %v9083, 4
      %v9089 = vshrl.u32 %v8869, 16
      %v9091 = vrot.slane %v9089, 7
      %v9092 = vshll.u32 %v8869, 16
      %v9094 = vor.u32 %v9091, %v9092
      %v9095 = vsel %vm4531, %v9087, %v9094
      %v9096 = vrot.slane %v9091, 4
      %v9098 = vshrl.u32 %v8870, 16
      %v9100 = vrot.slane %v9098, 7
      %v9101 = vshll.u32 %v8870, 16
      %v9103 = vor.u32 %v9100, %v9101
      %v9104 = vrot.slane %v9100, 4
      %v9106 = vshrl.u32 %v8871, 16
      %v9108 = vrot.slane %v9106, 7
      %v9109 = vshll.u32 %v8871, 16
      %v9111 = vor.u32 %v9108, %v9109
      %v9112 = vsel %vm4531, %v9104, %v9111
      %v9113 = vrot.slane %v9108, 4
      %v9115 = vshrl.u32 %v8872, 16
      %v9117 = vrot.slane %v9115, 7
      %v9118 = vshll.u32 %v8872, 16
      %v9120 = vor.u32 %v9117, %v9118
      %v9121 = vrot.slane %v9117, 4
      %v9123 = vshrl.u32 %v8873, 16
      %v9125 = vrot.slane %v9123, 7
      %v9126 = vshll.u32 %v8873, 16
      %v9128 = vor.u32 %v9125, %v9126
      %v9129 = vsel %vm4531, %v9121, %v9128
      %v9130 = vrot.slane %v9125, 4
      %v9132 = vshrl.u32 %v8874, 16
      %v9134 = vrot.slane %v9132, 7
      %v9135 = vshll.u32 %v8874, 16
      %v9137 = vor.u32 %v9134, %v9135
      %v9138 = vrot.slane %v9134, 4
      %v9140 = vshrl.u32 %v8875, 16
      %v9142 = vrot.slane %v9140, 7
      %v9143 = vshll.u32 %v8875, 16
      %v9145 = vor.u32 %v9142, %v9143
      %v9146 = vsel %vm4531, %v9138, %v9145
      %v9147 = vrot.slane %v9142, 4
      %s9196 = scalar_lea.vmem [#allocation3], 12
      %v9197 = vld [vmem:[%s9196] sm:$0xf]
      %v9198 = vsel %vm4855, %v8882, %v9197
      %9199 = vst [vmem:[%s9196] sm:$0xf] %v9198
      %9200 = vst.msk [vmem:[%s9196 + $0x4] sm:$0xf] %vm4859, %v8891
      %v9201 = vld [vmem:[%s9196 + $0x8] sm:$0x1]
      %v9202 = vsel %vm4862, %v8892, %v9201
      %9203 = vst [vmem:[%s9196 + $0x8] sm:$0x1] %v9202
      %v9204 = vld [vmem:[%s9196 + $0xc] sm:$0xf]
      %v9205 = vsel %vm4855, %v8899, %v9204
      %9206 = vst [vmem:[%s9196 + $0xc] sm:$0xf] %v9205
      %9207 = vst.msk [vmem:[%s9196 + $0x10] sm:$0xf] %vm4859, %v8908
      %v9208 = vld [vmem:[%s9196 + $0x14] sm:$0x1]
      %v9209 = vsel %vm4862, %v8909, %v9208
      %9210 = vst [vmem:[%s9196 + $0x14] sm:$0x1] %v9209
      %v9211 = vld [vmem:[%s9196 + $0x18] sm:$0xf]
      %v9212 = vsel %vm4855, %v8916, %v9211
      %9213 = vst [vmem:[%s9196 + $0x18] sm:$0xf] %v9212
      %9214 = vst.msk [vmem:[%s9196 + $0x1c] sm:$0xf] %vm4859, %v8925
      %v9215 = vld [vmem:[%s9196 + $0x20] sm:$0x1]
      %v9216 = vsel %vm4862, %v8926, %v9215
      %9217 = vst [vmem:[%s9196 + $0x20] sm:$0x1] %v9216
      %v9218 = vld [vmem:[%s9196 + $0x24] sm:$0xf]
      %v9219 = vsel %vm4855, %v8933, %v9218
      %9220 = vst [vmem:[%s9196 + $0x24] sm:$0xf] %v9219
      %9221 = vst.msk [vmem:[%s9196 + $0x28] sm:$0xf] %vm4859, %v8942
      %v9222 = vld [vmem:[%s9196 + $0x2c] sm:$0x1]
      %v9223 = vsel %vm4862, %v8943, %v9222
      %9224 = vst [vmem:[%s9196 + $0x2c] sm:$0x1] %v9223
      %v9225 = vld [vmem:[%s9196 + $0x30] sm:$0xf]
      %v9226 = vsel %vm4855, %v8950, %v9225
      %9227 = vst [vmem:[%s9196 + $0x30] sm:$0xf] %v9226
      %9228 = vst.msk [vmem:[%s9196 + $0x34] sm:$0xf] %vm4859, %v8959
      %v9229 = vld [vmem:[%s9196 + $0x38] sm:$0x1]
      %v9230 = vsel %vm4862, %v8960, %v9229
      %9231 = vst [vmem:[%s9196 + $0x38] sm:$0x1] %v9230
      %v9232 = vld [vmem:[%s9196 + $0x3c] sm:$0xf]
      %v9233 = vsel %vm4855, %v8967, %v9232
      %9234 = vst [vmem:[%s9196 + $0x3c] sm:$0xf] %v9233
      %9235 = vst.msk [vmem:[%s9196 + $0x40] sm:$0xf] %vm4859, %v8976
      %v9236 = vld [vmem:[%s9196 + $0x44] sm:$0x1]
      %v9237 = vsel %vm4862, %v8977, %v9236
      %9238 = vst [vmem:[%s9196 + $0x44] sm:$0x1] %v9237
      %v9239 = vld [vmem:[%s9196 + $0x48] sm:$0xf]
      %v9240 = vsel %vm4855, %v8984, %v9239
      %9241 = vst [vmem:[%s9196 + $0x48] sm:$0xf] %v9240
      %9242 = vst.msk [vmem:[%s9196 + $0x4c] sm:$0xf] %vm4859, %v8993
      %v9243 = vld [vmem:[%s9196 + $0x50] sm:$0x1]
      %v9244 = vsel %vm4862, %v8994, %v9243
      %9245 = vst [vmem:[%s9196 + $0x50] sm:$0x1] %v9244
      %v9246 = vld [vmem:[%s9196 + $0x54] sm:$0xf]
      %v9247 = vsel %vm4855, %v9001, %v9246
      %9248 = vst [vmem:[%s9196 + $0x54] sm:$0xf] %v9247
      %9249 = vst.msk [vmem:[%s9196 + $0x58] sm:$0xf] %vm4859, %v9010
      %v9250 = vld [vmem:[%s9196 + $0x5c] sm:$0x1]
      %v9251 = vsel %vm4862, %v9011, %v9250
      %9252 = vst [vmem:[%s9196 + $0x5c] sm:$0x1] %v9251
      %v9253 = vld [vmem:[%s9196 + $0x60] sm:$0xf]
      %v9254 = vsel %vm4855, %v9018, %v9253
      %9255 = vst [vmem:[%s9196 + $0x60] sm:$0xf] %v9254
      %9256 = vst.msk [vmem:[%s9196 + $0x64] sm:$0xf] %vm4859, %v9027
      %v9257 = vld [vmem:[%s9196 + $0x68] sm:$0x1]
      %v9258 = vsel %vm4862, %v9028, %v9257
      %9259 = vst [vmem:[%s9196 + $0x68] sm:$0x1] %v9258
      %v9260 = vld [vmem:[%s9196 + $0x6c] sm:$0xf]
      %v9261 = vsel %vm4855, %v9035, %v9260
      %9262 = vst [vmem:[%s9196 + $0x6c] sm:$0xf] %v9261
      %9263 = vst.msk [vmem:[%s9196 + $0x70] sm:$0xf] %vm4859, %v9044
      %v9264 = vld [vmem:[%s9196 + $0x74] sm:$0x1]
      %v9265 = vsel %vm4862, %v9045, %v9264
      %9266 = vst [vmem:[%s9196 + $0x74] sm:$0x1] %v9265
      %v9267 = vld [vmem:[%s9196 + $0x78] sm:$0xf]
      %v9268 = vsel %vm4855, %v9052, %v9267
      %9269 = vst [vmem:[%s9196 + $0x78] sm:$0xf] %v9268
      %9270 = vst.msk [vmem:[%s9196 + $0x7c] sm:$0xf] %vm4859, %v9061
      %v9271 = vld [vmem:[%s9196 + $0x80] sm:$0x1]
      %v9272 = vsel %vm4862, %v9062, %v9271
      %9273 = vst [vmem:[%s9196 + $0x80] sm:$0x1] %v9272
      %v9274 = vld [vmem:[%s9196 + $0x84] sm:$0xf]
      %v9275 = vsel %vm4855, %v9069, %v9274
      %9276 = vst [vmem:[%s9196 + $0x84] sm:$0xf] %v9275
      %9277 = vst.msk [vmem:[%s9196 + $0x88] sm:$0xf] %vm4859, %v9078
      %v9278 = vld [vmem:[%s9196 + $0x8c] sm:$0x1]
      %v9279 = vsel %vm4862, %v9079, %v9278
      %9280 = vst [vmem:[%s9196 + $0x8c] sm:$0x1] %v9279
      %v9281 = vld [vmem:[%s9196 + $0x90] sm:$0xf]
      %v9282 = vsel %vm4855, %v9086, %v9281
      %9283 = vst [vmem:[%s9196 + $0x90] sm:$0xf] %v9282
      %9284 = vst.msk [vmem:[%s9196 + $0x94] sm:$0xf] %vm4859, %v9095
      %v9285 = vld [vmem:[%s9196 + $0x98] sm:$0x1]
      %v9286 = vsel %vm4862, %v9096, %v9285
      %9287 = vst [vmem:[%s9196 + $0x98] sm:$0x1] %v9286
      %v9288 = vld [vmem:[%s9196 + $0x9c] sm:$0xf]
      %v9289 = vsel %vm4855, %v9103, %v9288
      %9290 = vst [vmem:[%s9196 + $0x9c] sm:$0xf] %v9289
      %9291 = vst.msk [vmem:[%s9196 + $0xa0] sm:$0xf] %vm4859, %v9112
      %v9292 = vld [vmem:[%s9196 + $0xa4] sm:$0x1]
      %v9293 = vsel %vm4862, %v9113, %v9292
      %9294 = vst [vmem:[%s9196 + $0xa4] sm:$0x1] %v9293
      %v9295 = vld [vmem:[%s9196 + $0xa8] sm:$0xf]
      %v9296 = vsel %vm4855, %v9120, %v9295
      %9297 = vst [vmem:[%s9196 + $0xa8] sm:$0xf] %v9296
      %9298 = vst.msk [vmem:[%s9196 + $0xac] sm:$0xf] %vm4859, %v9129
      %v9299 = vld [vmem:[%s9196 + $0xb0] sm:$0x1]
      %v9300 = vsel %vm4862, %v9130, %v9299
      %9301 = vst [vmem:[%s9196 + $0xb0] sm:$0x1] %v9300
      %v9302 = vld [vmem:[%s9196 + $0xb4] sm:$0xf]
      %v9303 = vsel %vm4855, %v9137, %v9302
      %9304 = vst [vmem:[%s9196 + $0xb4] sm:$0xf] %v9303
      %9305 = vst.msk [vmem:[%s9196 + $0xb8] sm:$0xf] %vm4859, %v9146
      %v9306 = vld [vmem:[%s9196 + $0xbc] sm:$0x1]
      %v9307 = vsel %vm4862, %v9147, %v9306
      %9308 = vst [vmem:[%s9196 + $0xbc] sm:$0x1] %v9307
      %v9309 = vld [vmem:[#allocation3] sm:$0xf]
      %v9310 = vld [vmem:[#allocation3 + $0x4] sm:$0xf]
      %v9311 = vld [vmem:[#allocation3 + $0xc] sm:$0xf]
      %v9312 = vld [vmem:[#allocation3 + $0x10] sm:$0xf]
      %v9313 = vld [vmem:[#allocation3 + $0x18] sm:$0xf]
      %v9314 = vld [vmem:[#allocation3 + $0x1c] sm:$0xf]
      %v9315 = vld [vmem:[#allocation3 + $0x24] sm:$0xf]
      %v9316 = vld [vmem:[#allocation3 + $0x28] sm:$0xf]
      %v9317 = vld [vmem:[#allocation3 + $0x30] sm:$0xf]
      %v9318 = vld [vmem:[#allocation3 + $0x34] sm:$0xf]
      %v9319 = vld [vmem:[#allocation3 + $0x3c] sm:$0xf]
      %v9320 = vld [vmem:[#allocation3 + $0x40] sm:$0xf]
      %v9321 = vld [vmem:[#allocation3 + $0x48] sm:$0xf]
      %v9322 = vld [vmem:[#allocation3 + $0x4c] sm:$0xf]
      %v9323 = vld [vmem:[#allocation3 + $0x54] sm:$0xf]
      %v9324 = vld [vmem:[#allocation3 + $0x58] sm:$0xf]
      %v9325 = vld [vmem:[#allocation3 + $0x60] sm:$0xf]
      %v9326 = vld [vmem:[#allocation3 + $0x64] sm:$0xf]
      %v9327 = vld [vmem:[#allocation3 + $0x6c] sm:$0xf]
      %v9328 = vld [vmem:[#allocation3 + $0x70] sm:$0xf]
      %v9329 = vld [vmem:[#allocation3 + $0x78] sm:$0xf]
      %v9330 = vld [vmem:[#allocation3 + $0x7c] sm:$0xf]
      %v9331 = vld [vmem:[#allocation3 + $0x84] sm:$0xf]
      %v9332 = vld [vmem:[#allocation3 + $0x88] sm:$0xf]
      %v9333 = vld [vmem:[#allocation3 + $0x90] sm:$0xf]
      %v9334 = vld [vmem:[#allocation3 + $0x94] sm:$0xf]
      %v9335 = vld [vmem:[#allocation3 + $0x9c] sm:$0xf]
      %v9336 = vld [vmem:[#allocation3 + $0xa0] sm:$0xf]
      %v9337 = vld [vmem:[#allocation3 + $0xa8] sm:$0xf]
      %v9338 = vld [vmem:[#allocation3 + $0xac] sm:$0xf]
      %v9339 = vld [vmem:[#allocation3 + $0xb4] sm:$0xf]
      %v9340 = vld [vmem:[#allocation3 + $0xb8] sm:$0xf]
      %v9341 = vld [vmem:[#allocation3 + $0x8] sm:$0x1]
      %v9342 = vld [vmem:[#allocation3 + $0x14] sm:$0x1]
      %v9343 = vld [vmem:[#allocation3 + $0x20] sm:$0x1]
      %v9344 = vld [vmem:[#allocation3 + $0x2c] sm:$0x1]
      %v9345 = vld [vmem:[#allocation3 + $0x38] sm:$0x1]
      %v9346 = vld [vmem:[#allocation3 + $0x44] sm:$0x1]
      %v9347 = vld [vmem:[#allocation3 + $0x50] sm:$0x1]
      %v9348 = vld [vmem:[#allocation3 + $0x5c] sm:$0x1]
      %v9349 = vld [vmem:[#allocation3 + $0x68] sm:$0x1]
      %v9350 = vld [vmem:[#allocation3 + $0x74] sm:$0x1]
      %v9351 = vld [vmem:[#allocation3 + $0x80] sm:$0x1]
      %v9352 = vld [vmem:[#allocation3 + $0x8c] sm:$0x1]
      %v9353 = vld [vmem:[#allocation3 + $0x98] sm:$0x1]
      %v9354 = vld [vmem:[#allocation3 + $0xa4] sm:$0x1]
      %v9355 = vld [vmem:[#allocation3 + $0xb0] sm:$0x1]
      %v9356 = vld [vmem:[#allocation3 + $0xbc] sm:$0x1]
      %v9358 = vshrl.u32 %v9309, 16
      %v9360 = vrot.slane %v9358, 4
      %v9361 = vshll.u32 %v9309, 16
      %v9363 = vrot.slane %v9361, 5
      %v9364 = vor.u32 %v9360, %v9363
      %v9365 = vrot.slane %v9364, 4
      %v9367 = vshll.u32 %v9310, 16
      %v9369 = vrot.slane %v9367, 5
      %v9370 = vsel %vm5586, %v9365, %v9369
      %v9371 = vshrl.u32 %v9310, 16
      %v9373 = vrot.slane %v9371, 4
      %v9374 = vor.u32 %v9373, %v9369
      %v9375 = vrot.slane %v9374, 4
      %v9377 = vshll.u32 %v9341, 16
      %v9379 = vrot.slane %v9377, 5
      %v9380 = vsel %vm5586, %v9375, %v9379
      %v9382 = vshrl.u32 %v9311, 16
      %v9384 = vrot.slane %v9382, 4
      %v9385 = vshll.u32 %v9311, 16
      %v9387 = vrot.slane %v9385, 5
      %v9388 = vor.u32 %v9384, %v9387
      %v9389 = vrot.slane %v9388, 4
      %v9391 = vshll.u32 %v9312, 16
      %v9393 = vrot.slane %v9391, 5
      %v9394 = vsel %vm5586, %v9389, %v9393
      %v9395 = vshrl.u32 %v9312, 16
      %v9397 = vrot.slane %v9395, 4
      %v9398 = vor.u32 %v9397, %v9393
      %v9399 = vrot.slane %v9398, 4
      %v9401 = vshll.u32 %v9342, 16
      %v9403 = vrot.slane %v9401, 5
      %v9404 = vsel %vm5586, %v9399, %v9403
      %v9406 = vshrl.u32 %v9313, 16
      %v9408 = vrot.slane %v9406, 4
      %v9409 = vshll.u32 %v9313, 16
      %v9411 = vrot.slane %v9409, 5
      %v9412 = vor.u32 %v9408, %v9411
      %v9413 = vrot.slane %v9412, 4
      %v9415 = vshll.u32 %v9314, 16
      %v9417 = vrot.slane %v9415, 5
      %v9418 = vsel %vm5586, %v9413, %v9417
      %v9419 = vshrl.u32 %v9314, 16
      %v9421 = vrot.slane %v9419, 4
      %v9422 = vor.u32 %v9421, %v9417
      %v9423 = vrot.slane %v9422, 4
      %v9425 = vshll.u32 %v9343, 16
      %v9427 = vrot.slane %v9425, 5
      %v9428 = vsel %vm5586, %v9423, %v9427
      %v9430 = vshrl.u32 %v9315, 16
      %v9432 = vrot.slane %v9430, 4
      %v9433 = vshll.u32 %v9315, 16
      %v9435 = vrot.slane %v9433, 5
      %v9436 = vor.u32 %v9432, %v9435
      %v9437 = vrot.slane %v9436, 4
      %v9439 = vshll.u32 %v9316, 16
      %v9441 = vrot.slane %v9439, 5
      %v9442 = vsel %vm5586, %v9437, %v9441
      %v9443 = vshrl.u32 %v9316, 16
      %v9445 = vrot.slane %v9443, 4
      %v9446 = vor.u32 %v9445, %v9441
      %v9447 = vrot.slane %v9446, 4
      %v9449 = vshll.u32 %v9344, 16
      %v9451 = vrot.slane %v9449, 5
      %v9452 = vsel %vm5586, %v9447, %v9451
      %v9454 = vshrl.u32 %v9317, 16
      %v9456 = vrot.slane %v9454, 4
      %v9457 = vshll.u32 %v9317, 16
      %v9459 = vrot.slane %v9457, 5
      %v9460 = vor.u32 %v9456, %v9459
      %v9461 = vrot.slane %v9460, 4
      %v9463 = vshll.u32 %v9318, 16
      %v9465 = vrot.slane %v9463, 5
      %v9466 = vsel %vm5586, %v9461, %v9465
      %v9467 = vshrl.u32 %v9318, 16
      %v9469 = vrot.slane %v9467, 4
      %v9470 = vor.u32 %v9469, %v9465
      %v9471 = vrot.slane %v9470, 4
      %v9473 = vshll.u32 %v9345, 16
      %v9475 = vrot.slane %v9473, 5
      %v9476 = vsel %vm5586, %v9471, %v9475
      %v9478 = vshrl.u32 %v9319, 16
      %v9480 = vrot.slane %v9478, 4
      %v9481 = vshll.u32 %v9319, 16
      %v9483 = vrot.slane %v9481, 5
      %v9484 = vor.u32 %v9480, %v9483
      %v9485 = vrot.slane %v9484, 4
      %v9487 = vshll.u32 %v9320, 16
      %v9489 = vrot.slane %v9487, 5
      %v9490 = vsel %vm5586, %v9485, %v9489
      %v9491 = vshrl.u32 %v9320, 16
      %v9493 = vrot.slane %v9491, 4
      %v9494 = vor.u32 %v9493, %v9489
      %v9495 = vrot.slane %v9494, 4
      %v9497 = vshll.u32 %v9346, 16
      %v9499 = vrot.slane %v9497, 5
      %v9500 = vsel %vm5586, %v9495, %v9499
      %v9502 = vshrl.u32 %v9321, 16
      %v9504 = vrot.slane %v9502, 4
      %v9505 = vshll.u32 %v9321, 16
      %v9507 = vrot.slane %v9505, 5
      %v9508 = vor.u32 %v9504, %v9507
      %v9509 = vrot.slane %v9508, 4
      %v9511 = vshll.u32 %v9322, 16
      %v9513 = vrot.slane %v9511, 5
      %v9514 = vsel %vm5586, %v9509, %v9513
      %v9515 = vshrl.u32 %v9322, 16
      %v9517 = vrot.slane %v9515, 4
      %v9518 = vor.u32 %v9517, %v9513
      %v9519 = vrot.slane %v9518, 4
      %v9521 = vshll.u32 %v9347, 16
      %v9523 = vrot.slane %v9521, 5
      %v9524 = vsel %vm5586, %v9519, %v9523
      %v9526 = vshrl.u32 %v9323, 16
      %v9528 = vrot.slane %v9526, 4
      %v9529 = vshll.u32 %v9323, 16
      %v9531 = vrot.slane %v9529, 5
      %v9532 = vor.u32 %v9528, %v9531
      %v9533 = vrot.slane %v9532, 4
      %v9535 = vshll.u32 %v9324, 16
      %v9537 = vrot.slane %v9535, 5
      %v9538 = vsel %vm5586, %v9533, %v9537
      %v9539 = vshrl.u32 %v9324, 16
      %v9541 = vrot.slane %v9539, 4
      %v9542 = vor.u32 %v9541, %v9537
      %v9543 = vrot.slane %v9542, 4
      %v9545 = vshll.u32 %v9348, 16
      %v9547 = vrot.slane %v9545, 5
      %v9548 = vsel %vm5586, %v9543, %v9547
      %v9550 = vshrl.u32 %v9325, 16
      %v9552 = vrot.slane %v9550, 4
      %v9553 = vshll.u32 %v9325, 16
      %v9555 = vrot.slane %v9553, 5
      %v9556 = vor.u32 %v9552, %v9555
      %v9557 = vrot.slane %v9556, 4
      %v9559 = vshll.u32 %v9326, 16
      %v9561 = vrot.slane %v9559, 5
      %v9562 = vsel %vm5586, %v9557, %v9561
      %v9563 = vshrl.u32 %v9326, 16
      %v9565 = vrot.slane %v9563, 4
      %v9566 = vor.u32 %v9565, %v9561
      %v9567 = vrot.slane %v9566, 4
      %v9569 = vshll.u32 %v9349, 16
      %v9571 = vrot.slane %v9569, 5
      %v9572 = vsel %vm5586, %v9567, %v9571
      %v9574 = vshrl.u32 %v9327, 16
      %v9576 = vrot.slane %v9574, 4
      %v9577 = vshll.u32 %v9327, 16
      %v9579 = vrot.slane %v9577, 5
      %v9580 = vor.u32 %v9576, %v9579
      %v9581 = vrot.slane %v9580, 4
      %v9583 = vshll.u32 %v9328, 16
      %v9585 = vrot.slane %v9583, 5
      %v9586 = vsel %vm5586, %v9581, %v9585
      %v9587 = vshrl.u32 %v9328, 16
      %v9589 = vrot.slane %v9587, 4
      %v9590 = vor.u32 %v9589, %v9585
      %v9591 = vrot.slane %v9590, 4
      %v9593 = vshll.u32 %v9350, 16
      %v9595 = vrot.slane %v9593, 5
      %v9596 = vsel %vm5586, %v9591, %v9595
      %v9598 = vshrl.u32 %v9329, 16
      %v9600 = vrot.slane %v9598, 4
      %v9601 = vshll.u32 %v9329, 16
      %v9603 = vrot.slane %v9601, 5
      %v9604 = vor.u32 %v9600, %v9603
      %v9605 = vrot.slane %v9604, 4
      %v9607 = vshll.u32 %v9330, 16
      %v9609 = vrot.slane %v9607, 5
      %v9610 = vsel %vm5586, %v9605, %v9609
      %v9611 = vshrl.u32 %v9330, 16
      %v9613 = vrot.slane %v9611, 4
      %v9614 = vor.u32 %v9613, %v9609
      %v9615 = vrot.slane %v9614, 4
      %v9617 = vshll.u32 %v9351, 16
      %v9619 = vrot.slane %v9617, 5
      %v9620 = vsel %vm5586, %v9615, %v9619
      %v9622 = vshrl.u32 %v9331, 16
      %v9624 = vrot.slane %v9622, 4
      %v9625 = vshll.u32 %v9331, 16
      %v9627 = vrot.slane %v9625, 5
      %v9628 = vor.u32 %v9624, %v9627
      %v9629 = vrot.slane %v9628, 4
      %v9631 = vshll.u32 %v9332, 16
      %v9633 = vrot.slane %v9631, 5
      %v9634 = vsel %vm5586, %v9629, %v9633
      %v9635 = vshrl.u32 %v9332, 16
      %v9637 = vrot.slane %v9635, 4
      %v9638 = vor.u32 %v9637, %v9633
      %v9639 = vrot.slane %v9638, 4
      %v9641 = vshll.u32 %v9352, 16
      %v9643 = vrot.slane %v9641, 5
      %v9644 = vsel %vm5586, %v9639, %v9643
      %v9646 = vshrl.u32 %v9333, 16
      %v9648 = vrot.slane %v9646, 4
      %v9649 = vshll.u32 %v9333, 16
      %v9651 = vrot.slane %v9649, 5
      %v9652 = vor.u32 %v9648, %v9651
      %v9653 = vrot.slane %v9652, 4
      %v9655 = vshll.u32 %v9334, 16
      %v9657 = vrot.slane %v9655, 5
      %v9658 = vsel %vm5586, %v9653, %v9657
      %v9659 = vshrl.u32 %v9334, 16
      %v9661 = vrot.slane %v9659, 4
      %v9662 = vor.u32 %v9661, %v9657
      %v9663 = vrot.slane %v9662, 4
      %v9665 = vshll.u32 %v9353, 16
      %v9667 = vrot.slane %v9665, 5
      %v9668 = vsel %vm5586, %v9663, %v9667
      %v9670 = vshrl.u32 %v9335, 16
      %v9672 = vrot.slane %v9670, 4
      %v9673 = vshll.u32 %v9335, 16
      %v9675 = vrot.slane %v9673, 5
      %v9676 = vor.u32 %v9672, %v9675
      %v9677 = vrot.slane %v9676, 4
      %v9679 = vshll.u32 %v9336, 16
      %v9681 = vrot.slane %v9679, 5
      %v9682 = vsel %vm5586, %v9677, %v9681
      %v9683 = vshrl.u32 %v9336, 16
      %v9685 = vrot.slane %v9683, 4
      %v9686 = vor.u32 %v9685, %v9681
      %v9687 = vrot.slane %v9686, 4
      %v9689 = vshll.u32 %v9354, 16
      %v9691 = vrot.slane %v9689, 5
      %v9692 = vsel %vm5586, %v9687, %v9691
      %v9694 = vshrl.u32 %v9337, 16
      %v9696 = vrot.slane %v9694, 4
      %v9697 = vshll.u32 %v9337, 16
      %v9699 = vrot.slane %v9697, 5
      %v9700 = vor.u32 %v9696, %v9699
      %v9701 = vrot.slane %v9700, 4
      %v9703 = vshll.u32 %v9338, 16
      %v9705 = vrot.slane %v9703, 5
      %v9706 = vsel %vm5586, %v9701, %v9705
      %v9707 = vshrl.u32 %v9338, 16
      %v9709 = vrot.slane %v9707, 4
      %v9710 = vor.u32 %v9709, %v9705
      %v9711 = vrot.slane %v9710, 4
      %v9713 = vshll.u32 %v9355, 16
      %v9715 = vrot.slane %v9713, 5
      %v9716 = vsel %vm5586, %v9711, %v9715
      %v9718 = vshrl.u32 %v9339, 16
      %v9720 = vrot.slane %v9718, 4
      %v9721 = vshll.u32 %v9339, 16
      %v9723 = vrot.slane %v9721, 5
      %v9724 = vor.u32 %v9720, %v9723
      %v9725 = vrot.slane %v9724, 4
      %v9727 = vshll.u32 %v9340, 16
      %v9729 = vrot.slane %v9727, 5
      %v9730 = vsel %vm5586, %v9725, %v9729
      %v9731 = vshrl.u32 %v9340, 16
      %v9733 = vrot.slane %v9731, 4
      %v9734 = vor.u32 %v9733, %v9729
      %v9735 = vrot.slane %v9734, 4
      %v9737 = vshll.u32 %v9356, 16
      %v9739 = vrot.slane %v9737, 5
      %v9740 = vsel %vm5586, %v9735, %v9739
      %v9741 = vld [vmem:[#allocation3] sm:$0xe]
      %v9742 = vld [vmem:[#allocation3 + $0xc] sm:$0xe]
      %v9743 = vld [vmem:[#allocation3 + $0x18] sm:$0xe]
      %v9744 = vld [vmem:[#allocation3 + $0x24] sm:$0xe]
      %v9745 = vld [vmem:[#allocation3 + $0x30] sm:$0xe]
      %v9746 = vld [vmem:[#allocation3 + $0x3c] sm:$0xe]
      %v9747 = vld [vmem:[#allocation3 + $0x48] sm:$0xe]
      %v9748 = vld [vmem:[#allocation3 + $0x54] sm:$0xe]
      %v9749 = vld [vmem:[#allocation3 + $0x60] sm:$0xe]
      %v9750 = vld [vmem:[#allocation3 + $0x6c] sm:$0xe]
      %v9751 = vld [vmem:[#allocation3 + $0x78] sm:$0xe]
      %v9752 = vld [vmem:[#allocation3 + $0x84] sm:$0xe]
      %v9753 = vld [vmem:[#allocation3 + $0x90] sm:$0xe]
      %v9754 = vld [vmem:[#allocation3 + $0x9c] sm:$0xe]
      %v9755 = vld [vmem:[#allocation3 + $0xa8] sm:$0xe]
      %v9756 = vld [vmem:[#allocation3 + $0xb4] sm:$0xe]
      %v9805 = vrot.slane %v9741, 5
      %v9806 = vrot.slane %v9805, 4
      %v9807 = vrot.slane %v9310, 5
      %v9808 = vsel %vm6037, %v9806, %v9807
      %v9809 = vrot.slane %v9807, 4
      %v9810 = vrot.slane %v9341, 5
      %v9811 = vsel %vm6037, %v9809, %v9810
      %v9812 = vrot.slane %v9742, 5
      %v9813 = vrot.slane %v9812, 4
      %v9814 = vrot.slane %v9312, 5
      %v9815 = vsel %vm6037, %v9813, %v9814
      %v9816 = vrot.slane %v9814, 4
      %v9817 = vrot.slane %v9342, 5
      %v9818 = vsel %vm6037, %v9816, %v9817
      %v9819 = vrot.slane %v9743, 5
      %v9820 = vrot.slane %v9819, 4
      %v9821 = vrot.slane %v9314, 5
      %v9822 = vsel %vm6037, %v9820, %v9821
      %v9823 = vrot.slane %v9821, 4
      %v9824 = vrot.slane %v9343, 5
      %v9825 = vsel %vm6037, %v9823, %v9824
      %v9826 = vrot.slane %v9744, 5
      %v9827 = vrot.slane %v9826, 4
      %v9828 = vrot.slane %v9316, 5
      %v9829 = vsel %vm6037, %v9827, %v9828
      %v9830 = vrot.slane %v9828, 4
      %v9831 = vrot.slane %v9344, 5
      %v9832 = vsel %vm6037, %v9830, %v9831
      %v9833 = vrot.slane %v9745, 5
      %v9834 = vrot.slane %v9833, 4
      %v9835 = vrot.slane %v9318, 5
      %v9836 = vsel %vm6037, %v9834, %v9835
      %v9837 = vrot.slane %v9835, 4
      %v9838 = vrot.slane %v9345, 5
      %v9839 = vsel %vm6037, %v9837, %v9838
      %v9840 = vrot.slane %v9746, 5
      %v9841 = vrot.slane %v9840, 4
      %v9842 = vrot.slane %v9320, 5
      %v9843 = vsel %vm6037, %v9841, %v9842
      %v9844 = vrot.slane %v9842, 4
      %v9845 = vrot.slane %v9346, 5
      %v9846 = vsel %vm6037, %v9844, %v9845
      %v9847 = vrot.slane %v9747, 5
      %v9848 = vrot.slane %v9847, 4
      %v9849 = vrot.slane %v9322, 5
      %v9850 = vsel %vm6037, %v9848, %v9849
      %v9851 = vrot.slane %v9849, 4
      %v9852 = vrot.slane %v9347, 5
      %v9853 = vsel %vm6037, %v9851, %v9852
      %v9854 = vrot.slane %v9748, 5
      %v9855 = vrot.slane %v9854, 4
      %v9856 = vrot.slane %v9324, 5
      %v9857 = vsel %vm6037, %v9855, %v9856
      %v9858 = vrot.slane %v9856, 4
      %v9859 = vrot.slane %v9348, 5
      %v9860 = vsel %vm6037, %v9858, %v9859
      %v9861 = vrot.slane %v9749, 5
      %v9862 = vrot.slane %v9861, 4
      %v9863 = vrot.slane %v9326, 5
      %v9864 = vsel %vm6037, %v9862, %v9863
      %v9865 = vrot.slane %v9863, 4
      %v9866 = vrot.slane %v9349, 5
      %v9867 = vsel %vm6037, %v9865, %v9866
      %v9868 = vrot.slane %v9750, 5
      %v9869 = vrot.slane %v9868, 4
      %v9870 = vrot.slane %v9328, 5
      %v9871 = vsel %vm6037, %v9869, %v9870
      %v9872 = vrot.slane %v9870, 4
      %v9873 = vrot.slane %v9350, 5
      %v9874 = vsel %vm6037, %v9872, %v9873
      %v9875 = vrot.slane %v9751, 5
      %v9876 = vrot.slane %v9875, 4
      %v9877 = vrot.slane %v9330, 5
      %v9878 = vsel %vm6037, %v9876, %v9877
      %v9879 = vrot.slane %v9877, 4
      %v9880 = vrot.slane %v9351, 5
      %v9881 = vsel %vm6037, %v9879, %v9880
      %v9882 = vrot.slane %v9752, 5
      %v9883 = vrot.slane %v9882, 4
      %v9884 = vrot.slane %v9332, 5
      %v9885 = vsel %vm6037, %v9883, %v9884
      %v9886 = vrot.slane %v9884, 4
      %v9887 = vrot.slane %v9352, 5
      %v9888 = vsel %vm6037, %v9886, %v9887
      %v9889 = vrot.slane %v9753, 5
      %v9890 = vrot.slane %v9889, 4
      %v9891 = vrot.slane %v9334, 5
      %v9892 = vsel %vm6037, %v9890, %v9891
      %v9893 = vrot.slane %v9891, 4
      %v9894 = vrot.slane %v9353, 5
      %v9895 = vsel %vm6037, %v9893, %v9894
      %v9896 = vrot.slane %v9754, 5
      %v9897 = vrot.slane %v9896, 4
      %v9898 = vrot.slane %v9336, 5
      %v9899 = vsel %vm6037, %v9897, %v9898
      %v9900 = vrot.slane %v9898, 4
      %v9901 = vrot.slane %v9354, 5
      %v9902 = vsel %vm6037, %v9900, %v9901
      %v9903 = vrot.slane %v9755, 5
      %v9904 = vrot.slane %v9903, 4
      %v9905 = vrot.slane %v9338, 5
      %v9906 = vsel %vm6037, %v9904, %v9905
      %v9907 = vrot.slane %v9905, 4
      %v9908 = vrot.slane %v9355, 5
      %v9909 = vsel %vm6037, %v9907, %v9908
      %v9910 = vrot.slane %v9756, 5
      %v9911 = vrot.slane %v9910, 4
      %v9912 = vrot.slane %v9340, 5
      %v9913 = vsel %vm6037, %v9911, %v9912
      %v9914 = vrot.slane %v9912, 4
      %v9915 = vrot.slane %v9356, 5
      %v9916 = vsel %vm6037, %v9914, %v9915
      %v9917 = vld [vmem:[%s9196] sm:$0xf]
      %v9918 = vld [vmem:[%s9196 + $0x4] sm:$0xf]
      %v9919 = vld [vmem:[%s9196 + $0xc] sm:$0xf]
      %v9920 = vld [vmem:[%s9196 + $0x10] sm:$0xf]
      %v9921 = vld [vmem:[%s9196 + $0x18] sm:$0xf]
      %v9922 = vld [vmem:[%s9196 + $0x1c] sm:$0xf]
      %v9923 = vld [vmem:[%s9196 + $0x24] sm:$0xf]
      %v9924 = vld [vmem:[%s9196 + $0x28] sm:$0xf]
      %v9925 = vld [vmem:[%s9196 + $0x30] sm:$0xf]
      %v9926 = vld [vmem:[%s9196 + $0x34] sm:$0xf]
      %v9927 = vld [vmem:[%s9196 + $0x3c] sm:$0xf]
      %v9928 = vld [vmem:[%s9196 + $0x40] sm:$0xf]
      %v9929 = vld [vmem:[%s9196 + $0x48] sm:$0xf]
      %v9930 = vld [vmem:[%s9196 + $0x4c] sm:$0xf]
      %v9931 = vld [vmem:[%s9196 + $0x54] sm:$0xf]
      %v9932 = vld [vmem:[%s9196 + $0x58] sm:$0xf]
      %v9933 = vld [vmem:[%s9196 + $0x60] sm:$0xf]
      %v9934 = vld [vmem:[%s9196 + $0x64] sm:$0xf]
      %v9935 = vld [vmem:[%s9196 + $0x6c] sm:$0xf]
      %v9936 = vld [vmem:[%s9196 + $0x70] sm:$0xf]
      %v9937 = vld [vmem:[%s9196 + $0x78] sm:$0xf]
      %v9938 = vld [vmem:[%s9196 + $0x7c] sm:$0xf]
      %v9939 = vld [vmem:[%s9196 + $0x84] sm:$0xf]
      %v9940 = vld [vmem:[%s9196 + $0x88] sm:$0xf]
      %v9941 = vld [vmem:[%s9196 + $0x90] sm:$0xf]
      %v9942 = vld [vmem:[%s9196 + $0x94] sm:$0xf]
      %v9943 = vld [vmem:[%s9196 + $0x9c] sm:$0xf]
      %v9944 = vld [vmem:[%s9196 + $0xa0] sm:$0xf]
      %v9945 = vld [vmem:[%s9196 + $0xa8] sm:$0xf]
      %v9946 = vld [vmem:[%s9196 + $0xac] sm:$0xf]
      %v9947 = vld [vmem:[%s9196 + $0xb4] sm:$0xf]
      %v9948 = vld [vmem:[%s9196 + $0xb8] sm:$0xf]
      %v9949 = vld [vmem:[%s9196 + $0x8] sm:$0x1]
      %v9950 = vld [vmem:[%s9196 + $0x14] sm:$0x1]
      %v9951 = vld [vmem:[%s9196 + $0x20] sm:$0x1]
      %v9952 = vld [vmem:[%s9196 + $0x2c] sm:$0x1]
      %v9953 = vld [vmem:[%s9196 + $0x38] sm:$0x1]
      %v9954 = vld [vmem:[%s9196 + $0x44] sm:$0x1]
      %v9955 = vld [vmem:[%s9196 + $0x50] sm:$0x1]
      %v9956 = vld [vmem:[%s9196 + $0x5c] sm:$0x1]
      %v9957 = vld [vmem:[%s9196 + $0x68] sm:$0x1]
      %v9958 = vld [vmem:[%s9196 + $0x74] sm:$0x1]
      %v9959 = vld [vmem:[%s9196 + $0x80] sm:$0x1]
      %v9960 = vld [vmem:[%s9196 + $0x8c] sm:$0x1]
      %v9961 = vld [vmem:[%s9196 + $0x98] sm:$0x1]
      %v9962 = vld [vmem:[%s9196 + $0xa4] sm:$0x1]
      %v9963 = vld [vmem:[%s9196 + $0xb0] sm:$0x1]
      %v9964 = vld [vmem:[%s9196 + $0xbc] sm:$0x1]
      %v9966 = vshrl.u32 %v9917, 16
      %v9968 = vrot.slane %v9966, 4
      %v9969 = vshll.u32 %v9917, 16
      %v9971 = vrot.slane %v9969, 5
      %v9972 = vor.u32 %v9968, %v9971
      %v9973 = vrot.slane %v9972, 4
      %v9975 = vshll.u32 %v9918, 16
      %v9977 = vrot.slane %v9975, 5
      %v9978 = vsel %vm5586, %v9973, %v9977
      %v9979 = vshrl.u32 %v9918, 16
      %v9981 = vrot.slane %v9979, 4
      %v9982 = vor.u32 %v9981, %v9977
      %v9983 = vrot.slane %v9982, 4
      %v9985 = vshll.u32 %v9949, 16
      %v9987 = vrot.slane %v9985, 5
      %v9988 = vsel %vm5586, %v9983, %v9987
      %v9990 = vshrl.u32 %v9919, 16
      %v9992 = vrot.slane %v9990, 4
      %v9993 = vshll.u32 %v9919, 16
      %v9995 = vrot.slane %v9993, 5
      %v9996 = vor.u32 %v9992, %v9995
      %v9997 = vrot.slane %v9996, 4
      %v9999 = vshll.u32 %v9920, 16
      %v10001 = vrot.slane %v9999, 5
      %v10002 = vsel %vm5586, %v9997, %v10001
      %v10003 = vshrl.u32 %v9920, 16
      %v10005 = vrot.slane %v10003, 4
      %v10006 = vor.u32 %v10005, %v10001
      %v10007 = vrot.slane %v10006, 4
      %v10009 = vshll.u32 %v9950, 16
      %v10011 = vrot.slane %v10009, 5
      %v10012 = vsel %vm5586, %v10007, %v10011
      %v10014 = vshrl.u32 %v9921, 16
      %v10016 = vrot.slane %v10014, 4
      %v10017 = vshll.u32 %v9921, 16
      %v10019 = vrot.slane %v10017, 5
      %v10020 = vor.u32 %v10016, %v10019
      %v10021 = vrot.slane %v10020, 4
      %v10023 = vshll.u32 %v9922, 16
      %v10025 = vrot.slane %v10023, 5
      %v10026 = vsel %vm5586, %v10021, %v10025
      %v10027 = vshrl.u32 %v9922, 16
      %v10029 = vrot.slane %v10027, 4
      %v10030 = vor.u32 %v10029, %v10025
      %v10031 = vrot.slane %v10030, 4
      %v10033 = vshll.u32 %v9951, 16
      %v10035 = vrot.slane %v10033, 5
      %v10036 = vsel %vm5586, %v10031, %v10035
      %v10038 = vshrl.u32 %v9923, 16
      %v10040 = vrot.slane %v10038, 4
      %v10041 = vshll.u32 %v9923, 16
      %v10043 = vrot.slane %v10041, 5
      %v10044 = vor.u32 %v10040, %v10043
      %v10045 = vrot.slane %v10044, 4
      %v10047 = vshll.u32 %v9924, 16
      %v10049 = vrot.slane %v10047, 5
      %v10050 = vsel %vm5586, %v10045, %v10049
      %v10051 = vshrl.u32 %v9924, 16
      %v10053 = vrot.slane %v10051, 4
      %v10054 = vor.u32 %v10053, %v10049
      %v10055 = vrot.slane %v10054, 4
      %v10057 = vshll.u32 %v9952, 16
      %v10059 = vrot.slane %v10057, 5
      %v10060 = vsel %vm5586, %v10055, %v10059
      %v10062 = vshrl.u32 %v9925, 16
      %v10064 = vrot.slane %v10062, 4
      %v10065 = vshll.u32 %v9925, 16
      %v10067 = vrot.slane %v10065, 5
      %v10068 = vor.u32 %v10064, %v10067
      %v10069 = vrot.slane %v10068, 4
      %v10071 = vshll.u32 %v9926, 16
      %v10073 = vrot.slane %v10071, 5
      %v10074 = vsel %vm5586, %v10069, %v10073
      %v10075 = vshrl.u32 %v9926, 16
      %v10077 = vrot.slane %v10075, 4
      %v10078 = vor.u32 %v10077, %v10073
      %v10079 = vrot.slane %v10078, 4
      %v10081 = vshll.u32 %v9953, 16
      %v10083 = vrot.slane %v10081, 5
      %v10084 = vsel %vm5586, %v10079, %v10083
      %v10086 = vshrl.u32 %v9927, 16
      %v10088 = vrot.slane %v10086, 4
      %v10089 = vshll.u32 %v9927, 16
      %v10091 = vrot.slane %v10089, 5
      %v10092 = vor.u32 %v10088, %v10091
      %v10093 = vrot.slane %v10092, 4
      %v10095 = vshll.u32 %v9928, 16
      %v10097 = vrot.slane %v10095, 5
      %v10098 = vsel %vm5586, %v10093, %v10097
      %v10099 = vshrl.u32 %v9928, 16
      %v10101 = vrot.slane %v10099, 4
      %v10102 = vor.u32 %v10101, %v10097
      %v10103 = vrot.slane %v10102, 4
      %v10105 = vshll.u32 %v9954, 16
      %v10107 = vrot.slane %v10105, 5
      %v10108 = vsel %vm5586, %v10103, %v10107
      %v10110 = vshrl.u32 %v9929, 16
      %v10112 = vrot.slane %v10110, 4
      %v10113 = vshll.u32 %v9929, 16
      %v10115 = vrot.slane %v10113, 5
      %v10116 = vor.u32 %v10112, %v10115
      %v10117 = vrot.slane %v10116, 4
      %v10119 = vshll.u32 %v9930, 16
      %v10121 = vrot.slane %v10119, 5
      %v10122 = vsel %vm5586, %v10117, %v10121
      %v10123 = vshrl.u32 %v9930, 16
      %v10125 = vrot.slane %v10123, 4
      %v10126 = vor.u32 %v10125, %v10121
      %v10127 = vrot.slane %v10126, 4
      %v10129 = vshll.u32 %v9955, 16
      %v10131 = vrot.slane %v10129, 5
      %v10132 = vsel %vm5586, %v10127, %v10131
      %v10134 = vshrl.u32 %v9931, 16
      %v10136 = vrot.slane %v10134, 4
      %v10137 = vshll.u32 %v9931, 16
      %v10139 = vrot.slane %v10137, 5
      %v10140 = vor.u32 %v10136, %v10139
      %v10141 = vrot.slane %v10140, 4
      %v10143 = vshll.u32 %v9932, 16
      %v10145 = vrot.slane %v10143, 5
      %v10146 = vsel %vm5586, %v10141, %v10145
      %v10147 = vshrl.u32 %v9932, 16
      %v10149 = vrot.slane %v10147, 4
      %v10150 = vor.u32 %v10149, %v10145
      %v10151 = vrot.slane %v10150, 4
      %v10153 = vshll.u32 %v9956, 16
      %v10155 = vrot.slane %v10153, 5
      %v10156 = vsel %vm5586, %v10151, %v10155
      %v10158 = vshrl.u32 %v9933, 16
      %v10160 = vrot.slane %v10158, 4
      %v10161 = vshll.u32 %v9933, 16
      %v10163 = vrot.slane %v10161, 5
      %v10164 = vor.u32 %v10160, %v10163
      %v10165 = vrot.slane %v10164, 4
      %v10167 = vshll.u32 %v9934, 16
      %v10169 = vrot.slane %v10167, 5
      %v10170 = vsel %vm5586, %v10165, %v10169
      %v10171 = vshrl.u32 %v9934, 16
      %v10173 = vrot.slane %v10171, 4
      %v10174 = vor.u32 %v10173, %v10169
      %v10175 = vrot.slane %v10174, 4
      %v10177 = vshll.u32 %v9957, 16
      %v10179 = vrot.slane %v10177, 5
      %v10180 = vsel %vm5586, %v10175, %v10179
      %v10182 = vshrl.u32 %v9935, 16
      %v10184 = vrot.slane %v10182, 4
      %v10185 = vshll.u32 %v9935, 16
      %v10187 = vrot.slane %v10185, 5
      %v10188 = vor.u32 %v10184, %v10187
      %v10189 = vrot.slane %v10188, 4
      %v10191 = vshll.u32 %v9936, 16
      %v10193 = vrot.slane %v10191, 5
      %v10194 = vsel %vm5586, %v10189, %v10193
      %v10195 = vshrl.u32 %v9936, 16
      %v10197 = vrot.slane %v10195, 4
      %v10198 = vor.u32 %v10197, %v10193
      %v10199 = vrot.slane %v10198, 4
      %v10201 = vshll.u32 %v9958, 16
      %v10203 = vrot.slane %v10201, 5
      %v10204 = vsel %vm5586, %v10199, %v10203
      %v10206 = vshrl.u32 %v9937, 16
      %v10208 = vrot.slane %v10206, 4
      %v10209 = vshll.u32 %v9937, 16
      %v10211 = vrot.slane %v10209, 5
      %v10212 = vor.u32 %v10208, %v10211
      %v10213 = vrot.slane %v10212, 4
      %v10215 = vshll.u32 %v9938, 16
      %v10217 = vrot.slane %v10215, 5
      %v10218 = vsel %vm5586, %v10213, %v10217
      %v10219 = vshrl.u32 %v9938, 16
      %v10221 = vrot.slane %v10219, 4
      %v10222 = vor.u32 %v10221, %v10217
      %v10223 = vrot.slane %v10222, 4
      %v10225 = vshll.u32 %v9959, 16
      %v10227 = vrot.slane %v10225, 5
      %v10228 = vsel %vm5586, %v10223, %v10227
      %v10230 = vshrl.u32 %v9939, 16
      %v10232 = vrot.slane %v10230, 4
      %v10233 = vshll.u32 %v9939, 16
      %v10235 = vrot.slane %v10233, 5
      %v10236 = vor.u32 %v10232, %v10235
      %v10237 = vrot.slane %v10236, 4
      %v10239 = vshll.u32 %v9940, 16
      %v10241 = vrot.slane %v10239, 5
      %v10242 = vsel %vm5586, %v10237, %v10241
      %v10243 = vshrl.u32 %v9940, 16
      %v10245 = vrot.slane %v10243, 4
      %v10246 = vor.u32 %v10245, %v10241
      %v10247 = vrot.slane %v10246, 4
      %v10249 = vshll.u32 %v9960, 16
      %v10251 = vrot.slane %v10249, 5
      %v10252 = vsel %vm5586, %v10247, %v10251
      %v10254 = vshrl.u32 %v9941, 16
      %v10256 = vrot.slane %v10254, 4
      %v10257 = vshll.u32 %v9941, 16
      %v10259 = vrot.slane %v10257, 5
      %v10260 = vor.u32 %v10256, %v10259
      %v10261 = vrot.slane %v10260, 4
      %v10263 = vshll.u32 %v9942, 16
      %v10265 = vrot.slane %v10263, 5
      %v10266 = vsel %vm5586, %v10261, %v10265
      %v10267 = vshrl.u32 %v9942, 16
      %v10269 = vrot.slane %v10267, 4
      %v10270 = vor.u32 %v10269, %v10265
      %v10271 = vrot.slane %v10270, 4
      %v10273 = vshll.u32 %v9961, 16
      %v10275 = vrot.slane %v10273, 5
      %v10276 = vsel %vm5586, %v10271, %v10275
      %v10278 = vshrl.u32 %v9943, 16
      %v10280 = vrot.slane %v10278, 4
      %v10281 = vshll.u32 %v9943, 16
      %v10283 = vrot.slane %v10281, 5
      %v10284 = vor.u32 %v10280, %v10283
      %v10285 = vrot.slane %v10284, 4
      %v10287 = vshll.u32 %v9944, 16
      %v10289 = vrot.slane %v10287, 5
      %v10290 = vsel %vm5586, %v10285, %v10289
      %v10291 = vshrl.u32 %v9944, 16
      %v10293 = vrot.slane %v10291, 4
      %v10294 = vor.u32 %v10293, %v10289
      %v10295 = vrot.slane %v10294, 4
      %v10297 = vshll.u32 %v9962, 16
      %v10299 = vrot.slane %v10297, 5
      %v10300 = vsel %vm5586, %v10295, %v10299
      %v10302 = vshrl.u32 %v9945, 16
      %v10304 = vrot.slane %v10302, 4
      %v10305 = vshll.u32 %v9945, 16
      %v10307 = vrot.slane %v10305, 5
      %v10308 = vor.u32 %v10304, %v10307
      %v10309 = vrot.slane %v10308, 4
      %v10311 = vshll.u32 %v9946, 16
      %v10313 = vrot.slane %v10311, 5
      %v10314 = vsel %vm5586, %v10309, %v10313
      %v10315 = vshrl.u32 %v9946, 16
      %v10317 = vrot.slane %v10315, 4
      %v10318 = vor.u32 %v10317, %v10313
      %v10319 = vrot.slane %v10318, 4
      %v10321 = vshll.u32 %v9963, 16
      %v10323 = vrot.slane %v10321, 5
      %v10324 = vsel %vm5586, %v10319, %v10323
      %v10326 = vshrl.u32 %v9947, 16
      %v10328 = vrot.slane %v10326, 4
      %v10329 = vshll.u32 %v9947, 16
      %v10331 = vrot.slane %v10329, 5
      %v10332 = vor.u32 %v10328, %v10331
      %v10333 = vrot.slane %v10332, 4
      %v10335 = vshll.u32 %v9948, 16
      %v10337 = vrot.slane %v10335, 5
      %v10338 = vsel %vm5586, %v10333, %v10337
      %v10339 = vshrl.u32 %v9948, 16
      %v10341 = vrot.slane %v10339, 4
      %v10342 = vor.u32 %v10341, %v10337
      %v10343 = vrot.slane %v10342, 4
      %v10345 = vshll.u32 %v9964, 16
      %v10347 = vrot.slane %v10345, 5
      %v10348 = vsel %vm5586, %v10343, %v10347
      %v10349 = vld [vmem:[%s9196] sm:$0xe]
      %v10350 = vld [vmem:[%s9196 + $0xc] sm:$0xe]
      %v10351 = vld [vmem:[%s9196 + $0x18] sm:$0xe]
      %v10352 = vld [vmem:[%s9196 + $0x24] sm:$0xe]
      %v10353 = vld [vmem:[%s9196 + $0x30] sm:$0xe]
      %v10354 = vld [vmem:[%s9196 + $0x3c] sm:$0xe]
      %v10355 = vld [vmem:[%s9196 + $0x48] sm:$0xe]
      %v10356 = vld [vmem:[%s9196 + $0x54] sm:$0xe]
      %v10357 = vld [vmem:[%s9196 + $0x60] sm:$0xe]
      %v10358 = vld [vmem:[%s9196 + $0x6c] sm:$0xe]
      %v10359 = vld [vmem:[%s9196 + $0x78] sm:$0xe]
      %v10360 = vld [vmem:[%s9196 + $0x84] sm:$0xe]
      %v10361 = vld [vmem:[%s9196 + $0x90] sm:$0xe]
      %v10362 = vld [vmem:[%s9196 + $0x9c] sm:$0xe]
      %v10363 = vld [vmem:[%s9196 + $0xa8] sm:$0xe]
      %v10364 = vld [vmem:[%s9196 + $0xb4] sm:$0xe]
      %v10413 = vrot.slane %v10349, 5
      %v10414 = vrot.slane %v10413, 4
      %v10415 = vrot.slane %v9918, 5
      %v10416 = vsel %vm6037, %v10414, %v10415
      %v10417 = vrot.slane %v10415, 4
      %v10418 = vrot.slane %v9949, 5
      %v10419 = vsel %vm6037, %v10417, %v10418
      %v10420 = vrot.slane %v10350, 5
      %v10421 = vrot.slane %v10420, 4
      %v10422 = vrot.slane %v9920, 5
      %v10423 = vsel %vm6037, %v10421, %v10422
      %v10424 = vrot.slane %v10422, 4
      %v10425 = vrot.slane %v9950, 5
      %v10426 = vsel %vm6037, %v10424, %v10425
      %v10427 = vrot.slane %v10351, 5
      %v10428 = vrot.slane %v10427, 4
      %v10429 = vrot.slane %v9922, 5
      %v10430 = vsel %vm6037, %v10428, %v10429
      %v10431 = vrot.slane %v10429, 4
      %v10432 = vrot.slane %v9951, 5
      %v10433 = vsel %vm6037, %v10431, %v10432
      %v10434 = vrot.slane %v10352, 5
      %v10435 = vrot.slane %v10434, 4
      %v10436 = vrot.slane %v9924, 5
      %v10437 = vsel %vm6037, %v10435, %v10436
      %v10438 = vrot.slane %v10436, 4
      %v10439 = vrot.slane %v9952, 5
      %v10440 = vsel %vm6037, %v10438, %v10439
      %v10441 = vrot.slane %v10353, 5
      %v10442 = vrot.slane %v10441, 4
      %v10443 = vrot.slane %v9926, 5
      %v10444 = vsel %vm6037, %v10442, %v10443
      %v10445 = vrot.slane %v10443, 4
      %v10446 = vrot.slane %v9953, 5
      %v10447 = vsel %vm6037, %v10445, %v10446
      %v10448 = vrot.slane %v10354, 5
      %v10449 = vrot.slane %v10448, 4
      %v10450 = vrot.slane %v9928, 5
      %v10451 = vsel %vm6037, %v10449, %v10450
      %v10452 = vrot.slane %v10450, 4
      %v10453 = vrot.slane %v9954, 5
      %v10454 = vsel %vm6037, %v10452, %v10453
      %v10455 = vrot.slane %v10355, 5
      %v10456 = vrot.slane %v10455, 4
      %v10457 = vrot.slane %v9930, 5
      %v10458 = vsel %vm6037, %v10456, %v10457
      %v10459 = vrot.slane %v10457, 4
      %v10460 = vrot.slane %v9955, 5
      %v10461 = vsel %vm6037, %v10459, %v10460
      %v10462 = vrot.slane %v10356, 5
      %v10463 = vrot.slane %v10462, 4
      %v10464 = vrot.slane %v9932, 5
      %v10465 = vsel %vm6037, %v10463, %v10464
      %v10466 = vrot.slane %v10464, 4
      %v10467 = vrot.slane %v9956, 5
      %v10468 = vsel %vm6037, %v10466, %v10467
      %v10469 = vrot.slane %v10357, 5
      %v10470 = vrot.slane %v10469, 4
      %v10471 = vrot.slane %v9934, 5
      %v10472 = vsel %vm6037, %v10470, %v10471
      %v10473 = vrot.slane %v10471, 4
      %v10474 = vrot.slane %v9957, 5
      %v10475 = vsel %vm6037, %v10473, %v10474
      %v10476 = vrot.slane %v10358, 5
      %v10477 = vrot.slane %v10476, 4
      %v10478 = vrot.slane %v9936, 5
      %v10479 = vsel %vm6037, %v10477, %v10478
      %v10480 = vrot.slane %v10478, 4
      %v10481 = vrot.slane %v9958, 5
      %v10482 = vsel %vm6037, %v10480, %v10481
      %v10483 = vrot.slane %v10359, 5
      %v10484 = vrot.slane %v10483, 4
      %v10485 = vrot.slane %v9938, 5
      %v10486 = vsel %vm6037, %v10484, %v10485
      %v10487 = vrot.slane %v10485, 4
      %v10488 = vrot.slane %v9959, 5
      %v10489 = vsel %vm6037, %v10487, %v10488
      %v10490 = vrot.slane %v10360, 5
      %v10491 = vrot.slane %v10490, 4
      %v10492 = vrot.slane %v9940, 5
      %v10493 = vsel %vm6037, %v10491, %v10492
      %v10494 = vrot.slane %v10492, 4
      %v10495 = vrot.slane %v9960, 5
      %v10496 = vsel %vm6037, %v10494, %v10495
      %v10497 = vrot.slane %v10361, 5
      %v10498 = vrot.slane %v10497, 4
      %v10499 = vrot.slane %v9942, 5
      %v10500 = vsel %vm6037, %v10498, %v10499
      %v10501 = vrot.slane %v10499, 4
      %v10502 = vrot.slane %v9961, 5
      %v10503 = vsel %vm6037, %v10501, %v10502
      %v10504 = vrot.slane %v10362, 5
      %v10505 = vrot.slane %v10504, 4
      %v10506 = vrot.slane %v9944, 5
      %v10507 = vsel %vm6037, %v10505, %v10506
      %v10508 = vrot.slane %v10506, 4
      %v10509 = vrot.slane %v9962, 5
      %v10510 = vsel %vm6037, %v10508, %v10509
      %v10511 = vrot.slane %v10363, 5
      %v10512 = vrot.slane %v10511, 4
      %v10513 = vrot.slane %v9946, 5
      %v10514 = vsel %vm6037, %v10512, %v10513
      %v10515 = vrot.slane %v10513, 4
      %v10516 = vrot.slane %v9963, 5
      %v10517 = vsel %vm6037, %v10515, %v10516
      %v10518 = vrot.slane %v10364, 5
      %v10519 = vrot.slane %v10518, 4
      %v10520 = vrot.slane %v9948, 5
      %v10521 = vsel %vm6037, %v10519, %v10520
      %v10522 = vrot.slane %v10520, 4
      %v10523 = vrot.slane %v9964, 5
      %v10524 = vsel %vm6037, %v10522, %v10523
      %s10525 = scalar_lea.vmem [#allocation3], 24
      %v10526 = vld [vmem:[%s10525] sm:$0xf]
      %v10527 = vld [vmem:[%s10525 + $0x4] sm:$0xf]
      %v10528 = vld [vmem:[%s10525 + $0xc] sm:$0xf]
      %v10529 = vld [vmem:[%s10525 + $0x10] sm:$0xf]
      %v10530 = vld [vmem:[%s10525 + $0x18] sm:$0xf]
      %v10531 = vld [vmem:[%s10525 + $0x1c] sm:$0xf]
      %v10532 = vld [vmem:[%s10525 + $0x24] sm:$0xf]
      %v10533 = vld [vmem:[%s10525 + $0x28] sm:$0xf]
      %v10534 = vld [vmem:[%s10525 + $0x30] sm:$0xf]
      %v10535 = vld [vmem:[%s10525 + $0x34] sm:$0xf]
      %v10536 = vld [vmem:[%s10525 + $0x3c] sm:$0xf]
      %v10537 = vld [vmem:[%s10525 + $0x40] sm:$0xf]
      %v10538 = vld [vmem:[%s10525 + $0x48] sm:$0xf]
      %v10539 = vld [vmem:[%s10525 + $0x4c] sm:$0xf]
      %v10540 = vld [vmem:[%s10525 + $0x54] sm:$0xf]
      %v10541 = vld [vmem:[%s10525 + $0x58] sm:$0xf]
      %v10542 = vld [vmem:[%s10525 + $0x60] sm:$0xf]
      %v10543 = vld [vmem:[%s10525 + $0x64] sm:$0xf]
      %v10544 = vld [vmem:[%s10525 + $0x6c] sm:$0xf]
      %v10545 = vld [vmem:[%s10525 + $0x70] sm:$0xf]
      %v10546 = vld [vmem:[%s10525 + $0x78] sm:$0xf]
      %v10547 = vld [vmem:[%s10525 + $0x7c] sm:$0xf]
      %v10548 = vld [vmem:[%s10525 + $0x84] sm:$0xf]
      %v10549 = vld [vmem:[%s10525 + $0x88] sm:$0xf]
      %v10550 = vld [vmem:[%s10525 + $0x90] sm:$0xf]
      %v10551 = vld [vmem:[%s10525 + $0x94] sm:$0xf]
      %v10552 = vld [vmem:[%s10525 + $0x9c] sm:$0xf]
      %v10553 = vld [vmem:[%s10525 + $0xa0] sm:$0xf]
      %v10554 = vld [vmem:[%s10525 + $0xa8] sm:$0xf]
      %v10555 = vld [vmem:[%s10525 + $0xac] sm:$0xf]
      %v10556 = vld [vmem:[%s10525 + $0xb4] sm:$0xf]
      %v10557 = vld [vmem:[%s10525 + $0xb8] sm:$0xf]
      %v10558 = vld [vmem:[%s10525 + $0x8] sm:$0x1]
      %v10559 = vld [vmem:[%s10525 + $0x14] sm:$0x1]
      %v10560 = vld [vmem:[%s10525 + $0x20] sm:$0x1]
      %v10561 = vld [vmem:[%s10525 + $0x2c] sm:$0x1]
      %v10562 = vld [vmem:[%s10525 + $0x38] sm:$0x1]
      %v10563 = vld [vmem:[%s10525 + $0x44] sm:$0x1]
      %v10564 = vld [vmem:[%s10525 + $0x50] sm:$0x1]
      %v10565 = vld [vmem:[%s10525 + $0x5c] sm:$0x1]
      %v10566 = vld [vmem:[%s10525 + $0x68] sm:$0x1]
      %v10567 = vld [vmem:[%s10525 + $0x74] sm:$0x1]
      %v10568 = vld [vmem:[%s10525 + $0x80] sm:$0x1]
      %v10569 = vld [vmem:[%s10525 + $0x8c] sm:$0x1]
      %v10570 = vld [vmem:[%s10525 + $0x98] sm:$0x1]
      %v10571 = vld [vmem:[%s10525 + $0xa4] sm:$0x1]
      %v10572 = vld [vmem:[%s10525 + $0xb0] sm:$0x1]
      %v10573 = vld [vmem:[%s10525 + $0xbc] sm:$0x1]
      %v10575 = vshrl.u32 %v10526, 16
      %v10577 = vrot.slane %v10575, 4
      %v10578 = vshll.u32 %v10526, 16
      %v10580 = vrot.slane %v10578, 5
      %v10581 = vor.u32 %v10577, %v10580
      %v10582 = vrot.slane %v10581, 4
      %v10584 = vshll.u32 %v10527, 16
      %v10586 = vrot.slane %v10584, 5
      %v10587 = vsel %vm5586, %v10582, %v10586
      %v10588 = vshrl.u32 %v10527, 16
      %v10590 = vrot.slane %v10588, 4
      %v10591 = vor.u32 %v10590, %v10586
      %v10592 = vrot.slane %v10591, 4
      %v10594 = vshll.u32 %v10558, 16
      %v10596 = vrot.slane %v10594, 5
      %v10597 = vsel %vm5586, %v10592, %v10596
      %v10599 = vshrl.u32 %v10528, 16
      %v10601 = vrot.slane %v10599, 4
      %v10602 = vshll.u32 %v10528, 16
      %v10604 = vrot.slane %v10602, 5
      %v10605 = vor.u32 %v10601, %v10604
      %v10606 = vrot.slane %v10605, 4
      %v10608 = vshll.u32 %v10529, 16
      %v10610 = vrot.slane %v10608, 5
      %v10611 = vsel %vm5586, %v10606, %v10610
      %v10612 = vshrl.u32 %v10529, 16
      %v10614 = vrot.slane %v10612, 4
      %v10615 = vor.u32 %v10614, %v10610
      %v10616 = vrot.slane %v10615, 4
      %v10618 = vshll.u32 %v10559, 16
      %v10620 = vrot.slane %v10618, 5
      %v10621 = vsel %vm5586, %v10616, %v10620
      %v10623 = vshrl.u32 %v10530, 16
      %v10625 = vrot.slane %v10623, 4
      %v10626 = vshll.u32 %v10530, 16
      %v10628 = vrot.slane %v10626, 5
      %v10629 = vor.u32 %v10625, %v10628
      %v10630 = vrot.slane %v10629, 4
      %v10632 = vshll.u32 %v10531, 16
      %v10634 = vrot.slane %v10632, 5
      %v10635 = vsel %vm5586, %v10630, %v10634
      %v10636 = vshrl.u32 %v10531, 16
      %v10638 = vrot.slane %v10636, 4
      %v10639 = vor.u32 %v10638, %v10634
      %v10640 = vrot.slane %v10639, 4
      %v10642 = vshll.u32 %v10560, 16
      %v10644 = vrot.slane %v10642, 5
      %v10645 = vsel %vm5586, %v10640, %v10644
      %v10647 = vshrl.u32 %v10532, 16
      %v10649 = vrot.slane %v10647, 4
      %v10650 = vshll.u32 %v10532, 16
      %v10652 = vrot.slane %v10650, 5
      %v10653 = vor.u32 %v10649, %v10652
      %v10654 = vrot.slane %v10653, 4
      %v10656 = vshll.u32 %v10533, 16
      %v10658 = vrot.slane %v10656, 5
      %v10659 = vsel %vm5586, %v10654, %v10658
      %v10660 = vshrl.u32 %v10533, 16
      %v10662 = vrot.slane %v10660, 4
      %v10663 = vor.u32 %v10662, %v10658
      %v10664 = vrot.slane %v10663, 4
      %v10666 = vshll.u32 %v10561, 16
      %v10668 = vrot.slane %v10666, 5
      %v10669 = vsel %vm5586, %v10664, %v10668
      %v10671 = vshrl.u32 %v10534, 16
      %v10673 = vrot.slane %v10671, 4
      %v10674 = vshll.u32 %v10534, 16
      %v10676 = vrot.slane %v10674, 5
      %v10677 = vor.u32 %v10673, %v10676
      %v10678 = vrot.slane %v10677, 4
      %v10680 = vshll.u32 %v10535, 16
      %v10682 = vrot.slane %v10680, 5
      %v10683 = vsel %vm5586, %v10678, %v10682
      %v10684 = vshrl.u32 %v10535, 16
      %v10686 = vrot.slane %v10684, 4
      %v10687 = vor.u32 %v10686, %v10682
      %v10688 = vrot.slane %v10687, 4
      %v10690 = vshll.u32 %v10562, 16
      %v10692 = vrot.slane %v10690, 5
      %v10693 = vsel %vm5586, %v10688, %v10692
      %v10695 = vshrl.u32 %v10536, 16
      %v10697 = vrot.slane %v10695, 4
      %v10698 = vshll.u32 %v10536, 16
      %v10700 = vrot.slane %v10698, 5
      %v10701 = vor.u32 %v10697, %v10700
      %v10702 = vrot.slane %v10701, 4
      %v10704 = vshll.u32 %v10537, 16
      %v10706 = vrot.slane %v10704, 5
      %v10707 = vsel %vm5586, %v10702, %v10706
      %v10708 = vshrl.u32 %v10537, 16
      %v10710 = vrot.slane %v10708, 4
      %v10711 = vor.u32 %v10710, %v10706
      %v10712 = vrot.slane %v10711, 4
      %v10714 = vshll.u32 %v10563, 16
      %v10716 = vrot.slane %v10714, 5
      %v10717 = vsel %vm5586, %v10712, %v10716
      %v10719 = vshrl.u32 %v10538, 16
      %v10721 = vrot.slane %v10719, 4
      %v10722 = vshll.u32 %v10538, 16
      %v10724 = vrot.slane %v10722, 5
      %v10725 = vor.u32 %v10721, %v10724
      %v10726 = vrot.slane %v10725, 4
      %v10728 = vshll.u32 %v10539, 16
      %v10730 = vrot.slane %v10728, 5
      %v10731 = vsel %vm5586, %v10726, %v10730
      %v10732 = vshrl.u32 %v10539, 16
      %v10734 = vrot.slane %v10732, 4
      %v10735 = vor.u32 %v10734, %v10730
      %v10736 = vrot.slane %v10735, 4
      %v10738 = vshll.u32 %v10564, 16
      %v10740 = vrot.slane %v10738, 5
      %v10741 = vsel %vm5586, %v10736, %v10740
      %v10743 = vshrl.u32 %v10540, 16
      %v10745 = vrot.slane %v10743, 4
      %v10746 = vshll.u32 %v10540, 16
      %v10748 = vrot.slane %v10746, 5
      %v10749 = vor.u32 %v10745, %v10748
      %v10750 = vrot.slane %v10749, 4
      %v10752 = vshll.u32 %v10541, 16
      %v10754 = vrot.slane %v10752, 5
      %v10755 = vsel %vm5586, %v10750, %v10754
      %v10756 = vshrl.u32 %v10541, 16
      %v10758 = vrot.slane %v10756, 4
      %v10759 = vor.u32 %v10758, %v10754
      %v10760 = vrot.slane %v10759, 4
      %v10762 = vshll.u32 %v10565, 16
      %v10764 = vrot.slane %v10762, 5
      %v10765 = vsel %vm5586, %v10760, %v10764
      %v10767 = vshrl.u32 %v10542, 16
      %v10769 = vrot.slane %v10767, 4
      %v10770 = vshll.u32 %v10542, 16
      %v10772 = vrot.slane %v10770, 5
      %v10773 = vor.u32 %v10769, %v10772
      %v10774 = vrot.slane %v10773, 4
      %v10776 = vshll.u32 %v10543, 16
      %v10778 = vrot.slane %v10776, 5
      %v10779 = vsel %vm5586, %v10774, %v10778
      %v10780 = vshrl.u32 %v10543, 16
      %v10782 = vrot.slane %v10780, 4
      %v10783 = vor.u32 %v10782, %v10778
      %v10784 = vrot.slane %v10783, 4
      %v10786 = vshll.u32 %v10566, 16
      %v10788 = vrot.slane %v10786, 5
      %v10789 = vsel %vm5586, %v10784, %v10788
      %v10791 = vshrl.u32 %v10544, 16
      %v10793 = vrot.slane %v10791, 4
      %v10794 = vshll.u32 %v10544, 16
      %v10796 = vrot.slane %v10794, 5
      %v10797 = vor.u32 %v10793, %v10796
      %v10798 = vrot.slane %v10797, 4
      %v10800 = vshll.u32 %v10545, 16
      %v10802 = vrot.slane %v10800, 5
      %v10803 = vsel %vm5586, %v10798, %v10802
      %v10804 = vshrl.u32 %v10545, 16
      %v10806 = vrot.slane %v10804, 4
      %v10807 = vor.u32 %v10806, %v10802
      %v10808 = vrot.slane %v10807, 4
      %v10810 = vshll.u32 %v10567, 16
      %v10812 = vrot.slane %v10810, 5
      %v10813 = vsel %vm5586, %v10808, %v10812
      %v10815 = vshrl.u32 %v10546, 16
      %v10817 = vrot.slane %v10815, 4
      %v10818 = vshll.u32 %v10546, 16
      %v10820 = vrot.slane %v10818, 5
      %v10821 = vor.u32 %v10817, %v10820
      %v10822 = vrot.slane %v10821, 4
      %v10824 = vshll.u32 %v10547, 16
      %v10826 = vrot.slane %v10824, 5
      %v10827 = vsel %vm5586, %v10822, %v10826
      %v10828 = vshrl.u32 %v10547, 16
      %v10830 = vrot.slane %v10828, 4
      %v10831 = vor.u32 %v10830, %v10826
      %v10832 = vrot.slane %v10831, 4
      %v10834 = vshll.u32 %v10568, 16
      %v10836 = vrot.slane %v10834, 5
      %v10837 = vsel %vm5586, %v10832, %v10836
      %v10839 = vshrl.u32 %v10548, 16
      %v10841 = vrot.slane %v10839, 4
      %v10842 = vshll.u32 %v10548, 16
      %v10844 = vrot.slane %v10842, 5
      %v10845 = vor.u32 %v10841, %v10844
      %v10846 = vrot.slane %v10845, 4
      %v10848 = vshll.u32 %v10549, 16
      %v10850 = vrot.slane %v10848, 5
      %v10851 = vsel %vm5586, %v10846, %v10850
      %v10852 = vshrl.u32 %v10549, 16
      %v10854 = vrot.slane %v10852, 4
      %v10855 = vor.u32 %v10854, %v10850
      %v10856 = vrot.slane %v10855, 4
      %v10858 = vshll.u32 %v10569, 16
      %v10860 = vrot.slane %v10858, 5
      %v10861 = vsel %vm5586, %v10856, %v10860
      %v10863 = vshrl.u32 %v10550, 16
      %v10865 = vrot.slane %v10863, 4
      %v10866 = vshll.u32 %v10550, 16
      %v10868 = vrot.slane %v10866, 5
      %v10869 = vor.u32 %v10865, %v10868
      %v10870 = vrot.slane %v10869, 4
      %v10872 = vshll.u32 %v10551, 16
      %v10874 = vrot.slane %v10872, 5
      %v10875 = vsel %vm5586, %v10870, %v10874
      %v10876 = vshrl.u32 %v10551, 16
      %v10878 = vrot.slane %v10876, 4
      %v10879 = vor.u32 %v10878, %v10874
      %v10880 = vrot.slane %v10879, 4
      %v10882 = vshll.u32 %v10570, 16
      %v10884 = vrot.slane %v10882, 5
      %v10885 = vsel %vm5586, %v10880, %v10884
      %v10887 = vshrl.u32 %v10552, 16
      %v10889 = vrot.slane %v10887, 4
      %v10890 = vshll.u32 %v10552, 16
      %v10892 = vrot.slane %v10890, 5
      %v10893 = vor.u32 %v10889, %v10892
      %v10894 = vrot.slane %v10893, 4
      %v10896 = vshll.u32 %v10553, 16
      %v10898 = vrot.slane %v10896, 5
      %v10899 = vsel %vm5586, %v10894, %v10898
      %v10900 = vshrl.u32 %v10553, 16
      %v10902 = vrot.slane %v10900, 4
      %v10903 = vor.u32 %v10902, %v10898
      %v10904 = vrot.slane %v10903, 4
      %v10906 = vshll.u32 %v10571, 16
      %v10908 = vrot.slane %v10906, 5
      %v10909 = vsel %vm5586, %v10904, %v10908
      %v10911 = vshrl.u32 %v10554, 16
      %v10913 = vrot.slane %v10911, 4
      %v10914 = vshll.u32 %v10554, 16
      %v10916 = vrot.slane %v10914, 5
      %v10917 = vor.u32 %v10913, %v10916
      %v10918 = vrot.slane %v10917, 4
      %v10920 = vshll.u32 %v10555, 16
      %v10922 = vrot.slane %v10920, 5
      %v10923 = vsel %vm5586, %v10918, %v10922
      %v10924 = vshrl.u32 %v10555, 16
      %v10926 = vrot.slane %v10924, 4
      %v10927 = vor.u32 %v10926, %v10922
      %v10928 = vrot.slane %v10927, 4
      %v10930 = vshll.u32 %v10572, 16
      %v10932 = vrot.slane %v10930, 5
      %v10933 = vsel %vm5586, %v10928, %v10932
      %v10935 = vshrl.u32 %v10556, 16
      %v10937 = vrot.slane %v10935, 4
      %v10938 = vshll.u32 %v10556, 16
      %v10940 = vrot.slane %v10938, 5
      %v10941 = vor.u32 %v10937, %v10940
      %v10942 = vrot.slane %v10941, 4
      %v10944 = vshll.u32 %v10557, 16
      %v10946 = vrot.slane %v10944, 5
      %v10947 = vsel %vm5586, %v10942, %v10946
      %v10948 = vshrl.u32 %v10557, 16
      %v10950 = vrot.slane %v10948, 4
      %v10951 = vor.u32 %v10950, %v10946
      %v10952 = vrot.slane %v10951, 4
      %v10954 = vshll.u32 %v10573, 16
      %v10956 = vrot.slane %v10954, 5
      %v10957 = vsel %vm5586, %v10952, %v10956
      %v10958 = vld [vmem:[%s10525] sm:$0xe]
      %v10959 = vld [vmem:[%s10525 + $0xc] sm:$0xe]
      %v10960 = vld [vmem:[%s10525 + $0x18] sm:$0xe]
      %v10961 = vld [vmem:[%s10525 + $0x24] sm:$0xe]
      %v10962 = vld [vmem:[%s10525 + $0x30] sm:$0xe]
      %v10963 = vld [vmem:[%s10525 + $0x3c] sm:$0xe]
      %v10964 = vld [vmem:[%s10525 + $0x48] sm:$0xe]
      %v10965 = vld [vmem:[%s10525 + $0x54] sm:$0xe]
      %v10966 = vld [vmem:[%s10525 + $0x60] sm:$0xe]
      %v10967 = vld [vmem:[%s10525 + $0x6c] sm:$0xe]
      %v10968 = vld [vmem:[%s10525 + $0x78] sm:$0xe]
      %v10969 = vld [vmem:[%s10525 + $0x84] sm:$0xe]
      %v10970 = vld [vmem:[%s10525 + $0x90] sm:$0xe]
      %v10971 = vld [vmem:[%s10525 + $0x9c] sm:$0xe]
      %v10972 = vld [vmem:[%s10525 + $0xa8] sm:$0xe]
      %v10973 = vld [vmem:[%s10525 + $0xb4] sm:$0xe]
      %v11022 = vrot.slane %v10958, 5
      %v11023 = vrot.slane %v11022, 4
      %v11024 = vrot.slane %v10527, 5
      %v11025 = vsel %vm6037, %v11023, %v11024
      %v11026 = vrot.slane %v11024, 4
      %v11027 = vrot.slane %v10558, 5
      %v11028 = vsel %vm6037, %v11026, %v11027
      %v11029 = vrot.slane %v10959, 5
      %v11030 = vrot.slane %v11029, 4
      %v11031 = vrot.slane %v10529, 5
      %v11032 = vsel %vm6037, %v11030, %v11031
      %v11033 = vrot.slane %v11031, 4
      %v11034 = vrot.slane %v10559, 5
      %v11035 = vsel %vm6037, %v11033, %v11034
      %v11036 = vrot.slane %v10960, 5
      %v11037 = vrot.slane %v11036, 4
      %v11038 = vrot.slane %v10531, 5
      %v11039 = vsel %vm6037, %v11037, %v11038
      %v11040 = vrot.slane %v11038, 4
      %v11041 = vrot.slane %v10560, 5
      %v11042 = vsel %vm6037, %v11040, %v11041
      %v11043 = vrot.slane %v10961, 5
      %v11044 = vrot.slane %v11043, 4
      %v11045 = vrot.slane %v10533, 5
      %v11046 = vsel %vm6037, %v11044, %v11045
      %v11047 = vrot.slane %v11045, 4
      %v11048 = vrot.slane %v10561, 5
      %v11049 = vsel %vm6037, %v11047, %v11048
      %v11050 = vrot.slane %v10962, 5
      %v11051 = vrot.slane %v11050, 4
      %v11052 = vrot.slane %v10535, 5
      %v11053 = vsel %vm6037, %v11051, %v11052
      %v11054 = vrot.slane %v11052, 4
      %v11055 = vrot.slane %v10562, 5
      %v11056 = vsel %vm6037, %v11054, %v11055
      %v11057 = vrot.slane %v10963, 5
      %v11058 = vrot.slane %v11057, 4
      %v11059 = vrot.slane %v10537, 5
      %v11060 = vsel %vm6037, %v11058, %v11059
      %v11061 = vrot.slane %v11059, 4
      %v11062 = vrot.slane %v10563, 5
      %v11063 = vsel %vm6037, %v11061, %v11062
      %v11064 = vrot.slane %v10964, 5
      %v11065 = vrot.slane %v11064, 4
      %v11066 = vrot.slane %v10539, 5
      %v11067 = vsel %vm6037, %v11065, %v11066
      %v11068 = vrot.slane %v11066, 4
      %v11069 = vrot.slane %v10564, 5
      %v11070 = vsel %vm6037, %v11068, %v11069
      %v11071 = vrot.slane %v10965, 5
      %v11072 = vrot.slane %v11071, 4
      %v11073 = vrot.slane %v10541, 5
      %v11074 = vsel %vm6037, %v11072, %v11073
      %v11075 = vrot.slane %v11073, 4
      %v11076 = vrot.slane %v10565, 5
      %v11077 = vsel %vm6037, %v11075, %v11076
      %v11078 = vrot.slane %v10966, 5
      %v11079 = vrot.slane %v11078, 4
      %v11080 = vrot.slane %v10543, 5
      %v11081 = vsel %vm6037, %v11079, %v11080
      %v11082 = vrot.slane %v11080, 4
      %v11083 = vrot.slane %v10566, 5
      %v11084 = vsel %vm6037, %v11082, %v11083
      %v11085 = vrot.slane %v10967, 5
      %v11086 = vrot.slane %v11085, 4
      %v11087 = vrot.slane %v10545, 5
      %v11088 = vsel %vm6037, %v11086, %v11087
      %v11089 = vrot.slane %v11087, 4
      %v11090 = vrot.slane %v10567, 5
      %v11091 = vsel %vm6037, %v11089, %v11090
      %v11092 = vrot.slane %v10968, 5
      %v11093 = vrot.slane %v11092, 4
      %v11094 = vrot.slane %v10547, 5
      %v11095 = vsel %vm6037, %v11093, %v11094
      %v11096 = vrot.slane %v11094, 4
      %v11097 = vrot.slane %v10568, 5
      %v11098 = vsel %vm6037, %v11096, %v11097
      %v11099 = vrot.slane %v10969, 5
      %v11100 = vrot.slane %v11099, 4
      %v11101 = vrot.slane %v10549, 5
      %v11102 = vsel %vm6037, %v11100, %v11101
      %v11103 = vrot.slane %v11101, 4
      %v11104 = vrot.slane %v10569, 5
      %v11105 = vsel %vm6037, %v11103, %v11104
      %v11106 = vrot.slane %v10970, 5
      %v11107 = vrot.slane %v11106, 4
      %v11108 = vrot.slane %v10551, 5
      %v11109 = vsel %vm6037, %v11107, %v11108
      %v11110 = vrot.slane %v11108, 4
      %v11111 = vrot.slane %v10570, 5
      %v11112 = vsel %vm6037, %v11110, %v11111
      %v11113 = vrot.slane %v10971, 5
      %v11114 = vrot.slane %v11113, 4
      %v11115 = vrot.slane %v10553, 5
      %v11116 = vsel %vm6037, %v11114, %v11115
      %v11117 = vrot.slane %v11115, 4
      %v11118 = vrot.slane %v10571, 5
      %v11119 = vsel %vm6037, %v11117, %v11118
      %v11120 = vrot.slane %v10972, 5
      %v11121 = vrot.slane %v11120, 4
      %v11122 = vrot.slane %v10555, 5
      %v11123 = vsel %vm6037, %v11121, %v11122
      %v11124 = vrot.slane %v11122, 4
      %v11125 = vrot.slane %v10572, 5
      %v11126 = vsel %vm6037, %v11124, %v11125
      %v11127 = vrot.slane %v10973, 5
      %v11128 = vrot.slane %v11127, 4
      %v11129 = vrot.slane %v10557, 5
      %v11130 = vsel %vm6037, %v11128, %v11129
      %v11131 = vrot.slane %v11129, 4
      %v11132 = vrot.slane %v10573, 5
      %v11133 = vsel %vm6037, %v11131, %v11132
      %v11150 = vunpack.c.l.b16 %v9309
      %v11151 = vunpack.c.l.b16 %v9310
      %v11152 = vunpack.c.l.b16 %v9311
      %v11153 = vunpack.c.l.b16 %v9312
      %v11154 = vunpack.c.l.b16 %v9313
      %v11155 = vunpack.c.l.b16 %v9314
      %v11156 = vunpack.c.l.b16 %v9315
      %v11157 = vunpack.c.l.b16 %v9316
      %v11158 = vunpack.c.l.b16 %v9317
      %v11159 = vunpack.c.l.b16 %v9318
      %v11160 = vunpack.c.l.b16 %v9319
      %v11161 = vunpack.c.l.b16 %v9320
      %v11162 = vunpack.c.l.b16 %v9321
      %v11163 = vunpack.c.l.b16 %v9322
      %v11164 = vunpack.c.l.b16 %v9323
      %v11165 = vunpack.c.l.b16 %v9324
      %v11166 = vunpack.c.l.b16 %v9325
      %v11167 = vunpack.c.l.b16 %v9326
      %v11168 = vunpack.c.l.b16 %v9327
      %v11169 = vunpack.c.l.b16 %v9328
      %v11170 = vunpack.c.l.b16 %v9329
      %v11171 = vunpack.c.l.b16 %v9330
      %v11172 = vunpack.c.l.b16 %v9331
      %v11173 = vunpack.c.l.b16 %v9332
      %v11174 = vunpack.c.l.b16 %v9333
      %v11175 = vunpack.c.l.b16 %v9334
      %v11176 = vunpack.c.l.b16 %v9335
      %v11177 = vunpack.c.l.b16 %v9336
      %v11178 = vunpack.c.l.b16 %v9337
      %v11179 = vunpack.c.l.b16 %v9338
      %v11180 = vunpack.c.l.b16 %v9339
      %v11181 = vunpack.c.l.b16 %v9340
      %v11182 = vpack.c.b16 %v11151, %v11150
      %v11183 = vpack.c.b16 %v11153, %v11152
      %v11184 = vpack.c.b16 %v11155, %v11154
      %v11185 = vpack.c.b16 %v11157, %v11156
      %v11186 = vpack.c.b16 %v11159, %v11158
      %v11187 = vpack.c.b16 %v11161, %v11160
      %v11188 = vpack.c.b16 %v11163, %v11162
      %v11189 = vpack.c.b16 %v11165, %v11164
      %v11190 = vpack.c.b16 %v11167, %v11166
      %v11191 = vpack.c.b16 %v11169, %v11168
      %v11192 = vpack.c.b16 %v11171, %v11170
      %v11193 = vpack.c.b16 %v11173, %v11172
      %v11194 = vpack.c.b16 %v11175, %v11174
      %v11195 = vpack.c.b16 %v11177, %v11176
      %v11196 = vpack.c.b16 %v11179, %v11178
      %v11197 = vpack.c.b16 %v11181, %v11180
      %v11198 = vunpack.c.l.b16 %v9370
      %v11199 = vunpack.c.l.b16 %v9380
      %v11200 = vunpack.c.l.b16 %v9394
      %v11201 = vunpack.c.l.b16 %v9404
      %v11202 = vunpack.c.l.b16 %v9418
      %v11203 = vunpack.c.l.b16 %v9428
      %v11204 = vunpack.c.l.b16 %v9442
      %v11205 = vunpack.c.l.b16 %v9452
      %v11206 = vunpack.c.l.b16 %v9466
      %v11207 = vunpack.c.l.b16 %v9476
      %v11208 = vunpack.c.l.b16 %v9490
      %v11209 = vunpack.c.l.b16 %v9500
      %v11210 = vunpack.c.l.b16 %v9514
      %v11211 = vunpack.c.l.b16 %v9524
      %v11212 = vunpack.c.l.b16 %v9538
      %v11213 = vunpack.c.l.b16 %v9548
      %v11214 = vunpack.c.l.b16 %v9562
      %v11215 = vunpack.c.l.b16 %v9572
      %v11216 = vunpack.c.l.b16 %v9586
      %v11217 = vunpack.c.l.b16 %v9596
      %v11218 = vunpack.c.l.b16 %v9610
      %v11219 = vunpack.c.l.b16 %v9620
      %v11220 = vunpack.c.l.b16 %v9634
      %v11221 = vunpack.c.l.b16 %v9644
      %v11222 = vunpack.c.l.b16 %v9658
      %v11223 = vunpack.c.l.b16 %v9668
      %v11224 = vunpack.c.l.b16 %v9682
      %v11225 = vunpack.c.l.b16 %v9692
      %v11226 = vunpack.c.l.b16 %v9706
      %v11227 = vunpack.c.l.b16 %v9716
      %v11228 = vunpack.c.l.b16 %v9730
      %v11229 = vunpack.c.l.b16 %v9740
      %v11230 = vpack.c.b16 %v11199, %v11198
      %v11231 = vpack.c.b16 %v11201, %v11200
      %v11232 = vpack.c.b16 %v11203, %v11202
      %v11233 = vpack.c.b16 %v11205, %v11204
      %v11234 = vpack.c.b16 %v11207, %v11206
      %v11235 = vpack.c.b16 %v11209, %v11208
      %v11236 = vpack.c.b16 %v11211, %v11210
      %v11237 = vpack.c.b16 %v11213, %v11212
      %v11238 = vpack.c.b16 %v11215, %v11214
      %v11239 = vpack.c.b16 %v11217, %v11216
      %v11240 = vpack.c.b16 %v11219, %v11218
      %v11241 = vpack.c.b16 %v11221, %v11220
      %v11242 = vpack.c.b16 %v11223, %v11222
      %v11243 = vpack.c.b16 %v11225, %v11224
      %v11244 = vpack.c.b16 %v11227, %v11226
      %v11245 = vpack.c.b16 %v11229, %v11228
      %11246 = vrot.lane.b32.xlu0 %v11230, 8
      %v11247 = vpop.permute.xlu0 %11246
      %11248 = vrot.lane.b32.xlu0 %v11231, 8
      %v11249 = vpop.permute.xlu0 %11248
      %11250 = vrot.lane.b32.xlu0 %v11232, 8
      %v11251 = vpop.permute.xlu0 %11250
      %11252 = vrot.lane.b32.xlu0 %v11233, 8
      %v11253 = vpop.permute.xlu0 %11252
      %11254 = vrot.lane.b32.xlu0 %v11234, 8
      %v11255 = vpop.permute.xlu0 %11254
      %11256 = vrot.lane.b32.xlu0 %v11235, 8
      %v11257 = vpop.permute.xlu0 %11256
      %11258 = vrot.lane.b32.xlu0 %v11236, 8
      %v11259 = vpop.permute.xlu0 %11258
      %11260 = vrot.lane.b32.xlu0 %v11237, 8
      %v11261 = vpop.permute.xlu0 %11260
      %11262 = vrot.lane.b32.xlu0 %v11238, 8
      %v11263 = vpop.permute.xlu0 %11262
      %11264 = vrot.lane.b32.xlu0 %v11239, 8
      %v11265 = vpop.permute.xlu0 %11264
      %11266 = vrot.lane.b32.xlu0 %v11240, 8
      %v11267 = vpop.permute.xlu0 %11266
      %11268 = vrot.lane.b32.xlu0 %v11241, 8
      %v11269 = vpop.permute.xlu0 %11268
      %11270 = vrot.lane.b32.xlu0 %v11242, 8
      %v11271 = vpop.permute.xlu0 %11270
      %11272 = vrot.lane.b32.xlu0 %v11243, 8
      %v11273 = vpop.permute.xlu0 %11272
      %11274 = vrot.lane.b32.xlu0 %v11244, 8
      %v11275 = vpop.permute.xlu0 %11274
      %11276 = vrot.lane.b32.xlu0 %v11245, 8
      %v11277 = vpop.permute.xlu0 %11276
      %v11278 = vunpack.c.l.b16 %v9808
      %v11279 = vunpack.c.l.b16 %v9811
      %v11280 = vunpack.c.l.b16 %v9815
      %v11281 = vunpack.c.l.b16 %v9818
      %v11282 = vunpack.c.l.b16 %v9822
      %v11283 = vunpack.c.l.b16 %v9825
      %v11284 = vunpack.c.l.b16 %v9829
      %v11285 = vunpack.c.l.b16 %v9832
      %v11286 = vunpack.c.l.b16 %v9836
      %v11287 = vunpack.c.l.b16 %v9839
      %v11288 = vunpack.c.l.b16 %v9843
      %v11289 = vunpack.c.l.b16 %v9846
      %v11290 = vunpack.c.l.b16 %v9850
      %v11291 = vunpack.c.l.b16 %v9853
      %v11292 = vunpack.c.l.b16 %v9857
      %v11293 = vunpack.c.l.b16 %v9860
      %v11294 = vunpack.c.l.b16 %v9864
      %v11295 = vunpack.c.l.b16 %v9867
      %v11296 = vunpack.c.l.b16 %v9871
      %v11297 = vunpack.c.l.b16 %v9874
      %v11298 = vunpack.c.l.b16 %v9878
      %v11299 = vunpack.c.l.b16 %v9881
      %v11300 = vunpack.c.l.b16 %v9885
      %v11301 = vunpack.c.l.b16 %v9888
      %v11302 = vunpack.c.l.b16 %v9892
      %v11303 = vunpack.c.l.b16 %v9895
      %v11304 = vunpack.c.l.b16 %v9899
      %v11305 = vunpack.c.l.b16 %v9902
      %v11306 = vunpack.c.l.b16 %v9906
      %v11307 = vunpack.c.l.b16 %v9909
      %v11308 = vunpack.c.l.b16 %v9913
      %v11309 = vunpack.c.l.b16 %v9916
      %v11310 = vpack.c.b16 %v11279, %v11278
      %v11311 = vpack.c.b16 %v11281, %v11280
      %v11312 = vpack.c.b16 %v11283, %v11282
      %v11313 = vpack.c.b16 %v11285, %v11284
      %v11314 = vpack.c.b16 %v11287, %v11286
      %v11315 = vpack.c.b16 %v11289, %v11288
      %v11316 = vpack.c.b16 %v11291, %v11290
      %v11317 = vpack.c.b16 %v11293, %v11292
      %v11318 = vpack.c.b16 %v11295, %v11294
      %v11319 = vpack.c.b16 %v11297, %v11296
      %v11320 = vpack.c.b16 %v11299, %v11298
      %v11321 = vpack.c.b16 %v11301, %v11300
      %v11322 = vpack.c.b16 %v11303, %v11302
      %v11323 = vpack.c.b16 %v11305, %v11304
      %v11324 = vpack.c.b16 %v11307, %v11306
      %v11325 = vpack.c.b16 %v11309, %v11308
      %11326 = vrot.lane.b32.xlu0 %v11310, 16
      %v11327 = vpop.permute.xlu0 %11326
      %11328 = vrot.lane.b32.xlu0 %v11311, 16
      %v11329 = vpop.permute.xlu0 %11328
      %11330 = vrot.lane.b32.xlu0 %v11312, 16
      %v11331 = vpop.permute.xlu0 %11330
      %11332 = vrot.lane.b32.xlu0 %v11313, 16
      %v11333 = vpop.permute.xlu0 %11332
      %11334 = vrot.lane.b32.xlu0 %v11314, 16
      %v11335 = vpop.permute.xlu0 %11334
      %11336 = vrot.lane.b32.xlu0 %v11315, 16
      %v11337 = vpop.permute.xlu0 %11336
      %11338 = vrot.lane.b32.xlu0 %v11316, 16
      %v11339 = vpop.permute.xlu0 %11338
      %11340 = vrot.lane.b32.xlu0 %v11317, 16
      %v11341 = vpop.permute.xlu0 %11340
      %11342 = vrot.lane.b32.xlu0 %v11318, 16
      %v11343 = vpop.permute.xlu0 %11342
      %11344 = vrot.lane.b32.xlu0 %v11319, 16
      %v11345 = vpop.permute.xlu0 %11344
      %11346 = vrot.lane.b32.xlu0 %v11320, 16
      %v11347 = vpop.permute.xlu0 %11346
      %11348 = vrot.lane.b32.xlu0 %v11321, 16
      %v11349 = vpop.permute.xlu0 %11348
      %11350 = vrot.lane.b32.xlu0 %v11322, 16
      %v11351 = vpop.permute.xlu0 %11350
      %11352 = vrot.lane.b32.xlu0 %v11323, 16
      %v11353 = vpop.permute.xlu0 %11352
      %11354 = vrot.lane.b32.xlu0 %v11324, 16
      %v11355 = vpop.permute.xlu0 %11354
      %11356 = vrot.lane.b32.xlu0 %v11325, 16
      %v11357 = vpop.permute.xlu0 %11356
      %v11374 = vunpack.c.l.b16 %v9917
      %v11375 = vunpack.c.l.b16 %v9918
      %v11376 = vunpack.c.l.b16 %v9919
      %v11377 = vunpack.c.l.b16 %v9920
      %v11378 = vunpack.c.l.b16 %v9921
      %v11379 = vunpack.c.l.b16 %v9922
      %v11380 = vunpack.c.l.b16 %v9923
      %v11381 = vunpack.c.l.b16 %v9924
      %v11382 = vunpack.c.l.b16 %v9925
      %v11383 = vunpack.c.l.b16 %v9926
      %v11384 = vunpack.c.l.b16 %v9927
      %v11385 = vunpack.c.l.b16 %v9928
      %v11386 = vunpack.c.l.b16 %v9929
      %v11387 = vunpack.c.l.b16 %v9930
      %v11388 = vunpack.c.l.b16 %v9931
      %v11389 = vunpack.c.l.b16 %v9932
      %v11390 = vunpack.c.l.b16 %v9933
      %v11391 = vunpack.c.l.b16 %v9934
      %v11392 = vunpack.c.l.b16 %v9935
      %v11393 = vunpack.c.l.b16 %v9936
      %v11394 = vunpack.c.l.b16 %v9937
      %v11395 = vunpack.c.l.b16 %v9938
      %v11396 = vunpack.c.l.b16 %v9939
      %v11397 = vunpack.c.l.b16 %v9940
      %v11398 = vunpack.c.l.b16 %v9941
      %v11399 = vunpack.c.l.b16 %v9942
      %v11400 = vunpack.c.l.b16 %v9943
      %v11401 = vunpack.c.l.b16 %v9944
      %v11402 = vunpack.c.l.b16 %v9945
      %v11403 = vunpack.c.l.b16 %v9946
      %v11404 = vunpack.c.l.b16 %v9947
      %v11405 = vunpack.c.l.b16 %v9948
      %v11406 = vpack.c.b16 %v11375, %v11374
      %v11407 = vpack.c.b16 %v11377, %v11376
      %v11408 = vpack.c.b16 %v11379, %v11378
      %v11409 = vpack.c.b16 %v11381, %v11380
      %v11410 = vpack.c.b16 %v11383, %v11382
      %v11411 = vpack.c.b16 %v11385, %v11384
      %v11412 = vpack.c.b16 %v11387, %v11386
      %v11413 = vpack.c.b16 %v11389, %v11388
      %v11414 = vpack.c.b16 %v11391, %v11390
      %v11415 = vpack.c.b16 %v11393, %v11392
      %v11416 = vpack.c.b16 %v11395, %v11394
      %v11417 = vpack.c.b16 %v11397, %v11396
      %v11418 = vpack.c.b16 %v11399, %v11398
      %v11419 = vpack.c.b16 %v11401, %v11400
      %v11420 = vpack.c.b16 %v11403, %v11402
      %v11421 = vpack.c.b16 %v11405, %v11404
      %11422 = vrot.lane.b32.xlu0 %v11406, 24
      %v11423 = vpop.permute.xlu0 %11422
      %11424 = vrot.lane.b32.xlu0 %v11407, 24
      %v11425 = vpop.permute.xlu0 %11424
      %11426 = vrot.lane.b32.xlu0 %v11408, 24
      %v11427 = vpop.permute.xlu0 %11426
      %11428 = vrot.lane.b32.xlu0 %v11409, 24
      %v11429 = vpop.permute.xlu0 %11428
      %11430 = vrot.lane.b32.xlu0 %v11410, 24
      %v11431 = vpop.permute.xlu0 %11430
      %11432 = vrot.lane.b32.xlu0 %v11411, 24
      %v11433 = vpop.permute.xlu0 %11432
      %11434 = vrot.lane.b32.xlu0 %v11412, 24
      %v11435 = vpop.permute.xlu0 %11434
      %11436 = vrot.lane.b32.xlu0 %v11413, 24
      %v11437 = vpop.permute.xlu0 %11436
      %11438 = vrot.lane.b32.xlu0 %v11414, 24
      %v11439 = vpop.permute.xlu0 %11438
      %11440 = vrot.lane.b32.xlu0 %v11415, 24
      %v11441 = vpop.permute.xlu0 %11440
      %11442 = vrot.lane.b32.xlu0 %v11416, 24
      %v11443 = vpop.permute.xlu0 %11442
      %11444 = vrot.lane.b32.xlu0 %v11417, 24
      %v11445 = vpop.permute.xlu0 %11444
      %11446 = vrot.lane.b32.xlu0 %v11418, 24
      %v11447 = vpop.permute.xlu0 %11446
      %11448 = vrot.lane.b32.xlu0 %v11419, 24
      %v11449 = vpop.permute.xlu0 %11448
      %11450 = vrot.lane.b32.xlu0 %v11420, 24
      %v11451 = vpop.permute.xlu0 %11450
      %11452 = vrot.lane.b32.xlu0 %v11421, 24
      %v11453 = vpop.permute.xlu0 %11452
      %v11454 = vunpack.c.l.b16 %v9978
      %v11455 = vunpack.c.l.b16 %v9988
      %v11456 = vunpack.c.l.b16 %v10002
      %v11457 = vunpack.c.l.b16 %v10012
      %v11458 = vunpack.c.l.b16 %v10026
      %v11459 = vunpack.c.l.b16 %v10036
      %v11460 = vunpack.c.l.b16 %v10050
      %v11461 = vunpack.c.l.b16 %v10060
      %v11462 = vunpack.c.l.b16 %v10074
      %v11463 = vunpack.c.l.b16 %v10084
      %v11464 = vunpack.c.l.b16 %v10098
      %v11465 = vunpack.c.l.b16 %v10108
      %v11466 = vunpack.c.l.b16 %v10122
      %v11467 = vunpack.c.l.b16 %v10132
      %v11468 = vunpack.c.l.b16 %v10146
      %v11469 = vunpack.c.l.b16 %v10156
      %v11470 = vunpack.c.l.b16 %v10170
      %v11471 = vunpack.c.l.b16 %v10180
      %v11472 = vunpack.c.l.b16 %v10194
      %v11473 = vunpack.c.l.b16 %v10204
      %v11474 = vunpack.c.l.b16 %v10218
      %v11475 = vunpack.c.l.b16 %v10228
      %v11476 = vunpack.c.l.b16 %v10242
      %v11477 = vunpack.c.l.b16 %v10252
      %v11478 = vunpack.c.l.b16 %v10266
      %v11479 = vunpack.c.l.b16 %v10276
      %v11480 = vunpack.c.l.b16 %v10290
      %v11481 = vunpack.c.l.b16 %v10300
      %v11482 = vunpack.c.l.b16 %v10314
      %v11483 = vunpack.c.l.b16 %v10324
      %v11484 = vunpack.c.l.b16 %v10338
      %v11485 = vunpack.c.l.b16 %v10348
      %v11486 = vpack.c.b16 %v11455, %v11454
      %v11487 = vpack.c.b16 %v11457, %v11456
      %v11488 = vpack.c.b16 %v11459, %v11458
      %v11489 = vpack.c.b16 %v11461, %v11460
      %v11490 = vpack.c.b16 %v11463, %v11462
      %v11491 = vpack.c.b16 %v11465, %v11464
      %v11492 = vpack.c.b16 %v11467, %v11466
      %v11493 = vpack.c.b16 %v11469, %v11468
      %v11494 = vpack.c.b16 %v11471, %v11470
      %v11495 = vpack.c.b16 %v11473, %v11472
      %v11496 = vpack.c.b16 %v11475, %v11474
      %v11497 = vpack.c.b16 %v11477, %v11476
      %v11498 = vpack.c.b16 %v11479, %v11478
      %v11499 = vpack.c.b16 %v11481, %v11480
      %v11500 = vpack.c.b16 %v11483, %v11482
      %v11501 = vpack.c.b16 %v11485, %v11484
      %11502 = vrot.lane.b32.xlu0 %v11486, 32
      %v11503 = vpop.permute.xlu0 %11502
      %11504 = vrot.lane.b32.xlu0 %v11487, 32
      %v11505 = vpop.permute.xlu0 %11504
      %11506 = vrot.lane.b32.xlu0 %v11488, 32
      %v11507 = vpop.permute.xlu0 %11506
      %11508 = vrot.lane.b32.xlu0 %v11489, 32
      %v11509 = vpop.permute.xlu0 %11508
      %11510 = vrot.lane.b32.xlu0 %v11490, 32
      %v11511 = vpop.permute.xlu0 %11510
      %11512 = vrot.lane.b32.xlu0 %v11491, 32
      %v11513 = vpop.permute.xlu0 %11512
      %11514 = vrot.lane.b32.xlu0 %v11492, 32
      %v11515 = vpop.permute.xlu0 %11514
      %11516 = vrot.lane.b32.xlu0 %v11493, 32
      %v11517 = vpop.permute.xlu0 %11516
      %11518 = vrot.lane.b32.xlu0 %v11494, 32
      %v11519 = vpop.permute.xlu0 %11518
      %11520 = vrot.lane.b32.xlu0 %v11495, 32
      %v11521 = vpop.permute.xlu0 %11520
      %11522 = vrot.lane.b32.xlu0 %v11496, 32
      %v11523 = vpop.permute.xlu0 %11522
      %11524 = vrot.lane.b32.xlu0 %v11497, 32
      %v11525 = vpop.permute.xlu0 %11524
      %11526 = vrot.lane.b32.xlu0 %v11498, 32
      %v11527 = vpop.permute.xlu0 %11526
      %11528 = vrot.lane.b32.xlu0 %v11499, 32
      %v11529 = vpop.permute.xlu0 %11528
      %11530 = vrot.lane.b32.xlu0 %v11500, 32
      %v11531 = vpop.permute.xlu0 %11530
      %11532 = vrot.lane.b32.xlu0 %v11501, 32
      %v11533 = vpop.permute.xlu0 %11532
      %v11534 = vunpack.c.l.b16 %v10416
      %v11535 = vunpack.c.l.b16 %v10419
      %v11536 = vunpack.c.l.b16 %v10423
      %v11537 = vunpack.c.l.b16 %v10426
      %v11538 = vunpack.c.l.b16 %v10430
      %v11539 = vunpack.c.l.b16 %v10433
      %v11540 = vunpack.c.l.b16 %v10437
      %v11541 = vunpack.c.l.b16 %v10440
      %v11542 = vunpack.c.l.b16 %v10444
      %v11543 = vunpack.c.l.b16 %v10447
      %v11544 = vunpack.c.l.b16 %v10451
      %v11545 = vunpack.c.l.b16 %v10454
      %v11546 = vunpack.c.l.b16 %v10458
      %v11547 = vunpack.c.l.b16 %v10461
      %v11548 = vunpack.c.l.b16 %v10465
      %v11549 = vunpack.c.l.b16 %v10468
      %v11550 = vunpack.c.l.b16 %v10472
      %v11551 = vunpack.c.l.b16 %v10475
      %v11552 = vunpack.c.l.b16 %v10479
      %v11553 = vunpack.c.l.b16 %v10482
      %v11554 = vunpack.c.l.b16 %v10486
      %v11555 = vunpack.c.l.b16 %v10489
      %v11556 = vunpack.c.l.b16 %v10493
      %v11557 = vunpack.c.l.b16 %v10496
      %v11558 = vunpack.c.l.b16 %v10500
      %v11559 = vunpack.c.l.b16 %v10503
      %v11560 = vunpack.c.l.b16 %v10507
      %v11561 = vunpack.c.l.b16 %v10510
      %v11562 = vunpack.c.l.b16 %v10514
      %v11563 = vunpack.c.l.b16 %v10517
      %v11564 = vunpack.c.l.b16 %v10521
      %v11565 = vunpack.c.l.b16 %v10524
      %v11566 = vpack.c.b16 %v11535, %v11534
      %v11567 = vpack.c.b16 %v11537, %v11536
      %v11568 = vpack.c.b16 %v11539, %v11538
      %v11569 = vpack.c.b16 %v11541, %v11540
      %v11570 = vpack.c.b16 %v11543, %v11542
      %v11571 = vpack.c.b16 %v11545, %v11544
      %v11572 = vpack.c.b16 %v11547, %v11546
      %v11573 = vpack.c.b16 %v11549, %v11548
      %v11574 = vpack.c.b16 %v11551, %v11550
      %v11575 = vpack.c.b16 %v11553, %v11552
      %v11576 = vpack.c.b16 %v11555, %v11554
      %v11577 = vpack.c.b16 %v11557, %v11556
      %v11578 = vpack.c.b16 %v11559, %v11558
      %v11579 = vpack.c.b16 %v11561, %v11560
      %v11580 = vpack.c.b16 %v11563, %v11562
      %v11581 = vpack.c.b16 %v11565, %v11564
      %11582 = vrot.lane.b32.xlu0 %v11566, 40
      %v11583 = vpop.permute.xlu0 %11582
      %11584 = vrot.lane.b32.xlu0 %v11567, 40
      %v11585 = vpop.permute.xlu0 %11584
      %11586 = vrot.lane.b32.xlu0 %v11568, 40
      %v11587 = vpop.permute.xlu0 %11586
      %11588 = vrot.lane.b32.xlu0 %v11569, 40
      %v11589 = vpop.permute.xlu0 %11588
      %11590 = vrot.lane.b32.xlu0 %v11570, 40
      %v11591 = vpop.permute.xlu0 %11590
      %11592 = vrot.lane.b32.xlu0 %v11571, 40
      %v11593 = vpop.permute.xlu0 %11592
      %11594 = vrot.lane.b32.xlu0 %v11572, 40
      %v11595 = vpop.permute.xlu0 %11594
      %11596 = vrot.lane.b32.xlu0 %v11573, 40
      %v11597 = vpop.permute.xlu0 %11596
      %11598 = vrot.lane.b32.xlu0 %v11574, 40
      %v11599 = vpop.permute.xlu0 %11598
      %11600 = vrot.lane.b32.xlu0 %v11575, 40
      %v11601 = vpop.permute.xlu0 %11600
      %11602 = vrot.lane.b32.xlu0 %v11576, 40
      %v11603 = vpop.permute.xlu0 %11602
      %11604 = vrot.lane.b32.xlu0 %v11577, 40
      %v11605 = vpop.permute.xlu0 %11604
      %11606 = vrot.lane.b32.xlu0 %v11578, 40
      %v11607 = vpop.permute.xlu0 %11606
      %11608 = vrot.lane.b32.xlu0 %v11579, 40
      %v11609 = vpop.permute.xlu0 %11608
      %11610 = vrot.lane.b32.xlu0 %v11580, 40
      %v11611 = vpop.permute.xlu0 %11610
      %11612 = vrot.lane.b32.xlu0 %v11581, 40
      %v11613 = vpop.permute.xlu0 %11612
      %v11630 = vunpack.c.l.b16 %v10526
      %v11631 = vunpack.c.l.b16 %v10527
      %v11632 = vunpack.c.l.b16 %v10528
      %v11633 = vunpack.c.l.b16 %v10529
      %v11634 = vunpack.c.l.b16 %v10530
      %v11635 = vunpack.c.l.b16 %v10531
      %v11636 = vunpack.c.l.b16 %v10532
      %v11637 = vunpack.c.l.b16 %v10533
      %v11638 = vunpack.c.l.b16 %v10534
      %v11639 = vunpack.c.l.b16 %v10535
      %v11640 = vunpack.c.l.b16 %v10536
      %v11641 = vunpack.c.l.b16 %v10537
      %v11642 = vunpack.c.l.b16 %v10538
      %v11643 = vunpack.c.l.b16 %v10539
      %v11644 = vunpack.c.l.b16 %v10540
      %v11645 = vunpack.c.l.b16 %v10541
      %v11646 = vunpack.c.l.b16 %v10542
      %v11647 = vunpack.c.l.b16 %v10543
      %v11648 = vunpack.c.l.b16 %v10544
      %v11649 = vunpack.c.l.b16 %v10545
      %v11650 = vunpack.c.l.b16 %v10546
      %v11651 = vunpack.c.l.b16 %v10547
      %v11652 = vunpack.c.l.b16 %v10548
      %v11653 = vunpack.c.l.b16 %v10549
      %v11654 = vunpack.c.l.b16 %v10550
      %v11655 = vunpack.c.l.b16 %v10551
      %v11656 = vunpack.c.l.b16 %v10552
      %v11657 = vunpack.c.l.b16 %v10553
      %v11658 = vunpack.c.l.b16 %v10554
      %v11659 = vunpack.c.l.b16 %v10555
      %v11660 = vunpack.c.l.b16 %v10556
      %v11661 = vunpack.c.l.b16 %v10557
      %v11662 = vpack.c.b16 %v11631, %v11630
      %v11663 = vpack.c.b16 %v11633, %v11632
      %v11664 = vpack.c.b16 %v11635, %v11634
      %v11665 = vpack.c.b16 %v11637, %v11636
      %v11666 = vpack.c.b16 %v11639, %v11638
      %v11667 = vpack.c.b16 %v11641, %v11640
      %v11668 = vpack.c.b16 %v11643, %v11642
      %v11669 = vpack.c.b16 %v11645, %v11644
      %v11670 = vpack.c.b16 %v11647, %v11646
      %v11671 = vpack.c.b16 %v11649, %v11648
      %v11672 = vpack.c.b16 %v11651, %v11650
      %v11673 = vpack.c.b16 %v11653, %v11652
      %v11674 = vpack.c.b16 %v11655, %v11654
      %v11675 = vpack.c.b16 %v11657, %v11656
      %v11676 = vpack.c.b16 %v11659, %v11658
      %v11677 = vpack.c.b16 %v11661, %v11660
      %11678 = vrot.lane.b32.xlu0 %v11662, 48
      %v11679 = vpop.permute.xlu0 %11678
      %11680 = vrot.lane.b32.xlu0 %v11663, 48
      %v11681 = vpop.permute.xlu0 %11680
      %11682 = vrot.lane.b32.xlu0 %v11664, 48
      %v11683 = vpop.permute.xlu0 %11682
      %11684 = vrot.lane.b32.xlu0 %v11665, 48
      %v11685 = vpop.permute.xlu0 %11684
      %11686 = vrot.lane.b32.xlu0 %v11666, 48
      %v11687 = vpop.permute.xlu0 %11686
      %11688 = vrot.lane.b32.xlu0 %v11667, 48
      %v11689 = vpop.permute.xlu0 %11688
      %11690 = vrot.lane.b32.xlu0 %v11668, 48
      %v11691 = vpop.permute.xlu0 %11690
      %11692 = vrot.lane.b32.xlu0 %v11669, 48
      %v11693 = vpop.permute.xlu0 %11692
      %11694 = vrot.lane.b32.xlu0 %v11670, 48
      %v11695 = vpop.permute.xlu0 %11694
      %11696 = vrot.lane.b32.xlu0 %v11671, 48
      %v11697 = vpop.permute.xlu0 %11696
      %11698 = vrot.lane.b32.xlu0 %v11672, 48
      %v11699 = vpop.permute.xlu0 %11698
      %11700 = vrot.lane.b32.xlu0 %v11673, 48
      %v11701 = vpop.permute.xlu0 %11700
      %11702 = vrot.lane.b32.xlu0 %v11674, 48
      %v11703 = vpop.permute.xlu0 %11702
      %11704 = vrot.lane.b32.xlu0 %v11675, 48
      %v11705 = vpop.permute.xlu0 %11704
      %11706 = vrot.lane.b32.xlu0 %v11676, 48
      %v11707 = vpop.permute.xlu0 %11706
      %11708 = vrot.lane.b32.xlu0 %v11677, 48
      %v11709 = vpop.permute.xlu0 %11708
      %v11710 = vunpack.c.l.b16 %v10587
      %v11711 = vunpack.c.l.b16 %v10597
      %v11712 = vunpack.c.l.b16 %v10611
      %v11713 = vunpack.c.l.b16 %v10621
      %v11714 = vunpack.c.l.b16 %v10635
      %v11715 = vunpack.c.l.b16 %v10645
      %v11716 = vunpack.c.l.b16 %v10659
      %v11717 = vunpack.c.l.b16 %v10669
      %v11718 = vunpack.c.l.b16 %v10683
      %v11719 = vunpack.c.l.b16 %v10693
      %v11720 = vunpack.c.l.b16 %v10707
      %v11721 = vunpack.c.l.b16 %v10717
      %v11722 = vunpack.c.l.b16 %v10731
      %v11723 = vunpack.c.l.b16 %v10741
      %v11724 = vunpack.c.l.b16 %v10755
      %v11725 = vunpack.c.l.b16 %v10765
      %v11726 = vunpack.c.l.b16 %v10779
      %v11727 = vunpack.c.l.b16 %v10789
      %v11728 = vunpack.c.l.b16 %v10803
      %v11729 = vunpack.c.l.b16 %v10813
      %v11730 = vunpack.c.l.b16 %v10827
      %v11731 = vunpack.c.l.b16 %v10837
      %v11732 = vunpack.c.l.b16 %v10851
      %v11733 = vunpack.c.l.b16 %v10861
      %v11734 = vunpack.c.l.b16 %v10875
      %v11735 = vunpack.c.l.b16 %v10885
      %v11736 = vunpack.c.l.b16 %v10899
      %v11737 = vunpack.c.l.b16 %v10909
      %v11738 = vunpack.c.l.b16 %v10923
      %v11739 = vunpack.c.l.b16 %v10933
      %v11740 = vunpack.c.l.b16 %v10947
      %v11741 = vunpack.c.l.b16 %v10957
      %v11742 = vpack.c.b16 %v11711, %v11710
      %v11743 = vpack.c.b16 %v11713, %v11712
      %v11744 = vpack.c.b16 %v11715, %v11714
      %v11745 = vpack.c.b16 %v11717, %v11716
      %v11746 = vpack.c.b16 %v11719, %v11718
      %v11747 = vpack.c.b16 %v11721, %v11720
      %v11748 = vpack.c.b16 %v11723, %v11722
      %v11749 = vpack.c.b16 %v11725, %v11724
      %v11750 = vpack.c.b16 %v11727, %v11726
      %v11751 = vpack.c.b16 %v11729, %v11728
      %v11752 = vpack.c.b16 %v11731, %v11730
      %v11753 = vpack.c.b16 %v11733, %v11732
      %v11754 = vpack.c.b16 %v11735, %v11734
      %v11755 = vpack.c.b16 %v11737, %v11736
      %v11756 = vpack.c.b16 %v11739, %v11738
      %v11757 = vpack.c.b16 %v11741, %v11740
      %11758 = vrot.lane.b32.xlu0 %v11742, 56
      %v11759 = vpop.permute.xlu0 %11758
      %11760 = vrot.lane.b32.xlu0 %v11743, 56
      %v11761 = vpop.permute.xlu0 %11760
      %11762 = vrot.lane.b32.xlu0 %v11744, 56
      %v11763 = vpop.permute.xlu0 %11762
      %11764 = vrot.lane.b32.xlu0 %v11745, 56
      %v11765 = vpop.permute.xlu0 %11764
      %11766 = vrot.lane.b32.xlu0 %v11746, 56
      %v11767 = vpop.permute.xlu0 %11766
      %11768 = vrot.lane.b32.xlu0 %v11747, 56
      %v11769 = vpop.permute.xlu0 %11768
      %11770 = vrot.lane.b32.xlu0 %v11748, 56
      %v11771 = vpop.permute.xlu0 %11770
      %11772 = vrot.lane.b32.xlu0 %v11749, 56
      %v11773 = vpop.permute.xlu0 %11772
      %11774 = vrot.lane.b32.xlu0 %v11750, 56
      %v11775 = vpop.permute.xlu0 %11774
      %11776 = vrot.lane.b32.xlu0 %v11751, 56
      %v11777 = vpop.permute.xlu0 %11776
      %11778 = vrot.lane.b32.xlu0 %v11752, 56
      %v11779 = vpop.permute.xlu0 %11778
      %11780 = vrot.lane.b32.xlu0 %v11753, 56
      %v11781 = vpop.permute.xlu0 %11780
      %11782 = vrot.lane.b32.xlu0 %v11754, 56
      %v11783 = vpop.permute.xlu0 %11782
      %11784 = vrot.lane.b32.xlu0 %v11755, 56
      %v11785 = vpop.permute.xlu0 %11784
      %11786 = vrot.lane.b32.xlu0 %v11756, 56
      %v11787 = vpop.permute.xlu0 %11786
      %11788 = vrot.lane.b32.xlu0 %v11757, 56
      %v11789 = vpop.permute.xlu0 %11788
      %v11790 = vunpack.c.l.b16 %v11025
      %v11791 = vunpack.c.l.b16 %v11028
      %v11792 = vunpack.c.l.b16 %v11032
      %v11793 = vunpack.c.l.b16 %v11035
      %v11794 = vunpack.c.l.b16 %v11039
      %v11795 = vunpack.c.l.b16 %v11042
      %v11796 = vunpack.c.l.b16 %v11046
      %v11797 = vunpack.c.l.b16 %v11049
      %v11798 = vunpack.c.l.b16 %v11053
      %v11799 = vunpack.c.l.b16 %v11056
      %v11800 = vunpack.c.l.b16 %v11060
      %v11801 = vunpack.c.l.b16 %v11063
      %v11802 = vunpack.c.l.b16 %v11067
      %v11803 = vunpack.c.l.b16 %v11070
      %v11804 = vunpack.c.l.b16 %v11074
      %v11805 = vunpack.c.l.b16 %v11077
      %v11806 = vunpack.c.l.b16 %v11081
      %v11807 = vunpack.c.l.b16 %v11084
      %v11808 = vunpack.c.l.b16 %v11088
      %v11809 = vunpack.c.l.b16 %v11091
      %v11810 = vunpack.c.l.b16 %v11095
      %v11811 = vunpack.c.l.b16 %v11098
      %v11812 = vunpack.c.l.b16 %v11102
      %v11813 = vunpack.c.l.b16 %v11105
      %v11814 = vunpack.c.l.b16 %v11109
      %v11815 = vunpack.c.l.b16 %v11112
      %v11816 = vunpack.c.l.b16 %v11116
      %v11817 = vunpack.c.l.b16 %v11119
      %v11818 = vunpack.c.l.b16 %v11123
      %v11819 = vunpack.c.l.b16 %v11126
      %v11820 = vunpack.c.l.b16 %v11130
      %v11821 = vunpack.c.l.b16 %v11133
      %v11822 = vpack.c.b16 %v11791, %v11790
      %v11823 = vpack.c.b16 %v11793, %v11792
      %v11824 = vpack.c.b16 %v11795, %v11794
      %v11825 = vpack.c.b16 %v11797, %v11796
      %v11826 = vpack.c.b16 %v11799, %v11798
      %v11827 = vpack.c.b16 %v11801, %v11800
      %v11828 = vpack.c.b16 %v11803, %v11802
      %v11829 = vpack.c.b16 %v11805, %v11804
      %v11830 = vpack.c.b16 %v11807, %v11806
      %v11831 = vpack.c.b16 %v11809, %v11808
      %v11832 = vpack.c.b16 %v11811, %v11810
      %v11833 = vpack.c.b16 %v11813, %v11812
      %v11834 = vpack.c.b16 %v11815, %v11814
      %v11835 = vpack.c.b16 %v11817, %v11816
      %v11836 = vpack.c.b16 %v11819, %v11818
      %v11837 = vpack.c.b16 %v11821, %v11820
      %11838 = vrot.lane.b32.xlu0 %v11822, 64
      %v11839 = vpop.permute.xlu0 %11838
      %11840 = vrot.lane.b32.xlu0 %v11823, 64
      %v11841 = vpop.permute.xlu0 %11840
      %11842 = vrot.lane.b32.xlu0 %v11824, 64
      %v11843 = vpop.permute.xlu0 %11842
      %11844 = vrot.lane.b32.xlu0 %v11825, 64
      %v11845 = vpop.permute.xlu0 %11844
      %11846 = vrot.lane.b32.xlu0 %v11826, 64
      %v11847 = vpop.permute.xlu0 %11846
      %11848 = vrot.lane.b32.xlu0 %v11827, 64
      %v11849 = vpop.permute.xlu0 %11848
      %11850 = vrot.lane.b32.xlu0 %v11828, 64
      %v11851 = vpop.permute.xlu0 %11850
      %11852 = vrot.lane.b32.xlu0 %v11829, 64
      %v11853 = vpop.permute.xlu0 %11852
      %11854 = vrot.lane.b32.xlu0 %v11830, 64
      %v11855 = vpop.permute.xlu0 %11854
      %11856 = vrot.lane.b32.xlu0 %v11831, 64
      %v11857 = vpop.permute.xlu0 %11856
      %11858 = vrot.lane.b32.xlu0 %v11832, 64
      %v11859 = vpop.permute.xlu0 %11858
      %11860 = vrot.lane.b32.xlu0 %v11833, 64
      %v11861 = vpop.permute.xlu0 %11860
      %11862 = vrot.lane.b32.xlu0 %v11834, 64
      %v11863 = vpop.permute.xlu0 %11862
      %11864 = vrot.lane.b32.xlu0 %v11835, 64
      %v11865 = vpop.permute.xlu0 %11864
      %11866 = vrot.lane.b32.xlu0 %v11836, 64
      %v11867 = vpop.permute.xlu0 %11866
      %11868 = vrot.lane.b32.xlu0 %v11837, 64
      %v11869 = vpop.permute.xlu0 %11868
      %v11872 = vsel %vm437, %v11182, %v11247
      %v11875 = vsel %vm437, %v11183, %v11249
      %v11878 = vsel %vm437, %v11184, %v11251
      %v11881 = vsel %vm437, %v11185, %v11253
      %v11884 = vsel %vm437, %v11186, %v11255
      %v11887 = vsel %vm437, %v11187, %v11257
      %v11890 = vsel %vm437, %v11188, %v11259
      %v11893 = vsel %vm437, %v11189, %v11261
      %v11896 = vsel %vm437, %v11190, %v11263
      %v11899 = vsel %vm437, %v11191, %v11265
      %v11902 = vsel %vm437, %v11192, %v11267
      %v11905 = vsel %vm437, %v11193, %v11269
      %v11908 = vsel %vm437, %v11194, %v11271
      %v11911 = vsel %vm437, %v11195, %v11273
      %v11914 = vsel %vm437, %v11196, %v11275
      %v11917 = vsel %vm437, %v11197, %v11277
      %v11919 = vsel %vm8071, %v11872, %v11327
      %v11921 = vsel %vm8071, %v11875, %v11329
      %v11923 = vsel %vm8071, %v11878, %v11331
      %v11925 = vsel %vm8071, %v11881, %v11333
      %v11927 = vsel %vm8071, %v11884, %v11335
      %v11929 = vsel %vm8071, %v11887, %v11337
      %v11931 = vsel %vm8071, %v11890, %v11339
      %v11933 = vsel %vm8071, %v11893, %v11341
      %v11935 = vsel %vm8071, %v11896, %v11343
      %v11937 = vsel %vm8071, %v11899, %v11345
      %v11939 = vsel %vm8071, %v11902, %v11347
      %v11941 = vsel %vm8071, %v11905, %v11349
      %v11943 = vsel %vm8071, %v11908, %v11351
      %v11945 = vsel %vm8071, %v11911, %v11353
      %v11947 = vsel %vm8071, %v11914, %v11355
      %v11949 = vsel %vm8071, %v11917, %v11357
      %vm11950 = vcmask 195584
      %v11952 = vsel %vm11950, %v11919, %v11423
      %v11954 = vsel %vm11950, %v11921, %v11425
      %v11956 = vsel %vm11950, %v11923, %v11427
      %v11958 = vsel %vm11950, %v11925, %v11429
      %v11960 = vsel %vm11950, %v11927, %v11431
      %v11962 = vsel %vm11950, %v11929, %v11433
      %v11964 = vsel %vm11950, %v11931, %v11435
      %v11966 = vsel %vm11950, %v11933, %v11437
      %v11968 = vsel %vm11950, %v11935, %v11439
      %v11970 = vsel %vm11950, %v11937, %v11441
      %v11972 = vsel %vm11950, %v11939, %v11443
      %v11974 = vsel %vm11950, %v11941, %v11445
      %v11976 = vsel %vm11950, %v11943, %v11447
      %v11978 = vsel %vm11950, %v11945, %v11449
      %v11980 = vsel %vm11950, %v11947, %v11451
      %v11982 = vsel %vm11950, %v11949, %v11453
      %v11984 = vsel %vm8120, %v11952, %v11503
      %v11986 = vsel %vm8120, %v11954, %v11505
      %v11988 = vsel %vm8120, %v11956, %v11507
      %v11990 = vsel %vm8120, %v11958, %v11509
      %v11992 = vsel %vm8120, %v11960, %v11511
      %v11994 = vsel %vm8120, %v11962, %v11513
      %v11996 = vsel %vm8120, %v11964, %v11515
      %v11998 = vsel %vm8120, %v11966, %v11517
      %v12000 = vsel %vm8120, %v11968, %v11519
      %v12002 = vsel %vm8120, %v11970, %v11521
      %v12004 = vsel %vm8120, %v11972, %v11523
      %v12006 = vsel %vm8120, %v11974, %v11525
      %v12008 = vsel %vm8120, %v11976, %v11527
      %v12010 = vsel %vm8120, %v11978, %v11529
      %v12012 = vsel %vm8120, %v11980, %v11531
      %v12014 = vsel %vm8120, %v11982, %v11533
      %vm12015 = vcmask 326656
      %v12017 = vsel %vm12015, %v11984, %v11583
      %v12019 = vsel %vm12015, %v11986, %v11585
      %v12021 = vsel %vm12015, %v11988, %v11587
      %v12023 = vsel %vm12015, %v11990, %v11589
      %v12025 = vsel %vm12015, %v11992, %v11591
      %v12027 = vsel %vm12015, %v11994, %v11593
      %v12029 = vsel %vm12015, %v11996, %v11595
      %v12031 = vsel %vm12015, %v11998, %v11597
      %v12033 = vsel %vm12015, %v12000, %v11599
      %v12035 = vsel %vm12015, %v12002, %v11601
      %v12037 = vsel %vm12015, %v12004, %v11603
      %v12039 = vsel %vm12015, %v12006, %v11605
      %v12041 = vsel %vm12015, %v12008, %v11607
      %v12043 = vsel %vm12015, %v12010, %v11609
      %v12045 = vsel %vm12015, %v12012, %v11611
      %v12047 = vsel %vm12015, %v12014, %v11613
      %v12049 = vsel %vm8153, %v12017, %v11679
      %v12051 = vsel %vm8153, %v12019, %v11681
      %v12053 = vsel %vm8153, %v12021, %v11683
      %v12055 = vsel %vm8153, %v12023, %v11685
      %v12057 = vsel %vm8153, %v12025, %v11687
      %v12059 = vsel %vm8153, %v12027, %v11689
      %v12061 = vsel %vm8153, %v12029, %v11691
      %v12063 = vsel %vm8153, %v12031, %v11693
      %v12065 = vsel %vm8153, %v12033, %v11695
      %v12067 = vsel %vm8153, %v12035, %v11697
      %v12069 = vsel %vm8153, %v12037, %v11699
      %v12071 = vsel %vm8153, %v12039, %v11701
      %v12073 = vsel %vm8153, %v12041, %v11703
      %v12075 = vsel %vm8153, %v12043, %v11705
      %v12077 = vsel %vm8153, %v12045, %v11707
      %v12079 = vsel %vm8153, %v12047, %v11709
      %vm12080 = vcmask 457728
      %v12082 = vsel %vm12080, %v12049, %v11759
      %v12084 = vsel %vm12080, %v12051, %v11761
      %v12086 = vsel %vm12080, %v12053, %v11763
      %v12088 = vsel %vm12080, %v12055, %v11765
      %v12090 = vsel %vm12080, %v12057, %v11767
      %v12092 = vsel %vm12080, %v12059, %v11769
      %v12094 = vsel %vm12080, %v12061, %v11771
      %v12096 = vsel %vm12080, %v12063, %v11773
      %v12098 = vsel %vm12080, %v12065, %v11775
      %v12100 = vsel %vm12080, %v12067, %v11777
      %v12102 = vsel %vm12080, %v12069, %v11779
      %v12104 = vsel %vm12080, %v12071, %v11781
      %v12106 = vsel %vm12080, %v12073, %v11783
      %v12108 = vsel %vm12080, %v12075, %v11785
      %v12110 = vsel %vm12080, %v12077, %v11787
      %v12112 = vsel %vm12080, %v12079, %v11789
      %v12114 = vsel %vm8186, %v12082, %v11839
      %v12116 = vsel %vm8186, %v12084, %v11841
      %v12118 = vsel %vm8186, %v12086, %v11843
      %v12120 = vsel %vm8186, %v12088, %v11845
      %v12122 = vsel %vm8186, %v12090, %v11847
      %v12124 = vsel %vm8186, %v12092, %v11849
      %v12126 = vsel %vm8186, %v12094, %v11851
      %v12128 = vsel %vm8186, %v12096, %v11853
      %v12130 = vsel %vm8186, %v12098, %v11855
      %v12132 = vsel %vm8186, %v12100, %v11857
      %v12134 = vsel %vm8186, %v12102, %v11859
      %v12136 = vsel %vm8186, %v12104, %v11861
      %v12138 = vsel %vm8186, %v12106, %v11863
      %v12140 = vsel %vm8186, %v12108, %v11865
      %v12142 = vsel %vm8186, %v12110, %v11867
      %v12144 = vsel %vm8186, %v12112, %v11869
      %v12145 = vld [vmem:[%s8] sm:$0xf]
      %vm12146 = vcmask 588800
      %v12148 = vsel %vm12146, %v12145, 0
      %v12150 = vsel %vm12146, %v12114, 0
      %v12152 = vsel %vm12146, %v12116, 0
      %v12154 = vsel %vm12146, %v12118, 0
      %v12156 = vsel %vm12146, %v12120, 0
      %v12158 = vsel %vm12146, %v12122, 0
      %v12160 = vsel %vm12146, %v12124, 0
      %v12162 = vsel %vm12146, %v12126, 0
      %v12164 = vsel %vm12146, %v12128, 0
      %v12166 = vsel %vm12146, %v12130, 0
      %v12168 = vsel %vm12146, %v12132, 0
      %v12170 = vsel %vm12146, %v12134, 0
      %v12172 = vsel %vm12146, %v12136, 0
      %v12174 = vsel %vm12146, %v12138, 0
      %v12176 = vsel %vm12146, %v12140, 0
      %v12178 = vsel %vm12146, %v12142, 0
      %v12180 = vsel %vm12146, %v12144, 0
      %12182 = vmatprep.subr.bf16.mxu0 0
      %12183 = vmatpush1.bf16.xpose.msra.mxu0 %v12150
      %12184 = vmatprep.subr.bf16.mxu0 0
      %12185 = vmatpush1.bf16.xpose.msra.mxu0 %v12152
      %12186 = vmatprep.subr.bf16.mxu0 0
      %12187 = vmatpush1.bf16.xpose.msra.mxu0 %v12154
      %12188 = vmatprep.subr.bf16.mxu0 0
      %12189 = vmatpush1.bf16.xpose.msra.mxu0 %v12156
      %12190 = vmatprep.subr.bf16.mxu0 0
      %12191 = vmatpush1.bf16.xpose.msra.mxu0 %v12158
      %12192 = vmatprep.subr.bf16.mxu0 0
      %12193 = vmatpush1.bf16.xpose.msra.mxu0 %v12160
      %12194 = vmatprep.subr.bf16.mxu0 0
      %12195 = vmatpush1.bf16.xpose.msra.mxu0 %v12162
      %12196 = vmatprep.subr.bf16.mxu0 0
      %12197 = vmatpush1.bf16.xpose.msra.mxu0 %v12164
      %12198 = vmatprep.subr.bf16.mxu0 0
      %12199 = vmatpush1.bf16.xpose.msra.mxu0 %v12166
      %12200 = vmatprep.subr.bf16.mxu0 0
      %12201 = vmatpush1.bf16.xpose.msra.mxu0 %v12168
      %12202 = vmatprep.subr.bf16.mxu0 0
      %12203 = vmatpush1.bf16.xpose.msra.mxu0 %v12170
      %12204 = vmatprep.subr.bf16.mxu0 0
      %12205 = vmatpush1.bf16.xpose.msra.mxu0 %v12172
      %12206 = vmatprep.subr.bf16.mxu0 0
      %12207 = vmatpush1.bf16.xpose.msra.mxu0 %v12174
      %12208 = vmatprep.subr.bf16.mxu0 0
      %12209 = vmatpush1.bf16.xpose.msra.mxu0 %v12176
      %12210 = vmatprep.subr.bf16.mxu0 0
      %12211 = vmatpush1.bf16.xpose.msra.mxu0 %v12178
      %12212 = vmatprep.subr.bf16.mxu0 0
      %12213 = vmatpush1.bf16.xpose.msra.mxu0 %v12180
      %12214 = vmatprep.mubr.bf16.mxu0 0
      %12215 = vmatmul.mubr.bf16.gmra.mrb[0].mxu0 %v12148
      %v12216 = vpop.f32.mrb[0].mxu0
      %v12217 = vadd.f32 0.0, %v12216
      %v12218 = vpop.f32.mrb[0].mxu0
      %v12219 = vadd.f32 0.0, %v12218
      %v12220 = vpop.f32.mrb[0].mxu0
      %v12221 = vpop.f32.mrb[0].mxu0
      %12222 = vdwg.mxu0
      %v12223 = vld [vmem:[%s9] sm:$0xff]
      %12225 = vset.pattern.permute.xlu0 0
      %12226 = vperm.xlu0 %12225, %v12223
      %v12227 = vpop.permute.xlu0 %12226
      %v12229 = vmul.f32 %v12217, %v12227
      %v12230 = vmul.f32 %v12219, %v12227
      %v12231 = vld [vmem:[%s10] sm:$0xff]
      %12233 = vset.pattern.permute.xlu0 0
      %12234 = vperm.xlu0 %12233, %v12231
      %v12235 = vpop.permute.xlu0 %12234
      %v12237 = vadd.f32 %v12229, %v12235
      %v12238 = vadd.f32 %v12230, %v12235
      %v12239 = vmax.f32 %v12237, 0.0
      %v12240 = vmax.f32 %v12238, 0.0
      %12241 = vst [vmem:[%s406] sm:$0xff] %v12239
      %12242 = vst [vmem:[%s406 + $0x8] sm:$0xff] %v12240
      %p12243 = scmp.lt.s32.totalorder %s22, 1
      %s12244 = scalar_select %p12243, %s22, 1
      %s12245 = smul.addr %s12244, 2
      %s12246 = smul.addr %s12245, 8
      %s12247 = scalar_lea.vmem %s11, %s12246
      // Predicated region
      $region65: #{up_forward.1} parent=63 // pred_check
        %p12248 = pneg %p281
      $region66: #{up_forward.1} parent=63 // pred_check_branch
        %12250 = sbr.rel (%p12248) target = $region68
      $region67: #{up_forward.1} parent=63 // pred_region
        _
      $region68: #{up_forward.1} parent=63 // pred_fallthru
        _
    $region64: #{up_forward.1} parent=5 // pred_fallthru
      _
    %p12251 = scmp.le.s32.totalorder 2, %s17
    // Predicated region
    $region69: #{up_forward.1} parent=5 // pred_check
      %p12252 = pneg %p12251
    $region70: #{up_forward.1} parent=5 // pred_check_branch
      %12254 = sbr.rel (%p12252) target = $region72
    $region71: #{up_forward.1} parent=5 // pred_region
      %s12255 = ssub.s32 %s17, 2
      // Predicated region
      $region73: #{up_forward.1} parent=71 // pred_check
        %p12256 = pneg %p287
      $region74: #{up_forward.1} parent=71 // pred_check_branch
        %12258 = sbr.rel (%p12256) target = $region76
      $region75: #{up_forward.1} parent=71 // pred_region
        %p12259 = scmp.lt.s32.totalorder %s23, 1
        %s12260 = scalar_select %p12259, %s23, 1
        %s12261 = smul.addr %s12260, 2
        %s12262 = smul.addr %s12261, 8
        %s12263 = scalar_lea.vmem %s11, %s12262
      $region76: #{up_forward.1} parent=71 // pred_fallthru
        _
    $region72: #{up_forward.1} parent=5 // pred_fallthru
      _
  $region6: #{up_forward.1} parent=0 // loop_footer
    %s21 = sadd.s32 1, %s17
  $region7: #{up_forward.1} parent=0 // loop_footer_branch
    %16 = sbr.rel target = $region3
  $region8: #{up_forward.1} parent=0 // loop_exit
    _

</llo_original>
